<compile_context>
chip_gen: v7x
topology: tpu7x:2x2x1
jax: 0.10.0
libtpu: 0.0.40
codegen_flags: <defaults>
</compile_context>

<pallas_src>
import functools

import jax
import jax.numpy as jnp
from jax import lax
from jax.experimental import pallas as pl
from jax.experimental.pallas import tpu as pltpu

LEAKY_SLOPE = 0.01             # nn.LeakyReLU() default, as used by Flatten_Module
K_SIZE, STRIDE, PADDING = 5, 2, 2
IM2COL_MAX_KDIM = 256          # use wrapper-side im2col when K*K*Cin <= this


def _round_up(x, m):
    return (x + m - 1) // m * m


def _vmem_limit_bytes(*block_bytes):
    need = 2 * sum(int(b) for b in block_bytes) + (8 << 20)
    return int(min(max(need, 32 << 20), 96 << 20))


def _pick_m_tile(mtot, cap=256, want_tiles=2):
    """Largest divisor tm of mtot with tm <= cap and a legal (8-divisible or full) block."""
    divs = [d for d in range(1, mtot + 1) if mtot % d == 0]
    legal = [d for d in divs if d == mtot or d % 8 == 0]
    cands = [d for d in legal if d <= cap]
    tm = max(cands) if cands else mtot
    if mtot // tm < want_tiles:                      # keep >= 2 grid steps when possible (v7x)
        smaller = [d for d in cands if mtot // d >= want_tiles]
        if smaller:
            tm = max(smaller)
    return tm


def _pick_row_tile(ho, wo, cap=256, extra_split=False):
    """Largest divisor tm of ho with tm*wo <= cap and a legal block shape."""
    divs = [d for d in range(1, ho + 1) if ho % d == 0]
    legal = [d for d in divs if d == ho or (d * wo) % 8 == 0]
    cands = [d for d in legal if d * wo <= cap]
    tm = max(cands) if cands else ho
    if extra_split and ho // tm < 2:                 # force >= 2 steps for v7x's 2 TCs
        smaller = [d for d in cands if ho // d >= 2]
        if smaller:
            tm = max(smaller)
    return tm


# ----------------------------- Pallas kernels --------------------------------
def _matmul_bias_lrelu_kernel(x_ref, w_ref, b_ref, o_ref):
    """im2col path: (TM, Kc) x (Kc, Ct) full-contraction matmul + bias + LeakyReLU."""
    y = jnp.dot(x_ref[...], w_ref[...], preferred_element_type=jnp.float32)
    y = y + b_ref[...]
    o_ref[...] = jnp.where(y > 0, y, LEAKY_SLOPE * y).astype(o_ref.dtype)


def _phase_conv_lrelu_kernel(x_ref, w_ref, b_ref, o_ref, *, K, S, tm_h, wo, cpad, ct):
    """Implicit-im2col conv step (one batch / cout-tile / row-tile of the grid).

    x_ref: (S, S, Hp2, Wp2, Cpad)   phase-split zero-padded bf16 input (batch squeezed)
    w_ref: (K*K, Cpad, ct)          bf16 weights, tap-major, cout-tiled
    b_ref: (1, ct)                  f32 bias tile
    o_ref: (tm_h*wo, ct)            output tile (batch squeezed)
    """
    m = pl.program_id(2)                         # grid = (N, cout_tiles, row_tiles)
    r0 = pl.multiple_of(m * tm_h, tm_h)          # first output row of this tile
    acc = jnp.zeros((tm_h * wo, ct), jnp.float32)   # <= ~128 KiB by construction
    for kh in range(K):                          # unrolled 25-tap accumulation
        ph, oh = kh % S, kh // S
        for kw in range(K):
            pw, ow = kw % S, kw // S
            xt = x_ref[ph, pw, pl.ds(r0 + oh, tm_h), pl.ds(ow, wo), :]
            xt = xt.reshape(tm_h * wo, cpad)
            acc = acc + jnp.dot(xt, w_ref[kh * K + kw],
                                preferred_element_type=jnp.float32)
    y = acc + b_ref[...]
    o_ref[...] = jnp.where(y > 0, y, LEAKY_SLOPE * y).astype(o_ref.dtype)


# ------------------------------ wrappers --------------------------------------
def _conv_lrelu_im2col(x_nhwc, w, b, out_dtype=jnp.bfloat16):
    """Small-Cin conv: wrapper-side im2col (contraction K*K*Cin -> padded to 128 multiple)."""
    N, H, W, Cin = x_nhwc.shape
    Cout = w.shape[-1]
    K, S, P = K_SIZE, STRIDE, PADDING
    Ho = (H + 2 * P - K) // S + 1
    Wo = (W + 2 * P - K) // S + 1

    xp = jnp.pad(x_nhwc.astype(jnp.bfloat16), ((0, 0), (P, P), (P, P), (0, 0)))
    taps = []
    for kh in range(K):
        for kw in range(K):
            taps.append(xp[:, kh:kh + S * (Ho - 1) + 1:S, kw:kw + S * (Wo - 1) + 1:S, :])
    patches = jnp.concatenate(taps, axis=-1)           # (N, Ho, Wo, K*K*Cin)

    Kc = K * K * Cin
    Kc_pad = _round_up(Kc, 128)
    Mtot = N * Ho * Wo
    patches = patches.reshape(Mtot, Kc)
    if Kc_pad != Kc:
        patches = jnp.pad(patches, ((0, 0), (0, Kc_pad - Kc)))

    w2 = w.astype(jnp.bfloat16).reshape(Kc, Cout)       # row order matches tap concat order
    if Kc_pad != Kc:
        w2 = jnp.pad(w2, ((0, Kc_pad - Kc), (0, 0)))
    b2 = b.reshape(1, Cout).astype(jnp.float32)

    tm = _pick_m_tile(Mtot, cap=256)
    ct = Cout if Cout <= 128 else 128
    n_mt, n_ct = Mtot // tm, Cout // ct

    out_bytes = Mtot * Cout * (2 if out_dtype == jnp.bfloat16 else 4)
    cost = pl.CostEstimate(
        flops=2 * Mtot * Kc_pad * Cout, transcendentals=0,
        bytes_accessed=int(patches.size * 2 + w2.size * 2 + b2.size * 4 + out_bytes))

    vmem = _vmem_limit_bytes(tm * Kc_pad * 2,
                             Kc_pad * max(ct, 128) * 2,
                             tm * max(ct, 128) * 4)

    out = pl.pallas_call(
        _matmul_bias_lrelu_kernel,
        out_shape=jax.ShapeDtypeStruct((Mtot, Cout), out_dtype),
        grid_spec=pltpu.PrefetchScalarGridSpec(
            num_scalar_prefetch=0,
            grid=(n_mt, n_ct),
            in_specs=[
                pl.BlockSpec((tm, Kc_pad), lambda m, c: (m, 0)),
                pl.BlockSpec((Kc_pad, ct), lambda m, c: (0, c)),
                pl.BlockSpec((1, ct), lambda m, c: (0, c)),
            ],
            out_specs=pl.BlockSpec((tm, ct), lambda m, c: (m, c)),
        ),
        compiler_params=pltpu.CompilerParams(
            dimension_semantics=("parallel", "parallel"),
            vmem_limit_bytes=vmem,
        ),
        cost_estimate=cost,
    )(patches, w2, b2)
    return out.reshape(N, Ho, Wo, Cout)


def _conv_lrelu_implicit(x_nhwc, w, b, out_dtype=jnp.bfloat16):
    """Larger-Cin conv: resident phase-split input, per-tap MXU matmuls, Cout-tiled grid."""
    N, H, W, Cin = x_nhwc.shape
    Cout = w.shape[-1]
    K, S, P = K_SIZE, STRIDE, PADDING
    Ho = (H + 2 * P - K) // S + 1
    Wo = (W + 2 * P - K) // S + 1

    Cpad = _round_up(Cin, 8)
    xb = x_nhwc.astype(jnp.bfloat16)
    if Cpad != Cin:
        xb = jnp.pad(xb, ((0, 0), (0, 0), (0, 0), (0, Cpad - Cin)))

    Hp2 = Ho + (K - 1) // S
    Wp2 = Wo + (K - 1) // S
    pad_h = S * Hp2 - H - P
    pad_w = S * Wp2 - W - P
    assert pad_h >= 0 and pad_w >= 0
    xp = jnp.pad(xb, ((0, 0), (P, pad_h), (P, pad_w), (0, 0)))
    # xs[n, ph, pw, i, j, c] == xp[n, S*i + ph, S*j + pw, c]   (1x bytes, no 25x im2col)
    xs = xp.reshape(N, Hp2, S, Wp2, S, Cpad).transpose(0, 2, 4, 1, 3, 5)

    wb = w.astype(jnp.bfloat16)
    if Cpad != Cin:
        wb = jnp.pad(wb, ((0, 0), (0, 0), (0, Cpad - Cin), (0, 0)))
    w2 = wb.reshape(K * K, Cpad, Cout)
    b2 = b.reshape(1, Cout).astype(jnp.float32)

    ct = Cout if Cout <= 128 else 128
    n_ct = Cout // ct
    tm_h = _pick_row_tile(Ho, Wo, cap=256, extra_split=(N * n_ct < 2))
    n_mt = Ho // tm_h
    TM = tm_h * Wo
    M = Ho * Wo

    kernel = functools.partial(_phase_conv_lrelu_kernel, K=K, S=S,
                               tm_h=tm_h, wo=Wo, cpad=Cpad, ct=ct)

    out_bytes = N * M * Cout * (2 if out_dtype == jnp.bfloat16 else 4)
    cost = pl.CostEstimate(
        flops=2 * N * M * K * K * Cpad * Cout, transcendentals=0,
        bytes_accessed=int(xs.size * 2 + w2.size * 2 + b2.size * 4 + out_bytes))

    vmem = _vmem_limit_bytes(S * S * Hp2 * Wp2 * max(Cpad, 128) * 2,
                             K * K * Cpad * max(ct, 128) * 2,
                             TM * max(ct, 128) * 4)

    out = pl.pallas_call(
        kernel,
        out_shape=jax.ShapeDtypeStruct((N, M, Cout), out_dtype),
        grid_spec=pltpu.PrefetchScalarGridSpec(
            num_scalar_prefetch=0,
            grid=(N, n_ct, n_mt),
            in_specs=[
                # full phase-split image for batch n (resident across cout/row tiles)
                pl.BlockSpec((pl.Squeezed(), S, S, Hp2, Wp2, Cpad),
                             lambda n, c, m: (n, 0, 0, 0, 0, 0)),
                # cout-tiled weights (small blocks -> default double-buffering is cheap)
                pl.BlockSpec((K * K, Cpad, ct), lambda n, c, m: (0, 0, c)),
                pl.BlockSpec((1, ct), lambda n, c, m: (0, c)),
            ],
            out_specs=pl.BlockSpec((pl.Squeezed(), TM, ct),
                                   lambda n, c, m: (n, m, c)),
        ),
        compiler_params=pltpu.CompilerParams(
            dimension_semantics=("parallel", "parallel", "parallel"),
            vmem_limit_bytes=vmem,
        ),
        cost_estimate=cost,
    )(xs, w2, b2)
    return out.reshape(N, Ho, Wo, Cout)


def conv_lrelu_pallas(x_nhwc, w, b, out_dtype=jnp.bfloat16):
    """Conv2d(K=5, S=2, P=2) + LeakyReLU on an NHWC input; path chosen by Cin."""
    Cin = x_nhwc.shape[-1]
    if K_SIZE * K_SIZE * Cin <= IM2COL_MAX_KDIM:
        return _conv_lrelu_im2col(x_nhwc, w, b, out_dtype)
    return _conv_lrelu_implicit(x_nhwc, w, b, out_dtype)


# ------------------------- Flatten_Module forward ----------------------------
def init_params(in_ch, out_ch, isLocal=True, seed=0):
    """Deterministic synthetic init (gaussian weights, zero bias), HWIO layout."""
    key = jax.random.PRNGKey(seed)
    chans = [in_ch, out_ch, out_ch * 2, out_ch * 4]
    chans.append(out_ch * 8 if isLocal else out_ch * 4)
    params = []
    for i in range(4):
        key, sub = jax.random.split(key)
        cin, cout = chans[i], chans[i + 1]
        w = 0.05 * jax.random.normal(sub, (5, 5, cin, cout), dtype=jnp.float32)
        b = jnp.zeros((cout,), dtype=jnp.float32)
        params.append((w, b))
    return params


def flatten_module_forward(x_nchw, params):
    """Flatten_Module.forward: 4x (Conv K5 S2 P2 + LeakyReLU), then flatten in NCHW order."""
    x = jnp.transpose(x_nchw, (0, 2, 3, 1))           # NCHW -> NHWC (channels on lanes)
    last = len(params) - 1
    for i, (w, b) in enumerate(params):
        out_dtype = jnp.float32 if i == last else jnp.bfloat16
        x = conv_lrelu_pallas(x, w, b, out_dtype=out_dtype)
    x = jnp.transpose(x, (0, 3, 1, 2))                # back to NCHW for torch flatten order
    return x.reshape(x.shape[0], -1)


# --------------------------- pure-JAX reference -------------------------------
def _reference_forward(x_nchw, params):
    """Same math (bf16 conv operands, f32 accumulation) via lax.conv, for validation."""
    x = jnp.transpose(x_nchw, (0, 2, 3, 1))
    last = len(params) - 1
    for i, (w, b) in enumerate(params):
        y = lax.conv_general_dilated(
            x.astype(jnp.bfloat16), w.astype(jnp.bfloat16),
            window_strides=(2, 2), padding=((2, 2), (2, 2)),
            dimension_numbers=("NHWC", "HWIO", "NHWC"),
            preferred_element_type=jnp.float32)
        y = y + b
        y = jnp.where(y > 0, y, LEAKY_SLOPE * y)
        x = y if i == last else y.astype(jnp.bfloat16)
    x = jnp.transpose(x, (0, 3, 1, 2))
    return x.reshape(x.shape[0], -1)


if __name__ == "__main__":
    # Small shapes: batch=2, in_ch=4, out_ch=8, spatial=16 -> output (2, 64*1*1)
    key = jax.random.PRNGKey(0)
    key, kx = jax.random.split(key)
    x = jax.random.normal(kx, (2, 4, 16, 16), dtype=jnp.float32)      # NCHW like torch
    params = init_params(in_ch=4, out_ch=8, isLocal=True, seed=0)

    fwd = jax.jit(flatten_module_forward)
    out = jax.block_until_ready(fwd(x, params))
    ref = jax.block_until_ready(_reference_forward(x, params))

    assert out.shape == (2, 64), out.shape
    assert jnp.allclose(out, ref, atol=5e-3, rtol=5e-3), \
        float(jnp.max(jnp.abs(out - ref)))

    # Also exercise the implicit (phase-split) path with Cout tiling (2 tiles) and
    # multiple row tiles (4) at a larger single-conv shape.
    key, k1, k2, k3 = jax.random.split(key, 4)
    x2 = jax.random.normal(k1, (1, 64, 64, 64), dtype=jnp.float32)    # NHWC
    w2 = 0.05 * jax.random.normal(k2, (5, 5, 64, 256), dtype=jnp.float32)
    b2 = 0.1 * jax.random.normal(k3, (256,), dtype=jnp.float32)
    out2 = jax.block_until_ready(
        jax.jit(functools.partial(_conv_lrelu_implicit, out_dtype=jnp.float32))(x2, w2, b2))
    ref2 = lax.conv_general_dilated(
        x2.astype(jnp.bfloat16), w2.astype(jnp.bfloat16),
        window_strides=(2, 2), padding=((2, 2), (2, 2)),
        dimension_numbers=("NHWC", "HWIO", "NHWC"),
        preferred_element_type=jnp.float32) + b2
    ref2 = jnp.where(ref2 > 0, ref2, LEAKY_SLOPE * ref2)
    assert out2.shape == ref2.shape, (out2.shape, ref2.shape)
    assert jnp.allclose(out2, ref2, atol=2e-2, rtol=2e-2), \
        float(jnp.max(jnp.abs(out2 - ref2)))

    print("KERNEL_OK")
</pallas_src>

<mosaic_0001>
module attributes {stable_mosaic.version = 11 : i64} {
  func.func @_matmul_bias_lrelu_kernel(%arg0: i32, %arg1: i32, %arg2: memref<64x128xbf16, #tpu.memory_space<vmem>>, %arg3: memref<128x8xbf16, #tpu.memory_space<vmem>>, %arg4: memref<1x8xf32, #tpu.memory_space<vmem>>, %arg5: memref<64x8xbf16, #tpu.memory_space<vmem>>) attributes {dimension_semantics = [#tpu.dimension_semantics<parallel>, #tpu.dimension_semantics<parallel>], iteration_bounds = array<i64: 2, 1>, scalar_prefetch = 0 : i64, scratch_operands = 0 : i64, tpu.core_type = #tpu.core_type<tc>, window_params = [{transform_indices = @transform_0, window_bounds = array<i64: 64, 128>}, {transform_indices = @transform_1, window_bounds = array<i64: 128, 8>}, {transform_indices = @transform_2, window_bounds = array<i64: 1, 8>}, {transform_indices = @transform_3, window_bounds = array<i64: 64, 8>}]} {
    %c0 = arith.constant 0 : index
    %c0_0 = arith.constant 0 : index
    %0 = vector.load %arg2[%c0, %c0_0] : memref<64x128xbf16, #tpu.memory_space<vmem>>, vector<64x128xbf16>
    %c0_1 = arith.constant 0 : index
    %c0_2 = arith.constant 0 : index
    %1 = vector.load %arg3[%c0_1, %c0_2] : memref<128x8xbf16, #tpu.memory_space<vmem>>, vector<128x8xbf16>
    %cst = arith.constant dense<0.000000e+00> : vector<64x8xf32>
    %2 = tpu.matmul %0, %1, %cst {dimension_numbers = #tpu.dot_dimension_numbers<[1], [0], [0], [1], [0, 0, 1, 1], [], []>} : vector<64x128xbf16>, vector<128x8xbf16>, vector<64x8xf32> -> vector<64x8xf32>
    %c0_3 = arith.constant 0 : index
    %c0_4 = arith.constant 0 : index
    %3 = vector.load %arg4[%c0_3, %c0_4] : memref<1x8xf32, #tpu.memory_space<vmem>>, vector<1x8xf32>
    %4 = vector.broadcast %3 : vector<1x8xf32> to vector<64x8xf32>
    %5 = arith.addf %2, %4 : vector<64x8xf32>
    %cst_5 = arith.constant 0.000000e+00 : f32
    %6 = vector.broadcast %cst_5 : f32 to vector<64x8xf32>
    %7 = arith.cmpf ogt, %5, %6 : vector<64x8xf32>
    %cst_6 = arith.constant 0.00999999977 : f32
    %8 = vector.broadcast %cst_6 : f32 to vector<64x8xf32>
    %9 = arith.mulf %8, %5 : vector<64x8xf32>
    %10 = arith.select %7, %5, %9 : vector<64x8xi1>, vector<64x8xf32>
    %11 = arith.truncf %10 : vector<64x8xf32> to vector<64x8xbf16>
    %c0_7 = arith.constant 0 : index
    %c0_8 = arith.constant 0 : index
    %12 = vector.load %arg5[%c0_7, %c0_8] : memref<64x8xbf16, #tpu.memory_space<vmem>>, vector<64x8xbf16>
    tpu.vector_store %arg5[%c0_7, %c0_8], %11 {strides = array<i32>} : memref<64x8xbf16, #tpu.memory_space<vmem>>, vector<64x8xbf16>,
    return
  }
  func.func @transform_0(%arg0: i32, %arg1: i32) -> (i32, i32) {
    %c0_i32 = arith.constant 0 : i32
    %c0_i32_0 = arith.constant 0 : i32
    return %arg0, %c0_i32 : i32, i32
  }
  func.func @transform_1(%arg0: i32, %arg1: i32) -> (i32, i32) {
    %c0_i32 = arith.constant 0 : i32
    %c0_i32_0 = arith.constant 0 : i32
    return %c0_i32, %arg1 : i32, i32
  }
  func.func @transform_2(%arg0: i32, %arg1: i32) -> (i32, i32) {
    %c0_i32 = arith.constant 0 : i32
    %c0_i32_0 = arith.constant 0 : i32
    return %c0_i32, %arg1 : i32, i32
  }
  func.func @transform_3(%arg0: i32, %arg1: i32) -> (i32, i32) {
    %c0_i32 = arith.constant 0 : i32
    return %arg0, %arg1 : i32, i32
  }
}

module attributes {stable_mosaic.version = 11 : i64} {
  func.func @_matmul_bias_lrelu_kernel(%arg0: i32, %arg1: i32, %arg2: memref<16x256xbf16, #tpu.memory_space<vmem>>, %arg3: memref<256x16xbf16, #tpu.memory_space<vmem>>, %arg4: memref<1x16xf32, #tpu.memory_space<vmem>>, %arg5: memref<16x16xbf16, #tpu.memory_space<vmem>>) attributes {dimension_semantics = [#tpu.dimension_semantics<parallel>, #tpu.dimension_semantics<parallel>], iteration_bounds = array<i64: 2, 1>, scalar_prefetch = 0 : i64, scratch_operands = 0 : i64, tpu.core_type = #tpu.core_type<tc>, window_params = [{transform_indices = @transform_0, window_bounds = array<i64: 16, 256>}, {transform_indices = @transform_1, window_bounds = array<i64: 256, 16>}, {transform_indices = @transform_2, window_bounds = array<i64: 1, 16>}, {transform_indices = @transform_3, window_bounds = array<i64: 16, 16>}]} {
    %c0 = arith.constant 0 : index
    %c0_0 = arith.constant 0 : index
    %0 = vector.load %arg2[%c0, %c0_0] : memref<16x256xbf16, #tpu.memory_space<vmem>>, vector<16x256xbf16>
    %c0_1 = arith.constant 0 : index
    %c0_2 = arith.constant 0 : index
    %1 = vector.load %arg3[%c0_1, %c0_2] : memref<256x16xbf16, #tpu.memory_space<vmem>>, vector<256x16xbf16>
    %cst = arith.constant dense<0.000000e+00> : vector<16x16xf32>
    %2 = tpu.matmul %0, %1, %cst {dimension_numbers = #tpu.dot_dimension_numbers<[1], [0], [0], [1], [0, 0, 1, 1], [], []>} : vector<16x256xbf16>, vector<256x16xbf16>, vector<16x16xf32> -> vector<16x16xf32>
    %c0_3 = arith.constant 0 : index
    %c0_4 = arith.constant 0 : index
    %3 = vector.load %arg4[%c0_3, %c0_4] : memref<1x16xf32, #tpu.memory_space<vmem>>, vector<1x16xf32>
    %4 = vector.broadcast %3 : vector<1x16xf32> to vector<16x16xf32>
    %5 = arith.addf %2, %4 : vector<16x16xf32>
    %cst_5 = arith.constant 0.000000e+00 : f32
    %6 = vector.broadcast %cst_5 : f32 to vector<16x16xf32>
    %7 = arith.cmpf ogt, %5, %6 : vector<16x16xf32>
    %cst_6 = arith.constant 0.00999999977 : f32
    %8 = vector.broadcast %cst_6 : f32 to vector<16x16xf32>
    %9 = arith.mulf %8, %5 : vector<16x16xf32>
    %10 = arith.select %7, %5, %9 : vector<16x16xi1>, vector<16x16xf32>
    %11 = arith.truncf %10 : vector<16x16xf32> to vector<16x16xbf16>
    %c0_7 = arith.constant 0 : index
    %c0_8 = arith.constant 0 : index
    %12 = vector.load %arg5[%c0_7, %c0_8] : memref<16x16xbf16, #tpu.memory_space<vmem>>, vector<16x16xbf16>
    tpu.vector_store %arg5[%c0_7, %c0_8], %11 {strides = array<i32>} : memref<16x16xbf16, #tpu.memory_space<vmem>>, vector<16x16xbf16>,
    return
  }
  func.func @transform_0(%arg0: i32, %arg1: i32) -> (i32, i32) {
    %c0_i32 = arith.constant 0 : i32
    %c0_i32_0 = arith.constant 0 : i32
    return %arg0, %c0_i32 : i32, i32
  }
  func.func @transform_1(%arg0: i32, %arg1: i32) -> (i32, i32) {
    %c0_i32 = arith.constant 0 : i32
    %c0_i32_0 = arith.constant 0 : i32
    return %c0_i32, %arg1 : i32, i32
  }
  func.func @transform_2(%arg0: i32, %arg1: i32) -> (i32, i32) {
    %c0_i32 = arith.constant 0 : i32
    %c0_i32_0 = arith.constant 0 : i32
    return %c0_i32, %arg1 : i32, i32
  }
  func.func @transform_3(%arg0: i32, %arg1: i32) -> (i32, i32) {
    %c0_i32 = arith.constant 0 : i32
    return %arg0, %arg1 : i32, i32
  }
}

module attributes {stable_mosaic.version = 11 : i64} {
  func.func @_phase_conv_lrelu_kernel(%arg0: i32, %arg1: i32, %arg2: i32, %arg3: memref<1x2x2x4x4x16xbf16, #tpu.memory_space<vmem>>, %arg4: memref<25x16x32xbf16, #tpu.memory_space<vmem>>, %arg5: memref<1x32xf32, #tpu.memory_space<vmem>>, %arg6: memref<1x4x32xbf16, #tpu.memory_space<vmem>>) attributes {dimension_semantics = [#tpu.dimension_semantics<parallel>, #tpu.dimension_semantics<parallel>, #tpu.dimension_semantics<parallel>], iteration_bounds = array<i64: 2, 1, 1>, scalar_prefetch = 0 : i64, scratch_operands = 0 : i64, tpu.core_type = #tpu.core_type<tc>, window_params = [{transform_indices = @transform_0, window_bounds = array<i64: 1, 2, 2, 4, 4, 16>}, {transform_indices = @transform_1, window_bounds = array<i64: 25, 16, 32>}, {transform_indices = @transform_2, window_bounds = array<i64: 1, 32>}, {transform_indices = @transform_3, window_bounds = array<i64: 1, 4, 32>}]} {
    %c2_i32 = arith.constant 2 : i32
    %0 = arith.muli %arg2, %c2_i32 : i32
    %1 = tpu.assume_multiple %0, 2 : i32
    %cst = arith.constant 0.000000e+00 : f32
    %2 = vector.broadcast %cst : f32 to vector<4x32xf32>
    %c0_i32 = arith.constant 0 : i32
    %3 = arith.addi %1, %c0_i32 : i32
    %c0 = arith.constant 0 : index
    %c0_0 = arith.constant 0 : index
    %c0_1 = arith.constant 0 : index
    %4 = arith.index_cast %3 : i32 to index
    %c0_2 = arith.constant 0 : index
    %c0_3 = arith.constant 0 : index
    %5 = vector.load %arg3[%c0, %c0_0, %c0_1, %4, %c0_2, %c0_3] : memref<1x2x2x4x4x16xbf16, #tpu.memory_space<vmem>>, vector<1x1x1x2x2x16xbf16>
    %6 = vector.shape_cast %5 : vector<1x1x1x2x2x16xbf16> to vector<2x2x16xbf16>
    %7 = vector.shape_cast %6 : vector<2x2x16xbf16> to vector<4x16xbf16>
    %c0_4 = arith.constant 0 : index
    %c0_5 = arith.constant 0 : index
    %c0_6 = arith.constant 0 : index
    %8 = vector.load %arg4[%c0_4, %c0_5, %c0_6] : memref<25x16x32xbf16, #tpu.memory_space<vmem>>, vector<1x16x32xbf16>
    %9 = vector.shape_cast %8 : vector<1x16x32xbf16> to vector<16x32xbf16>
    %cst_7 = arith.constant dense<0.000000e+00> : vector<4x32xf32>
    %10 = tpu.matmul %7, %9, %cst_7 {dimension_numbers = #tpu.dot_dimension_numbers<[1], [0], [0], [1], [0, 0, 1, 1], [], []>} : vector<4x16xbf16>, vector<16x32xbf16>, vector<4x32xf32> -> vector<4x32xf32>
    %11 = arith.addf %2, %10 : vector<4x32xf32>
    %c0_i32_8 = arith.constant 0 : i32
    %12 = arith.addi %1, %c0_i32_8 : i32
    %c0_9 = arith.constant 0 : index
    %c0_10 = arith.constant 0 : index
    %c1 = arith.constant 1 : index
    %13 = arith.index_cast %12 : i32 to index
    %c0_11 = arith.constant 0 : index
    %c0_12 = arith.constant 0 : index
    %14 = vector.load %arg3[%c0_9, %c0_10, %c1, %13, %c0_11, %c0_12] : memref<1x2x2x4x4x16xbf16, #tpu.memory_space<vmem>>, vector<1x1x1x2x2x16xbf16>
    %15 = vector.shape_cast %14 : vector<1x1x1x2x2x16xbf16> to vector<2x2x16xbf16>
    %16 = vector.shape_cast %15 : vector<2x2x16xbf16> to vector<4x16xbf16>
    %c1_13 = arith.constant 1 : index
    %c0_14 = arith.constant 0 : index
    %c0_15 = arith.constant 0 : index
    %17 = vector.load %arg4[%c1_13, %c0_14, %c0_15] : memref<25x16x32xbf16, #tpu.memory_space<vmem>>, vector<1x16x32xbf16>
    %18 = vector.shape_cast %17 : vector<1x16x32xbf16> to vector<16x32xbf16>
    %cst_16 = arith.constant dense<0.000000e+00> : vector<4x32xf32>
    %19 = tpu.matmul %16, %18, %cst_16 {dimension_numbers = #tpu.dot_dimension_numbers<[1], [0], [0], [1], [0, 0, 1, 1], [], []>} : vector<4x16xbf16>, vector<16x32xbf16>, vector<4x32xf32> -> vector<4x32xf32>
    %20 = arith.addf %11, %19 : vector<4x32xf32>
    %c0_i32_17 = arith.constant 0 : i32
    %21 = arith.addi %1, %c0_i32_17 : i32
    %c0_18 = arith.constant 0 : index
    %c0_19 = arith.constant 0 : index
    %c0_20 = arith.constant 0 : index
    %22 = arith.index_cast %21 : i32 to index
    %c1_21 = arith.constant 1 : index
    %c0_22 = arith.constant 0 : index
    %23 = vector.load %arg3[%c0_18, %c0_19, %c0_20, %22, %c1_21, %c0_22] : memref<1x2x2x4x4x16xbf16, #tpu.memory_space<vmem>>, vector<1x1x1x2x2x16xbf16>
    %24 = vector.shape_cast %23 : vector<1x1x1x2x2x16xbf16> to vector<2x2x16xbf16>
    %25 = vector.shape_cast %24 : vector<2x2x16xbf16> to vector<4x16xbf16>
    %c2 = arith.constant 2 : index
    %c0_23 = arith.constant 0 : index
    %c0_24 = arith.constant 0 : index
    %26 = vector.load %arg4[%c2, %c0_23, %c0_24] : memref<25x16x32xbf16, #tpu.memory_space<vmem>>, vector<1x16x32xbf16>
    %27 = vector.shape_cast %26 : vector<1x16x32xbf16> to vector<16x32xbf16>
    %cst_25 = arith.constant dense<0.000000e+00> : vector<4x32xf32>
    %28 = tpu.matmul %25, %27, %cst_25 {dimension_numbers = #tpu.dot_dimension_numbers<[1], [0], [0], [1], [0, 0, 1, 1], [], []>} : vector<4x16xbf16>, vector<16x32xbf16>, vector<4x32xf32> -> vector<4x32xf32>
    %29 = arith.addf %20, %28 : vector<4x32xf32>
    %c0_i32_26 = arith.constant 0 : i32
    %30 = arith.addi %1, %c0_i32_26 : i32
    %c0_27 = arith.constant 0 : index
    %c0_28 = arith.constant 0 : index
    %c1_29 = arith.constant 1 : index
    %31 = arith.index_cast %30 : i32 to index
    %c1_30 = arith.constant 1 : index
    %c0_31 = arith.constant 0 : index
    %32 = vector.load %arg3[%c0_27, %c0_28, %c1_29, %31, %c1_30, %c0_31] : memref<1x2x2x4x4x16xbf16, #tpu.memory_space<vmem>>, vector<1x1x1x2x2x16xbf16>
    %33 = vector.shape_cast %32 : vector<1x1x1x2x2x16xbf16> to vector<2x2x16xbf16>
    %34 = vector.shape_cast %33 : vector<2x2x16xbf16> to vector<4x16xbf16>
    %c3 = arith.constant 3 : index
    %c0_32 = arith.constant 0 : index
    %c0_33 = arith.constant 0 : index
    %35 = vector.load %arg4[%c3, %c0_32, %c0_33] : memref<25x16x32xbf16, #tpu.memory_space<vmem>>, vector<1x16x32xbf16>
    %36 = vector.shape_cast %35 : vector<1x16x32xbf16> to vector<16x32xbf16>
    %cst_34 = arith.constant dense<0.000000e+00> : vector<4x32xf32>
    %37 = tpu.matmul %34, %36, %cst_34 {dimension_numbers = #tpu.dot_dimension_numbers<[1], [0], [0], [1], [0, 0, 1, 1], [], []>} : vector<4x16xbf16>, vector<16x32xbf16>, vector<4x32xf32> -> vector<4x32xf32>
    %38 = arith.addf %29, %37 : vector<4x32xf32>
    %c0_i32_35 = arith.constant 0 : i32
    %39 = arith.addi %1, %c0_i32_35 : i32
    %c0_36 = arith.constant 0 : index
    %c0_37 = arith.constant 0 : index
    %c0_38 = arith.constant 0 : index
    %40 = arith.index_cast %39 : i32 to index
    %c2_39 = arith.constant 2 : index
    %c0_40 = arith.constant 0 : index
    %41 = vector.load %arg3[%c0_36, %c0_37, %c0_38, %40, %c2_39, %c0_40] : memref<1x2x2x4x4x16xbf16, #tpu.memory_space<vmem>>, vector<1x1x1x2x2x16xbf16>
    %42 = vector.shape_cast %41 : vector<1x1x1x2x2x16xbf16> to vector<2x2x16xbf16>
    %43 = vector.shape_cast %42 : vector<2x2x16xbf16> to vector<4x16xbf16>
    %c4 = arith.constant 4 : index
    %c0_41 = arith.constant 0 : index
    %c0_42 = arith.constant 0 : index
    %44 = vector.load %arg4[%c4, %c0_41, %c0_42] : memref<25x16x32xbf16, #tpu.memory_space<vmem>>, vector<1x16x32xbf16>
    %45 = vector.shape_cast %44 : vector<1x16x32xbf16> to vector<16x32xbf16>
    %cst_43 = arith.constant dense<0.000000e+00> : vector<4x32xf32>
    %46 = tpu.matmul %43, %45, %cst_43 {dimension_numbers = #tpu.dot_dimension_numbers<[1], [0], [0], [1], [0, 0, 1, 1], [], []>} : vector<4x16xbf16>, vector<16x32xbf16>, vector<4x32xf32> -> vector<4x32xf32>
    %47 = arith.addf %38, %46 : vector<4x32xf32>
    %c0_i32_44 = arith.constant 0 : i32
    %48 = arith.addi %1, %c0_i32_44 : i32
    %c0_45 = arith.constant 0 : index
    %c1_46 = arith.constant 1 : index
    %c0_47 = arith.constant 0 : index
    %49 = arith.index_cast %48 : i32 to index
    %c0_48 = arith.constant 0 : index
    %c0_49 = arith.constant 0 : index
    %50 = vector.load %arg3[%c0_45, %c1_46, %c0_47, %49, %c0_48, %c0_49] : memref<1x2x2x4x4x16xbf16, #tpu.memory_space<vmem>>, vector<1x1x1x2x2x16xbf16>
    %51 = vector.shape_cast %50 : vector<1x1x1x2x2x16xbf16> to vector<2x2x16xbf16>
    %52 = vector.shape_cast %51 : vector<2x2x16xbf16> to vector<4x16xbf16>
    %c5 = arith.constant 5 : index
    %c0_50 = arith.constant 0 : index
    %c0_51 = arith.constant 0 : index
    %53 = vector.load %arg4[%c5, %c0_50, %c0_51] : memref<25x16x32xbf16, #tpu.memory_space<vmem>>, vector<1x16x32xbf16>
    %54 = vector.shape_cast %53 : vector<1x16x32xbf16> to vector<16x32xbf16>
    %cst_52 = arith.constant dense<0.000000e+00> : vector<4x32xf32>
    %55 = tpu.matmul %52, %54, %cst_52 {dimension_numbers = #tpu.dot_dimension_numbers<[1], [0], [0], [1], [0, 0, 1, 1], [], []>} : vector<4x16xbf16>, vector<16x32xbf16>, vector<4x32xf32> -> vector<4x32xf32>
    %56 = arith.addf %47, %55 : vector<4x32xf32>
    %c0_i32_53 = arith.constant 0 : i32
    %57 = arith.addi %1, %c0_i32_53 : i32
    %c0_54 = arith.constant 0 : index
    %c1_55 = arith.constant 1 : index
    %c1_56 = arith.constant 1 : index
    %58 = arith.index_cast %57 : i32 to index
    %c0_57 = arith.constant 0 : index
    %c0_58 = arith.constant 0 : index
    %59 = vector.load %arg3[%c0_54, %c1_55, %c1_56, %58, %c0_57, %c0_58] : memref<1x2x2x4x4x16xbf16, #tpu.memory_space<vmem>>, vector<1x1x1x2x2x16xbf16>
    %60 = vector.shape_cast %59 : vector<1x1x1x2x2x16xbf16> to vector<2x2x16xbf16>
    %61 = vector.shape_cast %60 : vector<2x2x16xbf16> to vector<4x16xbf16>
    %c6 = arith.constant 6 : index
    %c0_59 = arith.constant 0 : index
    %c0_60 = arith.constant 0 : index
    %62 = vector.load %arg4[%c6, %c0_59, %c0_60] : memref<25x16x32xbf16, #tpu.memory_space<vmem>>, vector<1x16x32xbf16>
    %63 = vector.shape_cast %62 : vector<1x16x32xbf16> to vector<16x32xbf16>
    %cst_61 = arith.constant dense<0.000000e+00> : vector<4x32xf32>
    %64 = tpu.matmul %61, %63, %cst_61 {dimension_numbers = #tpu.dot_dimension_numbers<[1], [0], [0], [1], [0, 0, 1, 1], [], []>} : vector<4x16xbf16>, vector<16x32xbf16>, vector<4x32xf32> -> vector<4x32xf32>
    %65 = arith.addf %56, %64 : vector<4x32xf32>
    %c0_i32_62 = arith.constant 0 : i32
    %66 = arith.addi %1, %c0_i32_62 : i32
    %c0_63 = arith.constant 0 : index
    %c1_64 = arith.constant 1 : index
    %c0_65 = arith.constant 0 : index
    %67 = arith.index_cast %66 : i32 to index
    %c1_66 = arith.constant 1 : index
    %c0_67 = arith.constant 0 : index
    %68 = vector.load %arg3[%c0_63, %c1_64, %c0_65, %67, %c1_66, %c0_67] : memref<1x2x2x4x4x16xbf16, #tpu.memory_space<vmem>>, vector<1x1x1x2x2x16xbf16>
    %69 = vector.shape_cast %68 : vector<1x1x1x2x2x16xbf16> to vector<2x2x16xbf16>
    %70 = vector.shape_cast %69 : vector<2x2x16xbf16> to vector<4x16xbf16>
    %c7 = arith.constant 7 : index
    %c0_68 = arith.constant 0 : index
    %c0_69 = arith.constant 0 : index
    %71 = vector.load %arg4[%c7, %c0_68, %c0_69] : memref<25x16x32xbf16, #tpu.memory_space<vmem>>, vector<1x16x32xbf16>
    %72 = vector.shape_cast %71 : vector<1x16x32xbf16> to vector<16x32xbf16>
    %cst_70 = arith.constant dense<0.000000e+00> : vector<4x32xf32>
    %73 = tpu.matmul %70, %72, %cst_70 {dimension_numbers = #tpu.dot_dimension_numbers<[1], [0], [0], [1], [0, 0, 1, 1], [], []>} : vector<4x16xbf16>, vector<16x32xbf16>, vector<4x32xf32> -> vector<4x32xf32>
    %74 = arith.addf %65, %73 : vector<4x32xf32>
    %c0_i32_71 = arith.constant 0 : i32
    %75 = arith.addi %1, %c0_i32_71 : i32
    %c0_72 = arith.constant 0 : index
    %c1_73 = arith.constant 1 : index
    %c1_74 = arith.constant 1 : index
    %76 = arith.index_cast %75 : i32 to index
    %c1_75 = arith.constant 1 : index
    %c0_76 = arith.constant 0 : index
    %77 = vector.load %arg3[%c0_72, %c1_73, %c1_74, %76, %c1_75, %c0_76] : memref<1x2x2x4x4x16xbf16, #tpu.memory_space<vmem>>, vector<1x1x1x2x2x16xbf16>
    %78 = vector.shape_cast %77 : vector<1x1x1x2x2x16xbf16> to vector<2x2x16xbf16>
    %79 = vector.shape_cast %78 : vector<2x2x16xbf16> to vector<4x16xbf16>
    %c8 = arith.constant 8 : index
    %c0_77 = arith.constant 0 : index
    %c0_78 = arith.constant 0 : index
    %80 = vector.load %arg4[%c8, %c0_77, %c0_78] : memref<25x16x32xbf16, #tpu.memory_space<vmem>>, vector<1x16x32xbf16>
    %81 = vector.shape_cast %80 : vector<1x16x32xbf16> to vector<16x32xbf16>
    %cst_79 = arith.constant dense<0.000000e+00> : vector<4x32xf32>
    %82 = tpu.matmul %79, %81, %cst_79 {dimension_numbers = #tpu.dot_dimension_numbers<[1], [0], [0], [1], [0, 0, 1, 1], [], []>} : vector<4x16xbf16>, vector<16x32xbf16>, vector<4x32xf32> -> vector<4x32xf32>
    %83 = arith.addf %74, %82 : vector<4x32xf32>
    %c0_i32_80 = arith.constant 0 : i32
    %84 = arith.addi %1, %c0_i32_80 : i32
    %c0_81 = arith.constant 0 : index
    %c1_82 = arith.constant 1 : index
    %c0_83 = arith.constant 0 : index
    %85 = arith.index_cast %84 : i32 to index
    %c2_84 = arith.constant 2 : index
    %c0_85 = arith.constant 0 : index
    %86 = vector.load %arg3[%c0_81, %c1_82, %c0_83, %85, %c2_84, %c0_85] : memref<1x2x2x4x4x16xbf16, #tpu.memory_space<vmem>>, vector<1x1x1x2x2x16xbf16>
    %87 = vector.shape_cast %86 : vector<1x1x1x2x2x16xbf16> to vector<2x2x16xbf16>
    %88 = vector.shape_cast %87 : vector<2x2x16xbf16> to vector<4x16xbf16>
    %c9 = arith.constant 9 : index
    %c0_86 = arith.constant 0 : index
    %c0_87 = arith.constant 0 : index
    %89 = vector.load %arg4[%c9, %c0_86, %c0_87] : memref<25x16x32xbf16, #tpu.memory_space<vmem>>, vector<1x16x32xbf16>
    %90 = vector.shape_cast %89 : vector<1x16x32xbf16> to vector<16x32xbf16>
    %cst_88 = arith.constant dense<0.000000e+00> : vector<4x32xf32>
    %91 = tpu.matmul %88, %90, %cst_88 {dimension_numbers = #tpu.dot_dimension_numbers<[1], [0], [0], [1], [0, 0, 1, 1], [], []>} : vector<4x16xbf16>, vector<16x32xbf16>, vector<4x32xf32> -> vector<4x32xf32>
    %92 = arith.addf %83, %91 : vector<4x32xf32>
    %c1_i32 = arith.constant 1 : i32
    %93 = arith.addi %1, %c1_i32 : i32
    %c0_89 = arith.constant 0 : index
    %c0_90 = arith.constant 0 : index
    %c0_91 = arith.constant 0 : index
    %94 = arith.index_cast %93 : i32 to index
    %c0_92 = arith.constant 0 : index
    %c0_93 = arith.constant 0 : index
    %95 = vector.load %arg3[%c0_89, %c0_90, %c0_91, %94, %c0_92, %c0_93] : memref<1x2x2x4x4x16xbf16, #tpu.memory_space<vmem>>, vector<1x1x1x2x2x16xbf16>
    %96 = vector.shape_cast %95 : vector<1x1x1x2x2x16xbf16> to vector<2x2x16xbf16>
    %97 = vector.shape_cast %96 : vector<2x2x16xbf16> to vector<4x16xbf16>
    %c10 = arith.constant 10 : index
    %c0_94 = arith.constant 0 : index
    %c0_95 = arith.constant 0 : index
    %98 = vector.load %arg4[%c10, %c0_94, %c0_95] : memref<25x16x32xbf16, #tpu.memory_space<vmem>>, vector<1x16x32xbf16>
    %99 = vector.shape_cast %98 : vector<1x16x32xbf16> to vector<16x32xbf16>
    %cst_96 = arith.constant dense<0.000000e+00> : vector<4x32xf32>
    %100 = tpu.matmul %97, %99, %cst_96 {dimension_numbers = #tpu.dot_dimension_numbers<[1], [0], [0], [1], [0, 0, 1, 1], [], []>} : vector<4x16xbf16>, vector<16x32xbf16>, vector<4x32xf32> -> vector<4x32xf32>
    %101 = arith.addf %92, %100 : vector<4x32xf32>
    %c1_i32_97 = arith.constant 1 : i32
    %102 = arith.addi %1, %c1_i32_97 : i32
    %c0_98 = arith.constant 0 : index
    %c0_99 = arith.constant 0 : index
    %c1_100 = arith.constant 1 : index
    %103 = arith.index_cast %102 : i32 to index
    %c0_101 = arith.constant 0 : index
    %c0_102 = arith.constant 0 : index
    %104 = vector.load %arg3[%c0_98, %c0_99, %c1_100, %103, %c0_101, %c0_102] : memref<1x2x2x4x4x16xbf16, #tpu.memory_space<vmem>>, vector<1x1x1x2x2x16xbf16>
    %105 = vector.shape_cast %104 : vector<1x1x1x2x2x16xbf16> to vector<2x2x16xbf16>
    %106 = vector.shape_cast %105 : vector<2x2x16xbf16> to vector<4x16xbf16>
    %c11 = arith.constant 11 : index
    %c0_103 = arith.constant 0 : index
    %c0_104 = arith.constant 0 : index
    %107 = vector.load %arg4[%c11, %c0_103, %c0_104] : memref<25x16x32xbf16, #tpu.memory_space<vmem>>, vector<1x16x32xbf16>
    %108 = vector.shape_cast %107 : vector<1x16x32xbf16> to vector<16x32xbf16>
    %cst_105 = arith.constant dense<0.000000e+00> : vector<4x32xf32>
    %109 = tpu.matmul %106, %108, %cst_105 {dimension_numbers = #tpu.dot_dimension_numbers<[1], [0], [0], [1], [0, 0, 1, 1], [], []>} : vector<4x16xbf16>, vector<16x32xbf16>, vector<4x32xf32> -> vector<4x32xf32>
    %110 = arith.addf %101, %109 : vector<4x32xf32>
    %c1_i32_106 = arith.constant 1 : i32
    %111 = arith.addi %1, %c1_i32_106 : i32
    %c0_107 = arith.constant 0 : index
    %c0_108 = arith.constant 0 : index
    %c0_109 = arith.constant 0 : index
    %112 = arith.index_cast %111 : i32 to index
    %c1_110 = arith.constant 1 : index
    %c0_111 = arith.constant 0 : index
    %113 = vector.load %arg3[%c0_107, %c0_108, %c0_109, %112, %c1_110, %c0_111] : memref<1x2x2x4x4x16xbf16, #tpu.memory_space<vmem>>, vector<1x1x1x2x2x16xbf16>
    %114 = vector.shape_cast %113 : vector<1x1x1x2x2x16xbf16> to vector<2x2x16xbf16>
    %115 = vector.shape_cast %114 : vector<2x2x16xbf16> to vector<4x16xbf16>
    %c12 = arith.constant 12 : index
    %c0_112 = arith.constant 0 : index
    %c0_113 = arith.constant 0 : index
    %116 = vector.load %arg4[%c12, %c0_112, %c0_113] : memref<25x16x32xbf16, #tpu.memory_space<vmem>>, vector<1x16x32xbf16>
    %117 = vector.shape_cast %116 : vector<1x16x32xbf16> to vector<16x32xbf16>
    %cst_114 = arith.constant dense<0.000000e+00> : vector<4x32xf32>
    %118 = tpu.matmul %115, %117, %cst_114 {dimension_numbers = #tpu.dot_dimension_numbers<[1], [0], [0], [1], [0, 0, 1, 1], [], []>} : vector<4x16xbf16>, vector<16x32xbf16>, vector<4x32xf32> -> vector<4x32xf32>
    %119 = arith.addf %110, %118 : vector<4x32xf32>
    %c1_i32_115 = arith.constant 1 : i32
    %120 = arith.addi %1, %c1_i32_115 : i32
    %c0_116 = arith.constant 0 : index
    %c0_117 = arith.constant 0 : index
    %c1_118 = arith.constant 1 : index
    %121 = arith.index_cast %120 : i32 to index
    %c1_119 = arith.constant 1 : index
    %c0_120 = arith.constant 0 : index
    %122 = vector.load %arg3[%c0_116, %c0_117, %c1_118, %121, %c1_119, %c0_120] : memref<1x2x2x4x4x16xbf16, #tpu.memory_space<vmem>>, vector<1x1x1x2x2x16xbf16>
    %123 = vector.shape_cast %122 : vector<1x1x1x2x2x16xbf16> to vector<2x2x16xbf16>
    %124 = vector.shape_cast %123 : vector<2x2x16xbf16> to vector<4x16xbf16>
    %c13 = arith.constant 13 : index
    %c0_121 = arith.constant 0 : index
    %c0_122 = arith.constant 0 : index
    %125 = vector.load %arg4[%c13, %c0_121, %c0_122] : memref<25x16x32xbf16, #tpu.memory_space<vmem>>, vector<1x16x32xbf16>
    %126 = vector.shape_cast %125 : vector<1x16x32xbf16> to vector<16x32xbf16>
    %cst_123 = arith.constant dense<0.000000e+00> : vector<4x32xf32>
    %127 = tpu.matmul %124, %126, %cst_123 {dimension_numbers = #tpu.dot_dimension_numbers<[1], [0], [0], [1], [0, 0, 1, 1], [], []>} : vector<4x16xbf16>, vector<16x32xbf16>, vector<4x32xf32> -> vector<4x32xf32>
    %128 = arith.addf %119, %127 : vector<4x32xf32>
    %c1_i32_124 = arith.constant 1 : i32
    %129 = arith.addi %1, %c1_i32_124 : i32
    %c0_125 = arith.constant 0 : index
    %c0_126 = arith.constant 0 : index
    %c0_127 = arith.constant 0 : index
    %130 = arith.index_cast %129 : i32 to index
    %c2_128 = arith.constant 2 : index
    %c0_129 = arith.constant 0 : index
    %131 = vector.load %arg3[%c0_125, %c0_126, %c0_127, %130, %c2_128, %c0_129] : memref<1x2x2x4x4x16xbf16, #tpu.memory_space<vmem>>, vector<1x1x1x2x2x16xbf16>
    %132 = vector.shape_cast %131 : vector<1x1x1x2x2x16xbf16> to vector<2x2x16xbf16>
    %133 = vector.shape_cast %132 : vector<2x2x16xbf16> to vector<4x16xbf16>
    %c14 = arith.constant 14 : index
    %c0_130 = arith.constant 0 : index
    %c0_131 = arith.constant 0 : index
    %134 = vector.load %arg4[%c14, %c0_130, %c0_131] : memref<25x16x32xbf16, #tpu.memory_space<vmem>>, vector<1x16x32xbf16>
    %135 = vector.shape_cast %134 : vector<1x16x32xbf16> to vector<16x32xbf16>
    %cst_132 = arith.constant dense<0.000000e+00> : vector<4x32xf32>
    %136 = tpu.matmul %133, %135, %cst_132 {dimension_numbers = #tpu.dot_dimension_numbers<[1], [0], [0], [1], [0, 0, 1, 1], [], []>} : vector<4x16xbf16>, vector<16x32xbf16>, vector<4x32xf32> -> vector<4x32xf32>
    %137 = arith.addf %128, %136 : vector<4x32xf32>
    %c1_i32_133 = arith.constant 1 : i32
    %138 = arith.addi %1, %c1_i32_133 : i32
    %c0_134 = arith.constant 0 : index
    %c1_135 = arith.constant 1 : index
    %c0_136 = arith.constant 0 : index
    %139 = arith.index_cast %138 : i32 to index
    %c0_137 = arith.constant 0 : index
    %c0_138 = arith.constant 0 : index
    %140 = vector.load %arg3[%c0_134, %c1_135, %c0_136, %139, %c0_137, %c0_138] : memref<1x2x2x4x4x16xbf16, #tpu.memory_space<vmem>>, vector<1x1x1x2x2x16xbf16>
    %141 = vector.shape_cast %140 : vector<1x1x1x2x2x16xbf16> to vector<2x2x16xbf16>
    %142 = vector.shape_cast %141 : vector<2x2x16xbf16> to vector<4x16xbf16>
    %c15 = arith.constant 15 : index
    %c0_139 = arith.constant 0 : index
    %c0_140 = arith.constant 0 : index
    %143 = vector.load %arg4[%c15, %c0_139, %c0_140] : memref<25x16x32xbf16, #tpu.memory_space<vmem>>, vector<1x16x32xbf16>
    %144 = vector.shape_cast %143 : vector<1x16x32xbf16> to vector<16x32xbf16>
    %cst_141 = arith.constant dense<0.000000e+00> : vector<4x32xf32>
    %145 = tpu.matmul %142, %144, %cst_141 {dimension_numbers = #tpu.dot_dimension_numbers<[1], [0], [0], [1], [0, 0, 1, 1], [], []>} : vector<4x16xbf16>, vector<16x32xbf16>, vector<4x32xf32> -> vector<4x32xf32>
    %146 = arith.addf %137, %145 : vector<4x32xf32>
    %c1_i32_142 = arith.constant 1 : i32
    %147 = arith.addi %1, %c1_i32_142 : i32
    %c0_143 = arith.constant 0 : index
    %c1_144 = arith.constant 1 : index
    %c1_145 = arith.constant 1 : index
    %148 = arith.index_cast %147 : i32 to index
    %c0_146 = arith.constant 0 : index
    %c0_147 = arith.constant 0 : index
    %149 = vector.load %arg3[%c0_143, %c1_144, %c1_145, %148, %c0_146, %c0_147] : memref<1x2x2x4x4x16xbf16, #tpu.memory_space<vmem>>, vector<1x1x1x2x2x16xbf16>
    %150 = vector.shape_cast %149 : vector<1x1x1x2x2x16xbf16> to vector<2x2x16xbf16>
    %151 = vector.shape_cast %150 : vector<2x2x16xbf16> to vector<4x16xbf16>
    %c16 = arith.constant 16 : index
    %c0_148 = arith.constant 0 : index
    %c0_149 = arith.constant 0 : index
    %152 = vector.load %arg4[%c16, %c0_148, %c0_149] : memref<25x16x32xbf16, #tpu.memory_space<vmem>>, vector<1x16x32xbf16>
    %153 = vector.shape_cast %152 : vector<1x16x32xbf16> to vector<16x32xbf16>
    %cst_150 = arith.constant dense<0.000000e+00> : vector<4x32xf32>
    %154 = tpu.matmul %151, %153, %cst_150 {dimension_numbers = #tpu.dot_dimension_numbers<[1], [0], [0], [1], [0, 0, 1, 1], [], []>} : vector<4x16xbf16>, vector<16x32xbf16>, vector<4x32xf32> -> vector<4x32xf32>
    %155 = arith.addf %146, %154 : vector<4x32xf32>
    %c1_i32_151 = arith.constant 1 : i32
    %156 = arith.addi %1, %c1_i32_151 : i32
    %c0_152 = arith.constant 0 : index
    %c1_153 = arith.constant 1 : index
    %c0_154 = arith.constant 0 : index
    %157 = arith.index_cast %156 : i32 to index
    %c1_155 = arith.constant 1 : index
    %c0_156 = arith.constant 0 : index
    %158 = vector.load %arg3[%c0_152, %c1_153, %c0_154, %157, %c1_155, %c0_156] : memref<1x2x2x4x4x16xbf16, #tpu.memory_space<vmem>>, vector<1x1x1x2x2x16xbf16>
    %159 = vector.shape_cast %158 : vector<1x1x1x2x2x16xbf16> to vector<2x2x16xbf16>
    %160 = vector.shape_cast %159 : vector<2x2x16xbf16> to vector<4x16xbf16>
    %c17 = arith.constant 17 : index
    %c0_157 = arith.constant 0 : index
    %c0_158 = arith.constant 0 : index
    %161 = vector.load %arg4[%c17, %c0_157, %c0_158] : memref<25x16x32xbf16, #tpu.memory_space<vmem>>, vector<1x16x32xbf16>
    %162 = vector.shape_cast %161 : vector<1x16x32xbf16> to vector<16x32xbf16>
    %cst_159 = arith.constant dense<0.000000e+00> : vector<4x32xf32>
    %163 = tpu.matmul %160, %162, %cst_159 {dimension_numbers = #tpu.dot_dimension_numbers<[1], [0], [0], [1], [0, 0, 1, 1], [], []>} : vector<4x16xbf16>, vector<16x32xbf16>, vector<4x32xf32> -> vector<4x32xf32>
    %164 = arith.addf %155, %163 : vector<4x32xf32>
    %c1_i32_160 = arith.constant 1 : i32
    %165 = arith.addi %1, %c1_i32_160 : i32
    %c0_161 = arith.constant 0 : index
    %c1_162 = arith.constant 1 : index
    %c1_163 = arith.constant 1 : index
    %166 = arith.index_cast %165 : i32 to index
    %c1_164 = arith.constant 1 : index
    %c0_165 = arith.constant 0 : index
    %167 = vector.load %arg3[%c0_161, %c1_162, %c1_163, %166, %c1_164, %c0_165] : memref<1x2x2x4x4x16xbf16, #tpu.memory_space<vmem>>, vector<1x1x1x2x2x16xbf16>
    %168 = vector.shape_cast %167 : vector<1x1x1x2x2x16xbf16> to vector<2x2x16xbf16>
    %169 = vector.shape_cast %168 : vector<2x2x16xbf16> to vector<4x16xbf16>
    %c18 = arith.constant 18 : index
    %c0_166 = arith.constant 0 : index
    %c0_167 = arith.constant 0 : index
    %170 = vector.load %arg4[%c18, %c0_166, %c0_167] : memref<25x16x32xbf16, #tpu.memory_space<vmem>>, vector<1x16x32xbf16>
    %171 = vector.shape_cast %170 : vector<1x16x32xbf16> to vector<16x32xbf16>
    %cst_168 = arith.constant dense<0.000000e+00> : vector<4x32xf32>
    %172 = tpu.matmul %169, %171, %cst_168 {dimension_numbers = #tpu.dot_dimension_numbers<[1], [0], [0], [1], [0, 0, 1, 1], [], []>} : vector<4x16xbf16>, vector<16x32xbf16>, vector<4x32xf32> -> vector<4x32xf32>
    %173 = arith.addf %164, %172 : vector<4x32xf32>
    %c1_i32_169 = arith.constant 1 : i32
    %174 = arith.addi %1, %c1_i32_169 : i32
    %c0_170 = arith.constant 0 : index
    %c1_171 = arith.constant 1 : index
    %c0_172 = arith.constant 0 : index
    %175 = arith.index_cast %174 : i32 to index
    %c2_173 = arith.constant 2 : index
    %c0_174 = arith.constant 0 : index
    %176 = vector.load %arg3[%c0_170, %c1_171, %c0_172, %175, %c2_173, %c0_174] : memref<1x2x2x4x4x16xbf16, #tpu.memory_space<vmem>>, vector<1x1x1x2x2x16xbf16>
    %177 = vector.shape_cast %176 : vector<1x1x1x2x2x16xbf16> to vector<2x2x16xbf16>
    %178 = vector.shape_cast %177 : vector<2x2x16xbf16> to vector<4x16xbf16>
    %c19 = arith.constant 19 : index
    %c0_175 = arith.constant 0 : index
    %c0_176 = arith.constant 0 : index
    %179 = vector.load %arg4[%c19, %c0_175, %c0_176] : memref<25x16x32xbf16, #tpu.memory_space<vmem>>, vector<1x16x32xbf16>
    %180 = vector.shape_cast %179 : vector<1x16x32xbf16> to vector<16x32xbf16>
    %cst_177 = arith.constant dense<0.000000e+00> : vector<4x32xf32>
    %181 = tpu.matmul %178, %180, %cst_177 {dimension_numbers = #tpu.dot_dimension_numbers<[1], [0], [0], [1], [0, 0, 1, 1], [], []>} : vector<4x16xbf16>, vector<16x32xbf16>, vector<4x32xf32> -> vector<4x32xf32>
    %182 = arith.addf %173, %181 : vector<4x32xf32>
    %c2_i32_178 = arith.constant 2 : i32
    %183 = arith.addi %1, %c2_i32_178 : i32
    %c0_179 = arith.constant 0 : index
    %c0_180 = arith.constant 0 : index
    %c0_181 = arith.constant 0 : index
    %184 = arith.index_cast %183 : i32 to index
    %c0_182 = arith.constant 0 : index
    %c0_183 = arith.constant 0 : index
    %185 = vector.load %arg3[%c0_179, %c0_180, %c0_181, %184, %c0_182, %c0_183] : memref<1x2x2x4x4x16xbf16, #tpu.memory_space<vmem>>, vector<1x1x1x2x2x16xbf16>
    %186 = vector.shape_cast %185 : vector<1x1x1x2x2x16xbf16> to vector<2x2x16xbf16>
    %187 = vector.shape_cast %186 : vector<2x2x16xbf16> to vector<4x16xbf16>
    %c20 = arith.constant 20 : index
    %c0_184 = arith.constant 0 : index
    %c0_185 = arith.constant 0 : index
    %188 = vector.load %arg4[%c20, %c0_184, %c0_185] : memref<25x16x32xbf16, #tpu.memory_space<vmem>>, vector<1x16x32xbf16>
    %189 = vector.shape_cast %188 : vector<1x16x32xbf16> to vector<16x32xbf16>
    %cst_186 = arith.constant dense<0.000000e+00> : vector<4x32xf32>
    %190 = tpu.matmul %187, %189, %cst_186 {dimension_numbers = #tpu.dot_dimension_numbers<[1], [0], [0], [1], [0, 0, 1, 1], [], []>} : vector<4x16xbf16>, vector<16x32xbf16>, vector<4x32xf32> -> vector<4x32xf32>
    %191 = arith.addf %182, %190 : vector<4x32xf32>
    %c2_i32_187 = arith.constant 2 : i32
    %192 = arith.addi %1, %c2_i32_187 : i32
    %c0_188 = arith.constant 0 : index
    %c0_189 = arith.constant 0 : index
    %c1_190 = arith.constant 1 : index
    %193 = arith.index_cast %192 : i32 to index
    %c0_191 = arith.constant 0 : index
    %c0_192 = arith.constant 0 : index
    %194 = vector.load %arg3[%c0_188, %c0_189, %c1_190, %193, %c0_191, %c0_192] : memref<1x2x2x4x4x16xbf16, #tpu.memory_space<vmem>>, vector<1x1x1x2x2x16xbf16>
    %195 = vector.shape_cast %194 : vector<1x1x1x2x2x16xbf16> to vector<2x2x16xbf16>
    %196 = vector.shape_cast %195 : vector<2x2x16xbf16> to vector<4x16xbf16>
    %c21 = arith.constant 21 : index
    %c0_193 = arith.constant 0 : index
    %c0_194 = arith.constant 0 : index
    %197 = vector.load %arg4[%c21, %c0_193, %c0_194] : memref<25x16x32xbf16, #tpu.memory_space<vmem>>, vector<1x16x32xbf16>
    %198 = vector.shape_cast %197 : vector<1x16x32xbf16> to vector<16x32xbf16>
    %cst_195 = arith.constant dense<0.000000e+00> : vector<4x32xf32>
    %199 = tpu.matmul %196, %198, %cst_195 {dimension_numbers = #tpu.dot_dimension_numbers<[1], [0], [0], [1], [0, 0, 1, 1], [], []>} : vector<4x16xbf16>, vector<16x32xbf16>, vector<4x32xf32> -> vector<4x32xf32>
    %200 = arith.addf %191, %199 : vector<4x32xf32>
    %c2_i32_196 = arith.constant 2 : i32
    %201 = arith.addi %1, %c2_i32_196 : i32
    %c0_197 = arith.constant 0 : index
    %c0_198 = arith.constant 0 : index
    %c0_199 = arith.constant 0 : index
    %202 = arith.index_cast %201 : i32 to index
    %c1_200 = arith.constant 1 : index
    %c0_201 = arith.constant 0 : index
    %203 = vector.load %arg3[%c0_197, %c0_198, %c0_199, %202, %c1_200, %c0_201] : memref<1x2x2x4x4x16xbf16, #tpu.memory_space<vmem>>, vector<1x1x1x2x2x16xbf16>
    %204 = vector.shape_cast %203 : vector<1x1x1x2x2x16xbf16> to vector<2x2x16xbf16>
    %205 = vector.shape_cast %204 : vector<2x2x16xbf16> to vector<4x16xbf16>
    %c22 = arith.constant 22 : index
    %c0_202 = arith.constant 0 : index
    %c0_203 = arith.constant 0 : index
    %206 = vector.load %arg4[%c22, %c0_202, %c0_203] : memref<25x16x32xbf16, #tpu.memory_space<vmem>>, vector<1x16x32xbf16>
    %207 = vector.shape_cast %206 : vector<1x16x32xbf16> to vector<16x32xbf16>
    %cst_204 = arith.constant dense<0.000000e+00> : vector<4x32xf32>
    %208 = tpu.matmul %205, %207, %cst_204 {dimension_numbers = #tpu.dot_dimension_numbers<[1], [0], [0], [1], [0, 0, 1, 1], [], []>} : vector<4x16xbf16>, vector<16x32xbf16>, vector<4x32xf32> -> vector<4x32xf32>
    %209 = arith.addf %200, %208 : vector<4x32xf32>
    %c2_i32_205 = arith.constant 2 : i32
    %210 = arith.addi %1, %c2_i32_205 : i32
    %c0_206 = arith.constant 0 : index
    %c0_207 = arith.constant 0 : index
    %c1_208 = arith.constant 1 : index
    %211 = arith.index_cast %210 : i32 to index
    %c1_209 = arith.constant 1 : index
    %c0_210 = arith.constant 0 : index
    %212 = vector.load %arg3[%c0_206, %c0_207, %c1_208, %211, %c1_209, %c0_210] : memref<1x2x2x4x4x16xbf16, #tpu.memory_space<vmem>>, vector<1x1x1x2x2x16xbf16>
    %213 = vector.shape_cast %212 : vector<1x1x1x2x2x16xbf16> to vector<2x2x16xbf16>
    %214 = vector.shape_cast %213 : vector<2x2x16xbf16> to vector<4x16xbf16>
    %c23 = arith.constant 23 : index
    %c0_211 = arith.constant 0 : index
    %c0_212 = arith.constant 0 : index
    %215 = vector.load %arg4[%c23, %c0_211, %c0_212] : memref<25x16x32xbf16, #tpu.memory_space<vmem>>, vector<1x16x32xbf16>
    %216 = vector.shape_cast %215 : vector<1x16x32xbf16> to vector<16x32xbf16>
    %cst_213 = arith.constant dense<0.000000e+00> : vector<4x32xf32>
    %217 = tpu.matmul %214, %216, %cst_213 {dimension_numbers = #tpu.dot_dimension_numbers<[1], [0], [0], [1], [0, 0, 1, 1], [], []>} : vector<4x16xbf16>, vector<16x32xbf16>, vector<4x32xf32> -> vector<4x32xf32>
    %218 = arith.addf %209, %217 : vector<4x32xf32>
    %c2_i32_214 = arith.constant 2 : i32
    %219 = arith.addi %1, %c2_i32_214 : i32
    %c0_215 = arith.constant 0 : index
    %c0_216 = arith.constant 0 : index
    %c0_217 = arith.constant 0 : index
    %220 = arith.index_cast %219 : i32 to index
    %c2_218 = arith.constant 2 : index
    %c0_219 = arith.constant 0 : index
    %221 = vector.load %arg3[%c0_215, %c0_216, %c0_217, %220, %c2_218, %c0_219] : memref<1x2x2x4x4x16xbf16, #tpu.memory_space<vmem>>, vector<1x1x1x2x2x16xbf16>
    %222 = vector.shape_cast %221 : vector<1x1x1x2x2x16xbf16> to vector<2x2x16xbf16>
    %223 = vector.shape_cast %222 : vector<2x2x16xbf16> to vector<4x16xbf16>
    %c24 = arith.constant 24 : index
    %c0_220 = arith.constant 0 : index
    %c0_221 = arith.constant 0 : index
    %224 = vector.load %arg4[%c24, %c0_220, %c0_221] : memref<25x16x32xbf16, #tpu.memory_space<vmem>>, vector<1x16x32xbf16>
    %225 = vector.shape_cast %224 : vector<1x16x32xbf16> to vector<16x32xbf16>
    %cst_222 = arith.constant dense<0.000000e+00> : vector<4x32xf32>
    %226 = tpu.matmul %223, %225, %cst_222 {dimension_numbers = #tpu.dot_dimension_numbers<[1], [0], [0], [1], [0, 0, 1, 1], [], []>} : vector<4x16xbf16>, vector<16x32xbf16>, vector<4x32xf32> -> vector<4x32xf32>
    %227 = arith.addf %218, %226 : vector<4x32xf32>
    %c0_223 = arith.constant 0 : index
    %c0_224 = arith.constant 0 : index
    %228 = vector.load %arg5[%c0_223, %c0_224] : memref<1x32xf32, #tpu.memory_space<vmem>>, vector<1x32xf32>
    %229 = vector.broadcast %228 : vector<1x32xf32> to vector<4x32xf32>
    %230 = arith.addf %227, %229 : vector<4x32xf32>
    %cst_225 = arith.constant 0.000000e+00 : f32
    %231 = vector.broadcast %cst_225 : f32 to vector<4x32xf32>
    %232 = arith.cmpf ogt, %230, %231 : vector<4x32xf32>
    %cst_226 = arith.constant 0.00999999977 : f32
    %233 = vector.broadcast %cst_226 : f32 to vector<4x32xf32>
    %234 = arith.mulf %233, %230 : vector<4x32xf32>
    %235 = arith.select %232, %230, %234 : vector<4x32xi1>, vector<4x32xf32>
    %236 = arith.truncf %235 : vector<4x32xf32> to vector<4x32xbf16>
    %c0_227 = arith.constant 0 : index
    %c0_228 = arith.constant 0 : index
    %c0_229 = arith.constant 0 : index
    %237 = vector.load %arg6[%c0_227, %c0_228, %c0_229] : memref<1x4x32xbf16, #tpu.memory_space<vmem>>, vector<1x4x32xbf16>
    %238 = vector.shape_cast %237 : vector<1x4x32xbf16> to vector<4x32xbf16>
    %239 = vector.shape_cast %236 : vector<4x32xbf16> to vector<1x4x32xbf16>
    tpu.vector_store %arg6[%c0_227, %c0_228, %c0_229], %239 {strides = array<i32>} : memref<1x4x32xbf16, #tpu.memory_space<vmem>>, vector<1x4x32xbf16>,
    return
  }
  func.func @transform_0(%arg0: i32, %arg1: i32, %arg2: i32) -> (i32, i32, i32, i32, i32, i32) {
    %c0_i32 = arith.constant 0 : i32
    %c0_i32_0 = arith.constant 0 : i32
    %c0_i32_1 = arith.constant 0 : i32
    %c0_i32_2 = arith.constant 0 : i32
    %c0_i32_3 = arith.constant 0 : i32
    %c0_i32_4 = arith.constant 0 : i32
    return %arg0, %c0_i32, %c0_i32_0, %c0_i32_1, %c0_i32_2, %c0_i32_3 : i32, i32, i32, i32, i32, i32
  }
  func.func @transform_1(%arg0: i32, %arg1: i32, %arg2: i32) -> (i32, i32, i32) {
    %c0_i32 = arith.constant 0 : i32
    %c0_i32_0 = arith.constant 0 : i32
    %c0_i32_1 = arith.constant 0 : i32
    return %c0_i32, %c0_i32_0, %arg1 : i32, i32, i32
  }
  func.func @transform_2(%arg0: i32, %arg1: i32, %arg2: i32) -> (i32, i32) {
    %c0_i32 = arith.constant 0 : i32
    %c0_i32_0 = arith.constant 0 : i32
    return %c0_i32, %arg1 : i32, i32
  }
  func.func @transform_3(%arg0: i32, %arg1: i32, %arg2: i32) -> (i32, i32, i32) {
    %c0_i32 = arith.constant 0 : i32
    return %arg0, %arg2, %arg1 : i32, i32, i32
  }
}

module attributes {stable_mosaic.version = 11 : i64} {
  func.func @_phase_conv_lrelu_kernel(%arg0: i32, %arg1: i32, %arg2: i32, %arg3: memref<1x2x2x3x3x32xbf16, #tpu.memory_space<vmem>>, %arg4: memref<25x32x64xbf16, #tpu.memory_space<vmem>>, %arg5: memref<1x64xf32, #tpu.memory_space<vmem>>, %arg6: memref<1x1x64xf32, #tpu.memory_space<vmem>>) attributes {dimension_semantics = [#tpu.dimension_semantics<parallel>, #tpu.dimension_semantics<parallel>, #tpu.dimension_semantics<parallel>], iteration_bounds = array<i64: 2, 1, 1>, scalar_prefetch = 0 : i64, scratch_operands = 0 : i64, tpu.core_type = #tpu.core_type<tc>, window_params = [{transform_indices = @transform_0, window_bounds = array<i64: 1, 2, 2, 3, 3, 32>}, {transform_indices = @transform_1, window_bounds = array<i64: 25, 32, 64>}, {transform_indices = @transform_2, window_bounds = array<i64: 1, 64>}, {transform_indices = @transform_3, window_bounds = array<i64: 1, 1, 64>}]} {
    %c1_i32 = arith.constant 1 : i32
    %0 = arith.muli %arg2, %c1_i32 : i32
    %1 = tpu.assume_multiple %0, 1 : i32
    %cst = arith.constant 0.000000e+00 : f32
    %2 = vector.broadcast %cst : f32 to vector<1x64xf32>
    %c0_i32 = arith.constant 0 : i32
    %3 = arith.addi %1, %c0_i32 : i32
    %c0 = arith.constant 0 : index
    %c0_0 = arith.constant 0 : index
    %c0_1 = arith.constant 0 : index
    %4 = arith.index_cast %3 : i32 to index
    %c0_2 = arith.constant 0 : index
    %c0_3 = arith.constant 0 : index
    %5 = vector.load %arg3[%c0, %c0_0, %c0_1, %4, %c0_2, %c0_3] : memref<1x2x2x3x3x32xbf16, #tpu.memory_space<vmem>>, vector<1x1x1x1x1x32xbf16>
    %6 = vector.shape_cast %5 : vector<1x1x1x1x1x32xbf16> to vector<1x1x32xbf16>
    %7 = vector.shape_cast %6 : vector<1x1x32xbf16> to vector<1x32xbf16>
    %c0_4 = arith.constant 0 : index
    %c0_5 = arith.constant 0 : index
    %c0_6 = arith.constant 0 : index
    %8 = vector.load %arg4[%c0_4, %c0_5, %c0_6] : memref<25x32x64xbf16, #tpu.memory_space<vmem>>, vector<1x32x64xbf16>
    %9 = vector.shape_cast %8 : vector<1x32x64xbf16> to vector<32x64xbf16>
    %cst_7 = arith.constant dense<0.000000e+00> : vector<1x64xf32>
    %10 = tpu.matmul %7, %9, %cst_7 {dimension_numbers = #tpu.dot_dimension_numbers<[1], [0], [0], [1], [0, 0, 1, 1], [], []>} : vector<1x32xbf16>, vector<32x64xbf16>, vector<1x64xf32> -> vector<1x64xf32>
    %11 = arith.addf %2, %10 : vector<1x64xf32>
    %c0_i32_8 = arith.constant 0 : i32
    %12 = arith.addi %1, %c0_i32_8 : i32
    %c0_9 = arith.constant 0 : index
    %c0_10 = arith.constant 0 : index
    %c1 = arith.constant 1 : index
    %13 = arith.index_cast %12 : i32 to index
    %c0_11 = arith.constant 0 : index
    %c0_12 = arith.constant 0 : index
    %14 = vector.load %arg3[%c0_9, %c0_10, %c1, %13, %c0_11, %c0_12] : memref<1x2x2x3x3x32xbf16, #tpu.memory_space<vmem>>, vector<1x1x1x1x1x32xbf16>
    %15 = vector.shape_cast %14 : vector<1x1x1x1x1x32xbf16> to vector<1x1x32xbf16>
    %16 = vector.shape_cast %15 : vector<1x1x32xbf16> to vector<1x32xbf16>
    %c1_13 = arith.constant 1 : index
    %c0_14 = arith.constant 0 : index
    %c0_15 = arith.constant 0 : index
    %17 = vector.load %arg4[%c1_13, %c0_14, %c0_15] : memref<25x32x64xbf16, #tpu.memory_space<vmem>>, vector<1x32x64xbf16>
    %18 = vector.shape_cast %17 : vector<1x32x64xbf16> to vector<32x64xbf16>
    %cst_16 = arith.constant dense<0.000000e+00> : vector<1x64xf32>
    %19 = tpu.matmul %16, %18, %cst_16 {dimension_numbers = #tpu.dot_dimension_numbers<[1], [0], [0], [1], [0, 0, 1, 1], [], []>} : vector<1x32xbf16>, vector<32x64xbf16>, vector<1x64xf32> -> vector<1x64xf32>
    %20 = arith.addf %11, %19 : vector<1x64xf32>
    %c0_i32_17 = arith.constant 0 : i32
    %21 = arith.addi %1, %c0_i32_17 : i32
    %c0_18 = arith.constant 0 : index
    %c0_19 = arith.constant 0 : index
    %c0_20 = arith.constant 0 : index
    %22 = arith.index_cast %21 : i32 to index
    %c1_21 = arith.constant 1 : index
    %c0_22 = arith.constant 0 : index
    %23 = vector.load %arg3[%c0_18, %c0_19, %c0_20, %22, %c1_21, %c0_22] : memref<1x2x2x3x3x32xbf16, #tpu.memory_space<vmem>>, vector<1x1x1x1x1x32xbf16>
    %24 = vector.shape_cast %23 : vector<1x1x1x1x1x32xbf16> to vector<1x1x32xbf16>
    %25 = vector.shape_cast %24 : vector<1x1x32xbf16> to vector<1x32xbf16>
    %c2 = arith.constant 2 : index
    %c0_23 = arith.constant 0 : index
    %c0_24 = arith.constant 0 : index
    %26 = vector.load %arg4[%c2, %c0_23, %c0_24] : memref<25x32x64xbf16, #tpu.memory_space<vmem>>, vector<1x32x64xbf16>
    %27 = vector.shape_cast %26 : vector<1x32x64xbf16> to vector<32x64xbf16>
    %cst_25 = arith.constant dense<0.000000e+00> : vector<1x64xf32>
    %28 = tpu.matmul %25, %27, %cst_25 {dimension_numbers = #tpu.dot_dimension_numbers<[1], [0], [0], [1], [0, 0, 1, 1], [], []>} : vector<1x32xbf16>, vector<32x64xbf16>, vector<1x64xf32> -> vector<1x64xf32>
    %29 = arith.addf %20, %28 : vector<1x64xf32>
    %c0_i32_26 = arith.constant 0 : i32
    %30 = arith.addi %1, %c0_i32_26 : i32
    %c0_27 = arith.constant 0 : index
    %c0_28 = arith.constant 0 : index
    %c1_29 = arith.constant 1 : index
    %31 = arith.index_cast %30 : i32 to index
    %c1_30 = arith.constant 1 : index
    %c0_31 = arith.constant 0 : index
    %32 = vector.load %arg3[%c0_27, %c0_28, %c1_29, %31, %c1_30, %c0_31] : memref<1x2x2x3x3x32xbf16, #tpu.memory_space<vmem>>, vector<1x1x1x1x1x32xbf16>
    %33 = vector.shape_cast %32 : vector<1x1x1x1x1x32xbf16> to vector<1x1x32xbf16>
    %34 = vector.shape_cast %33 : vector<1x1x32xbf16> to vector<1x32xbf16>
    %c3 = arith.constant 3 : index
    %c0_32 = arith.constant 0 : index
    %c0_33 = arith.constant 0 : index
    %35 = vector.load %arg4[%c3, %c0_32, %c0_33] : memref<25x32x64xbf16, #tpu.memory_space<vmem>>, vector<1x32x64xbf16>
    %36 = vector.shape_cast %35 : vector<1x32x64xbf16> to vector<32x64xbf16>
    %cst_34 = arith.constant dense<0.000000e+00> : vector<1x64xf32>
    %37 = tpu.matmul %34, %36, %cst_34 {dimension_numbers = #tpu.dot_dimension_numbers<[1], [0], [0], [1], [0, 0, 1, 1], [], []>} : vector<1x32xbf16>, vector<32x64xbf16>, vector<1x64xf32> -> vector<1x64xf32>
    %38 = arith.addf %29, %37 : vector<1x64xf32>
    %c0_i32_35 = arith.constant 0 : i32
    %39 = arith.addi %1, %c0_i32_35 : i32
    %c0_36 = arith.constant 0 : index
    %c0_37 = arith.constant 0 : index
    %c0_38 = arith.constant 0 : index
    %40 = arith.index_cast %39 : i32 to index
    %c2_39 = arith.constant 2 : index
    %c0_40 = arith.constant 0 : index
    %41 = vector.load %arg3[%c0_36, %c0_37, %c0_38, %40, %c2_39, %c0_40] : memref<1x2x2x3x3x32xbf16, #tpu.memory_space<vmem>>, vector<1x1x1x1x1x32xbf16>
    %42 = vector.shape_cast %41 : vector<1x1x1x1x1x32xbf16> to vector<1x1x32xbf16>
    %43 = vector.shape_cast %42 : vector<1x1x32xbf16> to vector<1x32xbf16>
    %c4 = arith.constant 4 : index
    %c0_41 = arith.constant 0 : index
    %c0_42 = arith.constant 0 : index
    %44 = vector.load %arg4[%c4, %c0_41, %c0_42] : memref<25x32x64xbf16, #tpu.memory_space<vmem>>, vector<1x32x64xbf16>
    %45 = vector.shape_cast %44 : vector<1x32x64xbf16> to vector<32x64xbf16>
    %cst_43 = arith.constant dense<0.000000e+00> : vector<1x64xf32>
    %46 = tpu.matmul %43, %45, %cst_43 {dimension_numbers = #tpu.dot_dimension_numbers<[1], [0], [0], [1], [0, 0, 1, 1], [], []>} : vector<1x32xbf16>, vector<32x64xbf16>, vector<1x64xf32> -> vector<1x64xf32>
    %47 = arith.addf %38, %46 : vector<1x64xf32>
    %c0_i32_44 = arith.constant 0 : i32
    %48 = arith.addi %1, %c0_i32_44 : i32
    %c0_45 = arith.constant 0 : index
    %c1_46 = arith.constant 1 : index
    %c0_47 = arith.constant 0 : index
    %49 = arith.index_cast %48 : i32 to index
    %c0_48 = arith.constant 0 : index
    %c0_49 = arith.constant 0 : index
    %50 = vector.load %arg3[%c0_45, %c1_46, %c0_47, %49, %c0_48, %c0_49] : memref<1x2x2x3x3x32xbf16, #tpu.memory_space<vmem>>, vector<1x1x1x1x1x32xbf16>
    %51 = vector.shape_cast %50 : vector<1x1x1x1x1x32xbf16> to vector<1x1x32xbf16>
    %52 = vector.shape_cast %51 : vector<1x1x32xbf16> to vector<1x32xbf16>
    %c5 = arith.constant 5 : index
    %c0_50 = arith.constant 0 : index
    %c0_51 = arith.constant 0 : index
    %53 = vector.load %arg4[%c5, %c0_50, %c0_51] : memref<25x32x64xbf16, #tpu.memory_space<vmem>>, vector<1x32x64xbf16>
    %54 = vector.shape_cast %53 : vector<1x32x64xbf16> to vector<32x64xbf16>
    %cst_52 = arith.constant dense<0.000000e+00> : vector<1x64xf32>
    %55 = tpu.matmul %52, %54, %cst_52 {dimension_numbers = #tpu.dot_dimension_numbers<[1], [0], [0], [1], [0, 0, 1, 1], [], []>} : vector<1x32xbf16>, vector<32x64xbf16>, vector<1x64xf32> -> vector<1x64xf32>
    %56 = arith.addf %47, %55 : vector<1x64xf32>
    %c0_i32_53 = arith.constant 0 : i32
    %57 = arith.addi %1, %c0_i32_53 : i32
    %c0_54 = arith.constant 0 : index
    %c1_55 = arith.constant 1 : index
    %c1_56 = arith.constant 1 : index
    %58 = arith.index_cast %57 : i32 to index
    %c0_57 = arith.constant 0 : index
    %c0_58 = arith.constant 0 : index
    %59 = vector.load %arg3[%c0_54, %c1_55, %c1_56, %58, %c0_57, %c0_58] : memref<1x2x2x3x3x32xbf16, #tpu.memory_space<vmem>>, vector<1x1x1x1x1x32xbf16>
    %60 = vector.shape_cast %59 : vector<1x1x1x1x1x32xbf16> to vector<1x1x32xbf16>
    %61 = vector.shape_cast %60 : vector<1x1x32xbf16> to vector<1x32xbf16>
    %c6 = arith.constant 6 : index
    %c0_59 = arith.constant 0 : index
    %c0_60 = arith.constant 0 : index
    %62 = vector.load %arg4[%c6, %c0_59, %c0_60] : memref<25x32x64xbf16, #tpu.memory_space<vmem>>, vector<1x32x64xbf16>
    %63 = vector.shape_cast %62 : vector<1x32x64xbf16> to vector<32x64xbf16>
    %cst_61 = arith.constant dense<0.000000e+00> : vector<1x64xf32>
    %64 = tpu.matmul %61, %63, %cst_61 {dimension_numbers = #tpu.dot_dimension_numbers<[1], [0], [0], [1], [0, 0, 1, 1], [], []>} : vector<1x32xbf16>, vector<32x64xbf16>, vector<1x64xf32> -> vector<1x64xf32>
    %65 = arith.addf %56, %64 : vector<1x64xf32>
    %c0_i32_62 = arith.constant 0 : i32
    %66 = arith.addi %1, %c0_i32_62 : i32
    %c0_63 = arith.constant 0 : index
    %c1_64 = arith.constant 1 : index
    %c0_65 = arith.constant 0 : index
    %67 = arith.index_cast %66 : i32 to index
    %c1_66 = arith.constant 1 : index
    %c0_67 = arith.constant 0 : index
    %68 = vector.load %arg3[%c0_63, %c1_64, %c0_65, %67, %c1_66, %c0_67] : memref<1x2x2x3x3x32xbf16, #tpu.memory_space<vmem>>, vector<1x1x1x1x1x32xbf16>
    %69 = vector.shape_cast %68 : vector<1x1x1x1x1x32xbf16> to vector<1x1x32xbf16>
    %70 = vector.shape_cast %69 : vector<1x1x32xbf16> to vector<1x32xbf16>
    %c7 = arith.constant 7 : index
    %c0_68 = arith.constant 0 : index
    %c0_69 = arith.constant 0 : index
    %71 = vector.load %arg4[%c7, %c0_68, %c0_69] : memref<25x32x64xbf16, #tpu.memory_space<vmem>>, vector<1x32x64xbf16>
    %72 = vector.shape_cast %71 : vector<1x32x64xbf16> to vector<32x64xbf16>
    %cst_70 = arith.constant dense<0.000000e+00> : vector<1x64xf32>
    %73 = tpu.matmul %70, %72, %cst_70 {dimension_numbers = #tpu.dot_dimension_numbers<[1], [0], [0], [1], [0, 0, 1, 1], [], []>} : vector<1x32xbf16>, vector<32x64xbf16>, vector<1x64xf32> -> vector<1x64xf32>
    %74 = arith.addf %65, %73 : vector<1x64xf32>
    %c0_i32_71 = arith.constant 0 : i32
    %75 = arith.addi %1, %c0_i32_71 : i32
    %c0_72 = arith.constant 0 : index
    %c1_73 = arith.constant 1 : index
    %c1_74 = arith.constant 1 : index
    %76 = arith.index_cast %75 : i32 to index
    %c1_75 = arith.constant 1 : index
    %c0_76 = arith.constant 0 : index
    %77 = vector.load %arg3[%c0_72, %c1_73, %c1_74, %76, %c1_75, %c0_76] : memref<1x2x2x3x3x32xbf16, #tpu.memory_space<vmem>>, vector<1x1x1x1x1x32xbf16>
    %78 = vector.shape_cast %77 : vector<1x1x1x1x1x32xbf16> to vector<1x1x32xbf16>
    %79 = vector.shape_cast %78 : vector<1x1x32xbf16> to vector<1x32xbf16>
    %c8 = arith.constant 8 : index
    %c0_77 = arith.constant 0 : index
    %c0_78 = arith.constant 0 : index
    %80 = vector.load %arg4[%c8, %c0_77, %c0_78] : memref<25x32x64xbf16, #tpu.memory_space<vmem>>, vector<1x32x64xbf16>
    %81 = vector.shape_cast %80 : vector<1x32x64xbf16> to vector<32x64xbf16>
    %cst_79 = arith.constant dense<0.000000e+00> : vector<1x64xf32>
    %82 = tpu.matmul %79, %81, %cst_79 {dimension_numbers = #tpu.dot_dimension_numbers<[1], [0], [0], [1], [0, 0, 1, 1], [], []>} : vector<1x32xbf16>, vector<32x64xbf16>, vector<1x64xf32> -> vector<1x64xf32>
    %83 = arith.addf %74, %82 : vector<1x64xf32>
    %c0_i32_80 = arith.constant 0 : i32
    %84 = arith.addi %1, %c0_i32_80 : i32
    %c0_81 = arith.constant 0 : index
    %c1_82 = arith.constant 1 : index
    %c0_83 = arith.constant 0 : index
    %85 = arith.index_cast %84 : i32 to index
    %c2_84 = arith.constant 2 : index
    %c0_85 = arith.constant 0 : index
    %86 = vector.load %arg3[%c0_81, %c1_82, %c0_83, %85, %c2_84, %c0_85] : memref<1x2x2x3x3x32xbf16, #tpu.memory_space<vmem>>, vector<1x1x1x1x1x32xbf16>
    %87 = vector.shape_cast %86 : vector<1x1x1x1x1x32xbf16> to vector<1x1x32xbf16>
    %88 = vector.shape_cast %87 : vector<1x1x32xbf16> to vector<1x32xbf16>
    %c9 = arith.constant 9 : index
    %c0_86 = arith.constant 0 : index
    %c0_87 = arith.constant 0 : index
    %89 = vector.load %arg4[%c9, %c0_86, %c0_87] : memref<25x32x64xbf16, #tpu.memory_space<vmem>>, vector<1x32x64xbf16>
    %90 = vector.shape_cast %89 : vector<1x32x64xbf16> to vector<32x64xbf16>
    %cst_88 = arith.constant dense<0.000000e+00> : vector<1x64xf32>
    %91 = tpu.matmul %88, %90, %cst_88 {dimension_numbers = #tpu.dot_dimension_numbers<[1], [0], [0], [1], [0, 0, 1, 1], [], []>} : vector<1x32xbf16>, vector<32x64xbf16>, vector<1x64xf32> -> vector<1x64xf32>
    %92 = arith.addf %83, %91 : vector<1x64xf32>
    %c1_i32_89 = arith.constant 1 : i32
    %93 = arith.addi %1, %c1_i32_89 : i32
    %c0_90 = arith.constant 0 : index
    %c0_91 = arith.constant 0 : index
    %c0_92 = arith.constant 0 : index
    %94 = arith.index_cast %93 : i32 to index
    %c0_93 = arith.constant 0 : index
    %c0_94 = arith.constant 0 : index
    %95 = vector.load %arg3[%c0_90, %c0_91, %c0_92, %94, %c0_93, %c0_94] : memref<1x2x2x3x3x32xbf16, #tpu.memory_space<vmem>>, vector<1x1x1x1x1x32xbf16>
    %96 = vector.shape_cast %95 : vector<1x1x1x1x1x32xbf16> to vector<1x1x32xbf16>
    %97 = vector.shape_cast %96 : vector<1x1x32xbf16> to vector<1x32xbf16>
    %c10 = arith.constant 10 : index
    %c0_95 = arith.constant 0 : index
    %c0_96 = arith.constant 0 : index
    %98 = vector.load %arg4[%c10, %c0_95, %c0_96] : memref<25x32x64xbf16, #tpu.memory_space<vmem>>, vector<1x32x64xbf16>
    %99 = vector.shape_cast %98 : vector<1x32x64xbf16> to vector<32x64xbf16>
    %cst_97 = arith.constant dense<0.000000e+00> : vector<1x64xf32>
    %100 = tpu.matmul %97, %99, %cst_97 {dimension_numbers = #tpu.dot_dimension_numbers<[1], [0], [0], [1], [0, 0, 1, 1], [], []>} : vector<1x32xbf16>, vector<32x64xbf16>, vector<1x64xf32> -> vector<1x64xf32>
    %101 = arith.addf %92, %100 : vector<1x64xf32>
    %c1_i32_98 = arith.constant 1 : i32
    %102 = arith.addi %1, %c1_i32_98 : i32
    %c0_99 = arith.constant 0 : index
    %c0_100 = arith.constant 0 : index
    %c1_101 = arith.constant 1 : index
    %103 = arith.index_cast %102 : i32 to index
    %c0_102 = arith.constant 0 : index
    %c0_103 = arith.constant 0 : index
    %104 = vector.load %arg3[%c0_99, %c0_100, %c1_101, %103, %c0_102, %c0_103] : memref<1x2x2x3x3x32xbf16, #tpu.memory_space<vmem>>, vector<1x1x1x1x1x32xbf16>
    %105 = vector.shape_cast %104 : vector<1x1x1x1x1x32xbf16> to vector<1x1x32xbf16>
    %106 = vector.shape_cast %105 : vector<1x1x32xbf16> to vector<1x32xbf16>
    %c11 = arith.constant 11 : index
    %c0_104 = arith.constant 0 : index
    %c0_105 = arith.constant 0 : index
    %107 = vector.load %arg4[%c11, %c0_104, %c0_105] : memref<25x32x64xbf16, #tpu.memory_space<vmem>>, vector<1x32x64xbf16>
    %108 = vector.shape_cast %107 : vector<1x32x64xbf16> to vector<32x64xbf16>
    %cst_106 = arith.constant dense<0.000000e+00> : vector<1x64xf32>
    %109 = tpu.matmul %106, %108, %cst_106 {dimension_numbers = #tpu.dot_dimension_numbers<[1], [0], [0], [1], [0, 0, 1, 1], [], []>} : vector<1x32xbf16>, vector<32x64xbf16>, vector<1x64xf32> -> vector<1x64xf32>
    %110 = arith.addf %101, %109 : vector<1x64xf32>
    %c1_i32_107 = arith.constant 1 : i32
    %111 = arith.addi %1, %c1_i32_107 : i32
    %c0_108 = arith.constant 0 : index
    %c0_109 = arith.constant 0 : index
    %c0_110 = arith.constant 0 : index
    %112 = arith.index_cast %111 : i32 to index
    %c1_111 = arith.constant 1 : index
    %c0_112 = arith.constant 0 : index
    %113 = vector.load %arg3[%c0_108, %c0_109, %c0_110, %112, %c1_111, %c0_112] : memref<1x2x2x3x3x32xbf16, #tpu.memory_space<vmem>>, vector<1x1x1x1x1x32xbf16>
    %114 = vector.shape_cast %113 : vector<1x1x1x1x1x32xbf16> to vector<1x1x32xbf16>
    %115 = vector.shape_cast %114 : vector<1x1x32xbf16> to vector<1x32xbf16>
    %c12 = arith.constant 12 : index
    %c0_113 = arith.constant 0 : index
    %c0_114 = arith.constant 0 : index
    %116 = vector.load %arg4[%c12, %c0_113, %c0_114] : memref<25x32x64xbf16, #tpu.memory_space<vmem>>, vector<1x32x64xbf16>
    %117 = vector.shape_cast %116 : vector<1x32x64xbf16> to vector<32x64xbf16>
    %cst_115 = arith.constant dense<0.000000e+00> : vector<1x64xf32>
    %118 = tpu.matmul %115, %117, %cst_115 {dimension_numbers = #tpu.dot_dimension_numbers<[1], [0], [0], [1], [0, 0, 1, 1], [], []>} : vector<1x32xbf16>, vector<32x64xbf16>, vector<1x64xf32> -> vector<1x64xf32>
    %119 = arith.addf %110, %118 : vector<1x64xf32>
    %c1_i32_116 = arith.constant 1 : i32
    %120 = arith.addi %1, %c1_i32_116 : i32
    %c0_117 = arith.constant 0 : index
    %c0_118 = arith.constant 0 : index
    %c1_119 = arith.constant 1 : index
    %121 = arith.index_cast %120 : i32 to index
    %c1_120 = arith.constant 1 : index
    %c0_121 = arith.constant 0 : index
    %122 = vector.load %arg3[%c0_117, %c0_118, %c1_119, %121, %c1_120, %c0_121] : memref<1x2x2x3x3x32xbf16, #tpu.memory_space<vmem>>, vector<1x1x1x1x1x32xbf16>
    %123 = vector.shape_cast %122 : vector<1x1x1x1x1x32xbf16> to vector<1x1x32xbf16>
    %124 = vector.shape_cast %123 : vector<1x1x32xbf16> to vector<1x32xbf16>
    %c13 = arith.constant 13 : index
    %c0_122 = arith.constant 0 : index
    %c0_123 = arith.constant 0 : index
    %125 = vector.load %arg4[%c13, %c0_122, %c0_123] : memref<25x32x64xbf16, #tpu.memory_space<vmem>>, vector<1x32x64xbf16>
    %126 = vector.shape_cast %125 : vector<1x32x64xbf16> to vector<32x64xbf16>
    %cst_124 = arith.constant dense<0.000000e+00> : vector<1x64xf32>
    %127 = tpu.matmul %124, %126, %cst_124 {dimension_numbers = #tpu.dot_dimension_numbers<[1], [0], [0], [1], [0, 0, 1, 1], [], []>} : vector<1x32xbf16>, vector<32x64xbf16>, vector<1x64xf32> -> vector<1x64xf32>
    %128 = arith.addf %119, %127 : vector<1x64xf32>
    %c1_i32_125 = arith.constant 1 : i32
    %129 = arith.addi %1, %c1_i32_125 : i32
    %c0_126 = arith.constant 0 : index
    %c0_127 = arith.constant 0 : index
    %c0_128 = arith.constant 0 : index
    %130 = arith.index_cast %129 : i32 to index
    %c2_129 = arith.constant 2 : index
    %c0_130 = arith.constant 0 : index
    %131 = vector.load %arg3[%c0_126, %c0_127, %c0_128, %130, %c2_129, %c0_130] : memref<1x2x2x3x3x32xbf16, #tpu.memory_space<vmem>>, vector<1x1x1x1x1x32xbf16>
    %132 = vector.shape_cast %131 : vector<1x1x1x1x1x32xbf16> to vector<1x1x32xbf16>
    %133 = vector.shape_cast %132 : vector<1x1x32xbf16> to vector<1x32xbf16>
    %c14 = arith.constant 14 : index
    %c0_131 = arith.constant 0 : index
    %c0_132 = arith.constant 0 : index
    %134 = vector.load %arg4[%c14, %c0_131, %c0_132] : memref<25x32x64xbf16, #tpu.memory_space<vmem>>, vector<1x32x64xbf16>
    %135 = vector.shape_cast %134 : vector<1x32x64xbf16> to vector<32x64xbf16>
    %cst_133 = arith.constant dense<0.000000e+00> : vector<1x64xf32>
    %136 = tpu.matmul %133, %135, %cst_133 {dimension_numbers = #tpu.dot_dimension_numbers<[1], [0], [0], [1], [0, 0, 1, 1], [], []>} : vector<1x32xbf16>, vector<32x64xbf16>, vector<1x64xf32> -> vector<1x64xf32>
    %137 = arith.addf %128, %136 : vector<1x64xf32>
    %c1_i32_134 = arith.constant 1 : i32
    %138 = arith.addi %1, %c1_i32_134 : i32
    %c0_135 = arith.constant 0 : index
    %c1_136 = arith.constant 1 : index
    %c0_137 = arith.constant 0 : index
    %139 = arith.index_cast %138 : i32 to index
    %c0_138 = arith.constant 0 : index
    %c0_139 = arith.constant 0 : index
    %140 = vector.load %arg3[%c0_135, %c1_136, %c0_137, %139, %c0_138, %c0_139] : memref<1x2x2x3x3x32xbf16, #tpu.memory_space<vmem>>, vector<1x1x1x1x1x32xbf16>
    %141 = vector.shape_cast %140 : vector<1x1x1x1x1x32xbf16> to vector<1x1x32xbf16>
    %142 = vector.shape_cast %141 : vector<1x1x32xbf16> to vector<1x32xbf16>
    %c15 = arith.constant 15 : index
    %c0_140 = arith.constant 0 : index
    %c0_141 = arith.constant 0 : index
    %143 = vector.load %arg4[%c15, %c0_140, %c0_141] : memref<25x32x64xbf16, #tpu.memory_space<vmem>>, vector<1x32x64xbf16>
    %144 = vector.shape_cast %143 : vector<1x32x64xbf16> to vector<32x64xbf16>
    %cst_142 = arith.constant dense<0.000000e+00> : vector<1x64xf32>
    %145 = tpu.matmul %142, %144, %cst_142 {dimension_numbers = #tpu.dot_dimension_numbers<[1], [0], [0], [1], [0, 0, 1, 1], [], []>} : vector<1x32xbf16>, vector<32x64xbf16>, vector<1x64xf32> -> vector<1x64xf32>
    %146 = arith.addf %137, %145 : vector<1x64xf32>
    %c1_i32_143 = arith.constant 1 : i32
    %147 = arith.addi %1, %c1_i32_143 : i32
    %c0_144 = arith.constant 0 : index
    %c1_145 = arith.constant 1 : index
    %c1_146 = arith.constant 1 : index
    %148 = arith.index_cast %147 : i32 to index
    %c0_147 = arith.constant 0 : index
    %c0_148 = arith.constant 0 : index
    %149 = vector.load %arg3[%c0_144, %c1_145, %c1_146, %148, %c0_147, %c0_148] : memref<1x2x2x3x3x32xbf16, #tpu.memory_space<vmem>>, vector<1x1x1x1x1x32xbf16>
    %150 = vector.shape_cast %149 : vector<1x1x1x1x1x32xbf16> to vector<1x1x32xbf16>
    %151 = vector.shape_cast %150 : vector<1x1x32xbf16> to vector<1x32xbf16>
    %c16 = arith.constant 16 : index
    %c0_149 = arith.constant 0 : index
    %c0_150 = arith.constant 0 : index
    %152 = vector.load %arg4[%c16, %c0_149, %c0_150] : memref<25x32x64xbf16, #tpu.memory_space<vmem>>, vector<1x32x64xbf16>
    %153 = vector.shape_cast %152 : vector<1x32x64xbf16> to vector<32x64xbf16>
    %cst_151 = arith.constant dense<0.000000e+00> : vector<1x64xf32>
    %154 = tpu.matmul %151, %153, %cst_151 {dimension_numbers = #tpu.dot_dimension_numbers<[1], [0], [0], [1], [0, 0, 1, 1], [], []>} : vector<1x32xbf16>, vector<32x64xbf16>, vector<1x64xf32> -> vector<1x64xf32>
    %155 = arith.addf %146, %154 : vector<1x64xf32>
    %c1_i32_152 = arith.constant 1 : i32
    %156 = arith.addi %1, %c1_i32_152 : i32
    %c0_153 = arith.constant 0 : index
    %c1_154 = arith.constant 1 : index
    %c0_155 = arith.constant 0 : index
    %157 = arith.index_cast %156 : i32 to index
    %c1_156 = arith.constant 1 : index
    %c0_157 = arith.constant 0 : index
    %158 = vector.load %arg3[%c0_153, %c1_154, %c0_155, %157, %c1_156, %c0_157] : memref<1x2x2x3x3x32xbf16, #tpu.memory_space<vmem>>, vector<1x1x1x1x1x32xbf16>
    %159 = vector.shape_cast %158 : vector<1x1x1x1x1x32xbf16> to vector<1x1x32xbf16>
    %160 = vector.shape_cast %159 : vector<1x1x32xbf16> to vector<1x32xbf16>
    %c17 = arith.constant 17 : index
    %c0_158 = arith.constant 0 : index
    %c0_159 = arith.constant 0 : index
    %161 = vector.load %arg4[%c17, %c0_158, %c0_159] : memref<25x32x64xbf16, #tpu.memory_space<vmem>>, vector<1x32x64xbf16>
    %162 = vector.shape_cast %161 : vector<1x32x64xbf16> to vector<32x64xbf16>
    %cst_160 = arith.constant dense<0.000000e+00> : vector<1x64xf32>
    %163 = tpu.matmul %160, %162, %cst_160 {dimension_numbers = #tpu.dot_dimension_numbers<[1], [0], [0], [1], [0, 0, 1, 1], [], []>} : vector<1x32xbf16>, vector<32x64xbf16>, vector<1x64xf32> -> vector<1x64xf32>
    %164 = arith.addf %155, %163 : vector<1x64xf32>
    %c1_i32_161 = arith.constant 1 : i32
    %165 = arith.addi %1, %c1_i32_161 : i32
    %c0_162 = arith.constant 0 : index
    %c1_163 = arith.constant 1 : index
    %c1_164 = arith.constant 1 : index
    %166 = arith.index_cast %165 : i32 to index
    %c1_165 = arith.constant 1 : index
    %c0_166 = arith.constant 0 : index
    %167 = vector.load %arg3[%c0_162, %c1_163, %c1_164, %166, %c1_165, %c0_166] : memref<1x2x2x3x3x32xbf16, #tpu.memory_space<vmem>>, vector<1x1x1x1x1x32xbf16>
    %168 = vector.shape_cast %167 : vector<1x1x1x1x1x32xbf16> to vector<1x1x32xbf16>
    %169 = vector.shape_cast %168 : vector<1x1x32xbf16> to vector<1x32xbf16>
    %c18 = arith.constant 18 : index
    %c0_167 = arith.constant 0 : index
    %c0_168 = arith.constant 0 : index
    %170 = vector.load %arg4[%c18, %c0_167, %c0_168] : memref<25x32x64xbf16, #tpu.memory_space<vmem>>, vector<1x32x64xbf16>
    %171 = vector.shape_cast %170 : vector<1x32x64xbf16> to vector<32x64xbf16>
    %cst_169 = arith.constant dense<0.000000e+00> : vector<1x64xf32>
    %172 = tpu.matmul %169, %171, %cst_169 {dimension_numbers = #tpu.dot_dimension_numbers<[1], [0], [0], [1], [0, 0, 1, 1], [], []>} : vector<1x32xbf16>, vector<32x64xbf16>, vector<1x64xf32> -> vector<1x64xf32>
    %173 = arith.addf %164, %172 : vector<1x64xf32>
    %c1_i32_170 = arith.constant 1 : i32
    %174 = arith.addi %1, %c1_i32_170 : i32
    %c0_171 = arith.constant 0 : index
    %c1_172 = arith.constant 1 : index
    %c0_173 = arith.constant 0 : index
    %175 = arith.index_cast %174 : i32 to index
    %c2_174 = arith.constant 2 : index
    %c0_175 = arith.constant 0 : index
    %176 = vector.load %arg3[%c0_171, %c1_172, %c0_173, %175, %c2_174, %c0_175] : memref<1x2x2x3x3x32xbf16, #tpu.memory_space<vmem>>, vector<1x1x1x1x1x32xbf16>
    %177 = vector.shape_cast %176 : vector<1x1x1x1x1x32xbf16> to vector<1x1x32xbf16>
    %178 = vector.shape_cast %177 : vector<1x1x32xbf16> to vector<1x32xbf16>
    %c19 = arith.constant 19 : index
    %c0_176 = arith.constant 0 : index
    %c0_177 = arith.constant 0 : index
    %179 = vector.load %arg4[%c19, %c0_176, %c0_177] : memref<25x32x64xbf16, #tpu.memory_space<vmem>>, vector<1x32x64xbf16>
    %180 = vector.shape_cast %179 : vector<1x32x64xbf16> to vector<32x64xbf16>
    %cst_178 = arith.constant dense<0.000000e+00> : vector<1x64xf32>
    %181 = tpu.matmul %178, %180, %cst_178 {dimension_numbers = #tpu.dot_dimension_numbers<[1], [0], [0], [1], [0, 0, 1, 1], [], []>} : vector<1x32xbf16>, vector<32x64xbf16>, vector<1x64xf32> -> vector<1x64xf32>
    %182 = arith.addf %173, %181 : vector<1x64xf32>
    %c2_i32 = arith.constant 2 : i32
    %183 = arith.addi %1, %c2_i32 : i32
    %c0_179 = arith.constant 0 : index
    %c0_180 = arith.constant 0 : index
    %c0_181 = arith.constant 0 : index
    %184 = arith.index_cast %183 : i32 to index
    %c0_182 = arith.constant 0 : index
    %c0_183 = arith.constant 0 : index
    %185 = vector.load %arg3[%c0_179, %c0_180, %c0_181, %184, %c0_182, %c0_183] : memref<1x2x2x3x3x32xbf16, #tpu.memory_space<vmem>>, vector<1x1x1x1x1x32xbf16>
    %186 = vector.shape_cast %185 : vector<1x1x1x1x1x32xbf16> to vector<1x1x32xbf16>
    %187 = vector.shape_cast %186 : vector<1x1x32xbf16> to vector<1x32xbf16>
    %c20 = arith.constant 20 : index
    %c0_184 = arith.constant 0 : index
    %c0_185 = arith.constant 0 : index
    %188 = vector.load %arg4[%c20, %c0_184, %c0_185] : memref<25x32x64xbf16, #tpu.memory_space<vmem>>, vector<1x32x64xbf16>
    %189 = vector.shape_cast %188 : vector<1x32x64xbf16> to vector<32x64xbf16>
    %cst_186 = arith.constant dense<0.000000e+00> : vector<1x64xf32>
    %190 = tpu.matmul %187, %189, %cst_186 {dimension_numbers = #tpu.dot_dimension_numbers<[1], [0], [0], [1], [0, 0, 1, 1], [], []>} : vector<1x32xbf16>, vector<32x64xbf16>, vector<1x64xf32> -> vector<1x64xf32>
    %191 = arith.addf %182, %190 : vector<1x64xf32>
    %c2_i32_187 = arith.constant 2 : i32
    %192 = arith.addi %1, %c2_i32_187 : i32
    %c0_188 = arith.constant 0 : index
    %c0_189 = arith.constant 0 : index
    %c1_190 = arith.constant 1 : index
    %193 = arith.index_cast %192 : i32 to index
    %c0_191 = arith.constant 0 : index
    %c0_192 = arith.constant 0 : index
    %194 = vector.load %arg3[%c0_188, %c0_189, %c1_190, %193, %c0_191, %c0_192] : memref<1x2x2x3x3x32xbf16, #tpu.memory_space<vmem>>, vector<1x1x1x1x1x32xbf16>
    %195 = vector.shape_cast %194 : vector<1x1x1x1x1x32xbf16> to vector<1x1x32xbf16>
    %196 = vector.shape_cast %195 : vector<1x1x32xbf16> to vector<1x32xbf16>
    %c21 = arith.constant 21 : index
    %c0_193 = arith.constant 0 : index
    %c0_194 = arith.constant 0 : index
    %197 = vector.load %arg4[%c21, %c0_193, %c0_194] : memref<25x32x64xbf16, #tpu.memory_space<vmem>>, vector<1x32x64xbf16>
    %198 = vector.shape_cast %197 : vector<1x32x64xbf16> to vector<32x64xbf16>
    %cst_195 = arith.constant dense<0.000000e+00> : vector<1x64xf32>
    %199 = tpu.matmul %196, %198, %cst_195 {dimension_numbers = #tpu.dot_dimension_numbers<[1], [0], [0], [1], [0, 0, 1, 1], [], []>} : vector<1x32xbf16>, vector<32x64xbf16>, vector<1x64xf32> -> vector<1x64xf32>
    %200 = arith.addf %191, %199 : vector<1x64xf32>
    %c2_i32_196 = arith.constant 2 : i32
    %201 = arith.addi %1, %c2_i32_196 : i32
    %c0_197 = arith.constant 0 : index
    %c0_198 = arith.constant 0 : index
    %c0_199 = arith.constant 0 : index
    %202 = arith.index_cast %201 : i32 to index
    %c1_200 = arith.constant 1 : index
    %c0_201 = arith.constant 0 : index
    %203 = vector.load %arg3[%c0_197, %c0_198, %c0_199, %202, %c1_200, %c0_201] : memref<1x2x2x3x3x32xbf16, #tpu.memory_space<vmem>>, vector<1x1x1x1x1x32xbf16>
    %204 = vector.shape_cast %203 : vector<1x1x1x1x1x32xbf16> to vector<1x1x32xbf16>
    %205 = vector.shape_cast %204 : vector<1x1x32xbf16> to vector<1x32xbf16>
    %c22 = arith.constant 22 : index
    %c0_202 = arith.constant 0 : index
    %c0_203 = arith.constant 0 : index
    %206 = vector.load %arg4[%c22, %c0_202, %c0_203] : memref<25x32x64xbf16, #tpu.memory_space<vmem>>, vector<1x32x64xbf16>
    %207 = vector.shape_cast %206 : vector<1x32x64xbf16> to vector<32x64xbf16>
    %cst_204 = arith.constant dense<0.000000e+00> : vector<1x64xf32>
    %208 = tpu.matmul %205, %207, %cst_204 {dimension_numbers = #tpu.dot_dimension_numbers<[1], [0], [0], [1], [0, 0, 1, 1], [], []>} : vector<1x32xbf16>, vector<32x64xbf16>, vector<1x64xf32> -> vector<1x64xf32>
    %209 = arith.addf %200, %208 : vector<1x64xf32>
    %c2_i32_205 = arith.constant 2 : i32
    %210 = arith.addi %1, %c2_i32_205 : i32
    %c0_206 = arith.constant 0 : index
    %c0_207 = arith.constant 0 : index
    %c1_208 = arith.constant 1 : index
    %211 = arith.index_cast %210 : i32 to index
    %c1_209 = arith.constant 1 : index
    %c0_210 = arith.constant 0 : index
    %212 = vector.load %arg3[%c0_206, %c0_207, %c1_208, %211, %c1_209, %c0_210] : memref<1x2x2x3x3x32xbf16, #tpu.memory_space<vmem>>, vector<1x1x1x1x1x32xbf16>
    %213 = vector.shape_cast %212 : vector<1x1x1x1x1x32xbf16> to vector<1x1x32xbf16>
    %214 = vector.shape_cast %213 : vector<1x1x32xbf16> to vector<1x32xbf16>
    %c23 = arith.constant 23 : index
    %c0_211 = arith.constant 0 : index
    %c0_212 = arith.constant 0 : index
    %215 = vector.load %arg4[%c23, %c0_211, %c0_212] : memref<25x32x64xbf16, #tpu.memory_space<vmem>>, vector<1x32x64xbf16>
    %216 = vector.shape_cast %215 : vector<1x32x64xbf16> to vector<32x64xbf16>
    %cst_213 = arith.constant dense<0.000000e+00> : vector<1x64xf32>
    %217 = tpu.matmul %214, %216, %cst_213 {dimension_numbers = #tpu.dot_dimension_numbers<[1], [0], [0], [1], [0, 0, 1, 1], [], []>} : vector<1x32xbf16>, vector<32x64xbf16>, vector<1x64xf32> -> vector<1x64xf32>
    %218 = arith.addf %209, %217 : vector<1x64xf32>
    %c2_i32_214 = arith.constant 2 : i32
    %219 = arith.addi %1, %c2_i32_214 : i32
    %c0_215 = arith.constant 0 : index
    %c0_216 = arith.constant 0 : index
    %c0_217 = arith.constant 0 : index
    %220 = arith.index_cast %219 : i32 to index
    %c2_218 = arith.constant 2 : index
    %c0_219 = arith.constant 0 : index
    %221 = vector.load %arg3[%c0_215, %c0_216, %c0_217, %220, %c2_218, %c0_219] : memref<1x2x2x3x3x32xbf16, #tpu.memory_space<vmem>>, vector<1x1x1x1x1x32xbf16>
    %222 = vector.shape_cast %221 : vector<1x1x1x1x1x32xbf16> to vector<1x1x32xbf16>
    %223 = vector.shape_cast %222 : vector<1x1x32xbf16> to vector<1x32xbf16>
    %c24 = arith.constant 24 : index
    %c0_220 = arith.constant 0 : index
    %c0_221 = arith.constant 0 : index
    %224 = vector.load %arg4[%c24, %c0_220, %c0_221] : memref<25x32x64xbf16, #tpu.memory_space<vmem>>, vector<1x32x64xbf16>
    %225 = vector.shape_cast %224 : vector<1x32x64xbf16> to vector<32x64xbf16>
    %cst_222 = arith.constant dense<0.000000e+00> : vector<1x64xf32>
    %226 = tpu.matmul %223, %225, %cst_222 {dimension_numbers = #tpu.dot_dimension_numbers<[1], [0], [0], [1], [0, 0, 1, 1], [], []>} : vector<1x32xbf16>, vector<32x64xbf16>, vector<1x64xf32> -> vector<1x64xf32>
    %227 = arith.addf %218, %226 : vector<1x64xf32>
    %c0_223 = arith.constant 0 : index
    %c0_224 = arith.constant 0 : index
    %228 = vector.load %arg5[%c0_223, %c0_224] : memref<1x64xf32, #tpu.memory_space<vmem>>, vector<1x64xf32>
    %229 = arith.addf %227, %228 : vector<1x64xf32>
    %cst_225 = arith.constant 0.000000e+00 : f32
    %230 = vector.broadcast %cst_225 : f32 to vector<1x64xf32>
    %231 = arith.cmpf ogt, %229, %230 : vector<1x64xf32>
    %cst_226 = arith.constant 0.00999999977 : f32
    %232 = vector.broadcast %cst_226 : f32 to vector<1x64xf32>
    %233 = arith.mulf %232, %229 : vector<1x64xf32>
    %234 = arith.select %231, %229, %233 : vector<1x64xi1>, vector<1x64xf32>
    %c0_227 = arith.constant 0 : index
    %c0_228 = arith.constant 0 : index
    %c0_229 = arith.constant 0 : index
    %235 = vector.load %arg6[%c0_227, %c0_228, %c0_229] : memref<1x1x64xf32, #tpu.memory_space<vmem>>, vector<1x1x64xf32>
    %236 = vector.shape_cast %235 : vector<1x1x64xf32> to vector<1x64xf32>
    %237 = vector.shape_cast %234 : vector<1x64xf32> to vector<1x1x64xf32>
    tpu.vector_store %arg6[%c0_227, %c0_228, %c0_229], %237 {strides = array<i32>} : memref<1x1x64xf32, #tpu.memory_space<vmem>>, vector<1x1x64xf32>,
    return
  }
  func.func @transform_0(%arg0: i32, %arg1: i32, %arg2: i32) -> (i32, i32, i32, i32, i32, i32) {
    %c0_i32 = arith.constant 0 : i32
    %c0_i32_0 = arith.constant 0 : i32
    %c0_i32_1 = arith.constant 0 : i32
    %c0_i32_2 = arith.constant 0 : i32
    %c0_i32_3 = arith.constant 0 : i32
    %c0_i32_4 = arith.constant 0 : i32
    return %arg0, %c0_i32, %c0_i32_0, %c0_i32_1, %c0_i32_2, %c0_i32_3 : i32, i32, i32, i32, i32, i32
  }
  func.func @transform_1(%arg0: i32, %arg1: i32, %arg2: i32) -> (i32, i32, i32) {
    %c0_i32 = arith.constant 0 : i32
    %c0_i32_0 = arith.constant 0 : i32
    %c0_i32_1 = arith.constant 0 : i32
    return %c0_i32, %c0_i32_0, %arg1 : i32, i32, i32
  }
  func.func @transform_2(%arg0: i32, %arg1: i32, %arg2: i32) -> (i32, i32) {
    %c0_i32 = arith.constant 0 : i32
    %c0_i32_0 = arith.constant 0 : i32
    return %c0_i32, %arg1 : i32, i32
  }
  func.func @transform_3(%arg0: i32, %arg1: i32, %arg2: i32) -> (i32, i32, i32) {
    %c0_i32 = arith.constant 0 : i32
    return %arg0, %arg2, %arg1 : i32, i32, i32
  }
}

</mosaic_0001>

<llo_original>
// kernel: flatten_module_forward.4
$region0: #{flatten_module_forward.4}
  #allocation0 [shape = 'u32[]', space=smem, size = 0x4, offset = 0x4, fixed_abs, tag = 'smem constant byte address 0x4 - core index']
  #allocation1 [shape = 'u32[144,128]{1,0:T(1,128)}', space=vmem, size = 0x12000, scoped, tag = 'internal scratch']
  %s0 = inlined_call_operand.vmem [shape: bf16[128,128], index: 0, kind: input, shape index: {}]
  %s1 = inlined_call_operand.vmem [shape: bf16[128,8], index: 1, kind: input, shape index: {}]
  %s2 = inlined_call_operand.vmem [shape: f32[1,8], index: 2, kind: input, shape index: {}]
  %s3 = inlined_call_operand.vmem [shape: bf16[128,8], index: 3, kind: output, shape index: {}]
  %s4 = sld [smem:[#allocation0]]
  $region45: #{flatten_module_forward.4} parent=0
    _
  %s6 = ssub.s32 1, %s4
  %s7 = scalar_select 0, %s6, %s4
  loop: start=0, step=1, limit=4
  $region2: #{flatten_module_forward.4} parent=0 // loop_pre_header
    _
  $region3: #{flatten_module_forward.4} parent=0 // loop_header
    %s9 = sphi 0, %s13
    %p10 = scmp.ge.s32.totalorder %s9, 4
    %s16 = sphi 0, %s28
    %s17 = sphi 0, %s24
    %s18 = sphi 0, %s16
    %s19 = sphi 0, %s17
    %s20 = sphi 0, %s18
    %s21 = sphi 0, %s19
    %s31 = sphi 0, %s33
    %s34 = sphi 0, %s31
    %s35 = sphi 0, %s34
    %s51 = sphi 0, %s35
    %s57 = sphi 0, %s59
    %s60 = sphi 0, %s57
    %s61 = sphi 0, %s60
    %s77 = sphi 0, %s61
    %s83 = sphi 0, %s85
    %s86 = sphi 0, %s83
    %s87 = sphi 0, %s86
    %s103 = sphi 0, %s87
    %s111 = sphi 0, %s113
    %s114 = sphi 0, %s111
    %s115 = sphi 0, %s114
    %s131 = sphi 0, %s115
  $region4: #{flatten_module_forward.4} parent=0 // loop_header_branch
    %12 = sbr.rel (%p10) target = $region8
  $region5: #{flatten_module_forward.4} parent=0 // loop_body
    %s14 = ssub.s32 %s9, 1
    %s15 = ssub.s32 %s9, 2
    %s22 = sadd.s32 1, %s17
    %p23 = scmp.ge.s32.totalorder %s22, 1
    %s24 = scalar_select %p23, 0, %s22
    %s25 = sadd.s32 1, %s16
    %s26 = scalar_select %p23, %s25, %s16
    %p27 = scmp.ge.s32.totalorder %s26, 2
    %s28 = scalar_select %p27, 0, %s26
    %s29 = ssub.s32 %s16, %s28
    %p30 = scmp.eq.s32.totalorder %s29, 0
    %s32 = sadd.s32 %s31, 1
    %s33 = scalar_select %p30, %s31, %s32
    %p36 = pneg %p30
    %p37 = scmp.eq.s32.totalorder %s9, 1
    %p38 = por %p36, %p37
    %p39 = scmp.ne.s32.totalorder %s31, %s34
    %p40 = scmp.eq.s32.totalorder %s9, 0
    %p41 = por %p39, %p40
    %p42 = scmp.ne.s32.totalorder %s31, %s34
    %p43 = scmp.eq.s32.totalorder %s14, 1
    %p44 = por %p42, %p43
    %p45 = scmp.ne.s32.totalorder %s34, %s35
    %p46 = scmp.eq.s32.totalorder %s14, 0
    %p47 = por %p45, %p46
    %p48 = scmp.ne.s32.totalorder %s34, %s35
    %p49 = scmp.eq.s32.totalorder %s15, 1
    %p50 = por %p48, %p49
    %p52 = scmp.ne.s32.totalorder %s35, %s51
    %p53 = scmp.eq.s32.totalorder %s15, 0
    %p54 = por %p52, %p53
    %s55 = ssub.s32 %s17, %s24
    %p56 = scmp.eq.s32.totalorder %s55, 0
    %s58 = sadd.s32 %s57, 1
    %s59 = scalar_select %p56, %s57, %s58
    %p62 = pneg %p56
    %p63 = scmp.eq.s32.totalorder %s9, 1
    %p64 = por %p62, %p63
    %p65 = scmp.ne.s32.totalorder %s57, %s60
    %p66 = scmp.eq.s32.totalorder %s9, 0
    %p67 = por %p65, %p66
    %p68 = scmp.ne.s32.totalorder %s57, %s60
    %p69 = scmp.eq.s32.totalorder %s14, 1
    %p70 = por %p68, %p69
    %p71 = scmp.ne.s32.totalorder %s60, %s61
    %p72 = scmp.eq.s32.totalorder %s14, 0
    %p73 = por %p71, %p72
    %p74 = scmp.ne.s32.totalorder %s60, %s61
    %p75 = scmp.eq.s32.totalorder %s15, 1
    %p76 = por %p74, %p75
    %p78 = scmp.ne.s32.totalorder %s61, %s77
    %p79 = scmp.eq.s32.totalorder %s15, 0
    %p80 = por %p78, %p79
    %s81 = ssub.s32 %s17, %s24
    %p82 = scmp.eq.s32.totalorder %s81, 0
    %s84 = sadd.s32 %s83, 1
    %s85 = scalar_select %p82, %s83, %s84
    %p88 = pneg %p82
    %p89 = scmp.eq.s32.totalorder %s9, 1
    %p90 = por %p88, %p89
    %p91 = scmp.ne.s32.totalorder %s83, %s86
    %p92 = scmp.eq.s32.totalorder %s9, 0
    %p93 = por %p91, %p92
    %p94 = scmp.ne.s32.totalorder %s83, %s86
    %p95 = scmp.eq.s32.totalorder %s14, 1
    %p96 = por %p94, %p95
    %p97 = scmp.ne.s32.totalorder %s86, %s87
    %p98 = scmp.eq.s32.totalorder %s14, 0
    %p99 = por %p97, %p98
    %p100 = scmp.ne.s32.totalorder %s86, %s87
    %p101 = scmp.eq.s32.totalorder %s15, 1
    %p102 = por %p100, %p101
    %p104 = scmp.ne.s32.totalorder %s87, %s103
    %p105 = scmp.eq.s32.totalorder %s15, 0
    %p106 = por %p104, %p105
    %s107 = ssub.s32 %s16, %s28
    %s108 = ssub.s32 %s17, %s24
    %s109 = sor.u32 %s107, %s108
    %p110 = scmp.eq.s32.totalorder %s109, 0
    %s112 = sadd.s32 %s111, 1
    %s113 = scalar_select %p110, %s111, %s112
    %p116 = pneg %p110
    %p117 = scmp.eq.s32.totalorder %s9, 1
    %p118 = por %p116, %p117
    %p119 = scmp.ne.s32.totalorder %s111, %s114
    %p120 = scmp.eq.s32.totalorder %s9, 0
    %p121 = por %p119, %p120
    %p122 = scmp.ne.s32.totalorder %s111, %s114
    %p123 = scmp.eq.s32.totalorder %s14, 1
    %p124 = por %p122, %p123
    %p125 = scmp.ne.s32.totalorder %s114, %s115
    %p126 = scmp.eq.s32.totalorder %s14, 0
    %p127 = por %p125, %p126
    %p128 = scmp.ne.s32.totalorder %s114, %s115
    %p129 = scmp.eq.s32.totalorder %s15, 1
    %p130 = por %p128, %p129
    %p132 = scmp.ne.s32.totalorder %s115, %s131
    %p133 = scmp.eq.s32.totalorder %s15, 0
    %p134 = por %p132, %p133
    %p135 = scmp.le.s32.totalorder 1, %s9
    %p136 = scmp.lt.s32.totalorder %s9, 3
    %p137 = pnand %p135, %p136
    %p138 = pneg %p137
    // Predicated region
    $region9: #{flatten_module_forward.4} parent=5 // pred_check
      _
    $region10: #{flatten_module_forward.4} parent=5 // pred_check_branch
      %140 = sbr.rel (%p137) target = $region12
    $region11: #{flatten_module_forward.4} parent=5 // pred_region
      %s141 = ssub.s32 %s9, 1
      // Predicated region
      $region13: #{flatten_module_forward.4} parent=11 // pred_check
        %p142 = pneg %p73
      $region14: #{flatten_module_forward.4} parent=11 // pred_check_branch
        %144 = sbr.rel (%p142) target = $region16
      $region15: #{flatten_module_forward.4} parent=11 // pred_region
        %p145 = scmp.lt.s32.totalorder %s19, 0
        %s146 = scalar_select %p145, %s19, 0
        %s147 = smul.addr %s146, 4
        %s148 = scalar_lea.vmem %s1, %s147
      $region16: #{flatten_module_forward.4} parent=11 // pred_fallthru
        _
      // Predicated region
      $region17: #{flatten_module_forward.4} parent=11 // pred_check
        %p149 = pneg %p99
      $region18: #{flatten_module_forward.4} parent=11 // pred_check_branch
        %151 = sbr.rel (%p149) target = $region20
      $region19: #{flatten_module_forward.4} parent=11 // pred_region
        %p152 = scmp.lt.s32.totalorder %s19, 0
        %s153 = scalar_select %p152, %s19, 0
        %s154 = scalar_lea.vmem %s2, %s153
      $region20: #{flatten_module_forward.4} parent=11 // pred_fallthru
        _
    $region12: #{flatten_module_forward.4} parent=5 // pred_fallthru
      _
    %p155 = scmp.lt.s32.totalorder %s9, 2
    // Predicated region
    $region21: #{flatten_module_forward.4} parent=5 // pred_check
      %p156 = pneg %p155
    $region22: #{flatten_module_forward.4} parent=5 // pred_check_branch
      %158 = sbr.rel (%p156) target = $region24
    $region23: #{flatten_module_forward.4} parent=5 // pred_region
      // Predicated region
      $region25: #{flatten_module_forward.4} parent=23 // pred_check
        %p159 = pneg %p41
      $region26: #{flatten_module_forward.4} parent=23 // pred_check_branch
        %161 = sbr.rel (%p159) target = $region28
      $region27: #{flatten_module_forward.4} parent=23 // pred_region
        %s162 = smul.u32 8, %s16
        %p163 = scmp.lt.s32.totalorder %s162, 15
        %s164 = scalar_select %p163, %s162, 15
        %s165 = smul.addr %s164, 4
        %s166 = scalar_lea.vmem %s0, %s165
        %s167 = smul.u32 8, %s16
      $region28: #{flatten_module_forward.4} parent=23 // pred_fallthru
        _
    $region24: #{flatten_module_forward.4} parent=5 // pred_fallthru
      _
    %p168 = scmp.le.s32.totalorder 1, %s9
    %p169 = scmp.lt.s32.totalorder %s9, 3
    %p170 = pnand %p168, %p169
    %p171 = pneg %p170
    // Predicated region
    $region29: #{flatten_module_forward.4} parent=5 // pred_check
      _
    $region30: #{flatten_module_forward.4} parent=5 // pred_check_branch
      %173 = sbr.rel (%p170) target = $region32
    $region31: #{flatten_module_forward.4} parent=5 // pred_region
      %s174 = ssub.s32 %s9, 1
      %s175 = smul.u32 8, %s18
      %p176 = scmp.lt.s32.totalorder %s175, 15
      %s177 = scalar_select %p176, %s175, 15
      %s178 = smul.addr %s177, 4
      %s179 = scalar_lea.vmem %s0, %s178
      %p180 = pneg %p47
      %p181 = pneg %p44
      %p182 = scmp.lt.s32.totalorder %s19, 0
      %s183 = scalar_select %p182, %s19, 0
      %s184 = smul.addr %s183, 4
      %s185 = scalar_lea.vmem %s1, %s184
      %p186 = pneg %p73
      %p187 = pneg %p70
      %p188 = scmp.lt.s32.totalorder %s19, 0
      %s189 = scalar_select %p188, %s19, 0
      %s190 = scalar_lea.vmem %s2, %s189
      %p191 = pneg %p99
      %p192 = pneg %p96
      %p193 = pneg %p127
      %p194 = pneg %p124
      %s195 = smul.u32 8, %s18
      %p196 = scmp.lt.s32.totalorder %s195, 15
      %s197 = scalar_select %p196, %s195, 15
      %p198 = scmp.lt.s32.totalorder %s19, 0
      %s199 = scalar_select %p198, %s19, 0
      %s200 = sadd.s32 %s199, %s197
      %s201 = smul.addr %s200, 4
      %s202 = scalar_lea.vmem %s3, %s201
      %s203 = smul.u32 8, %s18
      %p204 = scmp.lt.s32.totalorder %s203, 15
      %s205 = scalar_select %p204, %s203, 15
      %s206 = smul.addr %s205, 4
      %s207 = scalar_lea.vmem %s0, %s206
      %s208 = smul.u32 8, %s18
      %p209 = scmp.lt.s32.totalorder %s19, 0
      %s210 = scalar_select %p209, %s19, 0
      %s211 = smul.addr %s210, 4
      %s212 = scalar_lea.vmem %s1, %s211
      %p213 = scmp.lt.s32.totalorder %s19, 0
      %s214 = scalar_select %p213, %s19, 0
      %s215 = scalar_lea.vmem %s2, %s214
      %s216 = smul.u32 8, %s18
      %p217 = scmp.lt.s32.totalorder %s216, 15
      %s218 = scalar_select %p217, %s216, 15
      %p219 = scmp.lt.s32.totalorder %s19, 0
      %s220 = scalar_select %p219, %s19, 0
      %s221 = sadd.s32 %s220, %s218
      %s222 = smul.addr %s221, 4
      %s223 = scalar_lea.vmem %s3, %s222
      %s224 = smul.u32 8, %s18
      %v226 = vld [vmem:[%s207] sm:$0xf]
      %v227 = vld [vmem:[%s207 + $0x4] sm:$0xf]
      %v228 = vld [vmem:[%s207 + $0x8] sm:$0xf]
      %v229 = vld [vmem:[%s207 + $0xc] sm:$0xf]
      %v230 = vld [vmem:[%s207 + $0x10] sm:$0xf]
      %v231 = vld [vmem:[%s207 + $0x14] sm:$0xf]
      %v232 = vld [vmem:[%s207 + $0x18] sm:$0xf]
      %v233 = vld [vmem:[%s207 + $0x1c] sm:$0xf]
      %v234 = vld [vmem:[%s212] sm:$0xf]
      %v235 = vld [vmem:[%s212 + $0x4] sm:$0xf]
      %v236 = vld [vmem:[%s212 + $0x8] sm:$0xf]
      %v237 = vld [vmem:[%s212 + $0xc] sm:$0xf]
      %v238 = vld [vmem:[%s212 + $0x10] sm:$0xf]
      %v239 = vld [vmem:[%s212 + $0x14] sm:$0xf]
      %v240 = vld [vmem:[%s212 + $0x18] sm:$0xf]
      %v241 = vld [vmem:[%s212 + $0x1c] sm:$0xf]
      %v242 = vld [vmem:[%s212 + $0x20] sm:$0xf]
      %v243 = vld [vmem:[%s212 + $0x24] sm:$0xf]
      %v244 = vld [vmem:[%s212 + $0x28] sm:$0xf]
      %v245 = vld [vmem:[%s212 + $0x2c] sm:$0xf]
      %v246 = vld [vmem:[%s212 + $0x30] sm:$0xf]
      %v247 = vld [vmem:[%s212 + $0x34] sm:$0xf]
      %v248 = vld [vmem:[%s212 + $0x38] sm:$0xf]
      %v249 = vld [vmem:[%s212 + $0x3c] sm:$0xf]
      %v250 = vld [vmem:[%s215] sm:$0x1]
      %v252 = vlaneseq
      %v253 = vshrl.u32 %v252, 7
      %v254 = vsub.s32 0, %v253
      %v255 = vrot.slane %v250, %v254
      %v265 = vunpack.c.l.b16 %v226
      %v266 = vunpack.c.l.b16 %v227
      %v267 = vunpack.c.l.b16 %v228
      %v268 = vunpack.c.l.b16 %v229
      %v269 = vunpack.c.l.b16 %v230
      %v270 = vunpack.c.l.b16 %v231
      %v271 = vunpack.c.l.b16 %v232
      %v272 = vunpack.c.l.b16 %v233
      %v273 = vpack.c.b16 %v266, %v265
      %v274 = vpack.c.b16 %v268, %v267
      %v275 = vpack.c.b16 %v270, %v269
      %v276 = vpack.c.b16 %v272, %v271
      %v297 = vunpack.c.l.b16 %v234
      %v298 = vunpack.c.l.b16 %v235
      %v299 = vunpack.c.l.b16 %v236
      %v300 = vunpack.c.l.b16 %v237
      %v301 = vunpack.c.l.b16 %v238
      %v302 = vunpack.c.l.b16 %v239
      %v303 = vunpack.c.l.b16 %v240
      %v304 = vunpack.c.l.b16 %v241
      %v305 = vunpack.c.l.b16 %v242
      %v306 = vunpack.c.l.b16 %v243
      %v307 = vunpack.c.l.b16 %v244
      %v308 = vunpack.c.l.b16 %v245
      %v309 = vunpack.c.l.b16 %v246
      %v310 = vunpack.c.l.b16 %v247
      %v311 = vunpack.c.l.b16 %v248
      %v312 = vunpack.c.l.b16 %v249
      %v313 = vpack.c.b16 %v298, %v297
      %v314 = vpack.c.b16 %v300, %v299
      %v315 = vpack.c.b16 %v302, %v301
      %v316 = vpack.c.b16 %v304, %v303
      %v317 = vpack.c.b16 %v306, %v305
      %v318 = vpack.c.b16 %v308, %v307
      %v319 = vpack.c.b16 %v310, %v309
      %v320 = vpack.c.b16 %v312, %v311
      %329 = vmatprep.subr.bf16.mxu0 0
      %330 = vmatpush1.bf16.msra.mxu0 %v313
      %331 = vmatprep.subr.bf16.mxu0 0
      %332 = vmatpush1.bf16.msra.mxu0 %v314
      %333 = vmatprep.subr.bf16.mxu0 0
      %334 = vmatpush1.bf16.msra.mxu0 %v315
      %335 = vmatprep.subr.bf16.mxu0 0
      %336 = vmatpush1.bf16.msra.mxu0 %v316
      %337 = vmatprep.subr.bf16.mxu0 0
      %338 = vmatpush1.bf16.msra.mxu0 %v317
      %339 = vmatprep.subr.bf16.mxu0 0
      %340 = vmatpush1.bf16.msra.mxu0 %v318
      %341 = vmatprep.subr.bf16.mxu0 0
      %342 = vmatpush1.bf16.msra.mxu0 %v319
      %343 = vmatprep.subr.bf16.mxu0 0
      %344 = vmatpush1.bf16.msra.mxu0 %v320
      %345 = vmatprep.subr.bf16.mxu0 0
      %346 = vmatpush1.bf16.msra.mxu0 0
      %347 = vmatprep.subr.bf16.mxu0 0
      %348 = vmatpush1.bf16.msra.mxu0 0
      %349 = vmatprep.subr.bf16.mxu0 0
      %350 = vmatpush1.bf16.msra.mxu0 0
      %351 = vmatprep.subr.bf16.mxu0 0
      %352 = vmatpush1.bf16.msra.mxu0 0
      %353 = vmatprep.subr.bf16.mxu0 0
      %354 = vmatpush1.bf16.msra.mxu0 0
      %355 = vmatprep.subr.bf16.mxu0 0
      %356 = vmatpush1.bf16.msra.mxu0 0
      %357 = vmatprep.subr.bf16.mxu0 0
      %358 = vmatpush1.bf16.msra.mxu0 0
      %359 = vmatprep.subr.bf16.mxu0 0
      %360 = vmatpush1.bf16.msra.mxu0 0
      %361 = vmatprep.mubr.bf16.mxu0 0
      %362 = vmatmul.mubr.bf16.gmra.mrb[0].mxu0 %v273
      %v363 = vpop.f32.mrb[0].mxu0
      %v364 = vadd.f32 %v255, %v363
      %v365 = vpop.f32.mrb[0].mxu0
      %v366 = vpop.f32.mrb[0].mxu0
      %v367 = vadd.f32 %v255, %v366
      %v368 = vpop.f32.mrb[0].mxu0
      %369 = vmatprep.mubr.bf16.mxu0 0
      %370 = vmatmul.mubr.bf16.gmra.mrb[0].mxu0 %v274
      %v371 = vpop.f32.mrb[0].mxu0
      %v372 = vadd.f32 %v255, %v371
      %v373 = vpop.f32.mrb[0].mxu0
      %v374 = vpop.f32.mrb[0].mxu0
      %v375 = vadd.f32 %v255, %v374
      %v376 = vpop.f32.mrb[0].mxu0
      %377 = vmatprep.mubr.bf16.mxu0 0
      %378 = vmatmul.mubr.bf16.gmra.mrb[0].mxu0 %v275
      %v379 = vpop.f32.mrb[0].mxu0
      %v380 = vadd.f32 %v255, %v379
      %v381 = vpop.f32.mrb[0].mxu0
      %v382 = vpop.f32.mrb[0].mxu0
      %v383 = vadd.f32 %v255, %v382
      %v384 = vpop.f32.mrb[0].mxu0
      %385 = vmatprep.mubr.bf16.mxu0 0
      %386 = vmatmul.mubr.bf16.gmra.mrb[0].mxu0 %v276
      %v387 = vpop.f32.mrb[0].mxu0
      %v388 = vadd.f32 %v255, %v387
      %v389 = vpop.f32.mrb[0].mxu0
      %v390 = vpop.f32.mrb[0].mxu0
      %v391 = vadd.f32 %v255, %v390
      %v392 = vpop.f32.mrb[0].mxu0
      %393 = vdwg.mxu0
      %vm394 = vcmp.gt.f32.partialorder %v364, 0.0
      %vm395 = vcmp.gt.f32.partialorder %v367, 0.0
      %vm396 = vcmp.gt.f32.partialorder %v372, 0.0
      %vm397 = vcmp.gt.f32.partialorder %v375, 0.0
      %vm398 = vcmp.gt.f32.partialorder %v380, 0.0
      %vm399 = vcmp.gt.f32.partialorder %v383, 0.0
      %vm400 = vcmp.gt.f32.partialorder %v388, 0.0
      %vm401 = vcmp.gt.f32.partialorder %v391, 0.0
      %v402 = vmul.f32 %v364, 0.01
      %v403 = vmul.f32 %v367, 0.01
      %v404 = vmul.f32 %v372, 0.01
      %v405 = vmul.f32 %v375, 0.01
      %v406 = vmul.f32 %v380, 0.01
      %v407 = vmul.f32 %v383, 0.01
      %v408 = vmul.f32 %v388, 0.01
      %v409 = vmul.f32 %v391, 0.01
      %v410 = vsel %vm394, %v364, %v402
      %v411 = vsel %vm395, %v367, %v403
      %v412 = vsel %vm396, %v372, %v404
      %v413 = vsel %vm397, %v375, %v405
      %v414 = vsel %vm398, %v380, %v406
      %v415 = vsel %vm399, %v383, %v407
      %v416 = vsel %vm400, %v388, %v408
      %v417 = vsel %vm401, %v391, %v409
      %v418 = vpack.c.bf16 %v411, %v410
      %v419 = vpack.c.bf16 %v413, %v412
      %v420 = vpack.c.bf16 %v415, %v414
      %v421 = vpack.c.bf16 %v417, %v416
      %v426 = vunpack.c.l.b16 %v418
      %v427 = vunpack.c.h.b16 %v418
      %v428 = vunpack.c.l.b16 %v419
      %v429 = vunpack.c.h.b16 %v419
      %v430 = vunpack.c.l.b16 %v420
      %v431 = vunpack.c.h.b16 %v420
      %v432 = vunpack.c.l.b16 %v421
      %v433 = vunpack.c.h.b16 %v421
      %v434 = vpack.c.b16 %v426, %v426
      %v435 = vpack.c.b16 %v427, %v427
      %v436 = vpack.c.b16 %v428, %v428
      %v437 = vpack.c.b16 %v429, %v429
      %v438 = vpack.c.b16 %v430, %v430
      %v439 = vpack.c.b16 %v431, %v431
      %v440 = vpack.c.b16 %v432, %v432
      %v441 = vpack.c.b16 %v433, %v433
      %vm450 = vcmask 60416
      %451 = vst.msk [vmem:[%s223] sm:$0xf] %vm450, %v434
      %452 = vst.msk [vmem:[%s223 + $0x4] sm:$0xf] %vm450, %v435
      %453 = vst.msk [vmem:[%s223 + $0x8] sm:$0xf] %vm450, %v436
      %454 = vst.msk [vmem:[%s223 + $0xc] sm:$0xf] %vm450, %v437
      %455 = vst.msk [vmem:[%s223 + $0x10] sm:$0xf] %vm450, %v438
      %456 = vst.msk [vmem:[%s223 + $0x14] sm:$0xf] %vm450, %v439
      %457 = vst.msk [vmem:[%s223 + $0x18] sm:$0xf] %vm450, %v440
      %458 = vst.msk [vmem:[%s223 + $0x1c] sm:$0xf] %vm450, %v441
      %s459 = smul.u32 8, %s18
      %p460 = scmp.lt.s32.totalorder %s459, 15
      %s461 = scalar_select %p460, %s459, 15
      %p462 = scmp.lt.s32.totalorder %s19, 0
      %s463 = scalar_select %p462, %s19, 0
      %s464 = sadd.s32 %s463, %s461
      %s465 = smul.addr %s464, 4
      %s466 = scalar_lea.vmem %s3, %s465
      // Predicated region
      $region33: #{flatten_module_forward.4} parent=31 // pred_check
        %p467 = pneg %p124
      $region34: #{flatten_module_forward.4} parent=31 // pred_check_branch
        %469 = sbr.rel (%p467) target = $region36
      $region35: #{flatten_module_forward.4} parent=31 // pred_region
        %s470 = smul.u32 8, %s18
      $region36: #{flatten_module_forward.4} parent=31 // pred_fallthru
        _
    $region32: #{flatten_module_forward.4} parent=5 // pred_fallthru
      _
    %p471 = scmp.le.s32.totalorder 2, %s9
    // Predicated region
    $region37: #{flatten_module_forward.4} parent=5 // pred_check
      %p472 = pneg %p471
    $region38: #{flatten_module_forward.4} parent=5 // pred_check_branch
      %474 = sbr.rel (%p472) target = $region40
    $region39: #{flatten_module_forward.4} parent=5 // pred_region
      %s475 = ssub.s32 %s9, 2
      // Predicated region
      $region41: #{flatten_module_forward.4} parent=39 // pred_check
        %p476 = pneg %p130
      $region42: #{flatten_module_forward.4} parent=39 // pred_check_branch
        %478 = sbr.rel (%p476) target = $region44
      $region43: #{flatten_module_forward.4} parent=39 // pred_region
        %s479 = smul.u32 8, %s20
        %p480 = scmp.lt.s32.totalorder %s479, 15
        %s481 = scalar_select %p480, %s479, 15
        %p482 = scmp.lt.s32.totalorder %s21, 0
        %s483 = scalar_select %p482, %s21, 0
        %s484 = sadd.s32 %s483, %s481
        %s485 = smul.addr %s484, 4
        %s486 = scalar_lea.vmem %s3, %s485
      $region44: #{flatten_module_forward.4} parent=39 // pred_fallthru
        _
    $region40: #{flatten_module_forward.4} parent=5 // pred_fallthru
      _
  $region6: #{flatten_module_forward.4} parent=0 // loop_footer
    %s13 = sadd.s32 1, %s9
  $region7: #{flatten_module_forward.4} parent=0 // loop_footer_branch
    %8 = sbr.rel target = $region3
  $region8: #{flatten_module_forward.4} parent=0 // loop_exit
    _

// kernel: flatten_module_forward.5
$region0: #{flatten_module_forward.5}
  #allocation0 [shape = 'u32[]', space=smem, size = 0x4, offset = 0x4, fixed_abs, tag = 'smem constant byte address 0x4 - core index']
  #allocation1 [shape = 'u32[144,128]{1,0:T(1,128)}', space=vmem, size = 0x12000, scoped, tag = 'internal scratch']
  %s0 = inlined_call_operand.vmem [shape: bf16[32,256], index: 0, kind: input, shape index: {}]
  %s1 = inlined_call_operand.vmem [shape: bf16[256,16], index: 1, kind: input, shape index: {}]
  %s2 = inlined_call_operand.vmem [shape: f32[1,16], index: 2, kind: input, shape index: {}]
  %s3 = inlined_call_operand.vmem [shape: bf16[32,16], index: 3, kind: output, shape index: {}]
  %s4 = sld [smem:[#allocation0]]
  $region45: #{flatten_module_forward.5} parent=0
    _
  %s6 = ssub.s32 1, %s4
  %s7 = scalar_select 0, %s6, %s4
  loop: start=0, step=1, limit=4
  $region2: #{flatten_module_forward.5} parent=0 // loop_pre_header
    _
  $region3: #{flatten_module_forward.5} parent=0 // loop_header
    %s9 = sphi 0, %s13
    %p10 = scmp.ge.s32.totalorder %s9, 4
    %s16 = sphi 0, %s28
    %s17 = sphi 0, %s24
    %s18 = sphi 0, %s16
    %s19 = sphi 0, %s17
    %s20 = sphi 0, %s18
    %s21 = sphi 0, %s19
    %s31 = sphi 0, %s33
    %s34 = sphi 0, %s31
    %s35 = sphi 0, %s34
    %s51 = sphi 0, %s35
    %s57 = sphi 0, %s59
    %s60 = sphi 0, %s57
    %s61 = sphi 0, %s60
    %s77 = sphi 0, %s61
    %s83 = sphi 0, %s85
    %s86 = sphi 0, %s83
    %s87 = sphi 0, %s86
    %s103 = sphi 0, %s87
    %s111 = sphi 0, %s113
    %s114 = sphi 0, %s111
    %s115 = sphi 0, %s114
    %s131 = sphi 0, %s115
  $region4: #{flatten_module_forward.5} parent=0 // loop_header_branch
    %12 = sbr.rel (%p10) target = $region8
  $region5: #{flatten_module_forward.5} parent=0 // loop_body
    %s14 = ssub.s32 %s9, 1
    %s15 = ssub.s32 %s9, 2
    %s22 = sadd.s32 1, %s17
    %p23 = scmp.ge.s32.totalorder %s22, 1
    %s24 = scalar_select %p23, 0, %s22
    %s25 = sadd.s32 1, %s16
    %s26 = scalar_select %p23, %s25, %s16
    %p27 = scmp.ge.s32.totalorder %s26, 2
    %s28 = scalar_select %p27, 0, %s26
    %s29 = ssub.s32 %s16, %s28
    %p30 = scmp.eq.s32.totalorder %s29, 0
    %s32 = sadd.s32 %s31, 1
    %s33 = scalar_select %p30, %s31, %s32
    %p36 = pneg %p30
    %p37 = scmp.eq.s32.totalorder %s9, 1
    %p38 = por %p36, %p37
    %p39 = scmp.ne.s32.totalorder %s31, %s34
    %p40 = scmp.eq.s32.totalorder %s9, 0
    %p41 = por %p39, %p40
    %p42 = scmp.ne.s32.totalorder %s31, %s34
    %p43 = scmp.eq.s32.totalorder %s14, 1
    %p44 = por %p42, %p43
    %p45 = scmp.ne.s32.totalorder %s34, %s35
    %p46 = scmp.eq.s32.totalorder %s14, 0
    %p47 = por %p45, %p46
    %p48 = scmp.ne.s32.totalorder %s34, %s35
    %p49 = scmp.eq.s32.totalorder %s15, 1
    %p50 = por %p48, %p49
    %p52 = scmp.ne.s32.totalorder %s35, %s51
    %p53 = scmp.eq.s32.totalorder %s15, 0
    %p54 = por %p52, %p53
    %s55 = ssub.s32 %s17, %s24
    %p56 = scmp.eq.s32.totalorder %s55, 0
    %s58 = sadd.s32 %s57, 1
    %s59 = scalar_select %p56, %s57, %s58
    %p62 = pneg %p56
    %p63 = scmp.eq.s32.totalorder %s9, 1
    %p64 = por %p62, %p63
    %p65 = scmp.ne.s32.totalorder %s57, %s60
    %p66 = scmp.eq.s32.totalorder %s9, 0
    %p67 = por %p65, %p66
    %p68 = scmp.ne.s32.totalorder %s57, %s60
    %p69 = scmp.eq.s32.totalorder %s14, 1
    %p70 = por %p68, %p69
    %p71 = scmp.ne.s32.totalorder %s60, %s61
    %p72 = scmp.eq.s32.totalorder %s14, 0
    %p73 = por %p71, %p72
    %p74 = scmp.ne.s32.totalorder %s60, %s61
    %p75 = scmp.eq.s32.totalorder %s15, 1
    %p76 = por %p74, %p75
    %p78 = scmp.ne.s32.totalorder %s61, %s77
    %p79 = scmp.eq.s32.totalorder %s15, 0
    %p80 = por %p78, %p79
    %s81 = ssub.s32 %s17, %s24
    %p82 = scmp.eq.s32.totalorder %s81, 0
    %s84 = sadd.s32 %s83, 1
    %s85 = scalar_select %p82, %s83, %s84
    %p88 = pneg %p82
    %p89 = scmp.eq.s32.totalorder %s9, 1
    %p90 = por %p88, %p89
    %p91 = scmp.ne.s32.totalorder %s83, %s86
    %p92 = scmp.eq.s32.totalorder %s9, 0
    %p93 = por %p91, %p92
    %p94 = scmp.ne.s32.totalorder %s83, %s86
    %p95 = scmp.eq.s32.totalorder %s14, 1
    %p96 = por %p94, %p95
    %p97 = scmp.ne.s32.totalorder %s86, %s87
    %p98 = scmp.eq.s32.totalorder %s14, 0
    %p99 = por %p97, %p98
    %p100 = scmp.ne.s32.totalorder %s86, %s87
    %p101 = scmp.eq.s32.totalorder %s15, 1
    %p102 = por %p100, %p101
    %p104 = scmp.ne.s32.totalorder %s87, %s103
    %p105 = scmp.eq.s32.totalorder %s15, 0
    %p106 = por %p104, %p105
    %s107 = ssub.s32 %s16, %s28
    %s108 = ssub.s32 %s17, %s24
    %s109 = sor.u32 %s107, %s108
    %p110 = scmp.eq.s32.totalorder %s109, 0
    %s112 = sadd.s32 %s111, 1
    %s113 = scalar_select %p110, %s111, %s112
    %p116 = pneg %p110
    %p117 = scmp.eq.s32.totalorder %s9, 1
    %p118 = por %p116, %p117
    %p119 = scmp.ne.s32.totalorder %s111, %s114
    %p120 = scmp.eq.s32.totalorder %s9, 0
    %p121 = por %p119, %p120
    %p122 = scmp.ne.s32.totalorder %s111, %s114
    %p123 = scmp.eq.s32.totalorder %s14, 1
    %p124 = por %p122, %p123
    %p125 = scmp.ne.s32.totalorder %s114, %s115
    %p126 = scmp.eq.s32.totalorder %s14, 0
    %p127 = por %p125, %p126
    %p128 = scmp.ne.s32.totalorder %s114, %s115
    %p129 = scmp.eq.s32.totalorder %s15, 1
    %p130 = por %p128, %p129
    %p132 = scmp.ne.s32.totalorder %s115, %s131
    %p133 = scmp.eq.s32.totalorder %s15, 0
    %p134 = por %p132, %p133
    %p135 = scmp.le.s32.totalorder 1, %s9
    %p136 = scmp.lt.s32.totalorder %s9, 3
    %p137 = pnand %p135, %p136
    %p138 = pneg %p137
    // Predicated region
    $region9: #{flatten_module_forward.5} parent=5 // pred_check
      _
    $region10: #{flatten_module_forward.5} parent=5 // pred_check_branch
      %140 = sbr.rel (%p137) target = $region12
    $region11: #{flatten_module_forward.5} parent=5 // pred_region
      %s141 = ssub.s32 %s9, 1
      // Predicated region
      $region13: #{flatten_module_forward.5} parent=11 // pred_check
        %p142 = pneg %p73
      $region14: #{flatten_module_forward.5} parent=11 // pred_check_branch
        %144 = sbr.rel (%p142) target = $region16
      $region15: #{flatten_module_forward.5} parent=11 // pred_region
        %p145 = scmp.lt.s32.totalorder %s19, 0
        %s146 = scalar_select %p145, %s19, 0
        %s147 = smul.addr %s146, 4
        %s148 = scalar_lea.vmem %s1, %s147
      $region16: #{flatten_module_forward.5} parent=11 // pred_fallthru
        _
      // Predicated region
      $region17: #{flatten_module_forward.5} parent=11 // pred_check
        %p149 = pneg %p99
      $region18: #{flatten_module_forward.5} parent=11 // pred_check_branch
        %151 = sbr.rel (%p149) target = $region20
      $region19: #{flatten_module_forward.5} parent=11 // pred_region
        %p152 = scmp.lt.s32.totalorder %s19, 0
        %s153 = scalar_select %p152, %s19, 0
        %s154 = scalar_lea.vmem %s2, %s153
      $region20: #{flatten_module_forward.5} parent=11 // pred_fallthru
        _
    $region12: #{flatten_module_forward.5} parent=5 // pred_fallthru
      _
    %p155 = scmp.lt.s32.totalorder %s9, 2
    // Predicated region
    $region21: #{flatten_module_forward.5} parent=5 // pred_check
      %p156 = pneg %p155
    $region22: #{flatten_module_forward.5} parent=5 // pred_check_branch
      %158 = sbr.rel (%p156) target = $region24
    $region23: #{flatten_module_forward.5} parent=5 // pred_region
      // Predicated region
      $region25: #{flatten_module_forward.5} parent=23 // pred_check
        %p159 = pneg %p41
      $region26: #{flatten_module_forward.5} parent=23 // pred_check_branch
        %161 = sbr.rel (%p159) target = $region28
      $region27: #{flatten_module_forward.5} parent=23 // pred_region
        %s162 = smul.u32 2, %s16
        %p163 = scmp.lt.s32.totalorder %s162, 3
        %s164 = scalar_select %p163, %s162, 3
        %s165 = smul.addr %s164, 2
        %s166 = smul.addr %s165, 4
        %s167 = scalar_lea.vmem %s0, %s166
        %s168 = smul.u32 2, %s16
      $region28: #{flatten_module_forward.5} parent=23 // pred_fallthru
        _
    $region24: #{flatten_module_forward.5} parent=5 // pred_fallthru
      _
    %p169 = scmp.le.s32.totalorder 1, %s9
    %p170 = scmp.lt.s32.totalorder %s9, 3
    %p171 = pnand %p169, %p170
    %p172 = pneg %p171
    // Predicated region
    $region29: #{flatten_module_forward.5} parent=5 // pred_check
      _
    $region30: #{flatten_module_forward.5} parent=5 // pred_check_branch
      %174 = sbr.rel (%p171) target = $region32
    $region31: #{flatten_module_forward.5} parent=5 // pred_region
      %s175 = ssub.s32 %s9, 1
      %s176 = smul.u32 2, %s18
      %p177 = scmp.lt.s32.totalorder %s176, 3
      %s178 = scalar_select %p177, %s176, 3
      %s179 = smul.addr %s178, 2
      %s180 = smul.addr %s179, 4
      %s181 = scalar_lea.vmem %s0, %s180
      %p182 = pneg %p47
      %p183 = pneg %p44
      %p184 = scmp.lt.s32.totalorder %s19, 0
      %s185 = scalar_select %p184, %s19, 0
      %s186 = smul.addr %s185, 4
      %s187 = scalar_lea.vmem %s1, %s186
      %p188 = pneg %p73
      %p189 = pneg %p70
      %p190 = scmp.lt.s32.totalorder %s19, 0
      %s191 = scalar_select %p190, %s19, 0
      %s192 = scalar_lea.vmem %s2, %s191
      %p193 = pneg %p99
      %p194 = pneg %p96
      %p195 = pneg %p127
      %p196 = pneg %p124
      %s197 = smul.u32 2, %s18
      %p198 = scmp.lt.s32.totalorder %s197, 3
      %s199 = scalar_select %p198, %s197, 3
      %p200 = scmp.lt.s32.totalorder %s19, 0
      %s201 = scalar_select %p200, %s19, 0
      %s202 = sadd.s32 %s201, %s199
      %s203 = smul.addr %s202, 4
      %s204 = scalar_lea.vmem %s3, %s203
      %s205 = smul.u32 2, %s18
      %p206 = scmp.lt.s32.totalorder %s205, 3
      %s207 = scalar_select %p206, %s205, 3
      %s208 = smul.addr %s207, 2
      %s209 = smul.addr %s208, 4
      %s210 = scalar_lea.vmem %s0, %s209
      %s211 = smul.u32 2, %s18
      %p212 = scmp.lt.s32.totalorder %s19, 0
      %s213 = scalar_select %p212, %s19, 0
      %s214 = smul.addr %s213, 4
      %s215 = scalar_lea.vmem %s1, %s214
      %p216 = scmp.lt.s32.totalorder %s19, 0
      %s217 = scalar_select %p216, %s19, 0
      %s218 = scalar_lea.vmem %s2, %s217
      %s219 = smul.u32 2, %s18
      %p220 = scmp.lt.s32.totalorder %s219, 3
      %s221 = scalar_select %p220, %s219, 3
      %p222 = scmp.lt.s32.totalorder %s19, 0
      %s223 = scalar_select %p222, %s19, 0
      %s224 = sadd.s32 %s223, %s221
      %s225 = smul.addr %s224, 4
      %s226 = scalar_lea.vmem %s3, %s225
      %s227 = smul.u32 2, %s18
      %v229 = vld [vmem:[%s210] sm:$0xff]
      %v230 = vld [vmem:[%s210 + $0x8] sm:$0xff]
      %v231 = vld [vmem:[%s215] sm:$0xf]
      %v232 = vld [vmem:[%s215 + $0x4] sm:$0xf]
      %v233 = vld [vmem:[%s215 + $0x8] sm:$0xf]
      %v234 = vld [vmem:[%s215 + $0xc] sm:$0xf]
      %v235 = vld [vmem:[%s215 + $0x10] sm:$0xf]
      %v236 = vld [vmem:[%s215 + $0x14] sm:$0xf]
      %v237 = vld [vmem:[%s215 + $0x18] sm:$0xf]
      %v238 = vld [vmem:[%s215 + $0x1c] sm:$0xf]
      %v239 = vld [vmem:[%s215 + $0x20] sm:$0xf]
      %v240 = vld [vmem:[%s215 + $0x24] sm:$0xf]
      %v241 = vld [vmem:[%s215 + $0x28] sm:$0xf]
      %v242 = vld [vmem:[%s215 + $0x2c] sm:$0xf]
      %v243 = vld [vmem:[%s215 + $0x30] sm:$0xf]
      %v244 = vld [vmem:[%s215 + $0x34] sm:$0xf]
      %v245 = vld [vmem:[%s215 + $0x38] sm:$0xf]
      %v246 = vld [vmem:[%s215 + $0x3c] sm:$0xf]
      %v247 = vld [vmem:[%s215 + $0x40] sm:$0xf]
      %v248 = vld [vmem:[%s215 + $0x44] sm:$0xf]
      %v249 = vld [vmem:[%s215 + $0x48] sm:$0xf]
      %v250 = vld [vmem:[%s215 + $0x4c] sm:$0xf]
      %v251 = vld [vmem:[%s215 + $0x50] sm:$0xf]
      %v252 = vld [vmem:[%s215 + $0x54] sm:$0xf]
      %v253 = vld [vmem:[%s215 + $0x58] sm:$0xf]
      %v254 = vld [vmem:[%s215 + $0x5c] sm:$0xf]
      %v255 = vld [vmem:[%s215 + $0x60] sm:$0xf]
      %v256 = vld [vmem:[%s215 + $0x64] sm:$0xf]
      %v257 = vld [vmem:[%s215 + $0x68] sm:$0xf]
      %v258 = vld [vmem:[%s215 + $0x6c] sm:$0xf]
      %v259 = vld [vmem:[%s215 + $0x70] sm:$0xf]
      %v260 = vld [vmem:[%s215 + $0x74] sm:$0xf]
      %v261 = vld [vmem:[%s215 + $0x78] sm:$0xf]
      %v262 = vld [vmem:[%s215 + $0x7c] sm:$0xf]
      %v263 = vld [vmem:[%s218] sm:$0x1]
      %v265 = vlaneseq
      %v266 = vshrl.u32 %v265, 7
      %v267 = vsub.s32 0, %v266
      %v268 = vrot.slane %v263, %v267
      %v272 = vunpack.c.l.b16 %v229
      %v273 = vunpack.c.h.b16 %v229
      %v274 = vunpack.c.l.b16 %v230
      %v275 = vunpack.c.h.b16 %v230
      %v276 = vpack.c.b16 %v274, %v272
      %v277 = vpack.c.b16 %v275, %v273
      %v312 = vunpack.c.l.b16 %v231
      %v313 = vunpack.c.l.b16 %v232
      %v314 = vunpack.c.l.b16 %v233
      %v315 = vunpack.c.l.b16 %v234
      %v316 = vunpack.c.l.b16 %v235
      %v317 = vunpack.c.l.b16 %v236
      %v318 = vunpack.c.l.b16 %v237
      %v319 = vunpack.c.l.b16 %v238
      %v320 = vunpack.c.l.b16 %v239
      %v321 = vunpack.c.l.b16 %v240
      %v322 = vunpack.c.l.b16 %v241
      %v323 = vunpack.c.l.b16 %v242
      %v324 = vunpack.c.l.b16 %v243
      %v325 = vunpack.c.l.b16 %v244
      %v326 = vunpack.c.l.b16 %v245
      %v327 = vunpack.c.l.b16 %v246
      %v328 = vunpack.c.l.b16 %v247
      %v329 = vunpack.c.l.b16 %v248
      %v330 = vunpack.c.l.b16 %v249
      %v331 = vunpack.c.l.b16 %v250
      %v332 = vunpack.c.l.b16 %v251
      %v333 = vunpack.c.l.b16 %v252
      %v334 = vunpack.c.l.b16 %v253
      %v335 = vunpack.c.l.b16 %v254
      %v336 = vunpack.c.l.b16 %v255
      %v337 = vunpack.c.l.b16 %v256
      %v338 = vunpack.c.l.b16 %v257
      %v339 = vunpack.c.l.b16 %v258
      %v340 = vunpack.c.l.b16 %v259
      %v341 = vunpack.c.l.b16 %v260
      %v342 = vunpack.c.l.b16 %v261
      %v343 = vunpack.c.l.b16 %v262
      %v344 = vpack.c.b16 %v313, %v312
      %v345 = vpack.c.b16 %v315, %v314
      %v346 = vpack.c.b16 %v317, %v316
      %v347 = vpack.c.b16 %v319, %v318
      %v348 = vpack.c.b16 %v321, %v320
      %v349 = vpack.c.b16 %v323, %v322
      %v350 = vpack.c.b16 %v325, %v324
      %v351 = vpack.c.b16 %v327, %v326
      %v352 = vpack.c.b16 %v329, %v328
      %v353 = vpack.c.b16 %v331, %v330
      %v354 = vpack.c.b16 %v333, %v332
      %v355 = vpack.c.b16 %v335, %v334
      %v356 = vpack.c.b16 %v337, %v336
      %v357 = vpack.c.b16 %v339, %v338
      %v358 = vpack.c.b16 %v341, %v340
      %v359 = vpack.c.b16 %v343, %v342
      %376 = vmatprep.subr.bf16.mxu0 0
      %377 = vmatpush1.bf16.msra.mxu0 %v344
      %378 = vmatprep.subr.bf16.mxu0 0
      %379 = vmatpush1.bf16.msra.mxu0 %v345
      %380 = vmatprep.subr.bf16.mxu0 0
      %381 = vmatpush1.bf16.msra.mxu0 %v346
      %382 = vmatprep.subr.bf16.mxu0 0
      %383 = vmatpush1.bf16.msra.mxu0 %v347
      %384 = vmatprep.subr.bf16.mxu0 0
      %385 = vmatpush1.bf16.msra.mxu0 %v348
      %386 = vmatprep.subr.bf16.mxu0 0
      %387 = vmatpush1.bf16.msra.mxu0 %v349
      %388 = vmatprep.subr.bf16.mxu0 0
      %389 = vmatpush1.bf16.msra.mxu0 %v350
      %390 = vmatprep.subr.bf16.mxu0 0
      %391 = vmatpush1.bf16.msra.mxu0 %v351
      %392 = vmatprep.subr.bf16.mxu0 0
      %393 = vmatpush1.bf16.msra.mxu0 %v352
      %394 = vmatprep.subr.bf16.mxu0 0
      %395 = vmatpush1.bf16.msra.mxu0 %v353
      %396 = vmatprep.subr.bf16.mxu0 0
      %397 = vmatpush1.bf16.msra.mxu0 %v354
      %398 = vmatprep.subr.bf16.mxu0 0
      %399 = vmatpush1.bf16.msra.mxu0 %v355
      %400 = vmatprep.subr.bf16.mxu0 0
      %401 = vmatpush1.bf16.msra.mxu0 %v356
      %402 = vmatprep.subr.bf16.mxu0 0
      %403 = vmatpush1.bf16.msra.mxu0 %v357
      %404 = vmatprep.subr.bf16.mxu0 0
      %405 = vmatpush1.bf16.msra.mxu0 %v358
      %406 = vmatprep.subr.bf16.mxu0 0
      %407 = vmatpush1.bf16.msra.mxu0 %v359
      %408 = vmatprep.mubr.bf16.mxu0 %v277
      %409 = vmatmul.mubr.bf16.gmra.mrb[0].mxu0 %v276
      %v410 = vpop.f32.mrb[0].mxu0
      %v411 = vadd.f32 %v268, %v410
      %v412 = vpop.f32.mrb[0].mxu0
      %v413 = vpop.f32.mrb[0].mxu0
      %v414 = vadd.f32 %v268, %v413
      %v415 = vpop.f32.mrb[0].mxu0
      %416 = vdwg.mxu0
      %vm417 = vcmp.gt.f32.partialorder %v411, 0.0
      %vm418 = vcmp.gt.f32.partialorder %v414, 0.0
      %v419 = vmul.f32 %v411, 0.01
      %v420 = vmul.f32 %v414, 0.01
      %v421 = vsel %vm417, %v411, %v419
      %v422 = vsel %vm418, %v414, %v420
      %v423 = vpack.c.bf16 %v422, %v421
      %v425 = vunpack.c.l.b16 %v423
      %v426 = vunpack.c.h.b16 %v423
      %v427 = vpack.c.b16 %v425, %v425
      %v428 = vpack.c.b16 %v426, %v426
      %vm431 = vcmask 125952
      %432 = vst.msk [vmem:[%s226] sm:$0xf] %vm431, %v427
      %433 = vst.msk [vmem:[%s226 + $0x4] sm:$0xf] %vm431, %v428
      %s434 = smul.u32 2, %s18
      %p435 = scmp.lt.s32.totalorder %s434, 3
      %s436 = scalar_select %p435, %s434, 3
      %p437 = scmp.lt.s32.totalorder %s19, 0
      %s438 = scalar_select %p437, %s19, 0
      %s439 = sadd.s32 %s438, %s436
      %s440 = smul.addr %s439, 4
      %s441 = scalar_lea.vmem %s3, %s440
      // Predicated region
      $region33: #{flatten_module_forward.5} parent=31 // pred_check
        %p442 = pneg %p124
      $region34: #{flatten_module_forward.5} parent=31 // pred_check_branch
        %444 = sbr.rel (%p442) target = $region36
      $region35: #{flatten_module_forward.5} parent=31 // pred_region
        %s445 = smul.u32 2, %s18
      $region36: #{flatten_module_forward.5} parent=31 // pred_fallthru
        _
    $region32: #{flatten_module_forward.5} parent=5 // pred_fallthru
      _
    %p446 = scmp.le.s32.totalorder 2, %s9
    // Predicated region
    $region37: #{flatten_module_forward.5} parent=5 // pred_check
      %p447 = pneg %p446
    $region38: #{flatten_module_forward.5} parent=5 // pred_check_branch
      %449 = sbr.rel (%p447) target = $region40
    $region39: #{flatten_module_forward.5} parent=5 // pred_region
      %s450 = ssub.s32 %s9, 2
      // Predicated region
      $region41: #{flatten_module_forward.5} parent=39 // pred_check
        %p451 = pneg %p130
      $region42: #{flatten_module_forward.5} parent=39 // pred_check_branch
        %453 = sbr.rel (%p451) target = $region44
      $region43: #{flatten_module_forward.5} parent=39 // pred_region
        %s454 = smul.u32 2, %s20
        %p455 = scmp.lt.s32.totalorder %s454, 3
        %s456 = scalar_select %p455, %s454, 3
        %p457 = scmp.lt.s32.totalorder %s21, 0
        %s458 = scalar_select %p457, %s21, 0
        %s459 = sadd.s32 %s458, %s456
        %s460 = smul.addr %s459, 4
        %s461 = scalar_lea.vmem %s3, %s460
      $region44: #{flatten_module_forward.5} parent=39 // pred_fallthru
        _
    $region40: #{flatten_module_forward.5} parent=5 // pred_fallthru
      _
  $region6: #{flatten_module_forward.5} parent=0 // loop_footer
    %s13 = sadd.s32 1, %s9
  $region7: #{flatten_module_forward.5} parent=0 // loop_footer_branch
    %8 = sbr.rel target = $region3
  $region8: #{flatten_module_forward.5} parent=0 // loop_exit
    _

// kernel: flatten_module_forward.6
$region0: #{flatten_module_forward.6}
  #allocation0 [shape = 'u32[]', space=smem, size = 0x4, offset = 0x4, fixed_abs, tag = 'smem constant byte address 0x4 - core index']
  #allocation1 [shape = 'u32[144,128]{1,0:T(1,128)}', space=vmem, size = 0x12000, scoped, tag = 'internal scratch']
  %s0 = inlined_call_operand.vmem [shape: bf16[2,2,2,4,4,16], index: 0, kind: input, shape index: {}]
  %s1 = inlined_call_operand.vmem [shape: bf16[25,16,32], index: 1, kind: input, shape index: {}]
  %s2 = inlined_call_operand.vmem [shape: f32[1,32], index: 2, kind: input, shape index: {}]
  %s3 = inlined_call_operand.vmem [shape: bf16[2,4,32], index: 3, kind: output, shape index: {}]
  %s4 = sld [smem:[#allocation0]]
  $region45: #{flatten_module_forward.6} parent=0
    _
  %s6 = ssub.s32 1, %s4
  %s7 = scalar_select 0, %s6, %s4
  loop: start=0, step=1, limit=4
  $region2: #{flatten_module_forward.6} parent=0 // loop_pre_header
    _
  $region3: #{flatten_module_forward.6} parent=0 // loop_header
    %s9 = sphi 0, %s13
    %p10 = scmp.ge.s32.totalorder %s9, 4
    %s16 = sphi 0, %s35
    %s17 = sphi 0, %s31
    %s18 = sphi 0, %s27
    %s19 = sphi 0, %s16
    %s20 = sphi 0, %s17
    %s21 = sphi 0, %s18
    %s22 = sphi 0, %s19
    %s23 = sphi 0, %s20
    %s24 = sphi 0, %s21
    %s38 = sphi 0, %s40
    %s41 = sphi 0, %s38
    %s42 = sphi 0, %s41
    %s58 = sphi 0, %s42
    %s64 = sphi 0, %s66
    %s67 = sphi 0, %s64
    %s68 = sphi 0, %s67
    %s84 = sphi 0, %s68
    %s90 = sphi 0, %s92
    %s93 = sphi 0, %s90
    %s94 = sphi 0, %s93
    %s110 = sphi 0, %s94
    %s120 = sphi 0, %s122
    %s123 = sphi 0, %s120
    %s124 = sphi 0, %s123
    %s140 = sphi 0, %s124
  $region4: #{flatten_module_forward.6} parent=0 // loop_header_branch
    %12 = sbr.rel (%p10) target = $region8
  $region5: #{flatten_module_forward.6} parent=0 // loop_body
    %s14 = ssub.s32 %s9, 1
    %s15 = ssub.s32 %s9, 2
    %s25 = sadd.s32 1, %s18
    %p26 = scmp.ge.s32.totalorder %s25, 1
    %s27 = scalar_select %p26, 0, %s25
    %s28 = sadd.s32 1, %s17
    %s29 = scalar_select %p26, %s28, %s17
    %p30 = scmp.ge.s32.totalorder %s29, 1
    %s31 = scalar_select %p30, 0, %s29
    %s32 = sadd.s32 1, %s16
    %s33 = scalar_select %p30, %s32, %s16
    %p34 = scmp.ge.s32.totalorder %s33, 2
    %s35 = scalar_select %p34, 0, %s33
    %s36 = ssub.s32 %s16, %s35
    %p37 = scmp.eq.s32.totalorder %s36, 0
    %s39 = sadd.s32 %s38, 1
    %s40 = scalar_select %p37, %s38, %s39
    %p43 = pneg %p37
    %p44 = scmp.eq.s32.totalorder %s9, 1
    %p45 = por %p43, %p44
    %p46 = scmp.ne.s32.totalorder %s38, %s41
    %p47 = scmp.eq.s32.totalorder %s9, 0
    %p48 = por %p46, %p47
    %p49 = scmp.ne.s32.totalorder %s38, %s41
    %p50 = scmp.eq.s32.totalorder %s14, 1
    %p51 = por %p49, %p50
    %p52 = scmp.ne.s32.totalorder %s41, %s42
    %p53 = scmp.eq.s32.totalorder %s14, 0
    %p54 = por %p52, %p53
    %p55 = scmp.ne.s32.totalorder %s41, %s42
    %p56 = scmp.eq.s32.totalorder %s15, 1
    %p57 = por %p55, %p56
    %p59 = scmp.ne.s32.totalorder %s42, %s58
    %p60 = scmp.eq.s32.totalorder %s15, 0
    %p61 = por %p59, %p60
    %s62 = ssub.s32 %s17, %s31
    %p63 = scmp.eq.s32.totalorder %s62, 0
    %s65 = sadd.s32 %s64, 1
    %s66 = scalar_select %p63, %s64, %s65
    %p69 = pneg %p63
    %p70 = scmp.eq.s32.totalorder %s9, 1
    %p71 = por %p69, %p70
    %p72 = scmp.ne.s32.totalorder %s64, %s67
    %p73 = scmp.eq.s32.totalorder %s9, 0
    %p74 = por %p72, %p73
    %p75 = scmp.ne.s32.totalorder %s64, %s67
    %p76 = scmp.eq.s32.totalorder %s14, 1
    %p77 = por %p75, %p76
    %p78 = scmp.ne.s32.totalorder %s67, %s68
    %p79 = scmp.eq.s32.totalorder %s14, 0
    %p80 = por %p78, %p79
    %p81 = scmp.ne.s32.totalorder %s67, %s68
    %p82 = scmp.eq.s32.totalorder %s15, 1
    %p83 = por %p81, %p82
    %p85 = scmp.ne.s32.totalorder %s68, %s84
    %p86 = scmp.eq.s32.totalorder %s15, 0
    %p87 = por %p85, %p86
    %s88 = ssub.s32 %s17, %s31
    %p89 = scmp.eq.s32.totalorder %s88, 0
    %s91 = sadd.s32 %s90, 1
    %s92 = scalar_select %p89, %s90, %s91
    %p95 = pneg %p89
    %p96 = scmp.eq.s32.totalorder %s9, 1
    %p97 = por %p95, %p96
    %p98 = scmp.ne.s32.totalorder %s90, %s93
    %p99 = scmp.eq.s32.totalorder %s9, 0
    %p100 = por %p98, %p99
    %p101 = scmp.ne.s32.totalorder %s90, %s93
    %p102 = scmp.eq.s32.totalorder %s14, 1
    %p103 = por %p101, %p102
    %p104 = scmp.ne.s32.totalorder %s93, %s94
    %p105 = scmp.eq.s32.totalorder %s14, 0
    %p106 = por %p104, %p105
    %p107 = scmp.ne.s32.totalorder %s93, %s94
    %p108 = scmp.eq.s32.totalorder %s15, 1
    %p109 = por %p107, %p108
    %p111 = scmp.ne.s32.totalorder %s94, %s110
    %p112 = scmp.eq.s32.totalorder %s15, 0
    %p113 = por %p111, %p112
    %s114 = ssub.s32 %s16, %s35
    %s115 = ssub.s32 %s18, %s27
    %s116 = sor.u32 %s114, %s115
    %s117 = ssub.s32 %s17, %s31
    %s118 = sor.u32 %s116, %s117
    %p119 = scmp.eq.s32.totalorder %s118, 0
    %s121 = sadd.s32 %s120, 1
    %s122 = scalar_select %p119, %s120, %s121
    %p125 = pneg %p119
    %p126 = scmp.eq.s32.totalorder %s9, 1
    %p127 = por %p125, %p126
    %p128 = scmp.ne.s32.totalorder %s120, %s123
    %p129 = scmp.eq.s32.totalorder %s9, 0
    %p130 = por %p128, %p129
    %p131 = scmp.ne.s32.totalorder %s120, %s123
    %p132 = scmp.eq.s32.totalorder %s14, 1
    %p133 = por %p131, %p132
    %p134 = scmp.ne.s32.totalorder %s123, %s124
    %p135 = scmp.eq.s32.totalorder %s14, 0
    %p136 = por %p134, %p135
    %p137 = scmp.ne.s32.totalorder %s123, %s124
    %p138 = scmp.eq.s32.totalorder %s15, 1
    %p139 = por %p137, %p138
    %p141 = scmp.ne.s32.totalorder %s124, %s140
    %p142 = scmp.eq.s32.totalorder %s15, 0
    %p143 = por %p141, %p142
    %p144 = scmp.le.s32.totalorder 1, %s9
    %p145 = scmp.lt.s32.totalorder %s9, 3
    %p146 = pnand %p144, %p145
    %p147 = pneg %p146
    // Predicated region
    $region9: #{flatten_module_forward.6} parent=5 // pred_check
      _
    $region10: #{flatten_module_forward.6} parent=5 // pred_check_branch
      %149 = sbr.rel (%p146) target = $region12
    $region11: #{flatten_module_forward.6} parent=5 // pred_region
      %s150 = ssub.s32 %s9, 1
      // Predicated region
      $region13: #{flatten_module_forward.6} parent=11 // pred_check
        %p151 = pneg %p80
      $region14: #{flatten_module_forward.6} parent=11 // pred_check_branch
        %153 = sbr.rel (%p151) target = $region16
      $region15: #{flatten_module_forward.6} parent=11 // pred_region
        %p154 = scmp.lt.s32.totalorder %s20, 0
        %s155 = scalar_select %p154, %s20, 0
        %s156 = smul.addr %s155, 4
        %s157 = scalar_lea.vmem %s1, %s156
      $region16: #{flatten_module_forward.6} parent=11 // pred_fallthru
        _
      // Predicated region
      $region17: #{flatten_module_forward.6} parent=11 // pred_check
        %p158 = pneg %p106
      $region18: #{flatten_module_forward.6} parent=11 // pred_check_branch
        %160 = sbr.rel (%p158) target = $region20
      $region19: #{flatten_module_forward.6} parent=11 // pred_region
        %p161 = scmp.lt.s32.totalorder %s20, 0
        %s162 = scalar_select %p161, %s20, 0
        %s163 = scalar_lea.vmem %s2, %s162
      $region20: #{flatten_module_forward.6} parent=11 // pred_fallthru
        _
    $region12: #{flatten_module_forward.6} parent=5 // pred_fallthru
      _
    %p164 = scmp.lt.s32.totalorder %s9, 2
    // Predicated region
    $region21: #{flatten_module_forward.6} parent=5 // pred_check
      %p165 = pneg %p164
    $region22: #{flatten_module_forward.6} parent=5 // pred_check_branch
      %167 = sbr.rel (%p165) target = $region24
    $region23: #{flatten_module_forward.6} parent=5 // pred_region
      // Predicated region
      $region25: #{flatten_module_forward.6} parent=23 // pred_check
        %p168 = pneg %p48
      $region26: #{flatten_module_forward.6} parent=23 // pred_check_branch
        %170 = sbr.rel (%p168) target = $region28
      $region27: #{flatten_module_forward.6} parent=23 // pred_region
        %p171 = scmp.lt.s32.totalorder %s16, 1
        %s172 = scalar_select %p171, %s16, 1
        %s173 = smul.addr %s172, 16
        %s174 = smul.addr %s173, 2
        %s175 = scalar_lea.vmem %s0, %s174
      $region28: #{flatten_module_forward.6} parent=23 // pred_fallthru
        _
    $region24: #{flatten_module_forward.6} parent=5 // pred_fallthru
      _
    %p176 = scmp.le.s32.totalorder 1, %s9
    %p177 = scmp.lt.s32.totalorder %s9, 3
    %p178 = pnand %p176, %p177
    %p179 = pneg %p178
    // Predicated region
    $region29: #{flatten_module_forward.6} parent=5 // pred_check
      _
    $region30: #{flatten_module_forward.6} parent=5 // pred_check_branch
      %181 = sbr.rel (%p178) target = $region32
    $region31: #{flatten_module_forward.6} parent=5 // pred_region
      %s182 = ssub.s32 %s9, 1
      %p183 = scmp.lt.s32.totalorder %s19, 1
      %s184 = scalar_select %p183, %s19, 1
      %s185 = smul.addr %s184, 16
      %s186 = smul.addr %s185, 2
      %s187 = scalar_lea.vmem %s0, %s186
      %p188 = pneg %p54
      %p189 = pneg %p51
      %p190 = scmp.lt.s32.totalorder %s20, 0
      %s191 = scalar_select %p190, %s20, 0
      %s192 = smul.addr %s191, 4
      %s193 = scalar_lea.vmem %s1, %s192
      %p194 = pneg %p80
      %p195 = pneg %p77
      %p196 = scmp.lt.s32.totalorder %s20, 0
      %s197 = scalar_select %p196, %s20, 0
      %s198 = scalar_lea.vmem %s2, %s197
      %p199 = pneg %p106
      %p200 = pneg %p103
      %p201 = pneg %p136
      %p202 = pneg %p133
      %p203 = scmp.lt.s32.totalorder %s19, 1
      %s204 = scalar_select %p203, %s19, 1
      %p205 = scmp.lt.s32.totalorder %s21, 0
      %s206 = scalar_select %p205, %s21, 0
      %p207 = scmp.lt.s32.totalorder %s20, 0
      %s208 = scalar_select %p207, %s20, 0
      %s209 = sadd.s32 %s208, %s206
      %s210 = sadd.s32 %s209, %s204
      %s211 = smul.addr %s210, 2
      %s212 = scalar_lea.vmem %s3, %s211
      %p213 = scmp.lt.s32.totalorder %s19, 1
      %s214 = scalar_select %p213, %s19, 1
      %s215 = smul.addr %s214, 16
      %s216 = smul.addr %s215, 2
      %s217 = scalar_lea.vmem %s0, %s216
      %p218 = scmp.lt.s32.totalorder %s20, 0
      %s219 = scalar_select %p218, %s20, 0
      %s220 = smul.addr %s219, 4
      %s221 = scalar_lea.vmem %s1, %s220
      %p222 = scmp.lt.s32.totalorder %s20, 0
      %s223 = scalar_select %p222, %s20, 0
      %s224 = scalar_lea.vmem %s2, %s223
      %p225 = scmp.lt.s32.totalorder %s19, 1
      %s226 = scalar_select %p225, %s19, 1
      %p227 = scmp.lt.s32.totalorder %s21, 0
      %s228 = scalar_select %p227, %s21, 0
      %p229 = scmp.lt.s32.totalorder %s20, 0
      %s230 = scalar_select %p229, %s20, 0
      %s231 = sadd.s32 %s230, %s228
      %s232 = sadd.s32 %s231, %s226
      %s233 = smul.addr %s232, 2
      %s234 = scalar_lea.vmem %s3, %s233
      %s236 = smul.u32 %s21, 2
      %s237 = smul.addr %s236, 2
      %s238 = scalar_lea.vmem %s217, %s237
      %v239 = vld [vmem:[%s238] sm:$0x1]
      %v240 = vld [vmem:[%s238 + $0x2] sm:$0x1]
      %v241 = vld [vmem:[%s221] sm:$0xf]
      %v242 = vld [vmem:[%s221 + $0x4] sm:$0xf]
      %s243 = sadd.s32 %s236, 4
      %s244 = smul.addr %s243, 2
      %s245 = scalar_lea.vmem %s217, %s244
      %v246 = vld [vmem:[%s245] sm:$0x1]
      %v247 = vld [vmem:[%s245 + $0x2] sm:$0x1]
      %s248 = scalar_lea.vmem %s221, 8
      %v249 = vld [vmem:[%s248] sm:$0xf]
      %v250 = vld [vmem:[%s248 + $0x4] sm:$0xf]
      %v253 = vcombine.low %v246, %v247
      %v255 = vunpack.c.l.s4 1966171168
      %v256 = vunpack.c.0.s8 %v255
      %v257 = vlaneseq
      %v258 = vshrl.u32 %v257, 7
      %v259 = vsub.s32 %v256, %v258
      %v260 = vrot.slane %v253, %v259
      %v262 = vunpack.c.l.s4 1966171168
      %v263 = vunpack.c.0.s8 %v262
      %v264 = vlaneseq
      %v265 = vshrl.u32 %v264, 7
      %v266 = vsub.s32 %v263, %v265
      %v267 = vrot.slane %v260, %v266
      %v270 = vunpack.c.l.b16 %v249
      %v271 = vunpack.c.l.b16 %v250
      %v272 = vpack.c.b16 %v271, %v270
      %vm274 = vcmask 130048
      %v276 = vsel %vm274, %v267, 0
      %278 = vmatprep.subr.bf16.mxu0 0
      %279 = vmatpush1.bf16.msra.mxu0 %v272
      %280 = vmatprep.subr.bf16.mxu0 0
      %281 = vmatpush1.bf16.msra.mxu0 0
      %282 = vmatprep.subr.bf16.mxu0 0
      %283 = vmatpush1.bf16.msra.mxu0 0
      %284 = vmatprep.subr.bf16.mxu0 0
      %285 = vmatpush1.bf16.msra.mxu0 0
      %286 = vmatprep.subr.bf16.mxu0 0
      %287 = vmatpush1.bf16.msra.mxu0 0
      %288 = vmatprep.subr.bf16.mxu0 0
      %289 = vmatpush1.bf16.msra.mxu0 0
      %290 = vmatprep.subr.bf16.mxu0 0
      %291 = vmatpush1.bf16.msra.mxu0 0
      %292 = vmatprep.subr.bf16.mxu0 0
      %293 = vmatpush1.bf16.msra.mxu0 0
      %294 = vmatprep.subr.bf16.mxu0 0
      %295 = vmatpush1.bf16.msra.mxu0 0
      %296 = vmatprep.subr.bf16.mxu0 0
      %297 = vmatpush1.bf16.msra.mxu0 0
      %298 = vmatprep.subr.bf16.mxu0 0
      %299 = vmatpush1.bf16.msra.mxu0 0
      %300 = vmatprep.subr.bf16.mxu0 0
      %301 = vmatpush1.bf16.msra.mxu0 0
      %302 = vmatprep.subr.bf16.mxu0 0
      %303 = vmatpush1.bf16.msra.mxu0 0
      %304 = vmatprep.subr.bf16.mxu0 0
      %305 = vmatpush1.bf16.msra.mxu0 0
      %306 = vmatprep.subr.bf16.mxu0 0
      %307 = vmatpush1.bf16.msra.mxu0 0
      %308 = vmatprep.subr.bf16.mxu0 0
      %309 = vmatpush1.bf16.msra.mxu0 0
      %310 = vmatprep.mubr.bf16.mxu0 0
      %311 = vmatmul.mubr.bf16.gmra.mrb[0].mxu0 %v276
      %v312 = vpop.f32.mrb[0].mxu0
      %v313 = vadd.f32 0.0, %v312
      %v314 = vpop.f32.mrb[0].mxu0
      %v315 = vpop.f32.mrb[0].mxu0
      %v316 = vpop.f32.mrb[0].mxu0
      %317 = vdwg.mxu0
      %v320 = vcombine.low %v239, %v240
      %v322 = vunpack.c.l.s4 1966171168
      %v323 = vunpack.c.0.s8 %v322
      %v324 = vlaneseq
      %v325 = vshrl.u32 %v324, 7
      %v326 = vsub.s32 %v323, %v325
      %v327 = vrot.slane %v320, %v326
      %v329 = vunpack.c.l.s4 1966171168
      %v330 = vunpack.c.0.s8 %v329
      %v331 = vlaneseq
      %v332 = vshrl.u32 %v331, 7
      %v333 = vsub.s32 %v330, %v332
      %v334 = vrot.slane %v327, %v333
      %v337 = vunpack.c.l.b16 %v241
      %v338 = vunpack.c.l.b16 %v242
      %v339 = vpack.c.b16 %v338, %v337
      %v342 = vsel %vm274, %v334, 0
      %344 = vmatprep.subr.bf16.mxu0 0
      %345 = vmatpush1.bf16.msra.mxu0 %v339
      %346 = vmatprep.subr.bf16.mxu0 0
      %347 = vmatpush1.bf16.msra.mxu0 0
      %348 = vmatprep.subr.bf16.mxu0 0
      %349 = vmatpush1.bf16.msra.mxu0 0
      %350 = vmatprep.subr.bf16.mxu0 0
      %351 = vmatpush1.bf16.msra.mxu0 0
      %352 = vmatprep.subr.bf16.mxu0 0
      %353 = vmatpush1.bf16.msra.mxu0 0
      %354 = vmatprep.subr.bf16.mxu0 0
      %355 = vmatpush1.bf16.msra.mxu0 0
      %356 = vmatprep.subr.bf16.mxu0 0
      %357 = vmatpush1.bf16.msra.mxu0 0
      %358 = vmatprep.subr.bf16.mxu0 0
      %359 = vmatpush1.bf16.msra.mxu0 0
      %360 = vmatprep.subr.bf16.mxu0 0
      %361 = vmatpush1.bf16.msra.mxu0 0
      %362 = vmatprep.subr.bf16.mxu0 0
      %363 = vmatpush1.bf16.msra.mxu0 0
      %364 = vmatprep.subr.bf16.mxu0 0
      %365 = vmatpush1.bf16.msra.mxu0 0
      %366 = vmatprep.subr.bf16.mxu0 0
      %367 = vmatpush1.bf16.msra.mxu0 0
      %368 = vmatprep.subr.bf16.mxu0 0
      %369 = vmatpush1.bf16.msra.mxu0 0
      %370 = vmatprep.subr.bf16.mxu0 0
      %371 = vmatpush1.bf16.msra.mxu0 0
      %372 = vmatprep.subr.bf16.mxu0 0
      %373 = vmatpush1.bf16.msra.mxu0 0
      %374 = vmatprep.subr.bf16.mxu0 0
      %375 = vmatpush1.bf16.msra.mxu0 0
      %376 = vmatprep.mubr.bf16.mxu0 0
      %377 = vmatmul.mubr.bf16.gmra.mrb[0].mxu0 %v342
      %v378 = vpop.f32.mrb[0].mxu0
      %v379 = vadd.f32 %v313, %v378
      %v380 = vpop.f32.mrb[0].mxu0
      %v381 = vpop.f32.mrb[0].mxu0
      %v382 = vpop.f32.mrb[0].mxu0
      %383 = vdwg.mxu0
      %v384 = vld [vmem:[%s238] sm:$0x3]
      %v385 = vld [vmem:[%s238 + $0x2] sm:$0x3]
      %v389 = vunpack.c.l.s4 1966171168
      %v390 = vunpack.c.0.s8 %v389
      %v391 = vlaneseq
      %v392 = vshrl.u32 %v391, 7
      %v393 = vsub.s32 %v390, %v392
      %v394 = vrot.slane %v384, %v393
      %v395 = vcombine.high %v394, %v394
      %v397 = vunpack.c.l.s4 1966171168
      %v398 = vunpack.c.0.s8 %v397
      %v399 = vlaneseq
      %v400 = vshrl.u32 %v399, 7
      %v401 = vsub.s32 %v398, %v400
      %v402 = vrot.slane %v385, %v401
      %v403 = vcombine.high %v402, %v402
      %vm404 = vsmask.f32 256
      %vm405 = vsmask.f32 1284
      %vm406 = vmor %vm404, %vm405
      %vm407 = vsmask.f32 2312
      %vm408 = vmor %vm406, %vm407
      %vm409 = vsmask.f32 3340
      %vm410 = vmor %vm408, %vm409
      %vm411 = vsmask.f32 4368
      %vm412 = vmor %vm410, %vm411
      %vm413 = vsmask.f32 5396
      %vm414 = vmor %vm412, %vm413
      %vm415 = vsmask.f32 6424
      %vm416 = vmor %vm414, %vm415
      %vm417 = vsmask.f32 7452
      %vm418 = vmor %vm416, %vm417
      %v420 = vshrl.u32 %v394, 16
      %v422 = vrot.slane %v420, 7
      %v423 = vrot.slane %v422, 1
      %v425 = vshll.u32 %v395, 16
      %v427 = vsel %vm418, %v423, %v425
      %v429 = vshrl.u32 %v402, 16
      %v431 = vrot.slane %v429, 7
      %v432 = vrot.slane %v431, 1
      %v434 = vshll.u32 %v403, 16
      %v436 = vsel %vm418, %v432, %v434
      %s437 = scalar_lea.vmem %s221, 16
      %v438 = vld [vmem:[%s437] sm:$0xf]
      %v439 = vld [vmem:[%s437 + $0x4] sm:$0xf]
      %v440 = vcombine.low %v427, %v436
      %v442 = vunpack.c.l.s4 1966171168
      %v443 = vunpack.c.0.s8 %v442
      %v444 = vlaneseq
      %v445 = vshrl.u32 %v444, 7
      %v446 = vsub.s32 %v443, %v445
      %v447 = vrot.slane %v440, %v446
      %v449 = vunpack.c.l.s4 1966171168
      %v450 = vunpack.c.0.s8 %v449
      %v451 = vlaneseq
      %v452 = vshrl.u32 %v451, 7
      %v453 = vsub.s32 %v450, %v452
      %v454 = vrot.slane %v447, %v453
      %v457 = vunpack.c.l.b16 %v438
      %v458 = vunpack.c.l.b16 %v439
      %v459 = vpack.c.b16 %v458, %v457
      %v462 = vsel %vm274, %v454, 0
      %464 = vmatprep.subr.bf16.mxu0 0
      %465 = vmatpush1.bf16.msra.mxu0 %v459
      %466 = vmatprep.subr.bf16.mxu0 0
      %467 = vmatpush1.bf16.msra.mxu0 0
      %468 = vmatprep.subr.bf16.mxu0 0
      %469 = vmatpush1.bf16.msra.mxu0 0
      %470 = vmatprep.subr.bf16.mxu0 0
      %471 = vmatpush1.bf16.msra.mxu0 0
      %472 = vmatprep.subr.bf16.mxu0 0
      %473 = vmatpush1.bf16.msra.mxu0 0
      %474 = vmatprep.subr.bf16.mxu0 0
      %475 = vmatpush1.bf16.msra.mxu0 0
      %476 = vmatprep.subr.bf16.mxu0 0
      %477 = vmatpush1.bf16.msra.mxu0 0
      %478 = vmatprep.subr.bf16.mxu0 0
      %479 = vmatpush1.bf16.msra.mxu0 0
      %480 = vmatprep.subr.bf16.mxu0 0
      %481 = vmatpush1.bf16.msra.mxu0 0
      %482 = vmatprep.subr.bf16.mxu0 0
      %483 = vmatpush1.bf16.msra.mxu0 0
      %484 = vmatprep.subr.bf16.mxu0 0
      %485 = vmatpush1.bf16.msra.mxu0 0
      %486 = vmatprep.subr.bf16.mxu0 0
      %487 = vmatpush1.bf16.msra.mxu0 0
      %488 = vmatprep.subr.bf16.mxu0 0
      %489 = vmatpush1.bf16.msra.mxu0 0
      %490 = vmatprep.subr.bf16.mxu0 0
      %491 = vmatpush1.bf16.msra.mxu0 0
      %492 = vmatprep.subr.bf16.mxu0 0
      %493 = vmatpush1.bf16.msra.mxu0 0
      %494 = vmatprep.subr.bf16.mxu0 0
      %495 = vmatpush1.bf16.msra.mxu0 0
      %496 = vmatprep.mubr.bf16.mxu0 0
      %497 = vmatmul.mubr.bf16.gmra.mrb[0].mxu0 %v462
      %v498 = vpop.f32.mrb[0].mxu0
      %v499 = vadd.f32 0.0, %v498
      %v500 = vpop.f32.mrb[0].mxu0
      %v501 = vpop.f32.mrb[0].mxu0
      %v502 = vpop.f32.mrb[0].mxu0
      %503 = vdwg.mxu0
      %v504 = vadd.f32 %v379, %v499
      %v505 = vld [vmem:[%s245] sm:$0x3]
      %v506 = vld [vmem:[%s245 + $0x2] sm:$0x3]
      %v510 = vunpack.c.l.s4 1966171168
      %v511 = vunpack.c.0.s8 %v510
      %v512 = vlaneseq
      %v513 = vshrl.u32 %v512, 7
      %v514 = vsub.s32 %v511, %v513
      %v515 = vrot.slane %v505, %v514
      %v516 = vcombine.high %v515, %v515
      %v518 = vunpack.c.l.s4 1966171168
      %v519 = vunpack.c.0.s8 %v518
      %v520 = vlaneseq
      %v521 = vshrl.u32 %v520, 7
      %v522 = vsub.s32 %v519, %v521
      %v523 = vrot.slane %v506, %v522
      %v524 = vcombine.high %v523, %v523
      %v526 = vshrl.u32 %v515, 16
      %v528 = vrot.slane %v526, 7
      %v529 = vrot.slane %v528, 1
      %v531 = vshll.u32 %v516, 16
      %v533 = vsel %vm418, %v529, %v531
      %v535 = vshrl.u32 %v523, 16
      %v537 = vrot.slane %v535, 7
      %v538 = vrot.slane %v537, 1
      %v540 = vshll.u32 %v524, 16
      %v542 = vsel %vm418, %v538, %v540
      %s543 = scalar_lea.vmem %s221, 24
      %v544 = vld [vmem:[%s543] sm:$0xf]
      %v545 = vld [vmem:[%s543 + $0x4] sm:$0xf]
      %v546 = vcombine.low %v533, %v542
      %v548 = vunpack.c.l.s4 1966171168
      %v549 = vunpack.c.0.s8 %v548
      %v550 = vlaneseq
      %v551 = vshrl.u32 %v550, 7
      %v552 = vsub.s32 %v549, %v551
      %v553 = vrot.slane %v546, %v552
      %v555 = vunpack.c.l.s4 1966171168
      %v556 = vunpack.c.0.s8 %v555
      %v557 = vlaneseq
      %v558 = vshrl.u32 %v557, 7
      %v559 = vsub.s32 %v556, %v558
      %v560 = vrot.slane %v553, %v559
      %v563 = vunpack.c.l.b16 %v544
      %v564 = vunpack.c.l.b16 %v545
      %v565 = vpack.c.b16 %v564, %v563
      %v568 = vsel %vm274, %v560, 0
      %570 = vmatprep.subr.bf16.mxu0 0
      %571 = vmatpush1.bf16.msra.mxu0 %v565
      %572 = vmatprep.subr.bf16.mxu0 0
      %573 = vmatpush1.bf16.msra.mxu0 0
      %574 = vmatprep.subr.bf16.mxu0 0
      %575 = vmatpush1.bf16.msra.mxu0 0
      %576 = vmatprep.subr.bf16.mxu0 0
      %577 = vmatpush1.bf16.msra.mxu0 0
      %578 = vmatprep.subr.bf16.mxu0 0
      %579 = vmatpush1.bf16.msra.mxu0 0
      %580 = vmatprep.subr.bf16.mxu0 0
      %581 = vmatpush1.bf16.msra.mxu0 0
      %582 = vmatprep.subr.bf16.mxu0 0
      %583 = vmatpush1.bf16.msra.mxu0 0
      %584 = vmatprep.subr.bf16.mxu0 0
      %585 = vmatpush1.bf16.msra.mxu0 0
      %586 = vmatprep.subr.bf16.mxu0 0
      %587 = vmatpush1.bf16.msra.mxu0 0
      %588 = vmatprep.subr.bf16.mxu0 0
      %589 = vmatpush1.bf16.msra.mxu0 0
      %590 = vmatprep.subr.bf16.mxu0 0
      %591 = vmatpush1.bf16.msra.mxu0 0
      %592 = vmatprep.subr.bf16.mxu0 0
      %593 = vmatpush1.bf16.msra.mxu0 0
      %594 = vmatprep.subr.bf16.mxu0 0
      %595 = vmatpush1.bf16.msra.mxu0 0
      %596 = vmatprep.subr.bf16.mxu0 0
      %597 = vmatpush1.bf16.msra.mxu0 0
      %598 = vmatprep.subr.bf16.mxu0 0
      %599 = vmatpush1.bf16.msra.mxu0 0
      %600 = vmatprep.subr.bf16.mxu0 0
      %601 = vmatpush1.bf16.msra.mxu0 0
      %602 = vmatprep.mubr.bf16.mxu0 0
      %603 = vmatmul.mubr.bf16.gmra.mrb[0].mxu0 %v568
      %v604 = vpop.f32.mrb[0].mxu0
      %v605 = vadd.f32 0.0, %v604
      %v606 = vpop.f32.mrb[0].mxu0
      %v607 = vpop.f32.mrb[0].mxu0
      %v608 = vpop.f32.mrb[0].mxu0
      %609 = vdwg.mxu0
      %v610 = vadd.f32 %v504, %v605
      %v611 = vld [vmem:[%s238] sm:$0x2]
      %v612 = vld [vmem:[%s238 + $0x2] sm:$0x2]
      %v616 = vunpack.c.l.s4 1966171168
      %v617 = vunpack.c.0.s8 %v616
      %v618 = vlaneseq
      %v619 = vshrl.u32 %v618, 7
      %v620 = vsub.s32 %v617, %v619
      %v621 = vrot.slane %v611, %v620
      %v622 = vcombine.high %v621, %v621
      %v624 = vunpack.c.l.s4 1966171168
      %v625 = vunpack.c.0.s8 %v624
      %v626 = vlaneseq
      %v627 = vshrl.u32 %v626, 7
      %v628 = vsub.s32 %v625, %v627
      %v629 = vrot.slane %v612, %v628
      %v630 = vcombine.high %v629, %v629
      %s631 = scalar_lea.vmem %s221, 32
      %v632 = vld [vmem:[%s631] sm:$0xf]
      %v633 = vld [vmem:[%s631 + $0x4] sm:$0xf]
      %v634 = vcombine.low %v622, %v630
      %v636 = vunpack.c.l.s4 1966171168
      %v637 = vunpack.c.0.s8 %v636
      %v638 = vlaneseq
      %v639 = vshrl.u32 %v638, 7
      %v640 = vsub.s32 %v637, %v639
      %v641 = vrot.slane %v634, %v640
      %v643 = vunpack.c.l.s4 1966171168
      %v644 = vunpack.c.0.s8 %v643
      %v645 = vlaneseq
      %v646 = vshrl.u32 %v645, 7
      %v647 = vsub.s32 %v644, %v646
      %v648 = vrot.slane %v641, %v647
      %v651 = vunpack.c.l.b16 %v632
      %v652 = vunpack.c.l.b16 %v633
      %v653 = vpack.c.b16 %v652, %v651
      %v656 = vsel %vm274, %v648, 0
      %658 = vmatprep.subr.bf16.mxu0 0
      %659 = vmatpush1.bf16.msra.mxu0 %v653
      %660 = vmatprep.subr.bf16.mxu0 0
      %661 = vmatpush1.bf16.msra.mxu0 0
      %662 = vmatprep.subr.bf16.mxu0 0
      %663 = vmatpush1.bf16.msra.mxu0 0
      %664 = vmatprep.subr.bf16.mxu0 0
      %665 = vmatpush1.bf16.msra.mxu0 0
      %666 = vmatprep.subr.bf16.mxu0 0
      %667 = vmatpush1.bf16.msra.mxu0 0
      %668 = vmatprep.subr.bf16.mxu0 0
      %669 = vmatpush1.bf16.msra.mxu0 0
      %670 = vmatprep.subr.bf16.mxu0 0
      %671 = vmatpush1.bf16.msra.mxu0 0
      %672 = vmatprep.subr.bf16.mxu0 0
      %673 = vmatpush1.bf16.msra.mxu0 0
      %674 = vmatprep.subr.bf16.mxu0 0
      %675 = vmatpush1.bf16.msra.mxu0 0
      %676 = vmatprep.subr.bf16.mxu0 0
      %677 = vmatpush1.bf16.msra.mxu0 0
      %678 = vmatprep.subr.bf16.mxu0 0
      %679 = vmatpush1.bf16.msra.mxu0 0
      %680 = vmatprep.subr.bf16.mxu0 0
      %681 = vmatpush1.bf16.msra.mxu0 0
      %682 = vmatprep.subr.bf16.mxu0 0
      %683 = vmatpush1.bf16.msra.mxu0 0
      %684 = vmatprep.subr.bf16.mxu0 0
      %685 = vmatpush1.bf16.msra.mxu0 0
      %686 = vmatprep.subr.bf16.mxu0 0
      %687 = vmatpush1.bf16.msra.mxu0 0
      %688 = vmatprep.subr.bf16.mxu0 0
      %689 = vmatpush1.bf16.msra.mxu0 0
      %690 = vmatprep.mubr.bf16.mxu0 0
      %691 = vmatmul.mubr.bf16.gmra.mrb[0].mxu0 %v656
      %v692 = vpop.f32.mrb[0].mxu0
      %v693 = vadd.f32 0.0, %v692
      %v694 = vpop.f32.mrb[0].mxu0
      %v695 = vpop.f32.mrb[0].mxu0
      %v696 = vpop.f32.mrb[0].mxu0
      %697 = vdwg.mxu0
      %v698 = vadd.f32 %v610, %v693
      %s699 = sadd.s32 %s236, 8
      %s700 = smul.addr %s699, 2
      %s701 = scalar_lea.vmem %s217, %s700
      %v702 = vld [vmem:[%s701] sm:$0x1]
      %v703 = vld [vmem:[%s701 + $0x2] sm:$0x1]
      %s704 = scalar_lea.vmem %s221, 40
      %v705 = vld [vmem:[%s704] sm:$0xf]
      %v706 = vld [vmem:[%s704 + $0x4] sm:$0xf]
      %v709 = vcombine.low %v702, %v703
      %v711 = vunpack.c.l.s4 1966171168
      %v712 = vunpack.c.0.s8 %v711
      %v713 = vlaneseq
      %v714 = vshrl.u32 %v713, 7
      %v715 = vsub.s32 %v712, %v714
      %v716 = vrot.slane %v709, %v715
      %v718 = vunpack.c.l.s4 1966171168
      %v719 = vunpack.c.0.s8 %v718
      %v720 = vlaneseq
      %v721 = vshrl.u32 %v720, 7
      %v722 = vsub.s32 %v719, %v721
      %v723 = vrot.slane %v716, %v722
      %v726 = vunpack.c.l.b16 %v705
      %v727 = vunpack.c.l.b16 %v706
      %v728 = vpack.c.b16 %v727, %v726
      %v731 = vsel %vm274, %v723, 0
      %733 = vmatprep.subr.bf16.mxu0 0
      %734 = vmatpush1.bf16.msra.mxu0 %v728
      %735 = vmatprep.subr.bf16.mxu0 0
      %736 = vmatpush1.bf16.msra.mxu0 0
      %737 = vmatprep.subr.bf16.mxu0 0
      %738 = vmatpush1.bf16.msra.mxu0 0
      %739 = vmatprep.subr.bf16.mxu0 0
      %740 = vmatpush1.bf16.msra.mxu0 0
      %741 = vmatprep.subr.bf16.mxu0 0
      %742 = vmatpush1.bf16.msra.mxu0 0
      %743 = vmatprep.subr.bf16.mxu0 0
      %744 = vmatpush1.bf16.msra.mxu0 0
      %745 = vmatprep.subr.bf16.mxu0 0
      %746 = vmatpush1.bf16.msra.mxu0 0
      %747 = vmatprep.subr.bf16.mxu0 0
      %748 = vmatpush1.bf16.msra.mxu0 0
      %749 = vmatprep.subr.bf16.mxu0 0
      %750 = vmatpush1.bf16.msra.mxu0 0
      %751 = vmatprep.subr.bf16.mxu0 0
      %752 = vmatpush1.bf16.msra.mxu0 0
      %753 = vmatprep.subr.bf16.mxu0 0
      %754 = vmatpush1.bf16.msra.mxu0 0
      %755 = vmatprep.subr.bf16.mxu0 0
      %756 = vmatpush1.bf16.msra.mxu0 0
      %757 = vmatprep.subr.bf16.mxu0 0
      %758 = vmatpush1.bf16.msra.mxu0 0
      %759 = vmatprep.subr.bf16.mxu0 0
      %760 = vmatpush1.bf16.msra.mxu0 0
      %761 = vmatprep.subr.bf16.mxu0 0
      %762 = vmatpush1.bf16.msra.mxu0 0
      %763 = vmatprep.subr.bf16.mxu0 0
      %764 = vmatpush1.bf16.msra.mxu0 0
      %765 = vmatprep.mubr.bf16.mxu0 0
      %766 = vmatmul.mubr.bf16.gmra.mrb[0].mxu0 %v731
      %v767 = vpop.f32.mrb[0].mxu0
      %v768 = vadd.f32 0.0, %v767
      %v769 = vpop.f32.mrb[0].mxu0
      %v770 = vpop.f32.mrb[0].mxu0
      %v771 = vpop.f32.mrb[0].mxu0
      %772 = vdwg.mxu0
      %v773 = vadd.f32 %v698, %v768
      %s774 = sadd.s32 %s243, 8
      %s775 = smul.addr %s774, 2
      %s776 = scalar_lea.vmem %s217, %s775
      %v777 = vld [vmem:[%s776] sm:$0x1]
      %v778 = vld [vmem:[%s776 + $0x2] sm:$0x1]
      %s779 = scalar_lea.vmem %s221, 48
      %v780 = vld [vmem:[%s779] sm:$0xf]
      %v781 = vld [vmem:[%s779 + $0x4] sm:$0xf]
      %v784 = vcombine.low %v777, %v778
      %v786 = vunpack.c.l.s4 1966171168
      %v787 = vunpack.c.0.s8 %v786
      %v788 = vlaneseq
      %v789 = vshrl.u32 %v788, 7
      %v790 = vsub.s32 %v787, %v789
      %v791 = vrot.slane %v784, %v790
      %v793 = vunpack.c.l.s4 1966171168
      %v794 = vunpack.c.0.s8 %v793
      %v795 = vlaneseq
      %v796 = vshrl.u32 %v795, 7
      %v797 = vsub.s32 %v794, %v796
      %v798 = vrot.slane %v791, %v797
      %v801 = vunpack.c.l.b16 %v780
      %v802 = vunpack.c.l.b16 %v781
      %v803 = vpack.c.b16 %v802, %v801
      %v806 = vsel %vm274, %v798, 0
      %808 = vmatprep.subr.bf16.mxu0 0
      %809 = vmatpush1.bf16.msra.mxu0 %v803
      %810 = vmatprep.subr.bf16.mxu0 0
      %811 = vmatpush1.bf16.msra.mxu0 0
      %812 = vmatprep.subr.bf16.mxu0 0
      %813 = vmatpush1.bf16.msra.mxu0 0
      %814 = vmatprep.subr.bf16.mxu0 0
      %815 = vmatpush1.bf16.msra.mxu0 0
      %816 = vmatprep.subr.bf16.mxu0 0
      %817 = vmatpush1.bf16.msra.mxu0 0
      %818 = vmatprep.subr.bf16.mxu0 0
      %819 = vmatpush1.bf16.msra.mxu0 0
      %820 = vmatprep.subr.bf16.mxu0 0
      %821 = vmatpush1.bf16.msra.mxu0 0
      %822 = vmatprep.subr.bf16.mxu0 0
      %823 = vmatpush1.bf16.msra.mxu0 0
      %824 = vmatprep.subr.bf16.mxu0 0
      %825 = vmatpush1.bf16.msra.mxu0 0
      %826 = vmatprep.subr.bf16.mxu0 0
      %827 = vmatpush1.bf16.msra.mxu0 0
      %828 = vmatprep.subr.bf16.mxu0 0
      %829 = vmatpush1.bf16.msra.mxu0 0
      %830 = vmatprep.subr.bf16.mxu0 0
      %831 = vmatpush1.bf16.msra.mxu0 0
      %832 = vmatprep.subr.bf16.mxu0 0
      %833 = vmatpush1.bf16.msra.mxu0 0
      %834 = vmatprep.subr.bf16.mxu0 0
      %835 = vmatpush1.bf16.msra.mxu0 0
      %836 = vmatprep.subr.bf16.mxu0 0
      %837 = vmatpush1.bf16.msra.mxu0 0
      %838 = vmatprep.subr.bf16.mxu0 0
      %839 = vmatpush1.bf16.msra.mxu0 0
      %840 = vmatprep.mubr.bf16.mxu0 0
      %841 = vmatmul.mubr.bf16.gmra.mrb[0].mxu0 %v806
      %v842 = vpop.f32.mrb[0].mxu0
      %v843 = vadd.f32 0.0, %v842
      %v844 = vpop.f32.mrb[0].mxu0
      %v845 = vpop.f32.mrb[0].mxu0
      %v846 = vpop.f32.mrb[0].mxu0
      %847 = vdwg.mxu0
      %v848 = vadd.f32 %v773, %v843
      %v849 = vld [vmem:[%s701] sm:$0x3]
      %v850 = vld [vmem:[%s701 + $0x2] sm:$0x3]
      %v854 = vunpack.c.l.s4 1966171168
      %v855 = vunpack.c.0.s8 %v854
      %v856 = vlaneseq
      %v857 = vshrl.u32 %v856, 7
      %v858 = vsub.s32 %v855, %v857
      %v859 = vrot.slane %v849, %v858
      %v860 = vcombine.high %v859, %v859
      %v862 = vunpack.c.l.s4 1966171168
      %v863 = vunpack.c.0.s8 %v862
      %v864 = vlaneseq
      %v865 = vshrl.u32 %v864, 7
      %v866 = vsub.s32 %v863, %v865
      %v867 = vrot.slane %v850, %v866
      %v868 = vcombine.high %v867, %v867
      %v870 = vshrl.u32 %v859, 16
      %v872 = vrot.slane %v870, 7
      %v873 = vrot.slane %v872, 1
      %v875 = vshll.u32 %v860, 16
      %v877 = vsel %vm418, %v873, %v875
      %v879 = vshrl.u32 %v867, 16
      %v881 = vrot.slane %v879, 7
      %v882 = vrot.slane %v881, 1
      %v884 = vshll.u32 %v868, 16
      %v886 = vsel %vm418, %v882, %v884
      %s887 = scalar_lea.vmem %s221, 56
      %v888 = vld [vmem:[%s887] sm:$0xf]
      %v889 = vld [vmem:[%s887 + $0x4] sm:$0xf]
      %v890 = vcombine.low %v877, %v886
      %v892 = vunpack.c.l.s4 1966171168
      %v893 = vunpack.c.0.s8 %v892
      %v894 = vlaneseq
      %v895 = vshrl.u32 %v894, 7
      %v896 = vsub.s32 %v893, %v895
      %v897 = vrot.slane %v890, %v896
      %v899 = vunpack.c.l.s4 1966171168
      %v900 = vunpack.c.0.s8 %v899
      %v901 = vlaneseq
      %v902 = vshrl.u32 %v901, 7
      %v903 = vsub.s32 %v900, %v902
      %v904 = vrot.slane %v897, %v903
      %v907 = vunpack.c.l.b16 %v888
      %v908 = vunpack.c.l.b16 %v889
      %v909 = vpack.c.b16 %v908, %v907
      %v912 = vsel %vm274, %v904, 0
      %914 = vmatprep.subr.bf16.mxu0 0
      %915 = vmatpush1.bf16.msra.mxu0 %v909
      %916 = vmatprep.subr.bf16.mxu0 0
      %917 = vmatpush1.bf16.msra.mxu0 0
      %918 = vmatprep.subr.bf16.mxu0 0
      %919 = vmatpush1.bf16.msra.mxu0 0
      %920 = vmatprep.subr.bf16.mxu0 0
      %921 = vmatpush1.bf16.msra.mxu0 0
      %922 = vmatprep.subr.bf16.mxu0 0
      %923 = vmatpush1.bf16.msra.mxu0 0
      %924 = vmatprep.subr.bf16.mxu0 0
      %925 = vmatpush1.bf16.msra.mxu0 0
      %926 = vmatprep.subr.bf16.mxu0 0
      %927 = vmatpush1.bf16.msra.mxu0 0
      %928 = vmatprep.subr.bf16.mxu0 0
      %929 = vmatpush1.bf16.msra.mxu0 0
      %930 = vmatprep.subr.bf16.mxu0 0
      %931 = vmatpush1.bf16.msra.mxu0 0
      %932 = vmatprep.subr.bf16.mxu0 0
      %933 = vmatpush1.bf16.msra.mxu0 0
      %934 = vmatprep.subr.bf16.mxu0 0
      %935 = vmatpush1.bf16.msra.mxu0 0
      %936 = vmatprep.subr.bf16.mxu0 0
      %937 = vmatpush1.bf16.msra.mxu0 0
      %938 = vmatprep.subr.bf16.mxu0 0
      %939 = vmatpush1.bf16.msra.mxu0 0
      %940 = vmatprep.subr.bf16.mxu0 0
      %941 = vmatpush1.bf16.msra.mxu0 0
      %942 = vmatprep.subr.bf16.mxu0 0
      %943 = vmatpush1.bf16.msra.mxu0 0
      %944 = vmatprep.subr.bf16.mxu0 0
      %945 = vmatpush1.bf16.msra.mxu0 0
      %946 = vmatprep.mubr.bf16.mxu0 0
      %947 = vmatmul.mubr.bf16.gmra.mrb[0].mxu0 %v912
      %v948 = vpop.f32.mrb[0].mxu0
      %v949 = vadd.f32 0.0, %v948
      %v950 = vpop.f32.mrb[0].mxu0
      %v951 = vpop.f32.mrb[0].mxu0
      %v952 = vpop.f32.mrb[0].mxu0
      %953 = vdwg.mxu0
      %v954 = vadd.f32 %v848, %v949
      %v955 = vld [vmem:[%s776] sm:$0x3]
      %v956 = vld [vmem:[%s776 + $0x2] sm:$0x3]
      %v960 = vunpack.c.l.s4 1966171168
      %v961 = vunpack.c.0.s8 %v960
      %v962 = vlaneseq
      %v963 = vshrl.u32 %v962, 7
      %v964 = vsub.s32 %v961, %v963
      %v965 = vrot.slane %v955, %v964
      %v966 = vcombine.high %v965, %v965
      %v968 = vunpack.c.l.s4 1966171168
      %v969 = vunpack.c.0.s8 %v968
      %v970 = vlaneseq
      %v971 = vshrl.u32 %v970, 7
      %v972 = vsub.s32 %v969, %v971
      %v973 = vrot.slane %v956, %v972
      %v974 = vcombine.high %v973, %v973
      %v976 = vshrl.u32 %v965, 16
      %v978 = vrot.slane %v976, 7
      %v979 = vrot.slane %v978, 1
      %v981 = vshll.u32 %v966, 16
      %v983 = vsel %vm418, %v979, %v981
      %v985 = vshrl.u32 %v973, 16
      %v987 = vrot.slane %v985, 7
      %v988 = vrot.slane %v987, 1
      %v990 = vshll.u32 %v974, 16
      %v992 = vsel %vm418, %v988, %v990
      %s993 = scalar_lea.vmem %s221, 64
      %v994 = vld [vmem:[%s993] sm:$0xf]
      %v995 = vld [vmem:[%s993 + $0x4] sm:$0xf]
      %v996 = vcombine.low %v983, %v992
      %v998 = vunpack.c.l.s4 1966171168
      %v999 = vunpack.c.0.s8 %v998
      %v1000 = vlaneseq
      %v1001 = vshrl.u32 %v1000, 7
      %v1002 = vsub.s32 %v999, %v1001
      %v1003 = vrot.slane %v996, %v1002
      %v1005 = vunpack.c.l.s4 1966171168
      %v1006 = vunpack.c.0.s8 %v1005
      %v1007 = vlaneseq
      %v1008 = vshrl.u32 %v1007, 7
      %v1009 = vsub.s32 %v1006, %v1008
      %v1010 = vrot.slane %v1003, %v1009
      %v1013 = vunpack.c.l.b16 %v994
      %v1014 = vunpack.c.l.b16 %v995
      %v1015 = vpack.c.b16 %v1014, %v1013
      %v1018 = vsel %vm274, %v1010, 0
      %1020 = vmatprep.subr.bf16.mxu0 0
      %1021 = vmatpush1.bf16.msra.mxu0 %v1015
      %1022 = vmatprep.subr.bf16.mxu0 0
      %1023 = vmatpush1.bf16.msra.mxu0 0
      %1024 = vmatprep.subr.bf16.mxu0 0
      %1025 = vmatpush1.bf16.msra.mxu0 0
      %1026 = vmatprep.subr.bf16.mxu0 0
      %1027 = vmatpush1.bf16.msra.mxu0 0
      %1028 = vmatprep.subr.bf16.mxu0 0
      %1029 = vmatpush1.bf16.msra.mxu0 0
      %1030 = vmatprep.subr.bf16.mxu0 0
      %1031 = vmatpush1.bf16.msra.mxu0 0
      %1032 = vmatprep.subr.bf16.mxu0 0
      %1033 = vmatpush1.bf16.msra.mxu0 0
      %1034 = vmatprep.subr.bf16.mxu0 0
      %1035 = vmatpush1.bf16.msra.mxu0 0
      %1036 = vmatprep.subr.bf16.mxu0 0
      %1037 = vmatpush1.bf16.msra.mxu0 0
      %1038 = vmatprep.subr.bf16.mxu0 0
      %1039 = vmatpush1.bf16.msra.mxu0 0
      %1040 = vmatprep.subr.bf16.mxu0 0
      %1041 = vmatpush1.bf16.msra.mxu0 0
      %1042 = vmatprep.subr.bf16.mxu0 0
      %1043 = vmatpush1.bf16.msra.mxu0 0
      %1044 = vmatprep.subr.bf16.mxu0 0
      %1045 = vmatpush1.bf16.msra.mxu0 0
      %1046 = vmatprep.subr.bf16.mxu0 0
      %1047 = vmatpush1.bf16.msra.mxu0 0
      %1048 = vmatprep.subr.bf16.mxu0 0
      %1049 = vmatpush1.bf16.msra.mxu0 0
      %1050 = vmatprep.subr.bf16.mxu0 0
      %1051 = vmatpush1.bf16.msra.mxu0 0
      %1052 = vmatprep.mubr.bf16.mxu0 0
      %1053 = vmatmul.mubr.bf16.gmra.mrb[0].mxu0 %v1018
      %v1054 = vpop.f32.mrb[0].mxu0
      %v1055 = vadd.f32 0.0, %v1054
      %v1056 = vpop.f32.mrb[0].mxu0
      %v1057 = vpop.f32.mrb[0].mxu0
      %v1058 = vpop.f32.mrb[0].mxu0
      %1059 = vdwg.mxu0
      %v1060 = vadd.f32 %v954, %v1055
      %v1061 = vld [vmem:[%s701] sm:$0x2]
      %v1062 = vld [vmem:[%s701 + $0x2] sm:$0x2]
      %v1066 = vunpack.c.l.s4 1966171168
      %v1067 = vunpack.c.0.s8 %v1066
      %v1068 = vlaneseq
      %v1069 = vshrl.u32 %v1068, 7
      %v1070 = vsub.s32 %v1067, %v1069
      %v1071 = vrot.slane %v1061, %v1070
      %v1072 = vcombine.high %v1071, %v1071
      %v1074 = vunpack.c.l.s4 1966171168
      %v1075 = vunpack.c.0.s8 %v1074
      %v1076 = vlaneseq
      %v1077 = vshrl.u32 %v1076, 7
      %v1078 = vsub.s32 %v1075, %v1077
      %v1079 = vrot.slane %v1062, %v1078
      %v1080 = vcombine.high %v1079, %v1079
      %s1081 = scalar_lea.vmem %s221, 72
      %v1082 = vld [vmem:[%s1081] sm:$0xf]
      %v1083 = vld [vmem:[%s1081 + $0x4] sm:$0xf]
      %v1084 = vcombine.low %v1072, %v1080
      %v1086 = vunpack.c.l.s4 1966171168
      %v1087 = vunpack.c.0.s8 %v1086
      %v1088 = vlaneseq
      %v1089 = vshrl.u32 %v1088, 7
      %v1090 = vsub.s32 %v1087, %v1089
      %v1091 = vrot.slane %v1084, %v1090
      %v1093 = vunpack.c.l.s4 1966171168
      %v1094 = vunpack.c.0.s8 %v1093
      %v1095 = vlaneseq
      %v1096 = vshrl.u32 %v1095, 7
      %v1097 = vsub.s32 %v1094, %v1096
      %v1098 = vrot.slane %v1091, %v1097
      %v1101 = vunpack.c.l.b16 %v1082
      %v1102 = vunpack.c.l.b16 %v1083
      %v1103 = vpack.c.b16 %v1102, %v1101
      %v1106 = vsel %vm274, %v1098, 0
      %1108 = vmatprep.subr.bf16.mxu0 0
      %1109 = vmatpush1.bf16.msra.mxu0 %v1103
      %1110 = vmatprep.subr.bf16.mxu0 0
      %1111 = vmatpush1.bf16.msra.mxu0 0
      %1112 = vmatprep.subr.bf16.mxu0 0
      %1113 = vmatpush1.bf16.msra.mxu0 0
      %1114 = vmatprep.subr.bf16.mxu0 0
      %1115 = vmatpush1.bf16.msra.mxu0 0
      %1116 = vmatprep.subr.bf16.mxu0 0
      %1117 = vmatpush1.bf16.msra.mxu0 0
      %1118 = vmatprep.subr.bf16.mxu0 0
      %1119 = vmatpush1.bf16.msra.mxu0 0
      %1120 = vmatprep.subr.bf16.mxu0 0
      %1121 = vmatpush1.bf16.msra.mxu0 0
      %1122 = vmatprep.subr.bf16.mxu0 0
      %1123 = vmatpush1.bf16.msra.mxu0 0
      %1124 = vmatprep.subr.bf16.mxu0 0
      %1125 = vmatpush1.bf16.msra.mxu0 0
      %1126 = vmatprep.subr.bf16.mxu0 0
      %1127 = vmatpush1.bf16.msra.mxu0 0
      %1128 = vmatprep.subr.bf16.mxu0 0
      %1129 = vmatpush1.bf16.msra.mxu0 0
      %1130 = vmatprep.subr.bf16.mxu0 0
      %1131 = vmatpush1.bf16.msra.mxu0 0
      %1132 = vmatprep.subr.bf16.mxu0 0
      %1133 = vmatpush1.bf16.msra.mxu0 0
      %1134 = vmatprep.subr.bf16.mxu0 0
      %1135 = vmatpush1.bf16.msra.mxu0 0
      %1136 = vmatprep.subr.bf16.mxu0 0
      %1137 = vmatpush1.bf16.msra.mxu0 0
      %1138 = vmatprep.subr.bf16.mxu0 0
      %1139 = vmatpush1.bf16.msra.mxu0 0
      %1140 = vmatprep.mubr.bf16.mxu0 0
      %1141 = vmatmul.mubr.bf16.gmra.mrb[0].mxu0 %v1106
      %v1142 = vpop.f32.mrb[0].mxu0
      %v1143 = vadd.f32 0.0, %v1142
      %v1144 = vpop.f32.mrb[0].mxu0
      %v1145 = vpop.f32.mrb[0].mxu0
      %v1146 = vpop.f32.mrb[0].mxu0
      %1147 = vdwg.mxu0
      %v1148 = vadd.f32 %v1060, %v1143
      %s1149 = sadd.s32 %s236, 1
      %s1150 = smul.addr %s1149, 2
      %s1151 = scalar_lea.vmem %s217, %s1150
      %v1152 = vld [vmem:[%s1151] sm:$0x1]
      %v1153 = vld [vmem:[%s1151 + $0x2] sm:$0x1]
      %s1154 = scalar_lea.vmem %s221, 80
      %v1155 = vld [vmem:[%s1154] sm:$0xf]
      %v1156 = vld [vmem:[%s1154 + $0x4] sm:$0xf]
      %v1159 = vcombine.low %v1152, %v1153
      %v1161 = vunpack.c.l.s4 1966171168
      %v1162 = vunpack.c.0.s8 %v1161
      %v1163 = vlaneseq
      %v1164 = vshrl.u32 %v1163, 7
      %v1165 = vsub.s32 %v1162, %v1164
      %v1166 = vrot.slane %v1159, %v1165
      %v1168 = vunpack.c.l.s4 1966171168
      %v1169 = vunpack.c.0.s8 %v1168
      %v1170 = vlaneseq
      %v1171 = vshrl.u32 %v1170, 7
      %v1172 = vsub.s32 %v1169, %v1171
      %v1173 = vrot.slane %v1166, %v1172
      %v1176 = vunpack.c.l.b16 %v1155
      %v1177 = vunpack.c.l.b16 %v1156
      %v1178 = vpack.c.b16 %v1177, %v1176
      %v1181 = vsel %vm274, %v1173, 0
      %1183 = vmatprep.subr.bf16.mxu0 0
      %1184 = vmatpush1.bf16.msra.mxu0 %v1178
      %1185 = vmatprep.subr.bf16.mxu0 0
      %1186 = vmatpush1.bf16.msra.mxu0 0
      %1187 = vmatprep.subr.bf16.mxu0 0
      %1188 = vmatpush1.bf16.msra.mxu0 0
      %1189 = vmatprep.subr.bf16.mxu0 0
      %1190 = vmatpush1.bf16.msra.mxu0 0
      %1191 = vmatprep.subr.bf16.mxu0 0
      %1192 = vmatpush1.bf16.msra.mxu0 0
      %1193 = vmatprep.subr.bf16.mxu0 0
      %1194 = vmatpush1.bf16.msra.mxu0 0
      %1195 = vmatprep.subr.bf16.mxu0 0
      %1196 = vmatpush1.bf16.msra.mxu0 0
      %1197 = vmatprep.subr.bf16.mxu0 0
      %1198 = vmatpush1.bf16.msra.mxu0 0
      %1199 = vmatprep.subr.bf16.mxu0 0
      %1200 = vmatpush1.bf16.msra.mxu0 0
      %1201 = vmatprep.subr.bf16.mxu0 0
      %1202 = vmatpush1.bf16.msra.mxu0 0
      %1203 = vmatprep.subr.bf16.mxu0 0
      %1204 = vmatpush1.bf16.msra.mxu0 0
      %1205 = vmatprep.subr.bf16.mxu0 0
      %1206 = vmatpush1.bf16.msra.mxu0 0
      %1207 = vmatprep.subr.bf16.mxu0 0
      %1208 = vmatpush1.bf16.msra.mxu0 0
      %1209 = vmatprep.subr.bf16.mxu0 0
      %1210 = vmatpush1.bf16.msra.mxu0 0
      %1211 = vmatprep.subr.bf16.mxu0 0
      %1212 = vmatpush1.bf16.msra.mxu0 0
      %1213 = vmatprep.subr.bf16.mxu0 0
      %1214 = vmatpush1.bf16.msra.mxu0 0
      %1215 = vmatprep.mubr.bf16.mxu0 0
      %1216 = vmatmul.mubr.bf16.gmra.mrb[0].mxu0 %v1181
      %v1217 = vpop.f32.mrb[0].mxu0
      %v1218 = vadd.f32 0.0, %v1217
      %v1219 = vpop.f32.mrb[0].mxu0
      %v1220 = vpop.f32.mrb[0].mxu0
      %v1221 = vpop.f32.mrb[0].mxu0
      %1222 = vdwg.mxu0
      %v1223 = vadd.f32 %v1148, %v1218
      %s1224 = sadd.s32 %s1149, 4
      %s1225 = smul.addr %s1224, 2
      %s1226 = scalar_lea.vmem %s217, %s1225
      %v1227 = vld [vmem:[%s1226] sm:$0x1]
      %v1228 = vld [vmem:[%s1226 + $0x2] sm:$0x1]
      %s1229 = scalar_lea.vmem %s221, 88
      %v1230 = vld [vmem:[%s1229] sm:$0xf]
      %v1231 = vld [vmem:[%s1229 + $0x4] sm:$0xf]
      %v1234 = vcombine.low %v1227, %v1228
      %v1236 = vunpack.c.l.s4 1966171168
      %v1237 = vunpack.c.0.s8 %v1236
      %v1238 = vlaneseq
      %v1239 = vshrl.u32 %v1238, 7
      %v1240 = vsub.s32 %v1237, %v1239
      %v1241 = vrot.slane %v1234, %v1240
      %v1243 = vunpack.c.l.s4 1966171168
      %v1244 = vunpack.c.0.s8 %v1243
      %v1245 = vlaneseq
      %v1246 = vshrl.u32 %v1245, 7
      %v1247 = vsub.s32 %v1244, %v1246
      %v1248 = vrot.slane %v1241, %v1247
      %v1251 = vunpack.c.l.b16 %v1230
      %v1252 = vunpack.c.l.b16 %v1231
      %v1253 = vpack.c.b16 %v1252, %v1251
      %v1256 = vsel %vm274, %v1248, 0
      %1258 = vmatprep.subr.bf16.mxu0 0
      %1259 = vmatpush1.bf16.msra.mxu0 %v1253
      %1260 = vmatprep.subr.bf16.mxu0 0
      %1261 = vmatpush1.bf16.msra.mxu0 0
      %1262 = vmatprep.subr.bf16.mxu0 0
      %1263 = vmatpush1.bf16.msra.mxu0 0
      %1264 = vmatprep.subr.bf16.mxu0 0
      %1265 = vmatpush1.bf16.msra.mxu0 0
      %1266 = vmatprep.subr.bf16.mxu0 0
      %1267 = vmatpush1.bf16.msra.mxu0 0
      %1268 = vmatprep.subr.bf16.mxu0 0
      %1269 = vmatpush1.bf16.msra.mxu0 0
      %1270 = vmatprep.subr.bf16.mxu0 0
      %1271 = vmatpush1.bf16.msra.mxu0 0
      %1272 = vmatprep.subr.bf16.mxu0 0
      %1273 = vmatpush1.bf16.msra.mxu0 0
      %1274 = vmatprep.subr.bf16.mxu0 0
      %1275 = vmatpush1.bf16.msra.mxu0 0
      %1276 = vmatprep.subr.bf16.mxu0 0
      %1277 = vmatpush1.bf16.msra.mxu0 0
      %1278 = vmatprep.subr.bf16.mxu0 0
      %1279 = vmatpush1.bf16.msra.mxu0 0
      %1280 = vmatprep.subr.bf16.mxu0 0
      %1281 = vmatpush1.bf16.msra.mxu0 0
      %1282 = vmatprep.subr.bf16.mxu0 0
      %1283 = vmatpush1.bf16.msra.mxu0 0
      %1284 = vmatprep.subr.bf16.mxu0 0
      %1285 = vmatpush1.bf16.msra.mxu0 0
      %1286 = vmatprep.subr.bf16.mxu0 0
      %1287 = vmatpush1.bf16.msra.mxu0 0
      %1288 = vmatprep.subr.bf16.mxu0 0
      %1289 = vmatpush1.bf16.msra.mxu0 0
      %1290 = vmatprep.mubr.bf16.mxu0 0
      %1291 = vmatmul.mubr.bf16.gmra.mrb[0].mxu0 %v1256
      %v1292 = vpop.f32.mrb[0].mxu0
      %v1293 = vadd.f32 0.0, %v1292
      %v1294 = vpop.f32.mrb[0].mxu0
      %v1295 = vpop.f32.mrb[0].mxu0
      %v1296 = vpop.f32.mrb[0].mxu0
      %1297 = vdwg.mxu0
      %v1298 = vadd.f32 %v1223, %v1293
      %v1299 = vld [vmem:[%s1151] sm:$0x3]
      %v1300 = vld [vmem:[%s1151 + $0x2] sm:$0x3]
      %v1304 = vunpack.c.l.s4 1966171168
      %v1305 = vunpack.c.0.s8 %v1304
      %v1306 = vlaneseq
      %v1307 = vshrl.u32 %v1306, 7
      %v1308 = vsub.s32 %v1305, %v1307
      %v1309 = vrot.slane %v1299, %v1308
      %v1310 = vcombine.high %v1309, %v1309
      %v1312 = vunpack.c.l.s4 1966171168
      %v1313 = vunpack.c.0.s8 %v1312
      %v1314 = vlaneseq
      %v1315 = vshrl.u32 %v1314, 7
      %v1316 = vsub.s32 %v1313, %v1315
      %v1317 = vrot.slane %v1300, %v1316
      %v1318 = vcombine.high %v1317, %v1317
      %v1320 = vshrl.u32 %v1309, 16
      %v1322 = vrot.slane %v1320, 7
      %v1323 = vrot.slane %v1322, 1
      %v1325 = vshll.u32 %v1310, 16
      %v1327 = vsel %vm418, %v1323, %v1325
      %v1329 = vshrl.u32 %v1317, 16
      %v1331 = vrot.slane %v1329, 7
      %v1332 = vrot.slane %v1331, 1
      %v1334 = vshll.u32 %v1318, 16
      %v1336 = vsel %vm418, %v1332, %v1334
      %s1337 = scalar_lea.vmem %s221, 96
      %v1338 = vld [vmem:[%s1337] sm:$0xf]
      %v1339 = vld [vmem:[%s1337 + $0x4] sm:$0xf]
      %v1340 = vcombine.low %v1327, %v1336
      %v1342 = vunpack.c.l.s4 1966171168
      %v1343 = vunpack.c.0.s8 %v1342
      %v1344 = vlaneseq
      %v1345 = vshrl.u32 %v1344, 7
      %v1346 = vsub.s32 %v1343, %v1345
      %v1347 = vrot.slane %v1340, %v1346
      %v1349 = vunpack.c.l.s4 1966171168
      %v1350 = vunpack.c.0.s8 %v1349
      %v1351 = vlaneseq
      %v1352 = vshrl.u32 %v1351, 7
      %v1353 = vsub.s32 %v1350, %v1352
      %v1354 = vrot.slane %v1347, %v1353
      %v1357 = vunpack.c.l.b16 %v1338
      %v1358 = vunpack.c.l.b16 %v1339
      %v1359 = vpack.c.b16 %v1358, %v1357
      %v1362 = vsel %vm274, %v1354, 0
      %1364 = vmatprep.subr.bf16.mxu0 0
      %1365 = vmatpush1.bf16.msra.mxu0 %v1359
      %1366 = vmatprep.subr.bf16.mxu0 0
      %1367 = vmatpush1.bf16.msra.mxu0 0
      %1368 = vmatprep.subr.bf16.mxu0 0
      %1369 = vmatpush1.bf16.msra.mxu0 0
      %1370 = vmatprep.subr.bf16.mxu0 0
      %1371 = vmatpush1.bf16.msra.mxu0 0
      %1372 = vmatprep.subr.bf16.mxu0 0
      %1373 = vmatpush1.bf16.msra.mxu0 0
      %1374 = vmatprep.subr.bf16.mxu0 0
      %1375 = vmatpush1.bf16.msra.mxu0 0
      %1376 = vmatprep.subr.bf16.mxu0 0
      %1377 = vmatpush1.bf16.msra.mxu0 0
      %1378 = vmatprep.subr.bf16.mxu0 0
      %1379 = vmatpush1.bf16.msra.mxu0 0
      %1380 = vmatprep.subr.bf16.mxu0 0
      %1381 = vmatpush1.bf16.msra.mxu0 0
      %1382 = vmatprep.subr.bf16.mxu0 0
      %1383 = vmatpush1.bf16.msra.mxu0 0
      %1384 = vmatprep.subr.bf16.mxu0 0
      %1385 = vmatpush1.bf16.msra.mxu0 0
      %1386 = vmatprep.subr.bf16.mxu0 0
      %1387 = vmatpush1.bf16.msra.mxu0 0
      %1388 = vmatprep.subr.bf16.mxu0 0
      %1389 = vmatpush1.bf16.msra.mxu0 0
      %1390 = vmatprep.subr.bf16.mxu0 0
      %1391 = vmatpush1.bf16.msra.mxu0 0
      %1392 = vmatprep.subr.bf16.mxu0 0
      %1393 = vmatpush1.bf16.msra.mxu0 0
      %1394 = vmatprep.subr.bf16.mxu0 0
      %1395 = vmatpush1.bf16.msra.mxu0 0
      %1396 = vmatprep.mubr.bf16.mxu0 0
      %1397 = vmatmul.mubr.bf16.gmra.mrb[0].mxu0 %v1362
      %v1398 = vpop.f32.mrb[0].mxu0
      %v1399 = vadd.f32 0.0, %v1398
      %v1400 = vpop.f32.mrb[0].mxu0
      %v1401 = vpop.f32.mrb[0].mxu0
      %v1402 = vpop.f32.mrb[0].mxu0
      %1403 = vdwg.mxu0
      %v1404 = vadd.f32 %v1298, %v1399
      %v1405 = vld [vmem:[%s1226] sm:$0x3]
      %v1406 = vld [vmem:[%s1226 + $0x2] sm:$0x3]
      %v1410 = vunpack.c.l.s4 1966171168
      %v1411 = vunpack.c.0.s8 %v1410
      %v1412 = vlaneseq
      %v1413 = vshrl.u32 %v1412, 7
      %v1414 = vsub.s32 %v1411, %v1413
      %v1415 = vrot.slane %v1405, %v1414
      %v1416 = vcombine.high %v1415, %v1415
      %v1418 = vunpack.c.l.s4 1966171168
      %v1419 = vunpack.c.0.s8 %v1418
      %v1420 = vlaneseq
      %v1421 = vshrl.u32 %v1420, 7
      %v1422 = vsub.s32 %v1419, %v1421
      %v1423 = vrot.slane %v1406, %v1422
      %v1424 = vcombine.high %v1423, %v1423
      %v1426 = vshrl.u32 %v1415, 16
      %v1428 = vrot.slane %v1426, 7
      %v1429 = vrot.slane %v1428, 1
      %v1431 = vshll.u32 %v1416, 16
      %v1433 = vsel %vm418, %v1429, %v1431
      %v1435 = vshrl.u32 %v1423, 16
      %v1437 = vrot.slane %v1435, 7
      %v1438 = vrot.slane %v1437, 1
      %v1440 = vshll.u32 %v1424, 16
      %v1442 = vsel %vm418, %v1438, %v1440
      %s1443 = scalar_lea.vmem %s221, 104
      %v1444 = vld [vmem:[%s1443] sm:$0xf]
      %v1445 = vld [vmem:[%s1443 + $0x4] sm:$0xf]
      %v1446 = vcombine.low %v1433, %v1442
      %v1448 = vunpack.c.l.s4 1966171168
      %v1449 = vunpack.c.0.s8 %v1448
      %v1450 = vlaneseq
      %v1451 = vshrl.u32 %v1450, 7
      %v1452 = vsub.s32 %v1449, %v1451
      %v1453 = vrot.slane %v1446, %v1452
      %v1455 = vunpack.c.l.s4 1966171168
      %v1456 = vunpack.c.0.s8 %v1455
      %v1457 = vlaneseq
      %v1458 = vshrl.u32 %v1457, 7
      %v1459 = vsub.s32 %v1456, %v1458
      %v1460 = vrot.slane %v1453, %v1459
      %v1463 = vunpack.c.l.b16 %v1444
      %v1464 = vunpack.c.l.b16 %v1445
      %v1465 = vpack.c.b16 %v1464, %v1463
      %v1468 = vsel %vm274, %v1460, 0
      %1470 = vmatprep.subr.bf16.mxu0 0
      %1471 = vmatpush1.bf16.msra.mxu0 %v1465
      %1472 = vmatprep.subr.bf16.mxu0 0
      %1473 = vmatpush1.bf16.msra.mxu0 0
      %1474 = vmatprep.subr.bf16.mxu0 0
      %1475 = vmatpush1.bf16.msra.mxu0 0
      %1476 = vmatprep.subr.bf16.mxu0 0
      %1477 = vmatpush1.bf16.msra.mxu0 0
      %1478 = vmatprep.subr.bf16.mxu0 0
      %1479 = vmatpush1.bf16.msra.mxu0 0
      %1480 = vmatprep.subr.bf16.mxu0 0
      %1481 = vmatpush1.bf16.msra.mxu0 0
      %1482 = vmatprep.subr.bf16.mxu0 0
      %1483 = vmatpush1.bf16.msra.mxu0 0
      %1484 = vmatprep.subr.bf16.mxu0 0
      %1485 = vmatpush1.bf16.msra.mxu0 0
      %1486 = vmatprep.subr.bf16.mxu0 0
      %1487 = vmatpush1.bf16.msra.mxu0 0
      %1488 = vmatprep.subr.bf16.mxu0 0
      %1489 = vmatpush1.bf16.msra.mxu0 0
      %1490 = vmatprep.subr.bf16.mxu0 0
      %1491 = vmatpush1.bf16.msra.mxu0 0
      %1492 = vmatprep.subr.bf16.mxu0 0
      %1493 = vmatpush1.bf16.msra.mxu0 0
      %1494 = vmatprep.subr.bf16.mxu0 0
      %1495 = vmatpush1.bf16.msra.mxu0 0
      %1496 = vmatprep.subr.bf16.mxu0 0
      %1497 = vmatpush1.bf16.msra.mxu0 0
      %1498 = vmatprep.subr.bf16.mxu0 0
      %1499 = vmatpush1.bf16.msra.mxu0 0
      %1500 = vmatprep.subr.bf16.mxu0 0
      %1501 = vmatpush1.bf16.msra.mxu0 0
      %1502 = vmatprep.mubr.bf16.mxu0 0
      %1503 = vmatmul.mubr.bf16.gmra.mrb[0].mxu0 %v1468
      %v1504 = vpop.f32.mrb[0].mxu0
      %v1505 = vadd.f32 0.0, %v1504
      %v1506 = vpop.f32.mrb[0].mxu0
      %v1507 = vpop.f32.mrb[0].mxu0
      %v1508 = vpop.f32.mrb[0].mxu0
      %1509 = vdwg.mxu0
      %v1510 = vadd.f32 %v1404, %v1505
      %v1511 = vld [vmem:[%s1151] sm:$0x2]
      %v1512 = vld [vmem:[%s1151 + $0x2] sm:$0x2]
      %v1516 = vunpack.c.l.s4 1966171168
      %v1517 = vunpack.c.0.s8 %v1516
      %v1518 = vlaneseq
      %v1519 = vshrl.u32 %v1518, 7
      %v1520 = vsub.s32 %v1517, %v1519
      %v1521 = vrot.slane %v1511, %v1520
      %v1522 = vcombine.high %v1521, %v1521
      %v1524 = vunpack.c.l.s4 1966171168
      %v1525 = vunpack.c.0.s8 %v1524
      %v1526 = vlaneseq
      %v1527 = vshrl.u32 %v1526, 7
      %v1528 = vsub.s32 %v1525, %v1527
      %v1529 = vrot.slane %v1512, %v1528
      %v1530 = vcombine.high %v1529, %v1529
      %s1531 = scalar_lea.vmem %s221, 112
      %v1532 = vld [vmem:[%s1531] sm:$0xf]
      %v1533 = vld [vmem:[%s1531 + $0x4] sm:$0xf]
      %v1534 = vcombine.low %v1522, %v1530
      %v1536 = vunpack.c.l.s4 1966171168
      %v1537 = vunpack.c.0.s8 %v1536
      %v1538 = vlaneseq
      %v1539 = vshrl.u32 %v1538, 7
      %v1540 = vsub.s32 %v1537, %v1539
      %v1541 = vrot.slane %v1534, %v1540
      %v1543 = vunpack.c.l.s4 1966171168
      %v1544 = vunpack.c.0.s8 %v1543
      %v1545 = vlaneseq
      %v1546 = vshrl.u32 %v1545, 7
      %v1547 = vsub.s32 %v1544, %v1546
      %v1548 = vrot.slane %v1541, %v1547
      %v1551 = vunpack.c.l.b16 %v1532
      %v1552 = vunpack.c.l.b16 %v1533
      %v1553 = vpack.c.b16 %v1552, %v1551
      %v1556 = vsel %vm274, %v1548, 0
      %1558 = vmatprep.subr.bf16.mxu0 0
      %1559 = vmatpush1.bf16.msra.mxu0 %v1553
      %1560 = vmatprep.subr.bf16.mxu0 0
      %1561 = vmatpush1.bf16.msra.mxu0 0
      %1562 = vmatprep.subr.bf16.mxu0 0
      %1563 = vmatpush1.bf16.msra.mxu0 0
      %1564 = vmatprep.subr.bf16.mxu0 0
      %1565 = vmatpush1.bf16.msra.mxu0 0
      %1566 = vmatprep.subr.bf16.mxu0 0
      %1567 = vmatpush1.bf16.msra.mxu0 0
      %1568 = vmatprep.subr.bf16.mxu0 0
      %1569 = vmatpush1.bf16.msra.mxu0 0
      %1570 = vmatprep.subr.bf16.mxu0 0
      %1571 = vmatpush1.bf16.msra.mxu0 0
      %1572 = vmatprep.subr.bf16.mxu0 0
      %1573 = vmatpush1.bf16.msra.mxu0 0
      %1574 = vmatprep.subr.bf16.mxu0 0
      %1575 = vmatpush1.bf16.msra.mxu0 0
      %1576 = vmatprep.subr.bf16.mxu0 0
      %1577 = vmatpush1.bf16.msra.mxu0 0
      %1578 = vmatprep.subr.bf16.mxu0 0
      %1579 = vmatpush1.bf16.msra.mxu0 0
      %1580 = vmatprep.subr.bf16.mxu0 0
      %1581 = vmatpush1.bf16.msra.mxu0 0
      %1582 = vmatprep.subr.bf16.mxu0 0
      %1583 = vmatpush1.bf16.msra.mxu0 0
      %1584 = vmatprep.subr.bf16.mxu0 0
      %1585 = vmatpush1.bf16.msra.mxu0 0
      %1586 = vmatprep.subr.bf16.mxu0 0
      %1587 = vmatpush1.bf16.msra.mxu0 0
      %1588 = vmatprep.subr.bf16.mxu0 0
      %1589 = vmatpush1.bf16.msra.mxu0 0
      %1590 = vmatprep.mubr.bf16.mxu0 0
      %1591 = vmatmul.mubr.bf16.gmra.mrb[0].mxu0 %v1556
      %v1592 = vpop.f32.mrb[0].mxu0
      %v1593 = vadd.f32 0.0, %v1592
      %v1594 = vpop.f32.mrb[0].mxu0
      %v1595 = vpop.f32.mrb[0].mxu0
      %v1596 = vpop.f32.mrb[0].mxu0
      %1597 = vdwg.mxu0
      %v1598 = vadd.f32 %v1510, %v1593
      %s1599 = sadd.s32 %s1149, 8
      %s1600 = smul.addr %s1599, 2
      %s1601 = scalar_lea.vmem %s217, %s1600
      %v1602 = vld [vmem:[%s1601] sm:$0x1]
      %v1603 = vld [vmem:[%s1601 + $0x2] sm:$0x1]
      %s1604 = scalar_lea.vmem %s221, 120
      %v1605 = vld [vmem:[%s1604] sm:$0xf]
      %v1606 = vld [vmem:[%s1604 + $0x4] sm:$0xf]
      %v1609 = vcombine.low %v1602, %v1603
      %v1611 = vunpack.c.l.s4 1966171168
      %v1612 = vunpack.c.0.s8 %v1611
      %v1613 = vlaneseq
      %v1614 = vshrl.u32 %v1613, 7
      %v1615 = vsub.s32 %v1612, %v1614
      %v1616 = vrot.slane %v1609, %v1615
      %v1618 = vunpack.c.l.s4 1966171168
      %v1619 = vunpack.c.0.s8 %v1618
      %v1620 = vlaneseq
      %v1621 = vshrl.u32 %v1620, 7
      %v1622 = vsub.s32 %v1619, %v1621
      %v1623 = vrot.slane %v1616, %v1622
      %v1626 = vunpack.c.l.b16 %v1605
      %v1627 = vunpack.c.l.b16 %v1606
      %v1628 = vpack.c.b16 %v1627, %v1626
      %v1631 = vsel %vm274, %v1623, 0
      %1633 = vmatprep.subr.bf16.mxu0 0
      %1634 = vmatpush1.bf16.msra.mxu0 %v1628
      %1635 = vmatprep.subr.bf16.mxu0 0
      %1636 = vmatpush1.bf16.msra.mxu0 0
      %1637 = vmatprep.subr.bf16.mxu0 0
      %1638 = vmatpush1.bf16.msra.mxu0 0
      %1639 = vmatprep.subr.bf16.mxu0 0
      %1640 = vmatpush1.bf16.msra.mxu0 0
      %1641 = vmatprep.subr.bf16.mxu0 0
      %1642 = vmatpush1.bf16.msra.mxu0 0
      %1643 = vmatprep.subr.bf16.mxu0 0
      %1644 = vmatpush1.bf16.msra.mxu0 0
      %1645 = vmatprep.subr.bf16.mxu0 0
      %1646 = vmatpush1.bf16.msra.mxu0 0
      %1647 = vmatprep.subr.bf16.mxu0 0
      %1648 = vmatpush1.bf16.msra.mxu0 0
      %1649 = vmatprep.subr.bf16.mxu0 0
      %1650 = vmatpush1.bf16.msra.mxu0 0
      %1651 = vmatprep.subr.bf16.mxu0 0
      %1652 = vmatpush1.bf16.msra.mxu0 0
      %1653 = vmatprep.subr.bf16.mxu0 0
      %1654 = vmatpush1.bf16.msra.mxu0 0
      %1655 = vmatprep.subr.bf16.mxu0 0
      %1656 = vmatpush1.bf16.msra.mxu0 0
      %1657 = vmatprep.subr.bf16.mxu0 0
      %1658 = vmatpush1.bf16.msra.mxu0 0
      %1659 = vmatprep.subr.bf16.mxu0 0
      %1660 = vmatpush1.bf16.msra.mxu0 0
      %1661 = vmatprep.subr.bf16.mxu0 0
      %1662 = vmatpush1.bf16.msra.mxu0 0
      %1663 = vmatprep.subr.bf16.mxu0 0
      %1664 = vmatpush1.bf16.msra.mxu0 0
      %1665 = vmatprep.mubr.bf16.mxu0 0
      %1666 = vmatmul.mubr.bf16.gmra.mrb[0].mxu0 %v1631
      %v1667 = vpop.f32.mrb[0].mxu0
      %v1668 = vadd.f32 0.0, %v1667
      %v1669 = vpop.f32.mrb[0].mxu0
      %v1670 = vpop.f32.mrb[0].mxu0
      %v1671 = vpop.f32.mrb[0].mxu0
      %1672 = vdwg.mxu0
      %v1673 = vadd.f32 %v1598, %v1668
      %s1674 = sadd.s32 %s1224, 8
      %s1675 = smul.addr %s1674, 2
      %s1676 = scalar_lea.vmem %s217, %s1675
      %v1677 = vld [vmem:[%s1676] sm:$0x1]
      %v1678 = vld [vmem:[%s1676 + $0x2] sm:$0x1]
      %s1679 = scalar_lea.vmem %s221, 128
      %v1680 = vld [vmem:[%s1679] sm:$0xf]
      %v1681 = vld [vmem:[%s1679 + $0x4] sm:$0xf]
      %v1684 = vcombine.low %v1677, %v1678
      %v1686 = vunpack.c.l.s4 1966171168
      %v1687 = vunpack.c.0.s8 %v1686
      %v1688 = vlaneseq
      %v1689 = vshrl.u32 %v1688, 7
      %v1690 = vsub.s32 %v1687, %v1689
      %v1691 = vrot.slane %v1684, %v1690
      %v1693 = vunpack.c.l.s4 1966171168
      %v1694 = vunpack.c.0.s8 %v1693
      %v1695 = vlaneseq
      %v1696 = vshrl.u32 %v1695, 7
      %v1697 = vsub.s32 %v1694, %v1696
      %v1698 = vrot.slane %v1691, %v1697
      %v1701 = vunpack.c.l.b16 %v1680
      %v1702 = vunpack.c.l.b16 %v1681
      %v1703 = vpack.c.b16 %v1702, %v1701
      %v1706 = vsel %vm274, %v1698, 0
      %1708 = vmatprep.subr.bf16.mxu0 0
      %1709 = vmatpush1.bf16.msra.mxu0 %v1703
      %1710 = vmatprep.subr.bf16.mxu0 0
      %1711 = vmatpush1.bf16.msra.mxu0 0
      %1712 = vmatprep.subr.bf16.mxu0 0
      %1713 = vmatpush1.bf16.msra.mxu0 0
      %1714 = vmatprep.subr.bf16.mxu0 0
      %1715 = vmatpush1.bf16.msra.mxu0 0
      %1716 = vmatprep.subr.bf16.mxu0 0
      %1717 = vmatpush1.bf16.msra.mxu0 0
      %1718 = vmatprep.subr.bf16.mxu0 0
      %1719 = vmatpush1.bf16.msra.mxu0 0
      %1720 = vmatprep.subr.bf16.mxu0 0
      %1721 = vmatpush1.bf16.msra.mxu0 0
      %1722 = vmatprep.subr.bf16.mxu0 0
      %1723 = vmatpush1.bf16.msra.mxu0 0
      %1724 = vmatprep.subr.bf16.mxu0 0
      %1725 = vmatpush1.bf16.msra.mxu0 0
      %1726 = vmatprep.subr.bf16.mxu0 0
      %1727 = vmatpush1.bf16.msra.mxu0 0
      %1728 = vmatprep.subr.bf16.mxu0 0
      %1729 = vmatpush1.bf16.msra.mxu0 0
      %1730 = vmatprep.subr.bf16.mxu0 0
      %1731 = vmatpush1.bf16.msra.mxu0 0
      %1732 = vmatprep.subr.bf16.mxu0 0
      %1733 = vmatpush1.bf16.msra.mxu0 0
      %1734 = vmatprep.subr.bf16.mxu0 0
      %1735 = vmatpush1.bf16.msra.mxu0 0
      %1736 = vmatprep.subr.bf16.mxu0 0
      %1737 = vmatpush1.bf16.msra.mxu0 0
      %1738 = vmatprep.subr.bf16.mxu0 0
      %1739 = vmatpush1.bf16.msra.mxu0 0
      %1740 = vmatprep.mubr.bf16.mxu0 0
      %1741 = vmatmul.mubr.bf16.gmra.mrb[0].mxu0 %v1706
      %v1742 = vpop.f32.mrb[0].mxu0
      %v1743 = vadd.f32 0.0, %v1742
      %v1744 = vpop.f32.mrb[0].mxu0
      %v1745 = vpop.f32.mrb[0].mxu0
      %v1746 = vpop.f32.mrb[0].mxu0
      %1747 = vdwg.mxu0
      %v1748 = vadd.f32 %v1673, %v1743
      %v1749 = vld [vmem:[%s1601] sm:$0x3]
      %v1750 = vld [vmem:[%s1601 + $0x2] sm:$0x3]
      %v1754 = vunpack.c.l.s4 1966171168
      %v1755 = vunpack.c.0.s8 %v1754
      %v1756 = vlaneseq
      %v1757 = vshrl.u32 %v1756, 7
      %v1758 = vsub.s32 %v1755, %v1757
      %v1759 = vrot.slane %v1749, %v1758
      %v1760 = vcombine.high %v1759, %v1759
      %v1762 = vunpack.c.l.s4 1966171168
      %v1763 = vunpack.c.0.s8 %v1762
      %v1764 = vlaneseq
      %v1765 = vshrl.u32 %v1764, 7
      %v1766 = vsub.s32 %v1763, %v1765
      %v1767 = vrot.slane %v1750, %v1766
      %v1768 = vcombine.high %v1767, %v1767
      %v1770 = vshrl.u32 %v1759, 16
      %v1772 = vrot.slane %v1770, 7
      %v1773 = vrot.slane %v1772, 1
      %v1775 = vshll.u32 %v1760, 16
      %v1777 = vsel %vm418, %v1773, %v1775
      %v1779 = vshrl.u32 %v1767, 16
      %v1781 = vrot.slane %v1779, 7
      %v1782 = vrot.slane %v1781, 1
      %v1784 = vshll.u32 %v1768, 16
      %v1786 = vsel %vm418, %v1782, %v1784
      %s1787 = scalar_lea.vmem %s221, 136
      %v1788 = vld [vmem:[%s1787] sm:$0xf]
      %v1789 = vld [vmem:[%s1787 + $0x4] sm:$0xf]
      %v1790 = vcombine.low %v1777, %v1786
      %v1792 = vunpack.c.l.s4 1966171168
      %v1793 = vunpack.c.0.s8 %v1792
      %v1794 = vlaneseq
      %v1795 = vshrl.u32 %v1794, 7
      %v1796 = vsub.s32 %v1793, %v1795
      %v1797 = vrot.slane %v1790, %v1796
      %v1799 = vunpack.c.l.s4 1966171168
      %v1800 = vunpack.c.0.s8 %v1799
      %v1801 = vlaneseq
      %v1802 = vshrl.u32 %v1801, 7
      %v1803 = vsub.s32 %v1800, %v1802
      %v1804 = vrot.slane %v1797, %v1803
      %v1807 = vunpack.c.l.b16 %v1788
      %v1808 = vunpack.c.l.b16 %v1789
      %v1809 = vpack.c.b16 %v1808, %v1807
      %v1812 = vsel %vm274, %v1804, 0
      %1814 = vmatprep.subr.bf16.mxu0 0
      %1815 = vmatpush1.bf16.msra.mxu0 %v1809
      %1816 = vmatprep.subr.bf16.mxu0 0
      %1817 = vmatpush1.bf16.msra.mxu0 0
      %1818 = vmatprep.subr.bf16.mxu0 0
      %1819 = vmatpush1.bf16.msra.mxu0 0
      %1820 = vmatprep.subr.bf16.mxu0 0
      %1821 = vmatpush1.bf16.msra.mxu0 0
      %1822 = vmatprep.subr.bf16.mxu0 0
      %1823 = vmatpush1.bf16.msra.mxu0 0
      %1824 = vmatprep.subr.bf16.mxu0 0
      %1825 = vmatpush1.bf16.msra.mxu0 0
      %1826 = vmatprep.subr.bf16.mxu0 0
      %1827 = vmatpush1.bf16.msra.mxu0 0
      %1828 = vmatprep.subr.bf16.mxu0 0
      %1829 = vmatpush1.bf16.msra.mxu0 0
      %1830 = vmatprep.subr.bf16.mxu0 0
      %1831 = vmatpush1.bf16.msra.mxu0 0
      %1832 = vmatprep.subr.bf16.mxu0 0
      %1833 = vmatpush1.bf16.msra.mxu0 0
      %1834 = vmatprep.subr.bf16.mxu0 0
      %1835 = vmatpush1.bf16.msra.mxu0 0
      %1836 = vmatprep.subr.bf16.mxu0 0
      %1837 = vmatpush1.bf16.msra.mxu0 0
      %1838 = vmatprep.subr.bf16.mxu0 0
      %1839 = vmatpush1.bf16.msra.mxu0 0
      %1840 = vmatprep.subr.bf16.mxu0 0
      %1841 = vmatpush1.bf16.msra.mxu0 0
      %1842 = vmatprep.subr.bf16.mxu0 0
      %1843 = vmatpush1.bf16.msra.mxu0 0
      %1844 = vmatprep.subr.bf16.mxu0 0
      %1845 = vmatpush1.bf16.msra.mxu0 0
      %1846 = vmatprep.mubr.bf16.mxu0 0
      %1847 = vmatmul.mubr.bf16.gmra.mrb[0].mxu0 %v1812
      %v1848 = vpop.f32.mrb[0].mxu0
      %v1849 = vadd.f32 0.0, %v1848
      %v1850 = vpop.f32.mrb[0].mxu0
      %v1851 = vpop.f32.mrb[0].mxu0
      %v1852 = vpop.f32.mrb[0].mxu0
      %1853 = vdwg.mxu0
      %v1854 = vadd.f32 %v1748, %v1849
      %v1855 = vld [vmem:[%s1676] sm:$0x3]
      %v1856 = vld [vmem:[%s1676 + $0x2] sm:$0x3]
      %v1860 = vunpack.c.l.s4 1966171168
      %v1861 = vunpack.c.0.s8 %v1860
      %v1862 = vlaneseq
      %v1863 = vshrl.u32 %v1862, 7
      %v1864 = vsub.s32 %v1861, %v1863
      %v1865 = vrot.slane %v1855, %v1864
      %v1866 = vcombine.high %v1865, %v1865
      %v1868 = vunpack.c.l.s4 1966171168
      %v1869 = vunpack.c.0.s8 %v1868
      %v1870 = vlaneseq
      %v1871 = vshrl.u32 %v1870, 7
      %v1872 = vsub.s32 %v1869, %v1871
      %v1873 = vrot.slane %v1856, %v1872
      %v1874 = vcombine.high %v1873, %v1873
      %v1876 = vshrl.u32 %v1865, 16
      %v1878 = vrot.slane %v1876, 7
      %v1879 = vrot.slane %v1878, 1
      %v1881 = vshll.u32 %v1866, 16
      %v1883 = vsel %vm418, %v1879, %v1881
      %v1885 = vshrl.u32 %v1873, 16
      %v1887 = vrot.slane %v1885, 7
      %v1888 = vrot.slane %v1887, 1
      %v1890 = vshll.u32 %v1874, 16
      %v1892 = vsel %vm418, %v1888, %v1890
      %s1893 = scalar_lea.vmem %s221, 144
      %v1894 = vld [vmem:[%s1893] sm:$0xf]
      %v1895 = vld [vmem:[%s1893 + $0x4] sm:$0xf]
      %v1896 = vcombine.low %v1883, %v1892
      %v1898 = vunpack.c.l.s4 1966171168
      %v1899 = vunpack.c.0.s8 %v1898
      %v1900 = vlaneseq
      %v1901 = vshrl.u32 %v1900, 7
      %v1902 = vsub.s32 %v1899, %v1901
      %v1903 = vrot.slane %v1896, %v1902
      %v1905 = vunpack.c.l.s4 1966171168
      %v1906 = vunpack.c.0.s8 %v1905
      %v1907 = vlaneseq
      %v1908 = vshrl.u32 %v1907, 7
      %v1909 = vsub.s32 %v1906, %v1908
      %v1910 = vrot.slane %v1903, %v1909
      %v1913 = vunpack.c.l.b16 %v1894
      %v1914 = vunpack.c.l.b16 %v1895
      %v1915 = vpack.c.b16 %v1914, %v1913
      %v1918 = vsel %vm274, %v1910, 0
      %1920 = vmatprep.subr.bf16.mxu0 0
      %1921 = vmatpush1.bf16.msra.mxu0 %v1915
      %1922 = vmatprep.subr.bf16.mxu0 0
      %1923 = vmatpush1.bf16.msra.mxu0 0
      %1924 = vmatprep.subr.bf16.mxu0 0
      %1925 = vmatpush1.bf16.msra.mxu0 0
      %1926 = vmatprep.subr.bf16.mxu0 0
      %1927 = vmatpush1.bf16.msra.mxu0 0
      %1928 = vmatprep.subr.bf16.mxu0 0
      %1929 = vmatpush1.bf16.msra.mxu0 0
      %1930 = vmatprep.subr.bf16.mxu0 0
      %1931 = vmatpush1.bf16.msra.mxu0 0
      %1932 = vmatprep.subr.bf16.mxu0 0
      %1933 = vmatpush1.bf16.msra.mxu0 0
      %1934 = vmatprep.subr.bf16.mxu0 0
      %1935 = vmatpush1.bf16.msra.mxu0 0
      %1936 = vmatprep.subr.bf16.mxu0 0
      %1937 = vmatpush1.bf16.msra.mxu0 0
      %1938 = vmatprep.subr.bf16.mxu0 0
      %1939 = vmatpush1.bf16.msra.mxu0 0
      %1940 = vmatprep.subr.bf16.mxu0 0
      %1941 = vmatpush1.bf16.msra.mxu0 0
      %1942 = vmatprep.subr.bf16.mxu0 0
      %1943 = vmatpush1.bf16.msra.mxu0 0
      %1944 = vmatprep.subr.bf16.mxu0 0
      %1945 = vmatpush1.bf16.msra.mxu0 0
      %1946 = vmatprep.subr.bf16.mxu0 0
      %1947 = vmatpush1.bf16.msra.mxu0 0
      %1948 = vmatprep.subr.bf16.mxu0 0
      %1949 = vmatpush1.bf16.msra.mxu0 0
      %1950 = vmatprep.subr.bf16.mxu0 0
      %1951 = vmatpush1.bf16.msra.mxu0 0
      %1952 = vmatprep.mubr.bf16.mxu0 0
      %1953 = vmatmul.mubr.bf16.gmra.mrb[0].mxu0 %v1918
      %v1954 = vpop.f32.mrb[0].mxu0
      %v1955 = vadd.f32 0.0, %v1954
      %v1956 = vpop.f32.mrb[0].mxu0
      %v1957 = vpop.f32.mrb[0].mxu0
      %v1958 = vpop.f32.mrb[0].mxu0
      %1959 = vdwg.mxu0
      %v1960 = vadd.f32 %v1854, %v1955
      %v1961 = vld [vmem:[%s1601] sm:$0x2]
      %v1962 = vld [vmem:[%s1601 + $0x2] sm:$0x2]
      %v1966 = vunpack.c.l.s4 1966171168
      %v1967 = vunpack.c.0.s8 %v1966
      %v1968 = vlaneseq
      %v1969 = vshrl.u32 %v1968, 7
      %v1970 = vsub.s32 %v1967, %v1969
      %v1971 = vrot.slane %v1961, %v1970
      %v1972 = vcombine.high %v1971, %v1971
      %v1974 = vunpack.c.l.s4 1966171168
      %v1975 = vunpack.c.0.s8 %v1974
      %v1976 = vlaneseq
      %v1977 = vshrl.u32 %v1976, 7
      %v1978 = vsub.s32 %v1975, %v1977
      %v1979 = vrot.slane %v1962, %v1978
      %v1980 = vcombine.high %v1979, %v1979
      %s1981 = scalar_lea.vmem %s221, 152
      %v1982 = vld [vmem:[%s1981] sm:$0xf]
      %v1983 = vld [vmem:[%s1981 + $0x4] sm:$0xf]
      %v1984 = vcombine.low %v1972, %v1980
      %v1986 = vunpack.c.l.s4 1966171168
      %v1987 = vunpack.c.0.s8 %v1986
      %v1988 = vlaneseq
      %v1989 = vshrl.u32 %v1988, 7
      %v1990 = vsub.s32 %v1987, %v1989
      %v1991 = vrot.slane %v1984, %v1990
      %v1993 = vunpack.c.l.s4 1966171168
      %v1994 = vunpack.c.0.s8 %v1993
      %v1995 = vlaneseq
      %v1996 = vshrl.u32 %v1995, 7
      %v1997 = vsub.s32 %v1994, %v1996
      %v1998 = vrot.slane %v1991, %v1997
      %v2001 = vunpack.c.l.b16 %v1982
      %v2002 = vunpack.c.l.b16 %v1983
      %v2003 = vpack.c.b16 %v2002, %v2001
      %v2006 = vsel %vm274, %v1998, 0
      %2008 = vmatprep.subr.bf16.mxu0 0
      %2009 = vmatpush1.bf16.msra.mxu0 %v2003
      %2010 = vmatprep.subr.bf16.mxu0 0
      %2011 = vmatpush1.bf16.msra.mxu0 0
      %2012 = vmatprep.subr.bf16.mxu0 0
      %2013 = vmatpush1.bf16.msra.mxu0 0
      %2014 = vmatprep.subr.bf16.mxu0 0
      %2015 = vmatpush1.bf16.msra.mxu0 0
      %2016 = vmatprep.subr.bf16.mxu0 0
      %2017 = vmatpush1.bf16.msra.mxu0 0
      %2018 = vmatprep.subr.bf16.mxu0 0
      %2019 = vmatpush1.bf16.msra.mxu0 0
      %2020 = vmatprep.subr.bf16.mxu0 0
      %2021 = vmatpush1.bf16.msra.mxu0 0
      %2022 = vmatprep.subr.bf16.mxu0 0
      %2023 = vmatpush1.bf16.msra.mxu0 0
      %2024 = vmatprep.subr.bf16.mxu0 0
      %2025 = vmatpush1.bf16.msra.mxu0 0
      %2026 = vmatprep.subr.bf16.mxu0 0
      %2027 = vmatpush1.bf16.msra.mxu0 0
      %2028 = vmatprep.subr.bf16.mxu0 0
      %2029 = vmatpush1.bf16.msra.mxu0 0
      %2030 = vmatprep.subr.bf16.mxu0 0
      %2031 = vmatpush1.bf16.msra.mxu0 0
      %2032 = vmatprep.subr.bf16.mxu0 0
      %2033 = vmatpush1.bf16.msra.mxu0 0
      %2034 = vmatprep.subr.bf16.mxu0 0
      %2035 = vmatpush1.bf16.msra.mxu0 0
      %2036 = vmatprep.subr.bf16.mxu0 0
      %2037 = vmatpush1.bf16.msra.mxu0 0
      %2038 = vmatprep.subr.bf16.mxu0 0
      %2039 = vmatpush1.bf16.msra.mxu0 0
      %2040 = vmatprep.mubr.bf16.mxu0 0
      %2041 = vmatmul.mubr.bf16.gmra.mrb[0].mxu0 %v2006
      %v2042 = vpop.f32.mrb[0].mxu0
      %v2043 = vadd.f32 0.0, %v2042
      %v2044 = vpop.f32.mrb[0].mxu0
      %v2045 = vpop.f32.mrb[0].mxu0
      %v2046 = vpop.f32.mrb[0].mxu0
      %2047 = vdwg.mxu0
      %v2048 = vadd.f32 %v1960, %v2043
      %s2049 = sadd.s32 %s236, 2
      %s2050 = smul.addr %s2049, 2
      %s2051 = scalar_lea.vmem %s217, %s2050
      %v2052 = vld [vmem:[%s2051] sm:$0x1]
      %v2053 = vld [vmem:[%s2051 + $0x2] sm:$0x1]
      %s2054 = scalar_lea.vmem %s221, 160
      %v2055 = vld [vmem:[%s2054] sm:$0xf]
      %v2056 = vld [vmem:[%s2054 + $0x4] sm:$0xf]
      %v2059 = vcombine.low %v2052, %v2053
      %v2061 = vunpack.c.l.s4 1966171168
      %v2062 = vunpack.c.0.s8 %v2061
      %v2063 = vlaneseq
      %v2064 = vshrl.u32 %v2063, 7
      %v2065 = vsub.s32 %v2062, %v2064
      %v2066 = vrot.slane %v2059, %v2065
      %v2068 = vunpack.c.l.s4 1966171168
      %v2069 = vunpack.c.0.s8 %v2068
      %v2070 = vlaneseq
      %v2071 = vshrl.u32 %v2070, 7
      %v2072 = vsub.s32 %v2069, %v2071
      %v2073 = vrot.slane %v2066, %v2072
      %v2076 = vunpack.c.l.b16 %v2055
      %v2077 = vunpack.c.l.b16 %v2056
      %v2078 = vpack.c.b16 %v2077, %v2076
      %v2081 = vsel %vm274, %v2073, 0
      %2083 = vmatprep.subr.bf16.mxu0 0
      %2084 = vmatpush1.bf16.msra.mxu0 %v2078
      %2085 = vmatprep.subr.bf16.mxu0 0
      %2086 = vmatpush1.bf16.msra.mxu0 0
      %2087 = vmatprep.subr.bf16.mxu0 0
      %2088 = vmatpush1.bf16.msra.mxu0 0
      %2089 = vmatprep.subr.bf16.mxu0 0
      %2090 = vmatpush1.bf16.msra.mxu0 0
      %2091 = vmatprep.subr.bf16.mxu0 0
      %2092 = vmatpush1.bf16.msra.mxu0 0
      %2093 = vmatprep.subr.bf16.mxu0 0
      %2094 = vmatpush1.bf16.msra.mxu0 0
      %2095 = vmatprep.subr.bf16.mxu0 0
      %2096 = vmatpush1.bf16.msra.mxu0 0
      %2097 = vmatprep.subr.bf16.mxu0 0
      %2098 = vmatpush1.bf16.msra.mxu0 0
      %2099 = vmatprep.subr.bf16.mxu0 0
      %2100 = vmatpush1.bf16.msra.mxu0 0
      %2101 = vmatprep.subr.bf16.mxu0 0
      %2102 = vmatpush1.bf16.msra.mxu0 0
      %2103 = vmatprep.subr.bf16.mxu0 0
      %2104 = vmatpush1.bf16.msra.mxu0 0
      %2105 = vmatprep.subr.bf16.mxu0 0
      %2106 = vmatpush1.bf16.msra.mxu0 0
      %2107 = vmatprep.subr.bf16.mxu0 0
      %2108 = vmatpush1.bf16.msra.mxu0 0
      %2109 = vmatprep.subr.bf16.mxu0 0
      %2110 = vmatpush1.bf16.msra.mxu0 0
      %2111 = vmatprep.subr.bf16.mxu0 0
      %2112 = vmatpush1.bf16.msra.mxu0 0
      %2113 = vmatprep.subr.bf16.mxu0 0
      %2114 = vmatpush1.bf16.msra.mxu0 0
      %2115 = vmatprep.mubr.bf16.mxu0 0
      %2116 = vmatmul.mubr.bf16.gmra.mrb[0].mxu0 %v2081
      %v2117 = vpop.f32.mrb[0].mxu0
      %v2118 = vadd.f32 0.0, %v2117
      %v2119 = vpop.f32.mrb[0].mxu0
      %v2120 = vpop.f32.mrb[0].mxu0
      %v2121 = vpop.f32.mrb[0].mxu0
      %2122 = vdwg.mxu0
      %v2123 = vadd.f32 %v2048, %v2118
      %s2124 = sadd.s32 %s2049, 4
      %s2125 = smul.addr %s2124, 2
      %s2126 = scalar_lea.vmem %s217, %s2125
      %v2127 = vld [vmem:[%s2126] sm:$0x1]
      %v2128 = vld [vmem:[%s2126 + $0x2] sm:$0x1]
      %s2129 = scalar_lea.vmem %s221, 168
      %v2130 = vld [vmem:[%s2129] sm:$0xf]
      %v2131 = vld [vmem:[%s2129 + $0x4] sm:$0xf]
      %v2134 = vcombine.low %v2127, %v2128
      %v2136 = vunpack.c.l.s4 1966171168
      %v2137 = vunpack.c.0.s8 %v2136
      %v2138 = vlaneseq
      %v2139 = vshrl.u32 %v2138, 7
      %v2140 = vsub.s32 %v2137, %v2139
      %v2141 = vrot.slane %v2134, %v2140
      %v2143 = vunpack.c.l.s4 1966171168
      %v2144 = vunpack.c.0.s8 %v2143
      %v2145 = vlaneseq
      %v2146 = vshrl.u32 %v2145, 7
      %v2147 = vsub.s32 %v2144, %v2146
      %v2148 = vrot.slane %v2141, %v2147
      %v2151 = vunpack.c.l.b16 %v2130
      %v2152 = vunpack.c.l.b16 %v2131
      %v2153 = vpack.c.b16 %v2152, %v2151
      %v2156 = vsel %vm274, %v2148, 0
      %2158 = vmatprep.subr.bf16.mxu0 0
      %2159 = vmatpush1.bf16.msra.mxu0 %v2153
      %2160 = vmatprep.subr.bf16.mxu0 0
      %2161 = vmatpush1.bf16.msra.mxu0 0
      %2162 = vmatprep.subr.bf16.mxu0 0
      %2163 = vmatpush1.bf16.msra.mxu0 0
      %2164 = vmatprep.subr.bf16.mxu0 0
      %2165 = vmatpush1.bf16.msra.mxu0 0
      %2166 = vmatprep.subr.bf16.mxu0 0
      %2167 = vmatpush1.bf16.msra.mxu0 0
      %2168 = vmatprep.subr.bf16.mxu0 0
      %2169 = vmatpush1.bf16.msra.mxu0 0
      %2170 = vmatprep.subr.bf16.mxu0 0
      %2171 = vmatpush1.bf16.msra.mxu0 0
      %2172 = vmatprep.subr.bf16.mxu0 0
      %2173 = vmatpush1.bf16.msra.mxu0 0
      %2174 = vmatprep.subr.bf16.mxu0 0
      %2175 = vmatpush1.bf16.msra.mxu0 0
      %2176 = vmatprep.subr.bf16.mxu0 0
      %2177 = vmatpush1.bf16.msra.mxu0 0
      %2178 = vmatprep.subr.bf16.mxu0 0
      %2179 = vmatpush1.bf16.msra.mxu0 0
      %2180 = vmatprep.subr.bf16.mxu0 0
      %2181 = vmatpush1.bf16.msra.mxu0 0
      %2182 = vmatprep.subr.bf16.mxu0 0
      %2183 = vmatpush1.bf16.msra.mxu0 0
      %2184 = vmatprep.subr.bf16.mxu0 0
      %2185 = vmatpush1.bf16.msra.mxu0 0
      %2186 = vmatprep.subr.bf16.mxu0 0
      %2187 = vmatpush1.bf16.msra.mxu0 0
      %2188 = vmatprep.subr.bf16.mxu0 0
      %2189 = vmatpush1.bf16.msra.mxu0 0
      %2190 = vmatprep.mubr.bf16.mxu0 0
      %2191 = vmatmul.mubr.bf16.gmra.mrb[0].mxu0 %v2156
      %v2192 = vpop.f32.mrb[0].mxu0
      %v2193 = vadd.f32 0.0, %v2192
      %v2194 = vpop.f32.mrb[0].mxu0
      %v2195 = vpop.f32.mrb[0].mxu0
      %v2196 = vpop.f32.mrb[0].mxu0
      %2197 = vdwg.mxu0
      %v2198 = vadd.f32 %v2123, %v2193
      %v2199 = vld [vmem:[%s2051] sm:$0x3]
      %v2200 = vld [vmem:[%s2051 + $0x2] sm:$0x3]
      %v2204 = vunpack.c.l.s4 1966171168
      %v2205 = vunpack.c.0.s8 %v2204
      %v2206 = vlaneseq
      %v2207 = vshrl.u32 %v2206, 7
      %v2208 = vsub.s32 %v2205, %v2207
      %v2209 = vrot.slane %v2199, %v2208
      %v2210 = vcombine.high %v2209, %v2209
      %v2212 = vunpack.c.l.s4 1966171168
      %v2213 = vunpack.c.0.s8 %v2212
      %v2214 = vlaneseq
      %v2215 = vshrl.u32 %v2214, 7
      %v2216 = vsub.s32 %v2213, %v2215
      %v2217 = vrot.slane %v2200, %v2216
      %v2218 = vcombine.high %v2217, %v2217
      %v2220 = vshrl.u32 %v2209, 16
      %v2222 = vrot.slane %v2220, 7
      %v2223 = vrot.slane %v2222, 1
      %v2225 = vshll.u32 %v2210, 16
      %v2227 = vsel %vm418, %v2223, %v2225
      %v2229 = vshrl.u32 %v2217, 16
      %v2231 = vrot.slane %v2229, 7
      %v2232 = vrot.slane %v2231, 1
      %v2234 = vshll.u32 %v2218, 16
      %v2236 = vsel %vm418, %v2232, %v2234
      %s2237 = scalar_lea.vmem %s221, 176
      %v2238 = vld [vmem:[%s2237] sm:$0xf]
      %v2239 = vld [vmem:[%s2237 + $0x4] sm:$0xf]
      %v2240 = vcombine.low %v2227, %v2236
      %v2242 = vunpack.c.l.s4 1966171168
      %v2243 = vunpack.c.0.s8 %v2242
      %v2244 = vlaneseq
      %v2245 = vshrl.u32 %v2244, 7
      %v2246 = vsub.s32 %v2243, %v2245
      %v2247 = vrot.slane %v2240, %v2246
      %v2249 = vunpack.c.l.s4 1966171168
      %v2250 = vunpack.c.0.s8 %v2249
      %v2251 = vlaneseq
      %v2252 = vshrl.u32 %v2251, 7
      %v2253 = vsub.s32 %v2250, %v2252
      %v2254 = vrot.slane %v2247, %v2253
      %v2257 = vunpack.c.l.b16 %v2238
      %v2258 = vunpack.c.l.b16 %v2239
      %v2259 = vpack.c.b16 %v2258, %v2257
      %v2262 = vsel %vm274, %v2254, 0
      %2264 = vmatprep.subr.bf16.mxu0 0
      %2265 = vmatpush1.bf16.msra.mxu0 %v2259
      %2266 = vmatprep.subr.bf16.mxu0 0
      %2267 = vmatpush1.bf16.msra.mxu0 0
      %2268 = vmatprep.subr.bf16.mxu0 0
      %2269 = vmatpush1.bf16.msra.mxu0 0
      %2270 = vmatprep.subr.bf16.mxu0 0
      %2271 = vmatpush1.bf16.msra.mxu0 0
      %2272 = vmatprep.subr.bf16.mxu0 0
      %2273 = vmatpush1.bf16.msra.mxu0 0
      %2274 = vmatprep.subr.bf16.mxu0 0
      %2275 = vmatpush1.bf16.msra.mxu0 0
      %2276 = vmatprep.subr.bf16.mxu0 0
      %2277 = vmatpush1.bf16.msra.mxu0 0
      %2278 = vmatprep.subr.bf16.mxu0 0
      %2279 = vmatpush1.bf16.msra.mxu0 0
      %2280 = vmatprep.subr.bf16.mxu0 0
      %2281 = vmatpush1.bf16.msra.mxu0 0
      %2282 = vmatprep.subr.bf16.mxu0 0
      %2283 = vmatpush1.bf16.msra.mxu0 0
      %2284 = vmatprep.subr.bf16.mxu0 0
      %2285 = vmatpush1.bf16.msra.mxu0 0
      %2286 = vmatprep.subr.bf16.mxu0 0
      %2287 = vmatpush1.bf16.msra.mxu0 0
      %2288 = vmatprep.subr.bf16.mxu0 0
      %2289 = vmatpush1.bf16.msra.mxu0 0
      %2290 = vmatprep.subr.bf16.mxu0 0
      %2291 = vmatpush1.bf16.msra.mxu0 0
      %2292 = vmatprep.subr.bf16.mxu0 0
      %2293 = vmatpush1.bf16.msra.mxu0 0
      %2294 = vmatprep.subr.bf16.mxu0 0
      %2295 = vmatpush1.bf16.msra.mxu0 0
      %2296 = vmatprep.mubr.bf16.mxu0 0
      %2297 = vmatmul.mubr.bf16.gmra.mrb[0].mxu0 %v2262
      %v2298 = vpop.f32.mrb[0].mxu0
      %v2299 = vadd.f32 0.0, %v2298
      %v2300 = vpop.f32.mrb[0].mxu0
      %v2301 = vpop.f32.mrb[0].mxu0
      %v2302 = vpop.f32.mrb[0].mxu0
      %2303 = vdwg.mxu0
      %v2304 = vadd.f32 %v2198, %v2299
      %v2305 = vld [vmem:[%s2126] sm:$0x3]
      %v2306 = vld [vmem:[%s2126 + $0x2] sm:$0x3]
      %v2310 = vunpack.c.l.s4 1966171168
      %v2311 = vunpack.c.0.s8 %v2310
      %v2312 = vlaneseq
      %v2313 = vshrl.u32 %v2312, 7
      %v2314 = vsub.s32 %v2311, %v2313
      %v2315 = vrot.slane %v2305, %v2314
      %v2316 = vcombine.high %v2315, %v2315
      %v2318 = vunpack.c.l.s4 1966171168
      %v2319 = vunpack.c.0.s8 %v2318
      %v2320 = vlaneseq
      %v2321 = vshrl.u32 %v2320, 7
      %v2322 = vsub.s32 %v2319, %v2321
      %v2323 = vrot.slane %v2306, %v2322
      %v2324 = vcombine.high %v2323, %v2323
      %v2326 = vshrl.u32 %v2315, 16
      %v2328 = vrot.slane %v2326, 7
      %v2329 = vrot.slane %v2328, 1
      %v2331 = vshll.u32 %v2316, 16
      %v2333 = vsel %vm418, %v2329, %v2331
      %v2335 = vshrl.u32 %v2323, 16
      %v2337 = vrot.slane %v2335, 7
      %v2338 = vrot.slane %v2337, 1
      %v2340 = vshll.u32 %v2324, 16
      %v2342 = vsel %vm418, %v2338, %v2340
      %s2343 = scalar_lea.vmem %s221, 184
      %v2344 = vld [vmem:[%s2343] sm:$0xf]
      %v2345 = vld [vmem:[%s2343 + $0x4] sm:$0xf]
      %v2346 = vcombine.low %v2333, %v2342
      %v2348 = vunpack.c.l.s4 1966171168
      %v2349 = vunpack.c.0.s8 %v2348
      %v2350 = vlaneseq
      %v2351 = vshrl.u32 %v2350, 7
      %v2352 = vsub.s32 %v2349, %v2351
      %v2353 = vrot.slane %v2346, %v2352
      %v2355 = vunpack.c.l.s4 1966171168
      %v2356 = vunpack.c.0.s8 %v2355
      %v2357 = vlaneseq
      %v2358 = vshrl.u32 %v2357, 7
      %v2359 = vsub.s32 %v2356, %v2358
      %v2360 = vrot.slane %v2353, %v2359
      %v2363 = vunpack.c.l.b16 %v2344
      %v2364 = vunpack.c.l.b16 %v2345
      %v2365 = vpack.c.b16 %v2364, %v2363
      %v2368 = vsel %vm274, %v2360, 0
      %2370 = vmatprep.subr.bf16.mxu0 0
      %2371 = vmatpush1.bf16.msra.mxu0 %v2365
      %2372 = vmatprep.subr.bf16.mxu0 0
      %2373 = vmatpush1.bf16.msra.mxu0 0
      %2374 = vmatprep.subr.bf16.mxu0 0
      %2375 = vmatpush1.bf16.msra.mxu0 0
      %2376 = vmatprep.subr.bf16.mxu0 0
      %2377 = vmatpush1.bf16.msra.mxu0 0
      %2378 = vmatprep.subr.bf16.mxu0 0
      %2379 = vmatpush1.bf16.msra.mxu0 0
      %2380 = vmatprep.subr.bf16.mxu0 0
      %2381 = vmatpush1.bf16.msra.mxu0 0
      %2382 = vmatprep.subr.bf16.mxu0 0
      %2383 = vmatpush1.bf16.msra.mxu0 0
      %2384 = vmatprep.subr.bf16.mxu0 0
      %2385 = vmatpush1.bf16.msra.mxu0 0
      %2386 = vmatprep.subr.bf16.mxu0 0
      %2387 = vmatpush1.bf16.msra.mxu0 0
      %2388 = vmatprep.subr.bf16.mxu0 0
      %2389 = vmatpush1.bf16.msra.mxu0 0
      %2390 = vmatprep.subr.bf16.mxu0 0
      %2391 = vmatpush1.bf16.msra.mxu0 0
      %2392 = vmatprep.subr.bf16.mxu0 0
      %2393 = vmatpush1.bf16.msra.mxu0 0
      %2394 = vmatprep.subr.bf16.mxu0 0
      %2395 = vmatpush1.bf16.msra.mxu0 0
      %2396 = vmatprep.subr.bf16.mxu0 0
      %2397 = vmatpush1.bf16.msra.mxu0 0
      %2398 = vmatprep.subr.bf16.mxu0 0
      %2399 = vmatpush1.bf16.msra.mxu0 0
      %2400 = vmatprep.subr.bf16.mxu0 0
      %2401 = vmatpush1.bf16.msra.mxu0 0
      %2402 = vmatprep.mubr.bf16.mxu0 0
      %2403 = vmatmul.mubr.bf16.gmra.mrb[0].mxu0 %v2368
      %v2404 = vpop.f32.mrb[0].mxu0
      %v2405 = vadd.f32 0.0, %v2404
      %v2406 = vpop.f32.mrb[0].mxu0
      %v2407 = vpop.f32.mrb[0].mxu0
      %v2408 = vpop.f32.mrb[0].mxu0
      %2409 = vdwg.mxu0
      %v2410 = vadd.f32 %v2304, %v2405
      %v2411 = vld [vmem:[%s2051] sm:$0x2]
      %v2412 = vld [vmem:[%s2051 + $0x2] sm:$0x2]
      %v2416 = vunpack.c.l.s4 1966171168
      %v2417 = vunpack.c.0.s8 %v2416
      %v2418 = vlaneseq
      %v2419 = vshrl.u32 %v2418, 7
      %v2420 = vsub.s32 %v2417, %v2419
      %v2421 = vrot.slane %v2411, %v2420
      %v2422 = vcombine.high %v2421, %v2421
      %v2424 = vunpack.c.l.s4 1966171168
      %v2425 = vunpack.c.0.s8 %v2424
      %v2426 = vlaneseq
      %v2427 = vshrl.u32 %v2426, 7
      %v2428 = vsub.s32 %v2425, %v2427
      %v2429 = vrot.slane %v2412, %v2428
      %v2430 = vcombine.high %v2429, %v2429
      %s2431 = scalar_lea.vmem %s221, 192
      %v2432 = vld [vmem:[%s2431] sm:$0xf]
      %v2433 = vld [vmem:[%s2431 + $0x4] sm:$0xf]
      %v2434 = vcombine.low %v2422, %v2430
      %v2436 = vunpack.c.l.s4 1966171168
      %v2437 = vunpack.c.0.s8 %v2436
      %v2438 = vlaneseq
      %v2439 = vshrl.u32 %v2438, 7
      %v2440 = vsub.s32 %v2437, %v2439
      %v2441 = vrot.slane %v2434, %v2440
      %v2443 = vunpack.c.l.s4 1966171168
      %v2444 = vunpack.c.0.s8 %v2443
      %v2445 = vlaneseq
      %v2446 = vshrl.u32 %v2445, 7
      %v2447 = vsub.s32 %v2444, %v2446
      %v2448 = vrot.slane %v2441, %v2447
      %v2451 = vunpack.c.l.b16 %v2432
      %v2452 = vunpack.c.l.b16 %v2433
      %v2453 = vpack.c.b16 %v2452, %v2451
      %v2456 = vsel %vm274, %v2448, 0
      %2458 = vmatprep.subr.bf16.mxu0 0
      %2459 = vmatpush1.bf16.msra.mxu0 %v2453
      %2460 = vmatprep.subr.bf16.mxu0 0
      %2461 = vmatpush1.bf16.msra.mxu0 0
      %2462 = vmatprep.subr.bf16.mxu0 0
      %2463 = vmatpush1.bf16.msra.mxu0 0
      %2464 = vmatprep.subr.bf16.mxu0 0
      %2465 = vmatpush1.bf16.msra.mxu0 0
      %2466 = vmatprep.subr.bf16.mxu0 0
      %2467 = vmatpush1.bf16.msra.mxu0 0
      %2468 = vmatprep.subr.bf16.mxu0 0
      %2469 = vmatpush1.bf16.msra.mxu0 0
      %2470 = vmatprep.subr.bf16.mxu0 0
      %2471 = vmatpush1.bf16.msra.mxu0 0
      %2472 = vmatprep.subr.bf16.mxu0 0
      %2473 = vmatpush1.bf16.msra.mxu0 0
      %2474 = vmatprep.subr.bf16.mxu0 0
      %2475 = vmatpush1.bf16.msra.mxu0 0
      %2476 = vmatprep.subr.bf16.mxu0 0
      %2477 = vmatpush1.bf16.msra.mxu0 0
      %2478 = vmatprep.subr.bf16.mxu0 0
      %2479 = vmatpush1.bf16.msra.mxu0 0
      %2480 = vmatprep.subr.bf16.mxu0 0
      %2481 = vmatpush1.bf16.msra.mxu0 0
      %2482 = vmatprep.subr.bf16.mxu0 0
      %2483 = vmatpush1.bf16.msra.mxu0 0
      %2484 = vmatprep.subr.bf16.mxu0 0
      %2485 = vmatpush1.bf16.msra.mxu0 0
      %2486 = vmatprep.subr.bf16.mxu0 0
      %2487 = vmatpush1.bf16.msra.mxu0 0
      %2488 = vmatprep.subr.bf16.mxu0 0
      %2489 = vmatpush1.bf16.msra.mxu0 0
      %2490 = vmatprep.mubr.bf16.mxu0 0
      %2491 = vmatmul.mubr.bf16.gmra.mrb[0].mxu0 %v2456
      %v2492 = vpop.f32.mrb[0].mxu0
      %v2493 = vadd.f32 0.0, %v2492
      %v2494 = vpop.f32.mrb[0].mxu0
      %v2495 = vpop.f32.mrb[0].mxu0
      %v2496 = vpop.f32.mrb[0].mxu0
      %2497 = vdwg.mxu0
      %v2498 = vadd.f32 %v2410, %v2493
      %v2499 = vld [vmem:[%s224] sm:$0x1]
      %v2501 = vlaneseq
      %v2502 = vshrl.u32 %v2501, 7
      %v2503 = vsub.s32 0, %v2502
      %v2504 = vrot.slane %v2499, %v2503
      %v2506 = vadd.f32 %v2498, %v2504
      %vm2507 = vcmp.gt.f32.partialorder %v2506, 0.0
      %v2508 = vmul.f32 %v2506, 0.01
      %v2509 = vsel %vm2507, %v2506, %v2508
      %v2510 = vpack.c.bf16 %v2509, %v2509
      %vm2511 = vcmask 254976
      %2512 = vst.msk [vmem:[%s234] sm:$0x3] %vm2511, %v2510
      %p2513 = scmp.lt.s32.totalorder %s19, 1
      %s2514 = scalar_select %p2513, %s19, 1
      %p2515 = scmp.lt.s32.totalorder %s21, 0
      %s2516 = scalar_select %p2515, %s21, 0
      %p2517 = scmp.lt.s32.totalorder %s20, 0
      %s2518 = scalar_select %p2517, %s20, 0
      %s2519 = sadd.s32 %s2518, %s2516
      %s2520 = sadd.s32 %s2519, %s2514
      %s2521 = smul.addr %s2520, 2
      %s2522 = scalar_lea.vmem %s3, %s2521
      // Predicated region
      $region33: #{flatten_module_forward.6} parent=31 // pred_check
        %p2523 = pneg %p133
      $region34: #{flatten_module_forward.6} parent=31 // pred_check_branch
        %2525 = sbr.rel (%p2523) target = $region36
      $region35: #{flatten_module_forward.6} parent=31 // pred_region
        _
      $region36: #{flatten_module_forward.6} parent=31 // pred_fallthru
        _
    $region32: #{flatten_module_forward.6} parent=5 // pred_fallthru
      _
    %p2526 = scmp.le.s32.totalorder 2, %s9
    // Predicated region
    $region37: #{flatten_module_forward.6} parent=5 // pred_check
      %p2527 = pneg %p2526
    $region38: #{flatten_module_forward.6} parent=5 // pred_check_branch
      %2529 = sbr.rel (%p2527) target = $region40
    $region39: #{flatten_module_forward.6} parent=5 // pred_region
      %s2530 = ssub.s32 %s9, 2
      // Predicated region
      $region41: #{flatten_module_forward.6} parent=39 // pred_check
        %p2531 = pneg %p139
      $region42: #{flatten_module_forward.6} parent=39 // pred_check_branch
        %2533 = sbr.rel (%p2531) target = $region44
      $region43: #{flatten_module_forward.6} parent=39 // pred_region
        %p2534 = scmp.lt.s32.totalorder %s22, 1
        %s2535 = scalar_select %p2534, %s22, 1
        %p2536 = scmp.lt.s32.totalorder %s24, 0
        %s2537 = scalar_select %p2536, %s24, 0
        %p2538 = scmp.lt.s32.totalorder %s23, 0
        %s2539 = scalar_select %p2538, %s23, 0
        %s2540 = sadd.s32 %s2539, %s2537
        %s2541 = sadd.s32 %s2540, %s2535
        %s2542 = smul.addr %s2541, 2
        %s2543 = scalar_lea.vmem %s3, %s2542
      $region44: #{flatten_module_forward.6} parent=39 // pred_fallthru
        _
    $region40: #{flatten_module_forward.6} parent=5 // pred_fallthru
      _
  $region6: #{flatten_module_forward.6} parent=0 // loop_footer
    %s13 = sadd.s32 1, %s9
  $region7: #{flatten_module_forward.6} parent=0 // loop_footer_branch
    %8 = sbr.rel target = $region3
  $region8: #{flatten_module_forward.6} parent=0 // loop_exit
    _

// kernel: flatten_module_forward.7
$region0: #{flatten_module_forward.7}
  #allocation0 [shape = 'u32[]', space=smem, size = 0x4, offset = 0x4, fixed_abs, tag = 'smem constant byte address 0x4 - core index']
  #allocation1 [shape = 'u32[144,128]{1,0:T(1,128)}', space=vmem, size = 0x12000, scoped, tag = 'internal scratch']
  %s0 = inlined_call_operand.vmem [shape: bf16[2,2,2,3,3,32], index: 0, kind: input, shape index: {}]
  %s1 = inlined_call_operand.vmem [shape: bf16[25,32,64], index: 1, kind: input, shape index: {}]
  %s2 = inlined_call_operand.vmem [shape: f32[1,64], index: 2, kind: input, shape index: {}]
  %s3 = inlined_call_operand.hbm [shape: f32[2,1,64], index: 3, kind: output, shape index: {}]
  %s4 = sld [smem:[#allocation0]]
  $region45: #{flatten_module_forward.7} parent=0
    _
  %s6 = ssub.s32 1, %s4
  %s7 = scalar_select 0, %s6, %s4
  $region1: #{flatten_module_forward.7} parent=0
    #allocation2 [shape = 'u8[1024]{0}', space=vmem, size = 0x400, scoped, tag = 'output window, operand 0']
    #allocation3 [shape = 's32[2]{0}', space=sflag, size = 0x8, scoped, tag = 'scoped memory for flatten_module_forward.7']
    %8 = vsyncpa [#allocation3], 0
    %s9 = scalar_lea.sflag [#allocation3], 1
    %10 = vsyncpa %s9, 0
    loop: start=0, step=1, limit=4
    $region2: #{flatten_module_forward.7} parent=1 // loop_pre_header
      _
    $region3: #{flatten_module_forward.7} parent=1 // loop_header
      %s12 = sphi 0, %s16
      %p13 = scmp.ge.s32.totalorder %s12, 4
      %s19 = sphi 0, %s38
      %s20 = sphi 0, %s34
      %s21 = sphi 0, %s30
      %s22 = sphi 0, %s19
      %s23 = sphi 0, %s20
      %s24 = sphi 0, %s21
      %s25 = sphi 0, %s22
      %s26 = sphi 0, %s23
      %s27 = sphi 0, %s24
      %s41 = sphi 0, %s43
      %s44 = sphi 0, %s41
      %s45 = sphi 0, %s44
      %s61 = sphi 0, %s45
      %s67 = sphi 0, %s69
      %s70 = sphi 0, %s67
      %s71 = sphi 0, %s70
      %s87 = sphi 0, %s71
      %s93 = sphi 0, %s95
      %s96 = sphi 0, %s93
      %s97 = sphi 0, %s96
      %s113 = sphi 0, %s97
      %s123 = sphi 0, %s125
      %s126 = sphi 0, %s123
      %s127 = sphi 0, %s126
      %s143 = sphi 0, %s127
    $region4: #{flatten_module_forward.7} parent=1 // loop_header_branch
      %15 = sbr.rel (%p13) target = $region8
    $region5: #{flatten_module_forward.7} parent=1 // loop_body
      %s17 = ssub.s32 %s12, 1
      %s18 = ssub.s32 %s12, 2
      %s28 = sadd.s32 1, %s21
      %p29 = scmp.ge.s32.totalorder %s28, 1
      %s30 = scalar_select %p29, 0, %s28
      %s31 = sadd.s32 1, %s20
      %s32 = scalar_select %p29, %s31, %s20
      %p33 = scmp.ge.s32.totalorder %s32, 1
      %s34 = scalar_select %p33, 0, %s32
      %s35 = sadd.s32 1, %s19
      %s36 = scalar_select %p33, %s35, %s19
      %p37 = scmp.ge.s32.totalorder %s36, 2
      %s38 = scalar_select %p37, 0, %s36
      %s39 = ssub.s32 %s19, %s38
      %p40 = scmp.eq.s32.totalorder %s39, 0
      %s42 = sadd.s32 %s41, 1
      %s43 = scalar_select %p40, %s41, %s42
      %p46 = pneg %p40
      %p47 = scmp.eq.s32.totalorder %s12, 1
      %p48 = por %p46, %p47
      %p49 = scmp.ne.s32.totalorder %s41, %s44
      %p50 = scmp.eq.s32.totalorder %s12, 0
      %p51 = por %p49, %p50
      %p52 = scmp.ne.s32.totalorder %s41, %s44
      %p53 = scmp.eq.s32.totalorder %s17, 1
      %p54 = por %p52, %p53
      %p55 = scmp.ne.s32.totalorder %s44, %s45
      %p56 = scmp.eq.s32.totalorder %s17, 0
      %p57 = por %p55, %p56
      %p58 = scmp.ne.s32.totalorder %s44, %s45
      %p59 = scmp.eq.s32.totalorder %s18, 1
      %p60 = por %p58, %p59
      %p62 = scmp.ne.s32.totalorder %s45, %s61
      %p63 = scmp.eq.s32.totalorder %s18, 0
      %p64 = por %p62, %p63
      %s65 = ssub.s32 %s20, %s34
      %p66 = scmp.eq.s32.totalorder %s65, 0
      %s68 = sadd.s32 %s67, 1
      %s69 = scalar_select %p66, %s67, %s68
      %p72 = pneg %p66
      %p73 = scmp.eq.s32.totalorder %s12, 1
      %p74 = por %p72, %p73
      %p75 = scmp.ne.s32.totalorder %s67, %s70
      %p76 = scmp.eq.s32.totalorder %s12, 0
      %p77 = por %p75, %p76
      %p78 = scmp.ne.s32.totalorder %s67, %s70
      %p79 = scmp.eq.s32.totalorder %s17, 1
      %p80 = por %p78, %p79
      %p81 = scmp.ne.s32.totalorder %s70, %s71
      %p82 = scmp.eq.s32.totalorder %s17, 0
      %p83 = por %p81, %p82
      %p84 = scmp.ne.s32.totalorder %s70, %s71
      %p85 = scmp.eq.s32.totalorder %s18, 1
      %p86 = por %p84, %p85
      %p88 = scmp.ne.s32.totalorder %s71, %s87
      %p89 = scmp.eq.s32.totalorder %s18, 0
      %p90 = por %p88, %p89
      %s91 = ssub.s32 %s20, %s34
      %p92 = scmp.eq.s32.totalorder %s91, 0
      %s94 = sadd.s32 %s93, 1
      %s95 = scalar_select %p92, %s93, %s94
      %p98 = pneg %p92
      %p99 = scmp.eq.s32.totalorder %s12, 1
      %p100 = por %p98, %p99
      %p101 = scmp.ne.s32.totalorder %s93, %s96
      %p102 = scmp.eq.s32.totalorder %s12, 0
      %p103 = por %p101, %p102
      %p104 = scmp.ne.s32.totalorder %s93, %s96
      %p105 = scmp.eq.s32.totalorder %s17, 1
      %p106 = por %p104, %p105
      %p107 = scmp.ne.s32.totalorder %s96, %s97
      %p108 = scmp.eq.s32.totalorder %s17, 0
      %p109 = por %p107, %p108
      %p110 = scmp.ne.s32.totalorder %s96, %s97
      %p111 = scmp.eq.s32.totalorder %s18, 1
      %p112 = por %p110, %p111
      %p114 = scmp.ne.s32.totalorder %s97, %s113
      %p115 = scmp.eq.s32.totalorder %s18, 0
      %p116 = por %p114, %p115
      %s117 = ssub.s32 %s19, %s38
      %s118 = ssub.s32 %s21, %s30
      %s119 = sor.u32 %s117, %s118
      %s120 = ssub.s32 %s20, %s34
      %s121 = sor.u32 %s119, %s120
      %p122 = scmp.eq.s32.totalorder %s121, 0
      %s124 = sadd.s32 %s123, 1
      %s125 = scalar_select %p122, %s123, %s124
      %p128 = pneg %p122
      %p129 = scmp.eq.s32.totalorder %s12, 1
      %p130 = por %p128, %p129
      %p131 = scmp.ne.s32.totalorder %s123, %s126
      %p132 = scmp.eq.s32.totalorder %s12, 0
      %p133 = por %p131, %p132
      %p134 = scmp.ne.s32.totalorder %s123, %s126
      %p135 = scmp.eq.s32.totalorder %s17, 1
      %p136 = por %p134, %p135
      %p137 = scmp.ne.s32.totalorder %s126, %s127
      %p138 = scmp.eq.s32.totalorder %s17, 0
      %p139 = por %p137, %p138
      %p140 = scmp.ne.s32.totalorder %s126, %s127
      %p141 = scmp.eq.s32.totalorder %s18, 1
      %p142 = por %p140, %p141
      %p144 = scmp.ne.s32.totalorder %s127, %s143
      %p145 = scmp.eq.s32.totalorder %s18, 0
      %p146 = por %p144, %p145
      %p147 = scmp.le.s32.totalorder 1, %s12
      %p148 = scmp.lt.s32.totalorder %s12, 3
      %p149 = pnand %p147, %p148
      %p150 = pneg %p149
      // Predicated region
      $region9: #{flatten_module_forward.7} parent=5 // pred_check
        _
      $region10: #{flatten_module_forward.7} parent=5 // pred_check_branch
        %152 = sbr.rel (%p149) target = $region12
      $region11: #{flatten_module_forward.7} parent=5 // pred_region
        %s153 = ssub.s32 %s12, 1
        // Predicated region
        $region13: #{flatten_module_forward.7} parent=11 // pred_check
          %p154 = pneg %p83
        $region14: #{flatten_module_forward.7} parent=11 // pred_check_branch
          %156 = sbr.rel (%p154) target = $region16
        $region15: #{flatten_module_forward.7} parent=11 // pred_region
          %p157 = scmp.lt.s32.totalorder %s23, 0
          %s158 = scalar_select %p157, %s23, 0
          %s159 = smul.addr %s158, 4
          %s160 = scalar_lea.vmem %s1, %s159
        $region16: #{flatten_module_forward.7} parent=11 // pred_fallthru
          _
        // Predicated region
        $region17: #{flatten_module_forward.7} parent=11 // pred_check
          %p161 = pneg %p109
        $region18: #{flatten_module_forward.7} parent=11 // pred_check_branch
          %163 = sbr.rel (%p161) target = $region20
        $region19: #{flatten_module_forward.7} parent=11 // pred_region
          %p164 = scmp.lt.s32.totalorder %s23, 0
          %s165 = scalar_select %p164, %s23, 0
          %s166 = scalar_lea.vmem %s2, %s165
        $region20: #{flatten_module_forward.7} parent=11 // pred_fallthru
          _
      $region12: #{flatten_module_forward.7} parent=5 // pred_fallthru
        _
      %p167 = scmp.lt.s32.totalorder %s12, 2
      // Predicated region
      $region21: #{flatten_module_forward.7} parent=5 // pred_check
        %p168 = pneg %p167
      $region22: #{flatten_module_forward.7} parent=5 // pred_check_branch
        %170 = sbr.rel (%p168) target = $region24
      $region23: #{flatten_module_forward.7} parent=5 // pred_region
        // Predicated region
        $region25: #{flatten_module_forward.7} parent=23 // pred_check
          %p171 = pneg %p51
        $region26: #{flatten_module_forward.7} parent=23 // pred_check_branch
          %173 = sbr.rel (%p171) target = $region28
        $region27: #{flatten_module_forward.7} parent=23 // pred_region
          %p174 = scmp.lt.s32.totalorder %s19, 1
          %s175 = scalar_select %p174, %s19, 1
          %s176 = smul.addr %s175, 12
          %s177 = smul.addr %s176, 2
          %s178 = scalar_lea.vmem %s0, %s177
        $region28: #{flatten_module_forward.7} parent=23 // pred_fallthru
          _
      $region24: #{flatten_module_forward.7} parent=5 // pred_fallthru
        _
      %p179 = scmp.le.s32.totalorder 1, %s12
      %p180 = scmp.lt.s32.totalorder %s12, 3
      %p181 = pnand %p179, %p180
      %p182 = pneg %p181
      // Predicated region
      $region29: #{flatten_module_forward.7} parent=5 // pred_check
        _
      $region30: #{flatten_module_forward.7} parent=5 // pred_check_branch
        %184 = sbr.rel (%p181) target = $region32
      $region31: #{flatten_module_forward.7} parent=5 // pred_region
        %s185 = ssub.s32 %s12, 1
        %p186 = scmp.lt.s32.totalorder %s22, 1
        %s187 = scalar_select %p186, %s22, 1
        %s188 = smul.addr %s187, 12
        %s189 = smul.addr %s188, 2
        %s190 = scalar_lea.vmem %s0, %s189
        %p191 = pneg %p57
        %p192 = pneg %p54
        %p193 = scmp.lt.s32.totalorder %s23, 0
        %s194 = scalar_select %p193, %s23, 0
        %s195 = smul.addr %s194, 4
        %s196 = scalar_lea.vmem %s1, %s195
        %p197 = pneg %p83
        %p198 = pneg %p80
        %p199 = scmp.lt.s32.totalorder %s23, 0
        %s200 = scalar_select %p199, %s23, 0
        %s201 = scalar_lea.vmem %s2, %s200
        %p202 = pneg %p109
        %p203 = pneg %p106
        %p204 = pneg %p139
        %p205 = pneg %p136
        %s206 = sand.u32 %s126, 1
        %s207 = scalar_lea.sflag [#allocation3], %s206
        %s208 = sand.u32 %s126, 1
        %s209 = scalar_lea.vmem [#allocation2], %s208
        %p210 = scmp.lt.s32.totalorder %s22, 1
        %s211 = scalar_select %p210, %s22, 1
        %s212 = smul.addr %s211, 12
        %s213 = smul.addr %s212, 2
        %s214 = scalar_lea.vmem %s0, %s213
        %p215 = scmp.lt.s32.totalorder %s23, 0
        %s216 = scalar_select %p215, %s23, 0
        %s217 = smul.addr %s216, 4
        %s218 = scalar_lea.vmem %s1, %s217
        %p219 = scmp.lt.s32.totalorder %s23, 0
        %s220 = scalar_select %p219, %s23, 0
        %s221 = scalar_lea.vmem %s2, %s220
        %s223 = smul.addr %s24, 2
        %s224 = scalar_lea.vmem %s214, %s223
        %v225 = vld [vmem:[%s224] sm:$0x1]
        %v226 = vld [vmem:[%s218] sm:$0xf]
        %v227 = vld [vmem:[%s218 + $0x4] sm:$0xf]
        %v228 = vld [vmem:[%s218 + $0x8] sm:$0xf]
        %v229 = vld [vmem:[%s218 + $0xc] sm:$0xf]
        %s230 = sadd.s32 %s24, 3
        %s231 = smul.addr %s230, 2
        %s232 = scalar_lea.vmem %s214, %s231
        %v233 = vld [vmem:[%s232] sm:$0x1]
        %s234 = scalar_lea.vmem %s218, 16
        %v235 = vld [vmem:[%s234] sm:$0xf]
        %v236 = vld [vmem:[%s234 + $0x4] sm:$0xf]
        %v237 = vld [vmem:[%s234 + $0x8] sm:$0xf]
        %v238 = vld [vmem:[%s234 + $0xc] sm:$0xf]
        %v243 = vunpack.c.l.b16 %v235
        %v244 = vunpack.c.l.b16 %v236
        %v245 = vunpack.c.l.b16 %v237
        %v246 = vunpack.c.l.b16 %v238
        %v247 = vpack.c.b16 %v244, %v243
        %v248 = vpack.c.b16 %v246, %v245
        %vm251 = vcmask 261120
        %v253 = vsel %vm251, %v233, 0
        %255 = vmatprep.subr.bf16.mxu0 0
        %256 = vmatpush1.bf16.msra.mxu0 %v247
        %257 = vmatprep.subr.bf16.mxu0 0
        %258 = vmatpush1.bf16.msra.mxu0 %v248
        %259 = vmatprep.subr.bf16.mxu0 0
        %260 = vmatpush1.bf16.msra.mxu0 0
        %261 = vmatprep.subr.bf16.mxu0 0
        %262 = vmatpush1.bf16.msra.mxu0 0
        %263 = vmatprep.subr.bf16.mxu0 0
        %264 = vmatpush1.bf16.msra.mxu0 0
        %265 = vmatprep.subr.bf16.mxu0 0
        %266 = vmatpush1.bf16.msra.mxu0 0
        %267 = vmatprep.subr.bf16.mxu0 0
        %268 = vmatpush1.bf16.msra.mxu0 0
        %269 = vmatprep.subr.bf16.mxu0 0
        %270 = vmatpush1.bf16.msra.mxu0 0
        %271 = vmatprep.subr.bf16.mxu0 0
        %272 = vmatpush1.bf16.msra.mxu0 0
        %273 = vmatprep.subr.bf16.mxu0 0
        %274 = vmatpush1.bf16.msra.mxu0 0
        %275 = vmatprep.subr.bf16.mxu0 0
        %276 = vmatpush1.bf16.msra.mxu0 0
        %277 = vmatprep.subr.bf16.mxu0 0
        %278 = vmatpush1.bf16.msra.mxu0 0
        %279 = vmatprep.subr.bf16.mxu0 0
        %280 = vmatpush1.bf16.msra.mxu0 0
        %281 = vmatprep.subr.bf16.mxu0 0
        %282 = vmatpush1.bf16.msra.mxu0 0
        %283 = vmatprep.subr.bf16.mxu0 0
        %284 = vmatpush1.bf16.msra.mxu0 0
        %285 = vmatprep.subr.bf16.mxu0 0
        %286 = vmatpush1.bf16.msra.mxu0 0
        %287 = vmatprep.mubr.bf16.mxu0 0
        %288 = vmatmul.mubr.bf16.gmra.mrb[0].mxu0 %v253
        %v289 = vpop.f32.mrb[0].mxu0
        %v290 = vadd.f32 0.0, %v289
        %v291 = vpop.f32.mrb[0].mxu0
        %v292 = vpop.f32.mrb[0].mxu0
        %v293 = vpop.f32.mrb[0].mxu0
        %294 = vdwg.mxu0
        %v299 = vunpack.c.l.b16 %v226
        %v300 = vunpack.c.l.b16 %v227
        %v301 = vunpack.c.l.b16 %v228
        %v302 = vunpack.c.l.b16 %v229
        %v303 = vpack.c.b16 %v300, %v299
        %v304 = vpack.c.b16 %v302, %v301
        %v308 = vsel %vm251, %v225, 0
        %310 = vmatprep.subr.bf16.mxu0 0
        %311 = vmatpush1.bf16.msra.mxu0 %v303
        %312 = vmatprep.subr.bf16.mxu0 0
        %313 = vmatpush1.bf16.msra.mxu0 %v304
        %314 = vmatprep.subr.bf16.mxu0 0
        %315 = vmatpush1.bf16.msra.mxu0 0
        %316 = vmatprep.subr.bf16.mxu0 0
        %317 = vmatpush1.bf16.msra.mxu0 0
        %318 = vmatprep.subr.bf16.mxu0 0
        %319 = vmatpush1.bf16.msra.mxu0 0
        %320 = vmatprep.subr.bf16.mxu0 0
        %321 = vmatpush1.bf16.msra.mxu0 0
        %322 = vmatprep.subr.bf16.mxu0 0
        %323 = vmatpush1.bf16.msra.mxu0 0
        %324 = vmatprep.subr.bf16.mxu0 0
        %325 = vmatpush1.bf16.msra.mxu0 0
        %326 = vmatprep.subr.bf16.mxu0 0
        %327 = vmatpush1.bf16.msra.mxu0 0
        %328 = vmatprep.subr.bf16.mxu0 0
        %329 = vmatpush1.bf16.msra.mxu0 0
        %330 = vmatprep.subr.bf16.mxu0 0
        %331 = vmatpush1.bf16.msra.mxu0 0
        %332 = vmatprep.subr.bf16.mxu0 0
        %333 = vmatpush1.bf16.msra.mxu0 0
        %334 = vmatprep.subr.bf16.mxu0 0
        %335 = vmatpush1.bf16.msra.mxu0 0
        %336 = vmatprep.subr.bf16.mxu0 0
        %337 = vmatpush1.bf16.msra.mxu0 0
        %338 = vmatprep.subr.bf16.mxu0 0
        %339 = vmatpush1.bf16.msra.mxu0 0
        %340 = vmatprep.subr.bf16.mxu0 0
        %341 = vmatpush1.bf16.msra.mxu0 0
        %342 = vmatprep.mubr.bf16.mxu0 0
        %343 = vmatmul.mubr.bf16.gmra.mrb[0].mxu0 %v308
        %v344 = vpop.f32.mrb[0].mxu0
        %v345 = vadd.f32 %v290, %v344
        %v346 = vpop.f32.mrb[0].mxu0
        %v347 = vpop.f32.mrb[0].mxu0
        %v348 = vpop.f32.mrb[0].mxu0
        %349 = vdwg.mxu0
        %s350 = scalar_lea.vmem %s218, 32
        %v351 = vld [vmem:[%s350] sm:$0xf]
        %v352 = vld [vmem:[%s350 + $0x4] sm:$0xf]
        %v353 = vld [vmem:[%s350 + $0x8] sm:$0xf]
        %v354 = vld [vmem:[%s350 + $0xc] sm:$0xf]
        %v357 = vunpack.c.l.s4 1983009808
        %v358 = vunpack.c.0.s8 %v357
        %v359 = vlaneseq
        %v360 = vshrl.u32 %v359, 7
        %v361 = vsub.s32 %v358, %v360
        %v362 = vrot.slane %v225, %v361
        %v364 = vshrl.u32 %v362, 16
        %v370 = vunpack.c.l.b16 %v351
        %v371 = vunpack.c.l.b16 %v352
        %v372 = vunpack.c.l.b16 %v353
        %v373 = vunpack.c.l.b16 %v354
        %v374 = vpack.c.b16 %v371, %v370
        %v375 = vpack.c.b16 %v373, %v372
        %v379 = vsel %vm251, %v364, 0
        %381 = vmatprep.subr.bf16.mxu0 0
        %382 = vmatpush1.bf16.msra.mxu0 %v374
        %383 = vmatprep.subr.bf16.mxu0 0
        %384 = vmatpush1.bf16.msra.mxu0 %v375
        %385 = vmatprep.subr.bf16.mxu0 0
        %386 = vmatpush1.bf16.msra.mxu0 0
        %387 = vmatprep.subr.bf16.mxu0 0
        %388 = vmatpush1.bf16.msra.mxu0 0
        %389 = vmatprep.subr.bf16.mxu0 0
        %390 = vmatpush1.bf16.msra.mxu0 0
        %391 = vmatprep.subr.bf16.mxu0 0
        %392 = vmatpush1.bf16.msra.mxu0 0
        %393 = vmatprep.subr.bf16.mxu0 0
        %394 = vmatpush1.bf16.msra.mxu0 0
        %395 = vmatprep.subr.bf16.mxu0 0
        %396 = vmatpush1.bf16.msra.mxu0 0
        %397 = vmatprep.subr.bf16.mxu0 0
        %398 = vmatpush1.bf16.msra.mxu0 0
        %399 = vmatprep.subr.bf16.mxu0 0
        %400 = vmatpush1.bf16.msra.mxu0 0
        %401 = vmatprep.subr.bf16.mxu0 0
        %402 = vmatpush1.bf16.msra.mxu0 0
        %403 = vmatprep.subr.bf16.mxu0 0
        %404 = vmatpush1.bf16.msra.mxu0 0
        %405 = vmatprep.subr.bf16.mxu0 0
        %406 = vmatpush1.bf16.msra.mxu0 0
        %407 = vmatprep.subr.bf16.mxu0 0
        %408 = vmatpush1.bf16.msra.mxu0 0
        %409 = vmatprep.subr.bf16.mxu0 0
        %410 = vmatpush1.bf16.msra.mxu0 0
        %411 = vmatprep.subr.bf16.mxu0 0
        %412 = vmatpush1.bf16.msra.mxu0 0
        %413 = vmatprep.mubr.bf16.mxu0 0
        %414 = vmatmul.mubr.bf16.gmra.mrb[0].mxu0 %v379
        %v415 = vpop.f32.mrb[0].mxu0
        %v416 = vadd.f32 0.0, %v415
        %v417 = vpop.f32.mrb[0].mxu0
        %v418 = vpop.f32.mrb[0].mxu0
        %v419 = vpop.f32.mrb[0].mxu0
        %420 = vdwg.mxu0
        %v421 = vadd.f32 %v345, %v416
        %v422 = vld [vmem:[%s232] sm:$0x1]
        %s423 = scalar_lea.vmem %s218, 48
        %v424 = vld [vmem:[%s423] sm:$0xf]
        %v425 = vld [vmem:[%s423 + $0x4] sm:$0xf]
        %v426 = vld [vmem:[%s423 + $0x8] sm:$0xf]
        %v427 = vld [vmem:[%s423 + $0xc] sm:$0xf]
        %v430 = vunpack.c.l.s4 1983009808
        %v431 = vunpack.c.0.s8 %v430
        %v432 = vlaneseq
        %v433 = vshrl.u32 %v432, 7
        %v434 = vsub.s32 %v431, %v433
        %v435 = vrot.slane %v422, %v434
        %v437 = vshrl.u32 %v435, 16
        %v443 = vunpack.c.l.b16 %v424
        %v444 = vunpack.c.l.b16 %v425
        %v445 = vunpack.c.l.b16 %v426
        %v446 = vunpack.c.l.b16 %v427
        %v447 = vpack.c.b16 %v444, %v443
        %v448 = vpack.c.b16 %v446, %v445
        %v452 = vsel %vm251, %v437, 0
        %454 = vmatprep.subr.bf16.mxu0 0
        %455 = vmatpush1.bf16.msra.mxu0 %v447
        %456 = vmatprep.subr.bf16.mxu0 0
        %457 = vmatpush1.bf16.msra.mxu0 %v448
        %458 = vmatprep.subr.bf16.mxu0 0
        %459 = vmatpush1.bf16.msra.mxu0 0
        %460 = vmatprep.subr.bf16.mxu0 0
        %461 = vmatpush1.bf16.msra.mxu0 0
        %462 = vmatprep.subr.bf16.mxu0 0
        %463 = vmatpush1.bf16.msra.mxu0 0
        %464 = vmatprep.subr.bf16.mxu0 0
        %465 = vmatpush1.bf16.msra.mxu0 0
        %466 = vmatprep.subr.bf16.mxu0 0
        %467 = vmatpush1.bf16.msra.mxu0 0
        %468 = vmatprep.subr.bf16.mxu0 0
        %469 = vmatpush1.bf16.msra.mxu0 0
        %470 = vmatprep.subr.bf16.mxu0 0
        %471 = vmatpush1.bf16.msra.mxu0 0
        %472 = vmatprep.subr.bf16.mxu0 0
        %473 = vmatpush1.bf16.msra.mxu0 0
        %474 = vmatprep.subr.bf16.mxu0 0
        %475 = vmatpush1.bf16.msra.mxu0 0
        %476 = vmatprep.subr.bf16.mxu0 0
        %477 = vmatpush1.bf16.msra.mxu0 0
        %478 = vmatprep.subr.bf16.mxu0 0
        %479 = vmatpush1.bf16.msra.mxu0 0
        %480 = vmatprep.subr.bf16.mxu0 0
        %481 = vmatpush1.bf16.msra.mxu0 0
        %482 = vmatprep.subr.bf16.mxu0 0
        %483 = vmatpush1.bf16.msra.mxu0 0
        %484 = vmatprep.subr.bf16.mxu0 0
        %485 = vmatpush1.bf16.msra.mxu0 0
        %486 = vmatprep.mubr.bf16.mxu0 0
        %487 = vmatmul.mubr.bf16.gmra.mrb[0].mxu0 %v452
        %v488 = vpop.f32.mrb[0].mxu0
        %v489 = vadd.f32 0.0, %v488
        %v490 = vpop.f32.mrb[0].mxu0
        %v491 = vpop.f32.mrb[0].mxu0
        %v492 = vpop.f32.mrb[0].mxu0
        %493 = vdwg.mxu0
        %v494 = vadd.f32 %v421, %v489
        %v495 = vld [vmem:[%s224] sm:$0x2]
        %s496 = scalar_lea.vmem %s218, 64
        %v497 = vld [vmem:[%s496] sm:$0xf]
        %v498 = vld [vmem:[%s496 + $0x4] sm:$0xf]
        %v499 = vld [vmem:[%s496 + $0x8] sm:$0xf]
        %v500 = vld [vmem:[%s496 + $0xc] sm:$0xf]
        %v503 = vunpack.c.l.s4 1983009808
        %v504 = vunpack.c.0.s8 %v503
        %v505 = vlaneseq
        %v506 = vshrl.u32 %v505, 7
        %v507 = vsub.s32 %v504, %v506
        %v508 = vrot.slane %v495, %v507
        %v509 = vrot.slane %v508, 1
        %v514 = vunpack.c.l.b16 %v497
        %v515 = vunpack.c.l.b16 %v498
        %v516 = vunpack.c.l.b16 %v499
        %v517 = vunpack.c.l.b16 %v500
        %v518 = vpack.c.b16 %v515, %v514
        %v519 = vpack.c.b16 %v517, %v516
        %v523 = vsel %vm251, %v509, 0
        %525 = vmatprep.subr.bf16.mxu0 0
        %526 = vmatpush1.bf16.msra.mxu0 %v518
        %527 = vmatprep.subr.bf16.mxu0 0
        %528 = vmatpush1.bf16.msra.mxu0 %v519
        %529 = vmatprep.subr.bf16.mxu0 0
        %530 = vmatpush1.bf16.msra.mxu0 0
        %531 = vmatprep.subr.bf16.mxu0 0
        %532 = vmatpush1.bf16.msra.mxu0 0
        %533 = vmatprep.subr.bf16.mxu0 0
        %534 = vmatpush1.bf16.msra.mxu0 0
        %535 = vmatprep.subr.bf16.mxu0 0
        %536 = vmatpush1.bf16.msra.mxu0 0
        %537 = vmatprep.subr.bf16.mxu0 0
        %538 = vmatpush1.bf16.msra.mxu0 0
        %539 = vmatprep.subr.bf16.mxu0 0
        %540 = vmatpush1.bf16.msra.mxu0 0
        %541 = vmatprep.subr.bf16.mxu0 0
        %542 = vmatpush1.bf16.msra.mxu0 0
        %543 = vmatprep.subr.bf16.mxu0 0
        %544 = vmatpush1.bf16.msra.mxu0 0
        %545 = vmatprep.subr.bf16.mxu0 0
        %546 = vmatpush1.bf16.msra.mxu0 0
        %547 = vmatprep.subr.bf16.mxu0 0
        %548 = vmatpush1.bf16.msra.mxu0 0
        %549 = vmatprep.subr.bf16.mxu0 0
        %550 = vmatpush1.bf16.msra.mxu0 0
        %551 = vmatprep.subr.bf16.mxu0 0
        %552 = vmatpush1.bf16.msra.mxu0 0
        %553 = vmatprep.subr.bf16.mxu0 0
        %554 = vmatpush1.bf16.msra.mxu0 0
        %555 = vmatprep.subr.bf16.mxu0 0
        %556 = vmatpush1.bf16.msra.mxu0 0
        %557 = vmatprep.mubr.bf16.mxu0 0
        %558 = vmatmul.mubr.bf16.gmra.mrb[0].mxu0 %v523
        %v559 = vpop.f32.mrb[0].mxu0
        %v560 = vadd.f32 0.0, %v559
        %v561 = vpop.f32.mrb[0].mxu0
        %v562 = vpop.f32.mrb[0].mxu0
        %v563 = vpop.f32.mrb[0].mxu0
        %564 = vdwg.mxu0
        %v565 = vadd.f32 %v494, %v560
        %s566 = sadd.s32 %s24, 6
        %s567 = smul.addr %s566, 2
        %s568 = scalar_lea.vmem %s214, %s567
        %v569 = vld [vmem:[%s568] sm:$0x1]
        %s570 = scalar_lea.vmem %s218, 80
        %v571 = vld [vmem:[%s570] sm:$0xf]
        %v572 = vld [vmem:[%s570 + $0x4] sm:$0xf]
        %v573 = vld [vmem:[%s570 + $0x8] sm:$0xf]
        %v574 = vld [vmem:[%s570 + $0xc] sm:$0xf]
        %v579 = vunpack.c.l.b16 %v571
        %v580 = vunpack.c.l.b16 %v572
        %v581 = vunpack.c.l.b16 %v573
        %v582 = vunpack.c.l.b16 %v574
        %v583 = vpack.c.b16 %v580, %v579
        %v584 = vpack.c.b16 %v582, %v581
        %v588 = vsel %vm251, %v569, 0
        %590 = vmatprep.subr.bf16.mxu0 0
        %591 = vmatpush1.bf16.msra.mxu0 %v583
        %592 = vmatprep.subr.bf16.mxu0 0
        %593 = vmatpush1.bf16.msra.mxu0 %v584
        %594 = vmatprep.subr.bf16.mxu0 0
        %595 = vmatpush1.bf16.msra.mxu0 0
        %596 = vmatprep.subr.bf16.mxu0 0
        %597 = vmatpush1.bf16.msra.mxu0 0
        %598 = vmatprep.subr.bf16.mxu0 0
        %599 = vmatpush1.bf16.msra.mxu0 0
        %600 = vmatprep.subr.bf16.mxu0 0
        %601 = vmatpush1.bf16.msra.mxu0 0
        %602 = vmatprep.subr.bf16.mxu0 0
        %603 = vmatpush1.bf16.msra.mxu0 0
        %604 = vmatprep.subr.bf16.mxu0 0
        %605 = vmatpush1.bf16.msra.mxu0 0
        %606 = vmatprep.subr.bf16.mxu0 0
        %607 = vmatpush1.bf16.msra.mxu0 0
        %608 = vmatprep.subr.bf16.mxu0 0
        %609 = vmatpush1.bf16.msra.mxu0 0
        %610 = vmatprep.subr.bf16.mxu0 0
        %611 = vmatpush1.bf16.msra.mxu0 0
        %612 = vmatprep.subr.bf16.mxu0 0
        %613 = vmatpush1.bf16.msra.mxu0 0
        %614 = vmatprep.subr.bf16.mxu0 0
        %615 = vmatpush1.bf16.msra.mxu0 0
        %616 = vmatprep.subr.bf16.mxu0 0
        %617 = vmatpush1.bf16.msra.mxu0 0
        %618 = vmatprep.subr.bf16.mxu0 0
        %619 = vmatpush1.bf16.msra.mxu0 0
        %620 = vmatprep.subr.bf16.mxu0 0
        %621 = vmatpush1.bf16.msra.mxu0 0
        %622 = vmatprep.mubr.bf16.mxu0 0
        %623 = vmatmul.mubr.bf16.gmra.mrb[0].mxu0 %v588
        %v624 = vpop.f32.mrb[0].mxu0
        %v625 = vadd.f32 0.0, %v624
        %v626 = vpop.f32.mrb[0].mxu0
        %v627 = vpop.f32.mrb[0].mxu0
        %v628 = vpop.f32.mrb[0].mxu0
        %629 = vdwg.mxu0
        %v630 = vadd.f32 %v565, %v625
        %s631 = sadd.s32 %s230, 6
        %s632 = smul.addr %s631, 2
        %s633 = scalar_lea.vmem %s214, %s632
        %v634 = vld [vmem:[%s633] sm:$0x1]
        %s635 = scalar_lea.vmem %s218, 96
        %v636 = vld [vmem:[%s635] sm:$0xf]
        %v637 = vld [vmem:[%s635 + $0x4] sm:$0xf]
        %v638 = vld [vmem:[%s635 + $0x8] sm:$0xf]
        %v639 = vld [vmem:[%s635 + $0xc] sm:$0xf]
        %v644 = vunpack.c.l.b16 %v636
        %v645 = vunpack.c.l.b16 %v637
        %v646 = vunpack.c.l.b16 %v638
        %v647 = vunpack.c.l.b16 %v639
        %v648 = vpack.c.b16 %v645, %v644
        %v649 = vpack.c.b16 %v647, %v646
        %v653 = vsel %vm251, %v634, 0
        %655 = vmatprep.subr.bf16.mxu0 0
        %656 = vmatpush1.bf16.msra.mxu0 %v648
        %657 = vmatprep.subr.bf16.mxu0 0
        %658 = vmatpush1.bf16.msra.mxu0 %v649
        %659 = vmatprep.subr.bf16.mxu0 0
        %660 = vmatpush1.bf16.msra.mxu0 0
        %661 = vmatprep.subr.bf16.mxu0 0
        %662 = vmatpush1.bf16.msra.mxu0 0
        %663 = vmatprep.subr.bf16.mxu0 0
        %664 = vmatpush1.bf16.msra.mxu0 0
        %665 = vmatprep.subr.bf16.mxu0 0
        %666 = vmatpush1.bf16.msra.mxu0 0
        %667 = vmatprep.subr.bf16.mxu0 0
        %668 = vmatpush1.bf16.msra.mxu0 0
        %669 = vmatprep.subr.bf16.mxu0 0
        %670 = vmatpush1.bf16.msra.mxu0 0
        %671 = vmatprep.subr.bf16.mxu0 0
        %672 = vmatpush1.bf16.msra.mxu0 0
        %673 = vmatprep.subr.bf16.mxu0 0
        %674 = vmatpush1.bf16.msra.mxu0 0
        %675 = vmatprep.subr.bf16.mxu0 0
        %676 = vmatpush1.bf16.msra.mxu0 0
        %677 = vmatprep.subr.bf16.mxu0 0
        %678 = vmatpush1.bf16.msra.mxu0 0
        %679 = vmatprep.subr.bf16.mxu0 0
        %680 = vmatpush1.bf16.msra.mxu0 0
        %681 = vmatprep.subr.bf16.mxu0 0
        %682 = vmatpush1.bf16.msra.mxu0 0
        %683 = vmatprep.subr.bf16.mxu0 0
        %684 = vmatpush1.bf16.msra.mxu0 0
        %685 = vmatprep.subr.bf16.mxu0 0
        %686 = vmatpush1.bf16.msra.mxu0 0
        %687 = vmatprep.mubr.bf16.mxu0 0
        %688 = vmatmul.mubr.bf16.gmra.mrb[0].mxu0 %v653
        %v689 = vpop.f32.mrb[0].mxu0
        %v690 = vadd.f32 0.0, %v689
        %v691 = vpop.f32.mrb[0].mxu0
        %v692 = vpop.f32.mrb[0].mxu0
        %v693 = vpop.f32.mrb[0].mxu0
        %694 = vdwg.mxu0
        %v695 = vadd.f32 %v630, %v690
        %s696 = scalar_lea.vmem %s218, 112
        %v697 = vld [vmem:[%s696] sm:$0xf]
        %v698 = vld [vmem:[%s696 + $0x4] sm:$0xf]
        %v699 = vld [vmem:[%s696 + $0x8] sm:$0xf]
        %v700 = vld [vmem:[%s696 + $0xc] sm:$0xf]
        %v703 = vunpack.c.l.s4 1983009808
        %v704 = vunpack.c.0.s8 %v703
        %v705 = vlaneseq
        %v706 = vshrl.u32 %v705, 7
        %v707 = vsub.s32 %v704, %v706
        %v708 = vrot.slane %v569, %v707
        %v710 = vshrl.u32 %v708, 16
        %v716 = vunpack.c.l.b16 %v697
        %v717 = vunpack.c.l.b16 %v698
        %v718 = vunpack.c.l.b16 %v699
        %v719 = vunpack.c.l.b16 %v700
        %v720 = vpack.c.b16 %v717, %v716
        %v721 = vpack.c.b16 %v719, %v718
        %v725 = vsel %vm251, %v710, 0
        %727 = vmatprep.subr.bf16.mxu0 0
        %728 = vmatpush1.bf16.msra.mxu0 %v720
        %729 = vmatprep.subr.bf16.mxu0 0
        %730 = vmatpush1.bf16.msra.mxu0 %v721
        %731 = vmatprep.subr.bf16.mxu0 0
        %732 = vmatpush1.bf16.msra.mxu0 0
        %733 = vmatprep.subr.bf16.mxu0 0
        %734 = vmatpush1.bf16.msra.mxu0 0
        %735 = vmatprep.subr.bf16.mxu0 0
        %736 = vmatpush1.bf16.msra.mxu0 0
        %737 = vmatprep.subr.bf16.mxu0 0
        %738 = vmatpush1.bf16.msra.mxu0 0
        %739 = vmatprep.subr.bf16.mxu0 0
        %740 = vmatpush1.bf16.msra.mxu0 0
        %741 = vmatprep.subr.bf16.mxu0 0
        %742 = vmatpush1.bf16.msra.mxu0 0
        %743 = vmatprep.subr.bf16.mxu0 0
        %744 = vmatpush1.bf16.msra.mxu0 0
        %745 = vmatprep.subr.bf16.mxu0 0
        %746 = vmatpush1.bf16.msra.mxu0 0
        %747 = vmatprep.subr.bf16.mxu0 0
        %748 = vmatpush1.bf16.msra.mxu0 0
        %749 = vmatprep.subr.bf16.mxu0 0
        %750 = vmatpush1.bf16.msra.mxu0 0
        %751 = vmatprep.subr.bf16.mxu0 0
        %752 = vmatpush1.bf16.msra.mxu0 0
        %753 = vmatprep.subr.bf16.mxu0 0
        %754 = vmatpush1.bf16.msra.mxu0 0
        %755 = vmatprep.subr.bf16.mxu0 0
        %756 = vmatpush1.bf16.msra.mxu0 0
        %757 = vmatprep.subr.bf16.mxu0 0
        %758 = vmatpush1.bf16.msra.mxu0 0
        %759 = vmatprep.mubr.bf16.mxu0 0
        %760 = vmatmul.mubr.bf16.gmra.mrb[0].mxu0 %v725
        %v761 = vpop.f32.mrb[0].mxu0
        %v762 = vadd.f32 0.0, %v761
        %v763 = vpop.f32.mrb[0].mxu0
        %v764 = vpop.f32.mrb[0].mxu0
        %v765 = vpop.f32.mrb[0].mxu0
        %766 = vdwg.mxu0
        %v767 = vadd.f32 %v695, %v762
        %v768 = vld [vmem:[%s633] sm:$0x1]
        %s769 = scalar_lea.vmem %s218, 128
        %v770 = vld [vmem:[%s769] sm:$0xf]
        %v771 = vld [vmem:[%s769 + $0x4] sm:$0xf]
        %v772 = vld [vmem:[%s769 + $0x8] sm:$0xf]
        %v773 = vld [vmem:[%s769 + $0xc] sm:$0xf]
        %v776 = vunpack.c.l.s4 1983009808
        %v777 = vunpack.c.0.s8 %v776
        %v778 = vlaneseq
        %v779 = vshrl.u32 %v778, 7
        %v780 = vsub.s32 %v777, %v779
        %v781 = vrot.slane %v768, %v780
        %v783 = vshrl.u32 %v781, 16
        %v789 = vunpack.c.l.b16 %v770
        %v790 = vunpack.c.l.b16 %v771
        %v791 = vunpack.c.l.b16 %v772
        %v792 = vunpack.c.l.b16 %v773
        %v793 = vpack.c.b16 %v790, %v789
        %v794 = vpack.c.b16 %v792, %v791
        %v798 = vsel %vm251, %v783, 0
        %800 = vmatprep.subr.bf16.mxu0 0
        %801 = vmatpush1.bf16.msra.mxu0 %v793
        %802 = vmatprep.subr.bf16.mxu0 0
        %803 = vmatpush1.bf16.msra.mxu0 %v794
        %804 = vmatprep.subr.bf16.mxu0 0
        %805 = vmatpush1.bf16.msra.mxu0 0
        %806 = vmatprep.subr.bf16.mxu0 0
        %807 = vmatpush1.bf16.msra.mxu0 0
        %808 = vmatprep.subr.bf16.mxu0 0
        %809 = vmatpush1.bf16.msra.mxu0 0
        %810 = vmatprep.subr.bf16.mxu0 0
        %811 = vmatpush1.bf16.msra.mxu0 0
        %812 = vmatprep.subr.bf16.mxu0 0
        %813 = vmatpush1.bf16.msra.mxu0 0
        %814 = vmatprep.subr.bf16.mxu0 0
        %815 = vmatpush1.bf16.msra.mxu0 0
        %816 = vmatprep.subr.bf16.mxu0 0
        %817 = vmatpush1.bf16.msra.mxu0 0
        %818 = vmatprep.subr.bf16.mxu0 0
        %819 = vmatpush1.bf16.msra.mxu0 0
        %820 = vmatprep.subr.bf16.mxu0 0
        %821 = vmatpush1.bf16.msra.mxu0 0
        %822 = vmatprep.subr.bf16.mxu0 0
        %823 = vmatpush1.bf16.msra.mxu0 0
        %824 = vmatprep.subr.bf16.mxu0 0
        %825 = vmatpush1.bf16.msra.mxu0 0
        %826 = vmatprep.subr.bf16.mxu0 0
        %827 = vmatpush1.bf16.msra.mxu0 0
        %828 = vmatprep.subr.bf16.mxu0 0
        %829 = vmatpush1.bf16.msra.mxu0 0
        %830 = vmatprep.subr.bf16.mxu0 0
        %831 = vmatpush1.bf16.msra.mxu0 0
        %832 = vmatprep.mubr.bf16.mxu0 0
        %833 = vmatmul.mubr.bf16.gmra.mrb[0].mxu0 %v798
        %v834 = vpop.f32.mrb[0].mxu0
        %v835 = vadd.f32 0.0, %v834
        %v836 = vpop.f32.mrb[0].mxu0
        %v837 = vpop.f32.mrb[0].mxu0
        %v838 = vpop.f32.mrb[0].mxu0
        %839 = vdwg.mxu0
        %v840 = vadd.f32 %v767, %v835
        %v841 = vld [vmem:[%s568] sm:$0x2]
        %s842 = scalar_lea.vmem %s218, 144
        %v843 = vld [vmem:[%s842] sm:$0xf]
        %v844 = vld [vmem:[%s842 + $0x4] sm:$0xf]
        %v845 = vld [vmem:[%s842 + $0x8] sm:$0xf]
        %v846 = vld [vmem:[%s842 + $0xc] sm:$0xf]
        %v849 = vunpack.c.l.s4 1983009808
        %v850 = vunpack.c.0.s8 %v849
        %v851 = vlaneseq
        %v852 = vshrl.u32 %v851, 7
        %v853 = vsub.s32 %v850, %v852
        %v854 = vrot.slane %v841, %v853
        %v855 = vrot.slane %v854, 1
        %v860 = vunpack.c.l.b16 %v843
        %v861 = vunpack.c.l.b16 %v844
        %v862 = vunpack.c.l.b16 %v845
        %v863 = vunpack.c.l.b16 %v846
        %v864 = vpack.c.b16 %v861, %v860
        %v865 = vpack.c.b16 %v863, %v862
        %v869 = vsel %vm251, %v855, 0
        %871 = vmatprep.subr.bf16.mxu0 0
        %872 = vmatpush1.bf16.msra.mxu0 %v864
        %873 = vmatprep.subr.bf16.mxu0 0
        %874 = vmatpush1.bf16.msra.mxu0 %v865
        %875 = vmatprep.subr.bf16.mxu0 0
        %876 = vmatpush1.bf16.msra.mxu0 0
        %877 = vmatprep.subr.bf16.mxu0 0
        %878 = vmatpush1.bf16.msra.mxu0 0
        %879 = vmatprep.subr.bf16.mxu0 0
        %880 = vmatpush1.bf16.msra.mxu0 0
        %881 = vmatprep.subr.bf16.mxu0 0
        %882 = vmatpush1.bf16.msra.mxu0 0
        %883 = vmatprep.subr.bf16.mxu0 0
        %884 = vmatpush1.bf16.msra.mxu0 0
        %885 = vmatprep.subr.bf16.mxu0 0
        %886 = vmatpush1.bf16.msra.mxu0 0
        %887 = vmatprep.subr.bf16.mxu0 0
        %888 = vmatpush1.bf16.msra.mxu0 0
        %889 = vmatprep.subr.bf16.mxu0 0
        %890 = vmatpush1.bf16.msra.mxu0 0
        %891 = vmatprep.subr.bf16.mxu0 0
        %892 = vmatpush1.bf16.msra.mxu0 0
        %893 = vmatprep.subr.bf16.mxu0 0
        %894 = vmatpush1.bf16.msra.mxu0 0
        %895 = vmatprep.subr.bf16.mxu0 0
        %896 = vmatpush1.bf16.msra.mxu0 0
        %897 = vmatprep.subr.bf16.mxu0 0
        %898 = vmatpush1.bf16.msra.mxu0 0
        %899 = vmatprep.subr.bf16.mxu0 0
        %900 = vmatpush1.bf16.msra.mxu0 0
        %901 = vmatprep.subr.bf16.mxu0 0
        %902 = vmatpush1.bf16.msra.mxu0 0
        %903 = vmatprep.mubr.bf16.mxu0 0
        %904 = vmatmul.mubr.bf16.gmra.mrb[0].mxu0 %v869
        %v905 = vpop.f32.mrb[0].mxu0
        %v906 = vadd.f32 0.0, %v905
        %v907 = vpop.f32.mrb[0].mxu0
        %v908 = vpop.f32.mrb[0].mxu0
        %v909 = vpop.f32.mrb[0].mxu0
        %910 = vdwg.mxu0
        %v911 = vadd.f32 %v840, %v906
        %s912 = sadd.s32 %s24, 1
        %s913 = smul.addr %s912, 2
        %s914 = scalar_lea.vmem %s214, %s913
        %v915 = vld [vmem:[%s914] sm:$0x1]
        %s916 = scalar_lea.vmem %s218, 160
        %v917 = vld [vmem:[%s916] sm:$0xf]
        %v918 = vld [vmem:[%s916 + $0x4] sm:$0xf]
        %v919 = vld [vmem:[%s916 + $0x8] sm:$0xf]
        %v920 = vld [vmem:[%s916 + $0xc] sm:$0xf]
        %v925 = vunpack.c.l.b16 %v917
        %v926 = vunpack.c.l.b16 %v918
        %v927 = vunpack.c.l.b16 %v919
        %v928 = vunpack.c.l.b16 %v920
        %v929 = vpack.c.b16 %v926, %v925
        %v930 = vpack.c.b16 %v928, %v927
        %v934 = vsel %vm251, %v915, 0
        %936 = vmatprep.subr.bf16.mxu0 0
        %937 = vmatpush1.bf16.msra.mxu0 %v929
        %938 = vmatprep.subr.bf16.mxu0 0
        %939 = vmatpush1.bf16.msra.mxu0 %v930
        %940 = vmatprep.subr.bf16.mxu0 0
        %941 = vmatpush1.bf16.msra.mxu0 0
        %942 = vmatprep.subr.bf16.mxu0 0
        %943 = vmatpush1.bf16.msra.mxu0 0
        %944 = vmatprep.subr.bf16.mxu0 0
        %945 = vmatpush1.bf16.msra.mxu0 0
        %946 = vmatprep.subr.bf16.mxu0 0
        %947 = vmatpush1.bf16.msra.mxu0 0
        %948 = vmatprep.subr.bf16.mxu0 0
        %949 = vmatpush1.bf16.msra.mxu0 0
        %950 = vmatprep.subr.bf16.mxu0 0
        %951 = vmatpush1.bf16.msra.mxu0 0
        %952 = vmatprep.subr.bf16.mxu0 0
        %953 = vmatpush1.bf16.msra.mxu0 0
        %954 = vmatprep.subr.bf16.mxu0 0
        %955 = vmatpush1.bf16.msra.mxu0 0
        %956 = vmatprep.subr.bf16.mxu0 0
        %957 = vmatpush1.bf16.msra.mxu0 0
        %958 = vmatprep.subr.bf16.mxu0 0
        %959 = vmatpush1.bf16.msra.mxu0 0
        %960 = vmatprep.subr.bf16.mxu0 0
        %961 = vmatpush1.bf16.msra.mxu0 0
        %962 = vmatprep.subr.bf16.mxu0 0
        %963 = vmatpush1.bf16.msra.mxu0 0
        %964 = vmatprep.subr.bf16.mxu0 0
        %965 = vmatpush1.bf16.msra.mxu0 0
        %966 = vmatprep.subr.bf16.mxu0 0
        %967 = vmatpush1.bf16.msra.mxu0 0
        %968 = vmatprep.mubr.bf16.mxu0 0
        %969 = vmatmul.mubr.bf16.gmra.mrb[0].mxu0 %v934
        %v970 = vpop.f32.mrb[0].mxu0
        %v971 = vadd.f32 0.0, %v970
        %v972 = vpop.f32.mrb[0].mxu0
        %v973 = vpop.f32.mrb[0].mxu0
        %v974 = vpop.f32.mrb[0].mxu0
        %975 = vdwg.mxu0
        %v976 = vadd.f32 %v911, %v971
        %s977 = sadd.s32 %s912, 3
        %s978 = smul.addr %s977, 2
        %s979 = scalar_lea.vmem %s214, %s978
        %v980 = vld [vmem:[%s979] sm:$0x1]
        %s981 = scalar_lea.vmem %s218, 176
        %v982 = vld [vmem:[%s981] sm:$0xf]
        %v983 = vld [vmem:[%s981 + $0x4] sm:$0xf]
        %v984 = vld [vmem:[%s981 + $0x8] sm:$0xf]
        %v985 = vld [vmem:[%s981 + $0xc] sm:$0xf]
        %v990 = vunpack.c.l.b16 %v982
        %v991 = vunpack.c.l.b16 %v983
        %v992 = vunpack.c.l.b16 %v984
        %v993 = vunpack.c.l.b16 %v985
        %v994 = vpack.c.b16 %v991, %v990
        %v995 = vpack.c.b16 %v993, %v992
        %v999 = vsel %vm251, %v980, 0
        %1001 = vmatprep.subr.bf16.mxu0 0
        %1002 = vmatpush1.bf16.msra.mxu0 %v994
        %1003 = vmatprep.subr.bf16.mxu0 0
        %1004 = vmatpush1.bf16.msra.mxu0 %v995
        %1005 = vmatprep.subr.bf16.mxu0 0
        %1006 = vmatpush1.bf16.msra.mxu0 0
        %1007 = vmatprep.subr.bf16.mxu0 0
        %1008 = vmatpush1.bf16.msra.mxu0 0
        %1009 = vmatprep.subr.bf16.mxu0 0
        %1010 = vmatpush1.bf16.msra.mxu0 0
        %1011 = vmatprep.subr.bf16.mxu0 0
        %1012 = vmatpush1.bf16.msra.mxu0 0
        %1013 = vmatprep.subr.bf16.mxu0 0
        %1014 = vmatpush1.bf16.msra.mxu0 0
        %1015 = vmatprep.subr.bf16.mxu0 0
        %1016 = vmatpush1.bf16.msra.mxu0 0
        %1017 = vmatprep.subr.bf16.mxu0 0
        %1018 = vmatpush1.bf16.msra.mxu0 0
        %1019 = vmatprep.subr.bf16.mxu0 0
        %1020 = vmatpush1.bf16.msra.mxu0 0
        %1021 = vmatprep.subr.bf16.mxu0 0
        %1022 = vmatpush1.bf16.msra.mxu0 0
        %1023 = vmatprep.subr.bf16.mxu0 0
        %1024 = vmatpush1.bf16.msra.mxu0 0
        %1025 = vmatprep.subr.bf16.mxu0 0
        %1026 = vmatpush1.bf16.msra.mxu0 0
        %1027 = vmatprep.subr.bf16.mxu0 0
        %1028 = vmatpush1.bf16.msra.mxu0 0
        %1029 = vmatprep.subr.bf16.mxu0 0
        %1030 = vmatpush1.bf16.msra.mxu0 0
        %1031 = vmatprep.subr.bf16.mxu0 0
        %1032 = vmatpush1.bf16.msra.mxu0 0
        %1033 = vmatprep.mubr.bf16.mxu0 0
        %1034 = vmatmul.mubr.bf16.gmra.mrb[0].mxu0 %v999
        %v1035 = vpop.f32.mrb[0].mxu0
        %v1036 = vadd.f32 0.0, %v1035
        %v1037 = vpop.f32.mrb[0].mxu0
        %v1038 = vpop.f32.mrb[0].mxu0
        %v1039 = vpop.f32.mrb[0].mxu0
        %1040 = vdwg.mxu0
        %v1041 = vadd.f32 %v976, %v1036
        %s1042 = scalar_lea.vmem %s218, 192
        %v1043 = vld [vmem:[%s1042] sm:$0xf]
        %v1044 = vld [vmem:[%s1042 + $0x4] sm:$0xf]
        %v1045 = vld [vmem:[%s1042 + $0x8] sm:$0xf]
        %v1046 = vld [vmem:[%s1042 + $0xc] sm:$0xf]
        %v1049 = vunpack.c.l.s4 1983009808
        %v1050 = vunpack.c.0.s8 %v1049
        %v1051 = vlaneseq
        %v1052 = vshrl.u32 %v1051, 7
        %v1053 = vsub.s32 %v1050, %v1052
        %v1054 = vrot.slane %v915, %v1053
        %v1056 = vshrl.u32 %v1054, 16
        %v1062 = vunpack.c.l.b16 %v1043
        %v1063 = vunpack.c.l.b16 %v1044
        %v1064 = vunpack.c.l.b16 %v1045
        %v1065 = vunpack.c.l.b16 %v1046
        %v1066 = vpack.c.b16 %v1063, %v1062
        %v1067 = vpack.c.b16 %v1065, %v1064
        %v1071 = vsel %vm251, %v1056, 0
        %1073 = vmatprep.subr.bf16.mxu0 0
        %1074 = vmatpush1.bf16.msra.mxu0 %v1066
        %1075 = vmatprep.subr.bf16.mxu0 0
        %1076 = vmatpush1.bf16.msra.mxu0 %v1067
        %1077 = vmatprep.subr.bf16.mxu0 0
        %1078 = vmatpush1.bf16.msra.mxu0 0
        %1079 = vmatprep.subr.bf16.mxu0 0
        %1080 = vmatpush1.bf16.msra.mxu0 0
        %1081 = vmatprep.subr.bf16.mxu0 0
        %1082 = vmatpush1.bf16.msra.mxu0 0
        %1083 = vmatprep.subr.bf16.mxu0 0
        %1084 = vmatpush1.bf16.msra.mxu0 0
        %1085 = vmatprep.subr.bf16.mxu0 0
        %1086 = vmatpush1.bf16.msra.mxu0 0
        %1087 = vmatprep.subr.bf16.mxu0 0
        %1088 = vmatpush1.bf16.msra.mxu0 0
        %1089 = vmatprep.subr.bf16.mxu0 0
        %1090 = vmatpush1.bf16.msra.mxu0 0
        %1091 = vmatprep.subr.bf16.mxu0 0
        %1092 = vmatpush1.bf16.msra.mxu0 0
        %1093 = vmatprep.subr.bf16.mxu0 0
        %1094 = vmatpush1.bf16.msra.mxu0 0
        %1095 = vmatprep.subr.bf16.mxu0 0
        %1096 = vmatpush1.bf16.msra.mxu0 0
        %1097 = vmatprep.subr.bf16.mxu0 0
        %1098 = vmatpush1.bf16.msra.mxu0 0
        %1099 = vmatprep.subr.bf16.mxu0 0
        %1100 = vmatpush1.bf16.msra.mxu0 0
        %1101 = vmatprep.subr.bf16.mxu0 0
        %1102 = vmatpush1.bf16.msra.mxu0 0
        %1103 = vmatprep.subr.bf16.mxu0 0
        %1104 = vmatpush1.bf16.msra.mxu0 0
        %1105 = vmatprep.mubr.bf16.mxu0 0
        %1106 = vmatmul.mubr.bf16.gmra.mrb[0].mxu0 %v1071
        %v1107 = vpop.f32.mrb[0].mxu0
        %v1108 = vadd.f32 0.0, %v1107
        %v1109 = vpop.f32.mrb[0].mxu0
        %v1110 = vpop.f32.mrb[0].mxu0
        %v1111 = vpop.f32.mrb[0].mxu0
        %1112 = vdwg.mxu0
        %v1113 = vadd.f32 %v1041, %v1108
        %v1114 = vld [vmem:[%s979] sm:$0x1]
        %s1115 = scalar_lea.vmem %s218, 208
        %v1116 = vld [vmem:[%s1115] sm:$0xf]
        %v1117 = vld [vmem:[%s1115 + $0x4] sm:$0xf]
        %v1118 = vld [vmem:[%s1115 + $0x8] sm:$0xf]
        %v1119 = vld [vmem:[%s1115 + $0xc] sm:$0xf]
        %v1122 = vunpack.c.l.s4 1983009808
        %v1123 = vunpack.c.0.s8 %v1122
        %v1124 = vlaneseq
        %v1125 = vshrl.u32 %v1124, 7
        %v1126 = vsub.s32 %v1123, %v1125
        %v1127 = vrot.slane %v1114, %v1126
        %v1129 = vshrl.u32 %v1127, 16
        %v1135 = vunpack.c.l.b16 %v1116
        %v1136 = vunpack.c.l.b16 %v1117
        %v1137 = vunpack.c.l.b16 %v1118
        %v1138 = vunpack.c.l.b16 %v1119
        %v1139 = vpack.c.b16 %v1136, %v1135
        %v1140 = vpack.c.b16 %v1138, %v1137
        %v1144 = vsel %vm251, %v1129, 0
        %1146 = vmatprep.subr.bf16.mxu0 0
        %1147 = vmatpush1.bf16.msra.mxu0 %v1139
        %1148 = vmatprep.subr.bf16.mxu0 0
        %1149 = vmatpush1.bf16.msra.mxu0 %v1140
        %1150 = vmatprep.subr.bf16.mxu0 0
        %1151 = vmatpush1.bf16.msra.mxu0 0
        %1152 = vmatprep.subr.bf16.mxu0 0
        %1153 = vmatpush1.bf16.msra.mxu0 0
        %1154 = vmatprep.subr.bf16.mxu0 0
        %1155 = vmatpush1.bf16.msra.mxu0 0
        %1156 = vmatprep.subr.bf16.mxu0 0
        %1157 = vmatpush1.bf16.msra.mxu0 0
        %1158 = vmatprep.subr.bf16.mxu0 0
        %1159 = vmatpush1.bf16.msra.mxu0 0
        %1160 = vmatprep.subr.bf16.mxu0 0
        %1161 = vmatpush1.bf16.msra.mxu0 0
        %1162 = vmatprep.subr.bf16.mxu0 0
        %1163 = vmatpush1.bf16.msra.mxu0 0
        %1164 = vmatprep.subr.bf16.mxu0 0
        %1165 = vmatpush1.bf16.msra.mxu0 0
        %1166 = vmatprep.subr.bf16.mxu0 0
        %1167 = vmatpush1.bf16.msra.mxu0 0
        %1168 = vmatprep.subr.bf16.mxu0 0
        %1169 = vmatpush1.bf16.msra.mxu0 0
        %1170 = vmatprep.subr.bf16.mxu0 0
        %1171 = vmatpush1.bf16.msra.mxu0 0
        %1172 = vmatprep.subr.bf16.mxu0 0
        %1173 = vmatpush1.bf16.msra.mxu0 0
        %1174 = vmatprep.subr.bf16.mxu0 0
        %1175 = vmatpush1.bf16.msra.mxu0 0
        %1176 = vmatprep.subr.bf16.mxu0 0
        %1177 = vmatpush1.bf16.msra.mxu0 0
        %1178 = vmatprep.mubr.bf16.mxu0 0
        %1179 = vmatmul.mubr.bf16.gmra.mrb[0].mxu0 %v1144
        %v1180 = vpop.f32.mrb[0].mxu0
        %v1181 = vadd.f32 0.0, %v1180
        %v1182 = vpop.f32.mrb[0].mxu0
        %v1183 = vpop.f32.mrb[0].mxu0
        %v1184 = vpop.f32.mrb[0].mxu0
        %1185 = vdwg.mxu0
        %v1186 = vadd.f32 %v1113, %v1181
        %v1187 = vld [vmem:[%s914] sm:$0x2]
        %s1188 = scalar_lea.vmem %s218, 224
        %v1189 = vld [vmem:[%s1188] sm:$0xf]
        %v1190 = vld [vmem:[%s1188 + $0x4] sm:$0xf]
        %v1191 = vld [vmem:[%s1188 + $0x8] sm:$0xf]
        %v1192 = vld [vmem:[%s1188 + $0xc] sm:$0xf]
        %v1195 = vunpack.c.l.s4 1983009808
        %v1196 = vunpack.c.0.s8 %v1195
        %v1197 = vlaneseq
        %v1198 = vshrl.u32 %v1197, 7
        %v1199 = vsub.s32 %v1196, %v1198
        %v1200 = vrot.slane %v1187, %v1199
        %v1201 = vrot.slane %v1200, 1
        %v1206 = vunpack.c.l.b16 %v1189
        %v1207 = vunpack.c.l.b16 %v1190
        %v1208 = vunpack.c.l.b16 %v1191
        %v1209 = vunpack.c.l.b16 %v1192
        %v1210 = vpack.c.b16 %v1207, %v1206
        %v1211 = vpack.c.b16 %v1209, %v1208
        %v1215 = vsel %vm251, %v1201, 0
        %1217 = vmatprep.subr.bf16.mxu0 0
        %1218 = vmatpush1.bf16.msra.mxu0 %v1210
        %1219 = vmatprep.subr.bf16.mxu0 0
        %1220 = vmatpush1.bf16.msra.mxu0 %v1211
        %1221 = vmatprep.subr.bf16.mxu0 0
        %1222 = vmatpush1.bf16.msra.mxu0 0
        %1223 = vmatprep.subr.bf16.mxu0 0
        %1224 = vmatpush1.bf16.msra.mxu0 0
        %1225 = vmatprep.subr.bf16.mxu0 0
        %1226 = vmatpush1.bf16.msra.mxu0 0
        %1227 = vmatprep.subr.bf16.mxu0 0
        %1228 = vmatpush1.bf16.msra.mxu0 0
        %1229 = vmatprep.subr.bf16.mxu0 0
        %1230 = vmatpush1.bf16.msra.mxu0 0
        %1231 = vmatprep.subr.bf16.mxu0 0
        %1232 = vmatpush1.bf16.msra.mxu0 0
        %1233 = vmatprep.subr.bf16.mxu0 0
        %1234 = vmatpush1.bf16.msra.mxu0 0
        %1235 = vmatprep.subr.bf16.mxu0 0
        %1236 = vmatpush1.bf16.msra.mxu0 0
        %1237 = vmatprep.subr.bf16.mxu0 0
        %1238 = vmatpush1.bf16.msra.mxu0 0
        %1239 = vmatprep.subr.bf16.mxu0 0
        %1240 = vmatpush1.bf16.msra.mxu0 0
        %1241 = vmatprep.subr.bf16.mxu0 0
        %1242 = vmatpush1.bf16.msra.mxu0 0
        %1243 = vmatprep.subr.bf16.mxu0 0
        %1244 = vmatpush1.bf16.msra.mxu0 0
        %1245 = vmatprep.subr.bf16.mxu0 0
        %1246 = vmatpush1.bf16.msra.mxu0 0
        %1247 = vmatprep.subr.bf16.mxu0 0
        %1248 = vmatpush1.bf16.msra.mxu0 0
        %1249 = vmatprep.mubr.bf16.mxu0 0
        %1250 = vmatmul.mubr.bf16.gmra.mrb[0].mxu0 %v1215
        %v1251 = vpop.f32.mrb[0].mxu0
        %v1252 = vadd.f32 0.0, %v1251
        %v1253 = vpop.f32.mrb[0].mxu0
        %v1254 = vpop.f32.mrb[0].mxu0
        %v1255 = vpop.f32.mrb[0].mxu0
        %1256 = vdwg.mxu0
        %v1257 = vadd.f32 %v1186, %v1252
        %s1258 = sadd.s32 %s912, 6
        %s1259 = smul.addr %s1258, 2
        %s1260 = scalar_lea.vmem %s214, %s1259
        %v1261 = vld [vmem:[%s1260] sm:$0x1]
        %s1262 = scalar_lea.vmem %s218, 240
        %v1263 = vld [vmem:[%s1262] sm:$0xf]
        %v1264 = vld [vmem:[%s1262 + $0x4] sm:$0xf]
        %v1265 = vld [vmem:[%s1262 + $0x8] sm:$0xf]
        %v1266 = vld [vmem:[%s1262 + $0xc] sm:$0xf]
        %v1271 = vunpack.c.l.b16 %v1263
        %v1272 = vunpack.c.l.b16 %v1264
        %v1273 = vunpack.c.l.b16 %v1265
        %v1274 = vunpack.c.l.b16 %v1266
        %v1275 = vpack.c.b16 %v1272, %v1271
        %v1276 = vpack.c.b16 %v1274, %v1273
        %v1280 = vsel %vm251, %v1261, 0
        %1282 = vmatprep.subr.bf16.mxu0 0
        %1283 = vmatpush1.bf16.msra.mxu0 %v1275
        %1284 = vmatprep.subr.bf16.mxu0 0
        %1285 = vmatpush1.bf16.msra.mxu0 %v1276
        %1286 = vmatprep.subr.bf16.mxu0 0
        %1287 = vmatpush1.bf16.msra.mxu0 0
        %1288 = vmatprep.subr.bf16.mxu0 0
        %1289 = vmatpush1.bf16.msra.mxu0 0
        %1290 = vmatprep.subr.bf16.mxu0 0
        %1291 = vmatpush1.bf16.msra.mxu0 0
        %1292 = vmatprep.subr.bf16.mxu0 0
        %1293 = vmatpush1.bf16.msra.mxu0 0
        %1294 = vmatprep.subr.bf16.mxu0 0
        %1295 = vmatpush1.bf16.msra.mxu0 0
        %1296 = vmatprep.subr.bf16.mxu0 0
        %1297 = vmatpush1.bf16.msra.mxu0 0
        %1298 = vmatprep.subr.bf16.mxu0 0
        %1299 = vmatpush1.bf16.msra.mxu0 0
        %1300 = vmatprep.subr.bf16.mxu0 0
        %1301 = vmatpush1.bf16.msra.mxu0 0
        %1302 = vmatprep.subr.bf16.mxu0 0
        %1303 = vmatpush1.bf16.msra.mxu0 0
        %1304 = vmatprep.subr.bf16.mxu0 0
        %1305 = vmatpush1.bf16.msra.mxu0 0
        %1306 = vmatprep.subr.bf16.mxu0 0
        %1307 = vmatpush1.bf16.msra.mxu0 0
        %1308 = vmatprep.subr.bf16.mxu0 0
        %1309 = vmatpush1.bf16.msra.mxu0 0
        %1310 = vmatprep.subr.bf16.mxu0 0
        %1311 = vmatpush1.bf16.msra.mxu0 0
        %1312 = vmatprep.subr.bf16.mxu0 0
        %1313 = vmatpush1.bf16.msra.mxu0 0
        %1314 = vmatprep.mubr.bf16.mxu0 0
        %1315 = vmatmul.mubr.bf16.gmra.mrb[0].mxu0 %v1280
        %v1316 = vpop.f32.mrb[0].mxu0
        %v1317 = vadd.f32 0.0, %v1316
        %v1318 = vpop.f32.mrb[0].mxu0
        %v1319 = vpop.f32.mrb[0].mxu0
        %v1320 = vpop.f32.mrb[0].mxu0
        %1321 = vdwg.mxu0
        %v1322 = vadd.f32 %v1257, %v1317
        %s1323 = sadd.s32 %s977, 6
        %s1324 = smul.addr %s1323, 2
        %s1325 = scalar_lea.vmem %s214, %s1324
        %v1326 = vld [vmem:[%s1325] sm:$0x1]
        %s1327 = scalar_lea.vmem %s218, 256
        %v1328 = vld [vmem:[%s1327] sm:$0xf]
        %v1329 = vld [vmem:[%s1327 + $0x4] sm:$0xf]
        %v1330 = vld [vmem:[%s1327 + $0x8] sm:$0xf]
        %v1331 = vld [vmem:[%s1327 + $0xc] sm:$0xf]
        %v1336 = vunpack.c.l.b16 %v1328
        %v1337 = vunpack.c.l.b16 %v1329
        %v1338 = vunpack.c.l.b16 %v1330
        %v1339 = vunpack.c.l.b16 %v1331
        %v1340 = vpack.c.b16 %v1337, %v1336
        %v1341 = vpack.c.b16 %v1339, %v1338
        %v1345 = vsel %vm251, %v1326, 0
        %1347 = vmatprep.subr.bf16.mxu0 0
        %1348 = vmatpush1.bf16.msra.mxu0 %v1340
        %1349 = vmatprep.subr.bf16.mxu0 0
        %1350 = vmatpush1.bf16.msra.mxu0 %v1341
        %1351 = vmatprep.subr.bf16.mxu0 0
        %1352 = vmatpush1.bf16.msra.mxu0 0
        %1353 = vmatprep.subr.bf16.mxu0 0
        %1354 = vmatpush1.bf16.msra.mxu0 0
        %1355 = vmatprep.subr.bf16.mxu0 0
        %1356 = vmatpush1.bf16.msra.mxu0 0
        %1357 = vmatprep.subr.bf16.mxu0 0
        %1358 = vmatpush1.bf16.msra.mxu0 0
        %1359 = vmatprep.subr.bf16.mxu0 0
        %1360 = vmatpush1.bf16.msra.mxu0 0
        %1361 = vmatprep.subr.bf16.mxu0 0
        %1362 = vmatpush1.bf16.msra.mxu0 0
        %1363 = vmatprep.subr.bf16.mxu0 0
        %1364 = vmatpush1.bf16.msra.mxu0 0
        %1365 = vmatprep.subr.bf16.mxu0 0
        %1366 = vmatpush1.bf16.msra.mxu0 0
        %1367 = vmatprep.subr.bf16.mxu0 0
        %1368 = vmatpush1.bf16.msra.mxu0 0
        %1369 = vmatprep.subr.bf16.mxu0 0
        %1370 = vmatpush1.bf16.msra.mxu0 0
        %1371 = vmatprep.subr.bf16.mxu0 0
        %1372 = vmatpush1.bf16.msra.mxu0 0
        %1373 = vmatprep.subr.bf16.mxu0 0
        %1374 = vmatpush1.bf16.msra.mxu0 0
        %1375 = vmatprep.subr.bf16.mxu0 0
        %1376 = vmatpush1.bf16.msra.mxu0 0
        %1377 = vmatprep.subr.bf16.mxu0 0
        %1378 = vmatpush1.bf16.msra.mxu0 0
        %1379 = vmatprep.mubr.bf16.mxu0 0
        %1380 = vmatmul.mubr.bf16.gmra.mrb[0].mxu0 %v1345
        %v1381 = vpop.f32.mrb[0].mxu0
        %v1382 = vadd.f32 0.0, %v1381
        %v1383 = vpop.f32.mrb[0].mxu0
        %v1384 = vpop.f32.mrb[0].mxu0
        %v1385 = vpop.f32.mrb[0].mxu0
        %1386 = vdwg.mxu0
        %v1387 = vadd.f32 %v1322, %v1382
        %s1388 = scalar_lea.vmem %s218, 272
        %v1389 = vld [vmem:[%s1388] sm:$0xf]
        %v1390 = vld [vmem:[%s1388 + $0x4] sm:$0xf]
        %v1391 = vld [vmem:[%s1388 + $0x8] sm:$0xf]
        %v1392 = vld [vmem:[%s1388 + $0xc] sm:$0xf]
        %v1395 = vunpack.c.l.s4 1983009808
        %v1396 = vunpack.c.0.s8 %v1395
        %v1397 = vlaneseq
        %v1398 = vshrl.u32 %v1397, 7
        %v1399 = vsub.s32 %v1396, %v1398
        %v1400 = vrot.slane %v1261, %v1399
        %v1402 = vshrl.u32 %v1400, 16
        %v1408 = vunpack.c.l.b16 %v1389
        %v1409 = vunpack.c.l.b16 %v1390
        %v1410 = vunpack.c.l.b16 %v1391
        %v1411 = vunpack.c.l.b16 %v1392
        %v1412 = vpack.c.b16 %v1409, %v1408
        %v1413 = vpack.c.b16 %v1411, %v1410
        %v1417 = vsel %vm251, %v1402, 0
        %1419 = vmatprep.subr.bf16.mxu0 0
        %1420 = vmatpush1.bf16.msra.mxu0 %v1412
        %1421 = vmatprep.subr.bf16.mxu0 0
        %1422 = vmatpush1.bf16.msra.mxu0 %v1413
        %1423 = vmatprep.subr.bf16.mxu0 0
        %1424 = vmatpush1.bf16.msra.mxu0 0
        %1425 = vmatprep.subr.bf16.mxu0 0
        %1426 = vmatpush1.bf16.msra.mxu0 0
        %1427 = vmatprep.subr.bf16.mxu0 0
        %1428 = vmatpush1.bf16.msra.mxu0 0
        %1429 = vmatprep.subr.bf16.mxu0 0
        %1430 = vmatpush1.bf16.msra.mxu0 0
        %1431 = vmatprep.subr.bf16.mxu0 0
        %1432 = vmatpush1.bf16.msra.mxu0 0
        %1433 = vmatprep.subr.bf16.mxu0 0
        %1434 = vmatpush1.bf16.msra.mxu0 0
        %1435 = vmatprep.subr.bf16.mxu0 0
        %1436 = vmatpush1.bf16.msra.mxu0 0
        %1437 = vmatprep.subr.bf16.mxu0 0
        %1438 = vmatpush1.bf16.msra.mxu0 0
        %1439 = vmatprep.subr.bf16.mxu0 0
        %1440 = vmatpush1.bf16.msra.mxu0 0
        %1441 = vmatprep.subr.bf16.mxu0 0
        %1442 = vmatpush1.bf16.msra.mxu0 0
        %1443 = vmatprep.subr.bf16.mxu0 0
        %1444 = vmatpush1.bf16.msra.mxu0 0
        %1445 = vmatprep.subr.bf16.mxu0 0
        %1446 = vmatpush1.bf16.msra.mxu0 0
        %1447 = vmatprep.subr.bf16.mxu0 0
        %1448 = vmatpush1.bf16.msra.mxu0 0
        %1449 = vmatprep.subr.bf16.mxu0 0
        %1450 = vmatpush1.bf16.msra.mxu0 0
        %1451 = vmatprep.mubr.bf16.mxu0 0
        %1452 = vmatmul.mubr.bf16.gmra.mrb[0].mxu0 %v1417
        %v1453 = vpop.f32.mrb[0].mxu0
        %v1454 = vadd.f32 0.0, %v1453
        %v1455 = vpop.f32.mrb[0].mxu0
        %v1456 = vpop.f32.mrb[0].mxu0
        %v1457 = vpop.f32.mrb[0].mxu0
        %1458 = vdwg.mxu0
        %v1459 = vadd.f32 %v1387, %v1454
        %v1460 = vld [vmem:[%s1325] sm:$0x1]
        %s1461 = scalar_lea.vmem %s218, 288
        %v1462 = vld [vmem:[%s1461] sm:$0xf]
        %v1463 = vld [vmem:[%s1461 + $0x4] sm:$0xf]
        %v1464 = vld [vmem:[%s1461 + $0x8] sm:$0xf]
        %v1465 = vld [vmem:[%s1461 + $0xc] sm:$0xf]
        %v1468 = vunpack.c.l.s4 1983009808
        %v1469 = vunpack.c.0.s8 %v1468
        %v1470 = vlaneseq
        %v1471 = vshrl.u32 %v1470, 7
        %v1472 = vsub.s32 %v1469, %v1471
        %v1473 = vrot.slane %v1460, %v1472
        %v1475 = vshrl.u32 %v1473, 16
        %v1481 = vunpack.c.l.b16 %v1462
        %v1482 = vunpack.c.l.b16 %v1463
        %v1483 = vunpack.c.l.b16 %v1464
        %v1484 = vunpack.c.l.b16 %v1465
        %v1485 = vpack.c.b16 %v1482, %v1481
        %v1486 = vpack.c.b16 %v1484, %v1483
        %v1490 = vsel %vm251, %v1475, 0
        %1492 = vmatprep.subr.bf16.mxu0 0
        %1493 = vmatpush1.bf16.msra.mxu0 %v1485
        %1494 = vmatprep.subr.bf16.mxu0 0
        %1495 = vmatpush1.bf16.msra.mxu0 %v1486
        %1496 = vmatprep.subr.bf16.mxu0 0
        %1497 = vmatpush1.bf16.msra.mxu0 0
        %1498 = vmatprep.subr.bf16.mxu0 0
        %1499 = vmatpush1.bf16.msra.mxu0 0
        %1500 = vmatprep.subr.bf16.mxu0 0
        %1501 = vmatpush1.bf16.msra.mxu0 0
        %1502 = vmatprep.subr.bf16.mxu0 0
        %1503 = vmatpush1.bf16.msra.mxu0 0
        %1504 = vmatprep.subr.bf16.mxu0 0
        %1505 = vmatpush1.bf16.msra.mxu0 0
        %1506 = vmatprep.subr.bf16.mxu0 0
        %1507 = vmatpush1.bf16.msra.mxu0 0
        %1508 = vmatprep.subr.bf16.mxu0 0
        %1509 = vmatpush1.bf16.msra.mxu0 0
        %1510 = vmatprep.subr.bf16.mxu0 0
        %1511 = vmatpush1.bf16.msra.mxu0 0
        %1512 = vmatprep.subr.bf16.mxu0 0
        %1513 = vmatpush1.bf16.msra.mxu0 0
        %1514 = vmatprep.subr.bf16.mxu0 0
        %1515 = vmatpush1.bf16.msra.mxu0 0
        %1516 = vmatprep.subr.bf16.mxu0 0
        %1517 = vmatpush1.bf16.msra.mxu0 0
        %1518 = vmatprep.subr.bf16.mxu0 0
        %1519 = vmatpush1.bf16.msra.mxu0 0
        %1520 = vmatprep.subr.bf16.mxu0 0
        %1521 = vmatpush1.bf16.msra.mxu0 0
        %1522 = vmatprep.subr.bf16.mxu0 0
        %1523 = vmatpush1.bf16.msra.mxu0 0
        %1524 = vmatprep.mubr.bf16.mxu0 0
        %1525 = vmatmul.mubr.bf16.gmra.mrb[0].mxu0 %v1490
        %v1526 = vpop.f32.mrb[0].mxu0
        %v1527 = vadd.f32 0.0, %v1526
        %v1528 = vpop.f32.mrb[0].mxu0
        %v1529 = vpop.f32.mrb[0].mxu0
        %v1530 = vpop.f32.mrb[0].mxu0
        %1531 = vdwg.mxu0
        %v1532 = vadd.f32 %v1459, %v1527
        %v1533 = vld [vmem:[%s1260] sm:$0x2]
        %s1534 = scalar_lea.vmem %s218, 304
        %v1535 = vld [vmem:[%s1534] sm:$0xf]
        %v1536 = vld [vmem:[%s1534 + $0x4] sm:$0xf]
        %v1537 = vld [vmem:[%s1534 + $0x8] sm:$0xf]
        %v1538 = vld [vmem:[%s1534 + $0xc] sm:$0xf]
        %v1541 = vunpack.c.l.s4 1983009808
        %v1542 = vunpack.c.0.s8 %v1541
        %v1543 = vlaneseq
        %v1544 = vshrl.u32 %v1543, 7
        %v1545 = vsub.s32 %v1542, %v1544
        %v1546 = vrot.slane %v1533, %v1545
        %v1547 = vrot.slane %v1546, 1
        %v1552 = vunpack.c.l.b16 %v1535
        %v1553 = vunpack.c.l.b16 %v1536
        %v1554 = vunpack.c.l.b16 %v1537
        %v1555 = vunpack.c.l.b16 %v1538
        %v1556 = vpack.c.b16 %v1553, %v1552
        %v1557 = vpack.c.b16 %v1555, %v1554
        %v1561 = vsel %vm251, %v1547, 0
        %1563 = vmatprep.subr.bf16.mxu0 0
        %1564 = vmatpush1.bf16.msra.mxu0 %v1556
        %1565 = vmatprep.subr.bf16.mxu0 0
        %1566 = vmatpush1.bf16.msra.mxu0 %v1557
        %1567 = vmatprep.subr.bf16.mxu0 0
        %1568 = vmatpush1.bf16.msra.mxu0 0
        %1569 = vmatprep.subr.bf16.mxu0 0
        %1570 = vmatpush1.bf16.msra.mxu0 0
        %1571 = vmatprep.subr.bf16.mxu0 0
        %1572 = vmatpush1.bf16.msra.mxu0 0
        %1573 = vmatprep.subr.bf16.mxu0 0
        %1574 = vmatpush1.bf16.msra.mxu0 0
        %1575 = vmatprep.subr.bf16.mxu0 0
        %1576 = vmatpush1.bf16.msra.mxu0 0
        %1577 = vmatprep.subr.bf16.mxu0 0
        %1578 = vmatpush1.bf16.msra.mxu0 0
        %1579 = vmatprep.subr.bf16.mxu0 0
        %1580 = vmatpush1.bf16.msra.mxu0 0
        %1581 = vmatprep.subr.bf16.mxu0 0
        %1582 = vmatpush1.bf16.msra.mxu0 0
        %1583 = vmatprep.subr.bf16.mxu0 0
        %1584 = vmatpush1.bf16.msra.mxu0 0
        %1585 = vmatprep.subr.bf16.mxu0 0
        %1586 = vmatpush1.bf16.msra.mxu0 0
        %1587 = vmatprep.subr.bf16.mxu0 0
        %1588 = vmatpush1.bf16.msra.mxu0 0
        %1589 = vmatprep.subr.bf16.mxu0 0
        %1590 = vmatpush1.bf16.msra.mxu0 0
        %1591 = vmatprep.subr.bf16.mxu0 0
        %1592 = vmatpush1.bf16.msra.mxu0 0
        %1593 = vmatprep.subr.bf16.mxu0 0
        %1594 = vmatpush1.bf16.msra.mxu0 0
        %1595 = vmatprep.mubr.bf16.mxu0 0
        %1596 = vmatmul.mubr.bf16.gmra.mrb[0].mxu0 %v1561
        %v1597 = vpop.f32.mrb[0].mxu0
        %v1598 = vadd.f32 0.0, %v1597
        %v1599 = vpop.f32.mrb[0].mxu0
        %v1600 = vpop.f32.mrb[0].mxu0
        %v1601 = vpop.f32.mrb[0].mxu0
        %1602 = vdwg.mxu0
        %v1603 = vadd.f32 %v1532, %v1598
        %s1604 = sadd.s32 %s24, 2
        %s1605 = smul.addr %s1604, 2
        %s1606 = scalar_lea.vmem %s214, %s1605
        %v1607 = vld [vmem:[%s1606] sm:$0x1]
        %s1608 = scalar_lea.vmem %s218, 320
        %v1609 = vld [vmem:[%s1608] sm:$0xf]
        %v1610 = vld [vmem:[%s1608 + $0x4] sm:$0xf]
        %v1611 = vld [vmem:[%s1608 + $0x8] sm:$0xf]
        %v1612 = vld [vmem:[%s1608 + $0xc] sm:$0xf]
        %v1617 = vunpack.c.l.b16 %v1609
        %v1618 = vunpack.c.l.b16 %v1610
        %v1619 = vunpack.c.l.b16 %v1611
        %v1620 = vunpack.c.l.b16 %v1612
        %v1621 = vpack.c.b16 %v1618, %v1617
        %v1622 = vpack.c.b16 %v1620, %v1619
        %v1626 = vsel %vm251, %v1607, 0
        %1628 = vmatprep.subr.bf16.mxu0 0
        %1629 = vmatpush1.bf16.msra.mxu0 %v1621
        %1630 = vmatprep.subr.bf16.mxu0 0
        %1631 = vmatpush1.bf16.msra.mxu0 %v1622
        %1632 = vmatprep.subr.bf16.mxu0 0
        %1633 = vmatpush1.bf16.msra.mxu0 0
        %1634 = vmatprep.subr.bf16.mxu0 0
        %1635 = vmatpush1.bf16.msra.mxu0 0
        %1636 = vmatprep.subr.bf16.mxu0 0
        %1637 = vmatpush1.bf16.msra.mxu0 0
        %1638 = vmatprep.subr.bf16.mxu0 0
        %1639 = vmatpush1.bf16.msra.mxu0 0
        %1640 = vmatprep.subr.bf16.mxu0 0
        %1641 = vmatpush1.bf16.msra.mxu0 0
        %1642 = vmatprep.subr.bf16.mxu0 0
        %1643 = vmatpush1.bf16.msra.mxu0 0
        %1644 = vmatprep.subr.bf16.mxu0 0
        %1645 = vmatpush1.bf16.msra.mxu0 0
        %1646 = vmatprep.subr.bf16.mxu0 0
        %1647 = vmatpush1.bf16.msra.mxu0 0
        %1648 = vmatprep.subr.bf16.mxu0 0
        %1649 = vmatpush1.bf16.msra.mxu0 0
        %1650 = vmatprep.subr.bf16.mxu0 0
        %1651 = vmatpush1.bf16.msra.mxu0 0
        %1652 = vmatprep.subr.bf16.mxu0 0
        %1653 = vmatpush1.bf16.msra.mxu0 0
        %1654 = vmatprep.subr.bf16.mxu0 0
        %1655 = vmatpush1.bf16.msra.mxu0 0
        %1656 = vmatprep.subr.bf16.mxu0 0
        %1657 = vmatpush1.bf16.msra.mxu0 0
        %1658 = vmatprep.subr.bf16.mxu0 0
        %1659 = vmatpush1.bf16.msra.mxu0 0
        %1660 = vmatprep.mubr.bf16.mxu0 0
        %1661 = vmatmul.mubr.bf16.gmra.mrb[0].mxu0 %v1626
        %v1662 = vpop.f32.mrb[0].mxu0
        %v1663 = vadd.f32 0.0, %v1662
        %v1664 = vpop.f32.mrb[0].mxu0
        %v1665 = vpop.f32.mrb[0].mxu0
        %v1666 = vpop.f32.mrb[0].mxu0
        %1667 = vdwg.mxu0
        %v1668 = vadd.f32 %v1603, %v1663
        %s1669 = sadd.s32 %s1604, 3
        %s1670 = smul.addr %s1669, 2
        %s1671 = scalar_lea.vmem %s214, %s1670
        %v1672 = vld [vmem:[%s1671] sm:$0x1]
        %s1673 = scalar_lea.vmem %s218, 336
        %v1674 = vld [vmem:[%s1673] sm:$0xf]
        %v1675 = vld [vmem:[%s1673 + $0x4] sm:$0xf]
        %v1676 = vld [vmem:[%s1673 + $0x8] sm:$0xf]
        %v1677 = vld [vmem:[%s1673 + $0xc] sm:$0xf]
        %v1682 = vunpack.c.l.b16 %v1674
        %v1683 = vunpack.c.l.b16 %v1675
        %v1684 = vunpack.c.l.b16 %v1676
        %v1685 = vunpack.c.l.b16 %v1677
        %v1686 = vpack.c.b16 %v1683, %v1682
        %v1687 = vpack.c.b16 %v1685, %v1684
        %v1691 = vsel %vm251, %v1672, 0
        %1693 = vmatprep.subr.bf16.mxu0 0
        %1694 = vmatpush1.bf16.msra.mxu0 %v1686
        %1695 = vmatprep.subr.bf16.mxu0 0
        %1696 = vmatpush1.bf16.msra.mxu0 %v1687
        %1697 = vmatprep.subr.bf16.mxu0 0
        %1698 = vmatpush1.bf16.msra.mxu0 0
        %1699 = vmatprep.subr.bf16.mxu0 0
        %1700 = vmatpush1.bf16.msra.mxu0 0
        %1701 = vmatprep.subr.bf16.mxu0 0
        %1702 = vmatpush1.bf16.msra.mxu0 0
        %1703 = vmatprep.subr.bf16.mxu0 0
        %1704 = vmatpush1.bf16.msra.mxu0 0
        %1705 = vmatprep.subr.bf16.mxu0 0
        %1706 = vmatpush1.bf16.msra.mxu0 0
        %1707 = vmatprep.subr.bf16.mxu0 0
        %1708 = vmatpush1.bf16.msra.mxu0 0
        %1709 = vmatprep.subr.bf16.mxu0 0
        %1710 = vmatpush1.bf16.msra.mxu0 0
        %1711 = vmatprep.subr.bf16.mxu0 0
        %1712 = vmatpush1.bf16.msra.mxu0 0
        %1713 = vmatprep.subr.bf16.mxu0 0
        %1714 = vmatpush1.bf16.msra.mxu0 0
        %1715 = vmatprep.subr.bf16.mxu0 0
        %1716 = vmatpush1.bf16.msra.mxu0 0
        %1717 = vmatprep.subr.bf16.mxu0 0
        %1718 = vmatpush1.bf16.msra.mxu0 0
        %1719 = vmatprep.subr.bf16.mxu0 0
        %1720 = vmatpush1.bf16.msra.mxu0 0
        %1721 = vmatprep.subr.bf16.mxu0 0
        %1722 = vmatpush1.bf16.msra.mxu0 0
        %1723 = vmatprep.subr.bf16.mxu0 0
        %1724 = vmatpush1.bf16.msra.mxu0 0
        %1725 = vmatprep.mubr.bf16.mxu0 0
        %1726 = vmatmul.mubr.bf16.gmra.mrb[0].mxu0 %v1691
        %v1727 = vpop.f32.mrb[0].mxu0
        %v1728 = vadd.f32 0.0, %v1727
        %v1729 = vpop.f32.mrb[0].mxu0
        %v1730 = vpop.f32.mrb[0].mxu0
        %v1731 = vpop.f32.mrb[0].mxu0
        %1732 = vdwg.mxu0
        %v1733 = vadd.f32 %v1668, %v1728
        %s1734 = scalar_lea.vmem %s218, 352
        %v1735 = vld [vmem:[%s1734] sm:$0xf]
        %v1736 = vld [vmem:[%s1734 + $0x4] sm:$0xf]
        %v1737 = vld [vmem:[%s1734 + $0x8] sm:$0xf]
        %v1738 = vld [vmem:[%s1734 + $0xc] sm:$0xf]
        %v1741 = vunpack.c.l.s4 1983009808
        %v1742 = vunpack.c.0.s8 %v1741
        %v1743 = vlaneseq
        %v1744 = vshrl.u32 %v1743, 7
        %v1745 = vsub.s32 %v1742, %v1744
        %v1746 = vrot.slane %v1607, %v1745
        %v1748 = vshrl.u32 %v1746, 16
        %v1754 = vunpack.c.l.b16 %v1735
        %v1755 = vunpack.c.l.b16 %v1736
        %v1756 = vunpack.c.l.b16 %v1737
        %v1757 = vunpack.c.l.b16 %v1738
        %v1758 = vpack.c.b16 %v1755, %v1754
        %v1759 = vpack.c.b16 %v1757, %v1756
        %v1763 = vsel %vm251, %v1748, 0
        %1765 = vmatprep.subr.bf16.mxu0 0
        %1766 = vmatpush1.bf16.msra.mxu0 %v1758
        %1767 = vmatprep.subr.bf16.mxu0 0
        %1768 = vmatpush1.bf16.msra.mxu0 %v1759
        %1769 = vmatprep.subr.bf16.mxu0 0
        %1770 = vmatpush1.bf16.msra.mxu0 0
        %1771 = vmatprep.subr.bf16.mxu0 0
        %1772 = vmatpush1.bf16.msra.mxu0 0
        %1773 = vmatprep.subr.bf16.mxu0 0
        %1774 = vmatpush1.bf16.msra.mxu0 0
        %1775 = vmatprep.subr.bf16.mxu0 0
        %1776 = vmatpush1.bf16.msra.mxu0 0
        %1777 = vmatprep.subr.bf16.mxu0 0
        %1778 = vmatpush1.bf16.msra.mxu0 0
        %1779 = vmatprep.subr.bf16.mxu0 0
        %1780 = vmatpush1.bf16.msra.mxu0 0
        %1781 = vmatprep.subr.bf16.mxu0 0
        %1782 = vmatpush1.bf16.msra.mxu0 0
        %1783 = vmatprep.subr.bf16.mxu0 0
        %1784 = vmatpush1.bf16.msra.mxu0 0
        %1785 = vmatprep.subr.bf16.mxu0 0
        %1786 = vmatpush1.bf16.msra.mxu0 0
        %1787 = vmatprep.subr.bf16.mxu0 0
        %1788 = vmatpush1.bf16.msra.mxu0 0
        %1789 = vmatprep.subr.bf16.mxu0 0
        %1790 = vmatpush1.bf16.msra.mxu0 0
        %1791 = vmatprep.subr.bf16.mxu0 0
        %1792 = vmatpush1.bf16.msra.mxu0 0
        %1793 = vmatprep.subr.bf16.mxu0 0
        %1794 = vmatpush1.bf16.msra.mxu0 0
        %1795 = vmatprep.subr.bf16.mxu0 0
        %1796 = vmatpush1.bf16.msra.mxu0 0
        %1797 = vmatprep.mubr.bf16.mxu0 0
        %1798 = vmatmul.mubr.bf16.gmra.mrb[0].mxu0 %v1763
        %v1799 = vpop.f32.mrb[0].mxu0
        %v1800 = vadd.f32 0.0, %v1799
        %v1801 = vpop.f32.mrb[0].mxu0
        %v1802 = vpop.f32.mrb[0].mxu0
        %v1803 = vpop.f32.mrb[0].mxu0
        %1804 = vdwg.mxu0
        %v1805 = vadd.f32 %v1733, %v1800
        %v1806 = vld [vmem:[%s1671] sm:$0x1]
        %s1807 = scalar_lea.vmem %s218, 368
        %v1808 = vld [vmem:[%s1807] sm:$0xf]
        %v1809 = vld [vmem:[%s1807 + $0x4] sm:$0xf]
        %v1810 = vld [vmem:[%s1807 + $0x8] sm:$0xf]
        %v1811 = vld [vmem:[%s1807 + $0xc] sm:$0xf]
        %v1814 = vunpack.c.l.s4 1983009808
        %v1815 = vunpack.c.0.s8 %v1814
        %v1816 = vlaneseq
        %v1817 = vshrl.u32 %v1816, 7
        %v1818 = vsub.s32 %v1815, %v1817
        %v1819 = vrot.slane %v1806, %v1818
        %v1821 = vshrl.u32 %v1819, 16
        %v1827 = vunpack.c.l.b16 %v1808
        %v1828 = vunpack.c.l.b16 %v1809
        %v1829 = vunpack.c.l.b16 %v1810
        %v1830 = vunpack.c.l.b16 %v1811
        %v1831 = vpack.c.b16 %v1828, %v1827
        %v1832 = vpack.c.b16 %v1830, %v1829
        %v1836 = vsel %vm251, %v1821, 0
        %1838 = vmatprep.subr.bf16.mxu0 0
        %1839 = vmatpush1.bf16.msra.mxu0 %v1831
        %1840 = vmatprep.subr.bf16.mxu0 0
        %1841 = vmatpush1.bf16.msra.mxu0 %v1832
        %1842 = vmatprep.subr.bf16.mxu0 0
        %1843 = vmatpush1.bf16.msra.mxu0 0
        %1844 = vmatprep.subr.bf16.mxu0 0
        %1845 = vmatpush1.bf16.msra.mxu0 0
        %1846 = vmatprep.subr.bf16.mxu0 0
        %1847 = vmatpush1.bf16.msra.mxu0 0
        %1848 = vmatprep.subr.bf16.mxu0 0
        %1849 = vmatpush1.bf16.msra.mxu0 0
        %1850 = vmatprep.subr.bf16.mxu0 0
        %1851 = vmatpush1.bf16.msra.mxu0 0
        %1852 = vmatprep.subr.bf16.mxu0 0
        %1853 = vmatpush1.bf16.msra.mxu0 0
        %1854 = vmatprep.subr.bf16.mxu0 0
        %1855 = vmatpush1.bf16.msra.mxu0 0
        %1856 = vmatprep.subr.bf16.mxu0 0
        %1857 = vmatpush1.bf16.msra.mxu0 0
        %1858 = vmatprep.subr.bf16.mxu0 0
        %1859 = vmatpush1.bf16.msra.mxu0 0
        %1860 = vmatprep.subr.bf16.mxu0 0
        %1861 = vmatpush1.bf16.msra.mxu0 0
        %1862 = vmatprep.subr.bf16.mxu0 0
        %1863 = vmatpush1.bf16.msra.mxu0 0
        %1864 = vmatprep.subr.bf16.mxu0 0
        %1865 = vmatpush1.bf16.msra.mxu0 0
        %1866 = vmatprep.subr.bf16.mxu0 0
        %1867 = vmatpush1.bf16.msra.mxu0 0
        %1868 = vmatprep.subr.bf16.mxu0 0
        %1869 = vmatpush1.bf16.msra.mxu0 0
        %1870 = vmatprep.mubr.bf16.mxu0 0
        %1871 = vmatmul.mubr.bf16.gmra.mrb[0].mxu0 %v1836
        %v1872 = vpop.f32.mrb[0].mxu0
        %v1873 = vadd.f32 0.0, %v1872
        %v1874 = vpop.f32.mrb[0].mxu0
        %v1875 = vpop.f32.mrb[0].mxu0
        %v1876 = vpop.f32.mrb[0].mxu0
        %1877 = vdwg.mxu0
        %v1878 = vadd.f32 %v1805, %v1873
        %v1879 = vld [vmem:[%s1606] sm:$0x2]
        %s1880 = scalar_lea.vmem %s218, 384
        %v1881 = vld [vmem:[%s1880] sm:$0xf]
        %v1882 = vld [vmem:[%s1880 + $0x4] sm:$0xf]
        %v1883 = vld [vmem:[%s1880 + $0x8] sm:$0xf]
        %v1884 = vld [vmem:[%s1880 + $0xc] sm:$0xf]
        %v1887 = vunpack.c.l.s4 1983009808
        %v1888 = vunpack.c.0.s8 %v1887
        %v1889 = vlaneseq
        %v1890 = vshrl.u32 %v1889, 7
        %v1891 = vsub.s32 %v1888, %v1890
        %v1892 = vrot.slane %v1879, %v1891
        %v1893 = vrot.slane %v1892, 1
        %v1898 = vunpack.c.l.b16 %v1881
        %v1899 = vunpack.c.l.b16 %v1882
        %v1900 = vunpack.c.l.b16 %v1883
        %v1901 = vunpack.c.l.b16 %v1884
        %v1902 = vpack.c.b16 %v1899, %v1898
        %v1903 = vpack.c.b16 %v1901, %v1900
        %v1907 = vsel %vm251, %v1893, 0
        %1909 = vmatprep.subr.bf16.mxu0 0
        %1910 = vmatpush1.bf16.msra.mxu0 %v1902
        %1911 = vmatprep.subr.bf16.mxu0 0
        %1912 = vmatpush1.bf16.msra.mxu0 %v1903
        %1913 = vmatprep.subr.bf16.mxu0 0
        %1914 = vmatpush1.bf16.msra.mxu0 0
        %1915 = vmatprep.subr.bf16.mxu0 0
        %1916 = vmatpush1.bf16.msra.mxu0 0
        %1917 = vmatprep.subr.bf16.mxu0 0
        %1918 = vmatpush1.bf16.msra.mxu0 0
        %1919 = vmatprep.subr.bf16.mxu0 0
        %1920 = vmatpush1.bf16.msra.mxu0 0
        %1921 = vmatprep.subr.bf16.mxu0 0
        %1922 = vmatpush1.bf16.msra.mxu0 0
        %1923 = vmatprep.subr.bf16.mxu0 0
        %1924 = vmatpush1.bf16.msra.mxu0 0
        %1925 = vmatprep.subr.bf16.mxu0 0
        %1926 = vmatpush1.bf16.msra.mxu0 0
        %1927 = vmatprep.subr.bf16.mxu0 0
        %1928 = vmatpush1.bf16.msra.mxu0 0
        %1929 = vmatprep.subr.bf16.mxu0 0
        %1930 = vmatpush1.bf16.msra.mxu0 0
        %1931 = vmatprep.subr.bf16.mxu0 0
        %1932 = vmatpush1.bf16.msra.mxu0 0
        %1933 = vmatprep.subr.bf16.mxu0 0
        %1934 = vmatpush1.bf16.msra.mxu0 0
        %1935 = vmatprep.subr.bf16.mxu0 0
        %1936 = vmatpush1.bf16.msra.mxu0 0
        %1937 = vmatprep.subr.bf16.mxu0 0
        %1938 = vmatpush1.bf16.msra.mxu0 0
        %1939 = vmatprep.subr.bf16.mxu0 0
        %1940 = vmatpush1.bf16.msra.mxu0 0
        %1941 = vmatprep.mubr.bf16.mxu0 0
        %1942 = vmatmul.mubr.bf16.gmra.mrb[0].mxu0 %v1907
        %v1943 = vpop.f32.mrb[0].mxu0
        %v1944 = vadd.f32 0.0, %v1943
        %v1945 = vpop.f32.mrb[0].mxu0
        %v1946 = vpop.f32.mrb[0].mxu0
        %v1947 = vpop.f32.mrb[0].mxu0
        %1948 = vdwg.mxu0
        %v1949 = vadd.f32 %v1878, %v1944
        %v1950 = vld [vmem:[%s221] sm:$0x1]
        %v1951 = vadd.f32 %v1949, %v1950
        %vm1952 = vcmp.gt.f32.partialorder %v1951, 0.0
        %v1953 = vmul.f32 %v1951, 0.01
        %v1954 = vsel %vm1952, %v1951, %v1953
        %vm1955 = vcmask 516096
        %1956 = vst.msk [vmem:[%s209] sm:$0x1] %vm1955, %v1954
        %s1957 = sand.u32 %s126, 1
        %s1958 = scalar_lea.sflag [#allocation3], %s1957
        %s1959 = sand.u32 %s126, 1
        %s1960 = scalar_lea.vmem [#allocation2], %s1959
        // Predicated region
        $region33: #{flatten_module_forward.7} parent=31 // pred_check
          %p1961 = pneg %p136
        $region34: #{flatten_module_forward.7} parent=31 // pred_check_branch
          %1963 = sbr.rel (%p1961) target = $region36
        $region35: #{flatten_module_forward.7} parent=31 // pred_region
          %s1965 = ssub.s32 16, 16
          %1966 = vsyncadd %s1958, %s1965
          %s1967 = sadd.s32 %s23, %s24
          %s1968 = sadd.s32 %s1967, %s22
          %s1969 = smul.addr %s1968, 16
          %s1970 = scalar_lea.hbm %s3, %s1969
          %s1972 = sshll.u32 %s1960, 4
          %s1973 = int_to_ptr.vmem [resolvable:$true] %s1972
          %1975 = dma.vmem_to_hbm [thread:$0]  %s1973, 16, %s1970, %s1958
        $region36: #{flatten_module_forward.7} parent=31 // pred_fallthru
          _
      $region32: #{flatten_module_forward.7} parent=5 // pred_fallthru
        _
      %p1976 = scmp.le.s32.totalorder 2, %s12
      // Predicated region
      $region37: #{flatten_module_forward.7} parent=5 // pred_check
        %p1977 = pneg %p1976
      $region38: #{flatten_module_forward.7} parent=5 // pred_check_branch
        %1979 = sbr.rel (%p1977) target = $region40
      $region39: #{flatten_module_forward.7} parent=5 // pred_region
        %s1980 = ssub.s32 %s12, 2
        // Predicated region
        $region41: #{flatten_module_forward.7} parent=39 // pred_check
          %p1981 = pneg %p142
        $region42: #{flatten_module_forward.7} parent=39 // pred_check_branch
          %1983 = sbr.rel (%p1981) target = $region44
        $region43: #{flatten_module_forward.7} parent=39 // pred_region
          %s1984 = sand.u32 %s127, 1
          %s1985 = scalar_lea.sflag [#allocation3], %s1984
          %s1986 = sand.u32 %s127, 1
          %s1987 = scalar_lea.vmem [#allocation2], %s1986
          %1988 = dma.done %s1985, 16
        $region44: #{flatten_module_forward.7} parent=39 // pred_fallthru
          _
      $region40: #{flatten_module_forward.7} parent=5 // pred_fallthru
        _
    $region6: #{flatten_module_forward.7} parent=1 // loop_footer
      %s16 = sadd.s32 1, %s12
    $region7: #{flatten_module_forward.7} parent=1 // loop_footer_branch
      %11 = sbr.rel target = $region3
    $region8: #{flatten_module_forward.7} parent=1 // loop_exit
      _
    %1989 = vsyncpa [#allocation3], 1
    %s1990 = scalar_lea.sflag [#allocation3], 1
    %1991 = vsyncpa %s1990, 1

</llo_original>
